<compile_context>
chip_gen: v7x
topology: tpu7x:2x2x1
jax: 0.10.0
libtpu: 0.0.40
codegen_flags: <defaults>
</compile_context>

<pallas_src>
import functools

import jax
import jax.numpy as jnp
from jax.experimental import pallas as pl
from jax.experimental.pallas import tpu as pltpu

_VMEM_LIMIT = 32 * 1024 * 1024       # scoped VMEM limit; blocks are sized far below this
_BLOCK_BUDGET = 4 * 1024 * 1024      # per-block working-set target (re-derived for v7x 64MiB)


# ----------------------------- Pallas kernels ------------------------------ #

def _build_taps(xt, th, w):
    """[th+2, w+2, c] f32 tile -> [th*w, 9*c] tap matrix (built entirely in VMEM).

    Column order is (dy*3 + dx)*c + channel, matching the wrapper's weight folds.
    Note: w must be a multiple of 8 (f32 sublane tile) for the cheap reshape; this
    holds for every stage of this decoder."""
    c = xt.shape[-1]
    cols = [xt[dy:dy + th, dx:dx + w, :] for dy in range(3) for dx in range(3)]
    taps = jnp.concatenate(cols, axis=-1)              # [th, w, 9c]
    return taps.reshape(th * w, 9 * c)


def _conv3x3_kernel(x_ref, w_ref, b_ref, o_ref, *, relu_in):
    """Generic fused conv:  taps(x) @ W + b   -- one MXU matmul with K = 9*Cin.

    Serves: the folded depthwise-separable layer, and the upsample-fused
    DoubleBlocks (where W packs the 4 sub-grid weight sets along its columns)."""
    th = x_ref.shape[1] - 2
    w = x_ref.shape[2] - 2
    xt = x_ref[0].astype(jnp.float32)                  # [th+2, w+2, c]
    if relu_in:
        xt = jnp.maximum(xt, 0.0)
    taps = _build_taps(xt, th, w).astype(jnp.bfloat16)
    acc = jnp.dot(taps, w_ref[...], preferred_element_type=jnp.float32)
    o_ref[0] = (acc + b_ref[...]).astype(o_ref.dtype)


def _residual_kernel(x_ref, w1_ref, w2_ref, o_ref):
    """x + conv1x1( relu( conv3x3( relu(x) ) ) )  (bias-free convs).

    The residual add reuses the raw center of the input tile (no extra input)."""
    th = x_ref.shape[1] - 2
    w = x_ref.shape[2] - 2
    xt = x_ref[0].astype(jnp.float32)                  # [th+2, w+2, c]
    taps = _build_taps(jnp.maximum(xt, 0.0), th, w).astype(jnp.bfloat16)
    t = jnp.dot(taps, w1_ref[...], preferred_element_type=jnp.float32)
    t = jnp.maximum(t, 0.0).astype(jnp.bfloat16)
    y = jnp.dot(t, w2_ref[...], preferred_element_type=jnp.float32)
    center = xt[1:1 + th, 1:1 + w, :].reshape(th * w, -1)
    o_ref[0] = (center + y).astype(o_ref.dtype)


# ------------------------------- JAX glue ---------------------------------- #

def _compiler_params():
    return pltpu.CompilerParams(
        dimension_semantics=("parallel", "parallel"),
        vmem_limit_bytes=_VMEM_LIMIT)


def _pick_tile_rows(h, w, c, cout_cols):
    """Largest row tile dividing h whose working set fits the block budget; prefer
    >= 2 tiles so the spatial grid axis can be sharded across v7x TensorCores."""
    cands = [r for r in range(8, h + 1, 8) if h % r == 0]
    if not cands:
        return h
    def bytes_for(r):
        tile = (r + 2) * (w + 2) * c * 2          # bf16 input tile
        taps = r * w * 9 * c * 6                  # f32 taps + bf16 copy
        out = r * w * cout_cols * 6               # f32 acc + output block
        return 2 * (tile + out) + taps            # in/out double-buffered
    fit = [r for r in cands if bytes_for(r) <= _BLOCK_BUDGET] or cands[:1]
    multi = [r for r in fit if h // r >= 2]
    return max(multi) if multi else max(fit)


def _halo_tiles(x, th):
    """NHWC -> zero-padded, row-tiled [N*T, th+2, W+2, C] bf16.  Only the 2 halo rows
    per tile are duplicated (~(th+2)/th HBM traffic) -- never a 9x im2col."""
    n, h, w, c = x.shape
    xp = jnp.pad(x.astype(jnp.bfloat16), ((0, 0), (1, 1), (1, 1), (0, 0)))
    t = h // th
    tiles = jnp.stack([xp[:, i * th:i * th + th + 2] for i in range(t)], axis=1)
    return tiles.reshape(n * t, th + 2, w + 2, c)


def _fused_conv(x, wf, bf, *, relu_in, out_dtype):
    """Tiled fused-conv pallas_call; returns logical [N, T, th, W, COLS]."""
    n, h, w, c = x.shape
    cols = wf.shape[1]
    th = _pick_tile_rows(h, w, c, cols)
    t = h // th
    tiles = _halo_tiles(x, th)
    out = pl.pallas_call(
        functools.partial(_conv3x3_kernel, relu_in=relu_in),
        out_shape=jax.ShapeDtypeStruct((n * t, th * w, cols), out_dtype),
        grid_spec=pltpu.PrefetchScalarGridSpec(
            num_scalar_prefetch=0,
            grid=(n, t),
            in_specs=[
                pl.BlockSpec((1, th + 2, w + 2, c),
                             lambda i, j: (i * t + j, 0, 0, 0)),
                pl.BlockSpec(wf.shape, lambda i, j: (0, 0)),
                pl.BlockSpec(bf.shape, lambda i, j: (0, 0)),
            ],
            out_specs=pl.BlockSpec((1, th * w, cols),
                                   lambda i, j: (i * t + j, 0, 0)),
        ),
        compiler_params=_compiler_params(),
    )(tiles, wf, bf)
    return out.reshape(n, t, th, w, cols)


def conv3x3(x, wf, bf, *, relu_in=False, out_dtype=jnp.bfloat16):
    """Plain fused 3x3 conv (also used for the folded depthwise-separable layer)."""
    n, h, w, _ = x.shape
    y = _fused_conv(x, wf, bf, relu_in=relu_in, out_dtype=out_dtype)
    return y.reshape(n, h, w, wf.shape[1])


def upsample_conv(x, wf, bf, *, relu_in, out_dtype=jnp.bfloat16, to_nchw=False):
    """DoubleBlock: 2x nearest upsample + 3x3 conv, fused at the weight level.
    Kernel emits the 4 sub-grids; XLA interleaves them in a single pass (and writes
    NCHW directly for the final layer, removing the extra transpose pass)."""
    n, h, w, _ = x.shape
    cout = wf.shape[1] // 4
    y = _fused_conv(x, wf, bf, relu_in=relu_in, out_dtype=out_dtype)
    t, th = y.shape[1], y.shape[2]
    y = y.reshape(n, t, th, w, 2, 2, cout)              # (n, tile, i, j, a, b, co)
    if to_nchw:
        return y.transpose(0, 6, 1, 2, 4, 3, 5).reshape(n, cout, 2 * h, 2 * w)
    return y.transpose(0, 1, 2, 4, 3, 5, 6).reshape(n, 2 * h, 2 * w, cout)


def residual_layer(x, w1f, w2f):
    n, h, w, c = x.shape
    th = _pick_tile_rows(h, w, c, c)
    t = h // th
    tiles = _halo_tiles(x, th)
    out = pl.pallas_call(
        _residual_kernel,
        out_shape=jax.ShapeDtypeStruct((n * t, th * w, c), jnp.bfloat16),
        grid_spec=pltpu.PrefetchScalarGridSpec(
            num_scalar_prefetch=0,
            grid=(n, t),
            in_specs=[
                pl.BlockSpec((1, th + 2, w + 2, c),
                             lambda i, j: (i * t + j, 0, 0, 0)),
                pl.BlockSpec(w1f.shape, lambda i, j: (0, 0)),
                pl.BlockSpec(w2f.shape, lambda i, j: (0, 0)),
            ],
            out_specs=pl.BlockSpec((1, th * w, c),
                                   lambda i, j: (i * t + j, 0, 0)),
        ),
        compiler_params=_compiler_params(),
    )(tiles, w1f, w2f)
    return out.reshape(n, h, w, c)


# --------------------------- weight folding (setup) ------------------------- #

# One-hot map from conv tap row dy and output-row parity a to the source-row
# offset (+1) in the ORIGINAL image, for 2x nearest upsample followed by a 3x3
# conv with padding 1:  src_offset(a, dy) = floor((a + dy - 1) / 2) in {-1, 0, +1}.
_UPSRC = jnp.array([[[1, 0, 0], [0, 1, 0], [0, 1, 0]],      # a = 0
                    [[0, 1, 0], [0, 1, 0], [0, 0, 1]]],     # a = 1
                   jnp.float32)                              # [a, dy, DY]


def _fold_3x3(w):
    """[3,3,Cin,Cout] -> [9*Cin, Cout] in the in-kernel tap order."""
    return w.reshape(9 * w.shape[2], w.shape[3])


def _fold_upsample(w, b):
    """Fold (2x nearest upsample + 3x3 conv) into one [9*Cin, 4*Cout] weight.
    Column block (a*2 + b) produces output pixels (2i+a, 2j+b) from the
    original-resolution 3x3 taps (zero padding handled exactly)."""
    cin, cout = w.shape[2], w.shape[3]
    wf = jnp.einsum("aym,bxn,yxco->mncabo", _UPSRC, _UPSRC, w)
    wf = wf.reshape(9 * cin, 4 * cout)
    bf = jnp.tile(b, 4).reshape(1, 4 * cout)
    return wf, bf


def init_decoder_params(key, in_channels, num_hiddens, num_residual_layers,
                        num_residual_hiddens):
    """Raw parameters in PyTorch-like layouts (f32)."""
    ks = jax.random.split(key, 8 + 2 * num_residual_layers)
    s = 0.1
    half = num_hiddens // 2
    p = {
        "dw_w": jax.random.normal(ks[0], (3, 3, in_channels)) * s,
        "dw_b": jax.random.normal(ks[1], (in_channels,)) * s,
        "pw_w": jax.random.normal(ks[2], (in_channels, num_hiddens)) * s,
        "pw_b": jax.random.normal(ks[3], (num_hiddens,)) * s,
        "res": [],
    }
    for l in range(num_residual_layers):
        w1 = jax.random.normal(ks[4 + 2 * l],
                               (3, 3, num_hiddens, num_residual_hiddens)) * s
        w2 = jax.random.normal(ks[5 + 2 * l],
                               (num_residual_hiddens, num_hiddens)) * s
        p["res"].append((w1, w2))
    off = 4 + 2 * num_residual_layers
    p["d1_w"] = jax.random.normal(ks[off + 0], (3, 3, num_hiddens, half)) * s
    p["d1_b"] = jax.random.normal(ks[off + 1], (half,)) * s
    p["d2_w"] = jax.random.normal(ks[off + 2], (3, 3, half, 3)) * s
    p["d2_b"] = jax.random.normal(ks[off + 3], (3,)) * s
    return p


def fold_decoder_params(p):
    """Precompute kernel-ready weight slabs: bf16 weights, f32 biases."""
    dw, pw = p["dw_w"], p["pw_w"]
    w_ds = (dw[:, :, :, None] * pw[None, None, :, :]).reshape(-1, pw.shape[1])
    b_ds = (p["dw_b"] @ pw + p["pw_b"]).reshape(1, -1)
    w_d1, b_d1 = _fold_upsample(p["d1_w"], p["d1_b"])
    w_d2, b_d2 = _fold_upsample(p["d2_w"], p["d2_b"])
    bf16 = jnp.bfloat16
    return {
        "w_ds": w_ds.astype(bf16), "b_ds": b_ds.astype(jnp.float32),
        "res": [(_fold_3x3(w1).astype(bf16), w2.astype(bf16))
                for (w1, w2) in p["res"]],
        "w_d1": w_d1.astype(bf16), "b_d1": b_d1.astype(jnp.float32),
        "w_d2": w_d2.astype(bf16), "b_d2": b_d2.astype(jnp.float32),
    }


# ----------------------------- Decoder forward ------------------------------ #

def decoder_forward(x_nchw, folded):
    # NCHW (PyTorch convention) in; NHWC / bf16 inside; NCHW f32 out.
    x = jnp.transpose(x_nchw, (0, 2, 3, 1))

    # DepthwiseSeparable2d(in_channels -> num_hiddens): dw+pw folded, one matmul.
    h = conv3x3(x, folded["w_ds"], folded["b_ds"], relu_in=False)

    # ResidualStack (its trailing ReLU is fused into the next conv's input; valid
    # since ReLU commutes with zero padding and nearest-neighbor upsampling).
    for w1f, w2f in folded["res"]:
        h = residual_layer(h, w1f, w2f)

    # DoubleBlock(num_hiddens -> num_hiddens // 2): upsample fused into the conv.
    h = upsample_conv(h, folded["w_d1"], folded["b_d1"], relu_in=True)

    # ReLU (fused) + DoubleBlock(num_hiddens // 2 -> 3): emit NCHW f32 directly.
    return upsample_conv(h, folded["w_d2"], folded["b_d2"], relu_in=True,
                         out_dtype=jnp.float32, to_nchw=True)


if __name__ == "__main__":
    N, C, H, W = 2, 4, 16, 16
    num_hiddens, num_residual_layers, num_residual_hiddens = 32, 2, 16

    key = jax.random.PRNGKey(0)
    kx, kp = jax.random.split(key)
    x = jax.random.normal(kx, (N, C, H, W), jnp.float32)
    raw = init_decoder_params(kp, C, num_hiddens, num_residual_layers,
                              num_residual_hiddens)
    folded = fold_decoder_params(raw)

    fwd = jax.jit(lambda xx: decoder_forward(xx, folded))
    y = fwd(x)
    jax.block_until_ready(y)
    assert y.shape == (N, 3, 4 * H, 4 * W), y.shape
    assert bool(jnp.all(jnp.isfinite(y)))
    print("KERNEL_OK")
</pallas_src>

<mosaic_0001>
module attributes {stable_mosaic.version = 11 : i64} {
  func.func @_conv3x3_kernel(%arg0: i32, %arg1: i32, %arg2: memref<1x10x18x4xbf16, #tpu.memory_space<vmem>>, %arg3: memref<36x32xbf16, #tpu.memory_space<vmem>>, %arg4: memref<1x32xf32, #tpu.memory_space<vmem>>, %arg5: memref<1x128x32xbf16, #tpu.memory_space<vmem>>) attributes {dimension_semantics = [#tpu.dimension_semantics<parallel>, #tpu.dimension_semantics<parallel>], iteration_bounds = array<i64: 2, 2>, scalar_prefetch = 0 : i64, scratch_operands = 0 : i64, tpu.core_type = #tpu.core_type<tc>, window_params = [{transform_indices = @transform_0, window_bounds = array<i64: 1, 10, 18, 4>}, {pipeline_mode = #tpu.pipeline_mode<synchronous>, transform_indices = @transform_1, window_bounds = array<i64: 36, 32>}, {pipeline_mode = #tpu.pipeline_mode<synchronous>, transform_indices = @transform_2, window_bounds = array<i64: 1, 32>}, {transform_indices = @transform_3, window_bounds = array<i64: 1, 128, 32>}]} {
    %c0 = arith.constant 0 : index
    %c0_0 = arith.constant 0 : index
    %c0_1 = arith.constant 0 : index
    %c0_2 = arith.constant 0 : index
    %0 = vector.load %arg2[%c0, %c0_0, %c0_1, %c0_2] : memref<1x10x18x4xbf16, #tpu.memory_space<vmem>>, vector<1x10x18x4xbf16>
    %1 = vector.shape_cast %0 : vector<1x10x18x4xbf16> to vector<10x18x4xbf16>
    %2 = arith.extf %1 : vector<10x18x4xbf16> to vector<10x18x4xf32>
    %3 = vector.extract_strided_slice %2 {offsets = [0, 0, 0], sizes = [8, 16, 4], strides = [1, 1, 1]} : vector<10x18x4xf32> to vector<8x16x4xf32>
    %4 = vector.extract_strided_slice %2 {offsets = [0, 1, 0], sizes = [8, 16, 4], strides = [1, 1, 1]} : vector<10x18x4xf32> to vector<8x16x4xf32>
    %5 = vector.extract_strided_slice %2 {offsets = [0, 2, 0], sizes = [8, 16, 4], strides = [1, 1, 1]} : vector<10x18x4xf32> to vector<8x16x4xf32>
    %6 = vector.extract_strided_slice %2 {offsets = [1, 0, 0], sizes = [8, 16, 4], strides = [1, 1, 1]} : vector<10x18x4xf32> to vector<8x16x4xf32>
    %7 = vector.extract_strided_slice %2 {offsets = [1, 1, 0], sizes = [8, 16, 4], strides = [1, 1, 1]} : vector<10x18x4xf32> to vector<8x16x4xf32>
    %8 = vector.extract_strided_slice %2 {offsets = [1, 2, 0], sizes = [8, 16, 4], strides = [1, 1, 1]} : vector<10x18x4xf32> to vector<8x16x4xf32>
    %9 = vector.extract_strided_slice %2 {offsets = [2, 0, 0], sizes = [8, 16, 4], strides = [1, 1, 1]} : vector<10x18x4xf32> to vector<8x16x4xf32>
    %10 = vector.extract_strided_slice %2 {offsets = [2, 1, 0], sizes = [8, 16, 4], strides = [1, 1, 1]} : vector<10x18x4xf32> to vector<8x16x4xf32>
    %11 = vector.extract_strided_slice %2 {offsets = [2, 2, 0], sizes = [8, 16, 4], strides = [1, 1, 1]} : vector<10x18x4xf32> to vector<8x16x4xf32>
    %12 = tpu.concatenate %3, %4, %5, %6, %7, %8, %9, %10, %11 in 2 : vector<8x16x4xf32>, vector<8x16x4xf32>, vector<8x16x4xf32>, vector<8x16x4xf32>, vector<8x16x4xf32>, vector<8x16x4xf32>, vector<8x16x4xf32>, vector<8x16x4xf32>, vector<8x16x4xf32> -> vector<8x16x36xf32>
    %13 = vector.shape_cast %12 : vector<8x16x36xf32> to vector<128x36xf32>
    %14 = arith.truncf %13 : vector<128x36xf32> to vector<128x36xbf16>
    %c0_3 = arith.constant 0 : index
    %c0_4 = arith.constant 0 : index
    %15 = vector.load %arg3[%c0_3, %c0_4] : memref<36x32xbf16, #tpu.memory_space<vmem>>, vector<36x32xbf16>
    %cst = arith.constant dense<0.000000e+00> : vector<128x32xf32>
    %16 = tpu.matmul %14, %15, %cst {dimension_numbers = #tpu.dot_dimension_numbers<[1], [0], [0], [1], [0, 0, 1, 1], [], []>} : vector<128x36xbf16>, vector<36x32xbf16>, vector<128x32xf32> -> vector<128x32xf32>
    %c0_5 = arith.constant 0 : index
    %c0_6 = arith.constant 0 : index
    %17 = vector.load %arg4[%c0_5, %c0_6] : memref<1x32xf32, #tpu.memory_space<vmem>>, vector<1x32xf32>
    %18 = vector.broadcast %17 : vector<1x32xf32> to vector<128x32xf32>
    %19 = arith.addf %16, %18 : vector<128x32xf32>
    %20 = arith.truncf %19 : vector<128x32xf32> to vector<128x32xbf16>
    %c0_7 = arith.constant 0 : index
    %c0_8 = arith.constant 0 : index
    %c0_9 = arith.constant 0 : index
    %21 = vector.load %arg5[%c0_7, %c0_8, %c0_9] : memref<1x128x32xbf16, #tpu.memory_space<vmem>>, vector<1x128x32xbf16>
    %22 = vector.shape_cast %21 : vector<1x128x32xbf16> to vector<128x32xbf16>
    %23 = vector.shape_cast %20 : vector<128x32xbf16> to vector<1x128x32xbf16>
    tpu.vector_store %arg5[%c0_7, %c0_8, %c0_9], %23 {strides = array<i32>} : memref<1x128x32xbf16, #tpu.memory_space<vmem>>, vector<1x128x32xbf16>,
    return
  }
  func.func @transform_0(%arg0: i32, %arg1: i32) -> (i32, i32, i32, i32) {
    %c2_i32 = arith.constant 2 : i32
    %0 = arith.muli %arg0, %c2_i32 : i32
    %1 = arith.addi %0, %arg1 : i32
    %c0_i32 = arith.constant 0 : i32
    %c0_i32_0 = arith.constant 0 : i32
    %c0_i32_1 = arith.constant 0 : i32
    %c0_i32_2 = arith.constant 0 : i32
    return %1, %c0_i32, %c0_i32_0, %c0_i32_1 : i32, i32, i32, i32
  }
  func.func @transform_1(%arg0: i32, %arg1: i32) -> (i32, i32) {
    %c0_i32 = arith.constant 0 : i32
    %c0_i32_0 = arith.constant 0 : i32
    %c0_i32_1 = arith.constant 0 : i32
    return %c0_i32, %c0_i32_0 : i32, i32
  }
  func.func @transform_2(%arg0: i32, %arg1: i32) -> (i32, i32) {
    %c0_i32 = arith.constant 0 : i32
    %c0_i32_0 = arith.constant 0 : i32
    %c0_i32_1 = arith.constant 0 : i32
    return %c0_i32, %c0_i32_0 : i32, i32
  }
  func.func @transform_3(%arg0: i32, %arg1: i32) -> (i32, i32, i32) {
    %c2_i32 = arith.constant 2 : i32
    %0 = arith.muli %arg0, %c2_i32 : i32
    %1 = arith.addi %0, %arg1 : i32
    %c0_i32 = arith.constant 0 : i32
    %c0_i32_0 = arith.constant 0 : i32
    %c0_i32_1 = arith.constant 0 : i32
    return %1, %c0_i32, %c0_i32_0 : i32, i32, i32
  }
}

module attributes {stable_mosaic.version = 11 : i64} {
  func.func @_conv3x3_kernel(%arg0: i32, %arg1: i32, %arg2: memref<1x10x18x32xbf16, #tpu.memory_space<vmem>>, %arg3: memref<288x64xbf16, #tpu.memory_space<vmem>>, %arg4: memref<1x64xf32, #tpu.memory_space<vmem>>, %arg5: memref<1x128x64xbf16, #tpu.memory_space<vmem>>) attributes {dimension_semantics = [#tpu.dimension_semantics<parallel>, #tpu.dimension_semantics<parallel>], iteration_bounds = array<i64: 2, 2>, scalar_prefetch = 0 : i64, scratch_operands = 0 : i64, tpu.core_type = #tpu.core_type<tc>, window_params = [{transform_indices = @transform_0, window_bounds = array<i64: 1, 10, 18, 32>}, {pipeline_mode = #tpu.pipeline_mode<synchronous>, transform_indices = @transform_1, window_bounds = array<i64: 288, 64>}, {pipeline_mode = #tpu.pipeline_mode<synchronous>, transform_indices = @transform_2, window_bounds = array<i64: 1, 64>}, {transform_indices = @transform_3, window_bounds = array<i64: 1, 128, 64>}]} {
    %c0 = arith.constant 0 : index
    %c0_0 = arith.constant 0 : index
    %c0_1 = arith.constant 0 : index
    %c0_2 = arith.constant 0 : index
    %0 = vector.load %arg2[%c0, %c0_0, %c0_1, %c0_2] : memref<1x10x18x32xbf16, #tpu.memory_space<vmem>>, vector<1x10x18x32xbf16>
    %1 = vector.shape_cast %0 : vector<1x10x18x32xbf16> to vector<10x18x32xbf16>
    %2 = arith.extf %1 : vector<10x18x32xbf16> to vector<10x18x32xf32>
    %cst = arith.constant 0.000000e+00 : f32
    %3 = vector.broadcast %cst : f32 to vector<10x18x32xf32>
    %4 = arith.maximumf %2, %3 : vector<10x18x32xf32>
    %5 = vector.extract_strided_slice %4 {offsets = [0, 0, 0], sizes = [8, 16, 32], strides = [1, 1, 1]} : vector<10x18x32xf32> to vector<8x16x32xf32>
    %6 = vector.extract_strided_slice %4 {offsets = [0, 1, 0], sizes = [8, 16, 32], strides = [1, 1, 1]} : vector<10x18x32xf32> to vector<8x16x32xf32>
    %7 = vector.extract_strided_slice %4 {offsets = [0, 2, 0], sizes = [8, 16, 32], strides = [1, 1, 1]} : vector<10x18x32xf32> to vector<8x16x32xf32>
    %8 = vector.extract_strided_slice %4 {offsets = [1, 0, 0], sizes = [8, 16, 32], strides = [1, 1, 1]} : vector<10x18x32xf32> to vector<8x16x32xf32>
    %9 = vector.extract_strided_slice %4 {offsets = [1, 1, 0], sizes = [8, 16, 32], strides = [1, 1, 1]} : vector<10x18x32xf32> to vector<8x16x32xf32>
    %10 = vector.extract_strided_slice %4 {offsets = [1, 2, 0], sizes = [8, 16, 32], strides = [1, 1, 1]} : vector<10x18x32xf32> to vector<8x16x32xf32>
    %11 = vector.extract_strided_slice %4 {offsets = [2, 0, 0], sizes = [8, 16, 32], strides = [1, 1, 1]} : vector<10x18x32xf32> to vector<8x16x32xf32>
    %12 = vector.extract_strided_slice %4 {offsets = [2, 1, 0], sizes = [8, 16, 32], strides = [1, 1, 1]} : vector<10x18x32xf32> to vector<8x16x32xf32>
    %13 = vector.extract_strided_slice %4 {offsets = [2, 2, 0], sizes = [8, 16, 32], strides = [1, 1, 1]} : vector<10x18x32xf32> to vector<8x16x32xf32>
    %14 = tpu.concatenate %5, %6, %7, %8, %9, %10, %11, %12, %13 in 2 : vector<8x16x32xf32>, vector<8x16x32xf32>, vector<8x16x32xf32>, vector<8x16x32xf32>, vector<8x16x32xf32>, vector<8x16x32xf32>, vector<8x16x32xf32>, vector<8x16x32xf32>, vector<8x16x32xf32> -> vector<8x16x288xf32>
    %15 = vector.shape_cast %14 : vector<8x16x288xf32> to vector<128x288xf32>
    %16 = arith.truncf %15 : vector<128x288xf32> to vector<128x288xbf16>
    %c0_3 = arith.constant 0 : index
    %c0_4 = arith.constant 0 : index
    %17 = vector.load %arg3[%c0_3, %c0_4] : memref<288x64xbf16, #tpu.memory_space<vmem>>, vector<288x64xbf16>
    %cst_5 = arith.constant dense<0.000000e+00> : vector<128x64xf32>
    %18 = tpu.matmul %16, %17, %cst_5 {dimension_numbers = #tpu.dot_dimension_numbers<[1], [0], [0], [1], [0, 0, 1, 1], [], []>} : vector<128x288xbf16>, vector<288x64xbf16>, vector<128x64xf32> -> vector<128x64xf32>
    %c0_6 = arith.constant 0 : index
    %c0_7 = arith.constant 0 : index
    %19 = vector.load %arg4[%c0_6, %c0_7] : memref<1x64xf32, #tpu.memory_space<vmem>>, vector<1x64xf32>
    %20 = vector.broadcast %19 : vector<1x64xf32> to vector<128x64xf32>
    %21 = arith.addf %18, %20 : vector<128x64xf32>
    %22 = arith.truncf %21 : vector<128x64xf32> to vector<128x64xbf16>
    %c0_8 = arith.constant 0 : index
    %c0_9 = arith.constant 0 : index
    %c0_10 = arith.constant 0 : index
    %23 = vector.load %arg5[%c0_8, %c0_9, %c0_10] : memref<1x128x64xbf16, #tpu.memory_space<vmem>>, vector<1x128x64xbf16>
    %24 = vector.shape_cast %23 : vector<1x128x64xbf16> to vector<128x64xbf16>
    %25 = vector.shape_cast %22 : vector<128x64xbf16> to vector<1x128x64xbf16>
    tpu.vector_store %arg5[%c0_8, %c0_9, %c0_10], %25 {strides = array<i32>} : memref<1x128x64xbf16, #tpu.memory_space<vmem>>, vector<1x128x64xbf16>,
    return
  }
  func.func @transform_0(%arg0: i32, %arg1: i32) -> (i32, i32, i32, i32) {
    %c2_i32 = arith.constant 2 : i32
    %0 = arith.muli %arg0, %c2_i32 : i32
    %1 = arith.addi %0, %arg1 : i32
    %c0_i32 = arith.constant 0 : i32
    %c0_i32_0 = arith.constant 0 : i32
    %c0_i32_1 = arith.constant 0 : i32
    %c0_i32_2 = arith.constant 0 : i32
    return %1, %c0_i32, %c0_i32_0, %c0_i32_1 : i32, i32, i32, i32
  }
  func.func @transform_1(%arg0: i32, %arg1: i32) -> (i32, i32) {
    %c0_i32 = arith.constant 0 : i32
    %c0_i32_0 = arith.constant 0 : i32
    %c0_i32_1 = arith.constant 0 : i32
    return %c0_i32, %c0_i32_0 : i32, i32
  }
  func.func @transform_2(%arg0: i32, %arg1: i32) -> (i32, i32) {
    %c0_i32 = arith.constant 0 : i32
    %c0_i32_0 = arith.constant 0 : i32
    %c0_i32_1 = arith.constant 0 : i32
    return %c0_i32, %c0_i32_0 : i32, i32
  }
  func.func @transform_3(%arg0: i32, %arg1: i32) -> (i32, i32, i32) {
    %c2_i32 = arith.constant 2 : i32
    %0 = arith.muli %arg0, %c2_i32 : i32
    %1 = arith.addi %0, %arg1 : i32
    %c0_i32 = arith.constant 0 : i32
    %c0_i32_0 = arith.constant 0 : i32
    %c0_i32_1 = arith.constant 0 : i32
    return %1, %c0_i32, %c0_i32_0 : i32, i32, i32
  }
}

module attributes {stable_mosaic.version = 11 : i64} {
  func.func @_residual_kernel(%arg0: i32, %arg1: i32, %arg2: memref<1x10x18x32xbf16, #tpu.memory_space<vmem>>, %arg3: memref<288x16xbf16, #tpu.memory_space<vmem>>, %arg4: memref<16x32xbf16, #tpu.memory_space<vmem>>, %arg5: memref<1x128x32xbf16, #tpu.memory_space<vmem>>) attributes {dimension_semantics = [#tpu.dimension_semantics<parallel>, #tpu.dimension_semantics<parallel>], iteration_bounds = array<i64: 2, 2>, scalar_prefetch = 0 : i64, scratch_operands = 0 : i64, tpu.core_type = #tpu.core_type<tc>, window_params = [{transform_indices = @transform_0, window_bounds = array<i64: 1, 10, 18, 32>}, {pipeline_mode = #tpu.pipeline_mode<synchronous>, transform_indices = @transform_1, window_bounds = array<i64: 288, 16>}, {pipeline_mode = #tpu.pipeline_mode<synchronous>, transform_indices = @transform_2, window_bounds = array<i64: 16, 32>}, {transform_indices = @transform_3, window_bounds = array<i64: 1, 128, 32>}]} {
    %c0 = arith.constant 0 : index
    %c0_0 = arith.constant 0 : index
    %c0_1 = arith.constant 0 : index
    %c0_2 = arith.constant 0 : index
    %0 = vector.load %arg2[%c0, %c0_0, %c0_1, %c0_2] : memref<1x10x18x32xbf16, #tpu.memory_space<vmem>>, vector<1x10x18x32xbf16>
    %1 = vector.shape_cast %0 : vector<1x10x18x32xbf16> to vector<10x18x32xbf16>
    %2 = arith.extf %1 : vector<10x18x32xbf16> to vector<10x18x32xf32>
    %cst = arith.constant 0.000000e+00 : f32
    %3 = vector.broadcast %cst : f32 to vector<10x18x32xf32>
    %4 = arith.maximumf %2, %3 : vector<10x18x32xf32>
    %5 = vector.extract_strided_slice %4 {offsets = [0, 0, 0], sizes = [8, 16, 32], strides = [1, 1, 1]} : vector<10x18x32xf32> to vector<8x16x32xf32>
    %6 = vector.extract_strided_slice %4 {offsets = [0, 1, 0], sizes = [8, 16, 32], strides = [1, 1, 1]} : vector<10x18x32xf32> to vector<8x16x32xf32>
    %7 = vector.extract_strided_slice %4 {offsets = [0, 2, 0], sizes = [8, 16, 32], strides = [1, 1, 1]} : vector<10x18x32xf32> to vector<8x16x32xf32>
    %8 = vector.extract_strided_slice %4 {offsets = [1, 0, 0], sizes = [8, 16, 32], strides = [1, 1, 1]} : vector<10x18x32xf32> to vector<8x16x32xf32>
    %9 = vector.extract_strided_slice %4 {offsets = [1, 1, 0], sizes = [8, 16, 32], strides = [1, 1, 1]} : vector<10x18x32xf32> to vector<8x16x32xf32>
    %10 = vector.extract_strided_slice %4 {offsets = [1, 2, 0], sizes = [8, 16, 32], strides = [1, 1, 1]} : vector<10x18x32xf32> to vector<8x16x32xf32>
    %11 = vector.extract_strided_slice %4 {offsets = [2, 0, 0], sizes = [8, 16, 32], strides = [1, 1, 1]} : vector<10x18x32xf32> to vector<8x16x32xf32>
    %12 = vector.extract_strided_slice %4 {offsets = [2, 1, 0], sizes = [8, 16, 32], strides = [1, 1, 1]} : vector<10x18x32xf32> to vector<8x16x32xf32>
    %13 = vector.extract_strided_slice %4 {offsets = [2, 2, 0], sizes = [8, 16, 32], strides = [1, 1, 1]} : vector<10x18x32xf32> to vector<8x16x32xf32>
    %14 = tpu.concatenate %5, %6, %7, %8, %9, %10, %11, %12, %13 in 2 : vector<8x16x32xf32>, vector<8x16x32xf32>, vector<8x16x32xf32>, vector<8x16x32xf32>, vector<8x16x32xf32>, vector<8x16x32xf32>, vector<8x16x32xf32>, vector<8x16x32xf32>, vector<8x16x32xf32> -> vector<8x16x288xf32>
    %15 = vector.shape_cast %14 : vector<8x16x288xf32> to vector<128x288xf32>
    %16 = arith.truncf %15 : vector<128x288xf32> to vector<128x288xbf16>
    %c0_3 = arith.constant 0 : index
    %c0_4 = arith.constant 0 : index
    %17 = vector.load %arg3[%c0_3, %c0_4] : memref<288x16xbf16, #tpu.memory_space<vmem>>, vector<288x16xbf16>
    %cst_5 = arith.constant dense<0.000000e+00> : vector<128x16xf32>
    %18 = tpu.matmul %16, %17, %cst_5 {dimension_numbers = #tpu.dot_dimension_numbers<[1], [0], [0], [1], [0, 0, 1, 1], [], []>} : vector<128x288xbf16>, vector<288x16xbf16>, vector<128x16xf32> -> vector<128x16xf32>
    %cst_6 = arith.constant 0.000000e+00 : f32
    %19 = vector.broadcast %cst_6 : f32 to vector<128x16xf32>
    %20 = arith.maximumf %18, %19 : vector<128x16xf32>
    %21 = arith.truncf %20 : vector<128x16xf32> to vector<128x16xbf16>
    %c0_7 = arith.constant 0 : index
    %c0_8 = arith.constant 0 : index
    %22 = vector.load %arg4[%c0_7, %c0_8] : memref<16x32xbf16, #tpu.memory_space<vmem>>, vector<16x32xbf16>
    %cst_9 = arith.constant dense<0.000000e+00> : vector<128x32xf32>
    %23 = tpu.matmul %21, %22, %cst_9 {dimension_numbers = #tpu.dot_dimension_numbers<[1], [0], [0], [1], [0, 0, 1, 1], [], []>} : vector<128x16xbf16>, vector<16x32xbf16>, vector<128x32xf32> -> vector<128x32xf32>
    %24 = vector.extract_strided_slice %2 {offsets = [1, 1, 0], sizes = [8, 16, 32], strides = [1, 1, 1]} : vector<10x18x32xf32> to vector<8x16x32xf32>
    %25 = vector.shape_cast %24 : vector<8x16x32xf32> to vector<128x32xf32>
    %26 = arith.addf %25, %23 : vector<128x32xf32>
    %27 = arith.truncf %26 : vector<128x32xf32> to vector<128x32xbf16>
    %c0_10 = arith.constant 0 : index
    %c0_11 = arith.constant 0 : index
    %c0_12 = arith.constant 0 : index
    %28 = vector.load %arg5[%c0_10, %c0_11, %c0_12] : memref<1x128x32xbf16, #tpu.memory_space<vmem>>, vector<1x128x32xbf16>
    %29 = vector.shape_cast %28 : vector<1x128x32xbf16> to vector<128x32xbf16>
    %30 = vector.shape_cast %27 : vector<128x32xbf16> to vector<1x128x32xbf16>
    tpu.vector_store %arg5[%c0_10, %c0_11, %c0_12], %30 {strides = array<i32>} : memref<1x128x32xbf16, #tpu.memory_space<vmem>>, vector<1x128x32xbf16>,
    return
  }
  func.func @transform_0(%arg0: i32, %arg1: i32) -> (i32, i32, i32, i32) {
    %c2_i32 = arith.constant 2 : i32
    %0 = arith.muli %arg0, %c2_i32 : i32
    %1 = arith.addi %0, %arg1 : i32
    %c0_i32 = arith.constant 0 : i32
    %c0_i32_0 = arith.constant 0 : i32
    %c0_i32_1 = arith.constant 0 : i32
    %c0_i32_2 = arith.constant 0 : i32
    return %1, %c0_i32, %c0_i32_0, %c0_i32_1 : i32, i32, i32, i32
  }
  func.func @transform_1(%arg0: i32, %arg1: i32) -> (i32, i32) {
    %c0_i32 = arith.constant 0 : i32
    %c0_i32_0 = arith.constant 0 : i32
    %c0_i32_1 = arith.constant 0 : i32
    return %c0_i32, %c0_i32_0 : i32, i32
  }
  func.func @transform_2(%arg0: i32, %arg1: i32) -> (i32, i32) {
    %c0_i32 = arith.constant 0 : i32
    %c0_i32_0 = arith.constant 0 : i32
    %c0_i32_1 = arith.constant 0 : i32
    return %c0_i32, %c0_i32_0 : i32, i32
  }
  func.func @transform_3(%arg0: i32, %arg1: i32) -> (i32, i32, i32) {
    %c2_i32 = arith.constant 2 : i32
    %0 = arith.muli %arg0, %c2_i32 : i32
    %1 = arith.addi %0, %arg1 : i32
    %c0_i32 = arith.constant 0 : i32
    %c0_i32_0 = arith.constant 0 : i32
    %c0_i32_1 = arith.constant 0 : i32
    return %1, %c0_i32, %c0_i32_0 : i32, i32, i32
  }
}

module attributes {stable_mosaic.version = 11 : i64} {
  func.func @_conv3x3_kernel(%arg0: i32, %arg1: i32, %arg2: memref<1x18x34x16xbf16, #tpu.memory_space<vmem>>, %arg3: memref<144x12xbf16, #tpu.memory_space<vmem>>, %arg4: memref<1x12xf32, #tpu.memory_space<vmem>>, %arg5: memref<1x512x12xf32, #tpu.memory_space<vmem>>) attributes {dimension_semantics = [#tpu.dimension_semantics<parallel>, #tpu.dimension_semantics<parallel>], iteration_bounds = array<i64: 2, 2>, scalar_prefetch = 0 : i64, scratch_operands = 0 : i64, tpu.core_type = #tpu.core_type<tc>, window_params = [{transform_indices = @transform_0, window_bounds = array<i64: 1, 18, 34, 16>}, {pipeline_mode = #tpu.pipeline_mode<synchronous>, transform_indices = @transform_1, window_bounds = array<i64: 144, 12>}, {pipeline_mode = #tpu.pipeline_mode<synchronous>, transform_indices = @transform_2, window_bounds = array<i64: 1, 12>}, {transform_indices = @transform_3, window_bounds = array<i64: 1, 512, 12>}]} {
    %c0 = arith.constant 0 : index
    %c0_0 = arith.constant 0 : index
    %c0_1 = arith.constant 0 : index
    %c0_2 = arith.constant 0 : index
    %0 = vector.load %arg2[%c0, %c0_0, %c0_1, %c0_2] : memref<1x18x34x16xbf16, #tpu.memory_space<vmem>>, vector<1x18x34x16xbf16>
    %1 = vector.shape_cast %0 : vector<1x18x34x16xbf16> to vector<18x34x16xbf16>
    %2 = arith.extf %1 : vector<18x34x16xbf16> to vector<18x34x16xf32>
    %cst = arith.constant 0.000000e+00 : f32
    %3 = vector.broadcast %cst : f32 to vector<18x34x16xf32>
    %4 = arith.maximumf %2, %3 : vector<18x34x16xf32>
    %5 = vector.extract_strided_slice %4 {offsets = [0, 0, 0], sizes = [16, 32, 16], strides = [1, 1, 1]} : vector<18x34x16xf32> to vector<16x32x16xf32>
    %6 = vector.extract_strided_slice %4 {offsets = [0, 1, 0], sizes = [16, 32, 16], strides = [1, 1, 1]} : vector<18x34x16xf32> to vector<16x32x16xf32>
    %7 = vector.extract_strided_slice %4 {offsets = [0, 2, 0], sizes = [16, 32, 16], strides = [1, 1, 1]} : vector<18x34x16xf32> to vector<16x32x16xf32>
    %8 = vector.extract_strided_slice %4 {offsets = [1, 0, 0], sizes = [16, 32, 16], strides = [1, 1, 1]} : vector<18x34x16xf32> to vector<16x32x16xf32>
    %9 = vector.extract_strided_slice %4 {offsets = [1, 1, 0], sizes = [16, 32, 16], strides = [1, 1, 1]} : vector<18x34x16xf32> to vector<16x32x16xf32>
    %10 = vector.extract_strided_slice %4 {offsets = [1, 2, 0], sizes = [16, 32, 16], strides = [1, 1, 1]} : vector<18x34x16xf32> to vector<16x32x16xf32>
    %11 = vector.extract_strided_slice %4 {offsets = [2, 0, 0], sizes = [16, 32, 16], strides = [1, 1, 1]} : vector<18x34x16xf32> to vector<16x32x16xf32>
    %12 = vector.extract_strided_slice %4 {offsets = [2, 1, 0], sizes = [16, 32, 16], strides = [1, 1, 1]} : vector<18x34x16xf32> to vector<16x32x16xf32>
    %13 = vector.extract_strided_slice %4 {offsets = [2, 2, 0], sizes = [16, 32, 16], strides = [1, 1, 1]} : vector<18x34x16xf32> to vector<16x32x16xf32>
    %14 = tpu.concatenate %5, %6, %7, %8, %9, %10, %11, %12, %13 in 2 : vector<16x32x16xf32>, vector<16x32x16xf32>, vector<16x32x16xf32>, vector<16x32x16xf32>, vector<16x32x16xf32>, vector<16x32x16xf32>, vector<16x32x16xf32>, vector<16x32x16xf32>, vector<16x32x16xf32> -> vector<16x32x144xf32>
    %15 = vector.shape_cast %14 : vector<16x32x144xf32> to vector<512x144xf32>
    %16 = arith.truncf %15 : vector<512x144xf32> to vector<512x144xbf16>
    %c0_3 = arith.constant 0 : index
    %c0_4 = arith.constant 0 : index
    %17 = vector.load %arg3[%c0_3, %c0_4] : memref<144x12xbf16, #tpu.memory_space<vmem>>, vector<144x12xbf16>
    %cst_5 = arith.constant dense<0.000000e+00> : vector<512x12xf32>
    %18 = tpu.matmul %16, %17, %cst_5 {dimension_numbers = #tpu.dot_dimension_numbers<[1], [0], [0], [1], [0, 0, 1, 1], [], []>} : vector<512x144xbf16>, vector<144x12xbf16>, vector<512x12xf32> -> vector<512x12xf32>
    %c0_6 = arith.constant 0 : index
    %c0_7 = arith.constant 0 : index
    %19 = vector.load %arg4[%c0_6, %c0_7] : memref<1x12xf32, #tpu.memory_space<vmem>>, vector<1x12xf32>
    %20 = vector.broadcast %19 : vector<1x12xf32> to vector<512x12xf32>
    %21 = arith.addf %18, %20 : vector<512x12xf32>
    %c0_8 = arith.constant 0 : index
    %c0_9 = arith.constant 0 : index
    %c0_10 = arith.constant 0 : index
    %22 = vector.load %arg5[%c0_8, %c0_9, %c0_10] : memref<1x512x12xf32, #tpu.memory_space<vmem>>, vector<1x512x12xf32>
    %23 = vector.shape_cast %22 : vector<1x512x12xf32> to vector<512x12xf32>
    %24 = vector.shape_cast %21 : vector<512x12xf32> to vector<1x512x12xf32>
    tpu.vector_store %arg5[%c0_8, %c0_9, %c0_10], %24 {strides = array<i32>} : memref<1x512x12xf32, #tpu.memory_space<vmem>>, vector<1x512x12xf32>,
    return
  }
  func.func @transform_0(%arg0: i32, %arg1: i32) -> (i32, i32, i32, i32) {
    %c2_i32 = arith.constant 2 : i32
    %0 = arith.muli %arg0, %c2_i32 : i32
    %1 = arith.addi %0, %arg1 : i32
    %c0_i32 = arith.constant 0 : i32
    %c0_i32_0 = arith.constant 0 : i32
    %c0_i32_1 = arith.constant 0 : i32
    %c0_i32_2 = arith.constant 0 : i32
    return %1, %c0_i32, %c0_i32_0, %c0_i32_1 : i32, i32, i32, i32
  }
  func.func @transform_1(%arg0: i32, %arg1: i32) -> (i32, i32) {
    %c0_i32 = arith.constant 0 : i32
    %c0_i32_0 = arith.constant 0 : i32
    %c0_i32_1 = arith.constant 0 : i32
    return %c0_i32, %c0_i32_0 : i32, i32
  }
  func.func @transform_2(%arg0: i32, %arg1: i32) -> (i32, i32) {
    %c0_i32 = arith.constant 0 : i32
    %c0_i32_0 = arith.constant 0 : i32
    %c0_i32_1 = arith.constant 0 : i32
    return %c0_i32, %c0_i32_0 : i32, i32
  }
  func.func @transform_3(%arg0: i32, %arg1: i32) -> (i32, i32, i32) {
    %c2_i32 = arith.constant 2 : i32
    %0 = arith.muli %arg0, %c2_i32 : i32
    %1 = arith.addi %0, %arg1 : i32
    %c0_i32 = arith.constant 0 : i32
    %c0_i32_0 = arith.constant 0 : i32
    %c0_i32_1 = arith.constant 0 : i32
    return %1, %c0_i32, %c0_i32_0 : i32, i32, i32
  }
}

</mosaic_0001>

<llo_original>
// kernel: _lambda_.5
$region0: #{_lambda_.5}
  #allocation0 [shape = 'u32[]', space=smem, size = 0x4, offset = 0x4, fixed_abs, tag = 'smem constant byte address 0x4 - core index']
  #allocation1 [shape = 'u32[144,128]{1,0:T(1,128)}', space=vmem, size = 0x12000, scoped, tag = 'internal scratch']
  %s0 = inlined_call_operand.vmem [shape: bf16[4,10,18,4], index: 0, kind: input, shape index: {}]
  %s1 = inlined_call_operand.hbm [shape: bf16[36,32], index: 1, kind: input, shape index: {}]
  %s2 = inlined_call_operand.hbm [shape: f32[1,32], index: 2, kind: input, shape index: {}]
  %s3 = inlined_call_operand.vmem [shape: bf16[4,128,32], index: 3, kind: output, shape index: {}]
  %s4 = sld [smem:[#allocation0]]
  $region53: #{_lambda_.5} parent=0
    _
  %s6 = ssub.s32 1, %s4
  %s7 = scalar_select 0, %s6, %s4
  $region1: #{_lambda_.5} parent=0
    #allocation2 [shape = 'u8[10240]{0}', space=vmem, size = 0x2800, scoped, tag = 'input window, operand 1, single buffered']
    #allocation3 [shape = 's32[2]{0}', space=sflag, size = 0x8, scoped, tag = 'scoped memory for _lambda_.5']
    #allocation4 [shape = 'u8[512]{0}', space=vmem, size = 0x400, scoped, tag = 'input window, operand 2, single buffered']
    #allocation5 [shape = 's32[1]{0}', space=sflag, size = 0x4, scoped, tag = 'scoped memory for _lambda_.5']
    %8 = vsyncpa [#allocation3], 0
    %9 = vsyncpa [#allocation5], 0
    loop: start=0, step=1, limit=6
    $region2: #{_lambda_.5} parent=1 // loop_pre_header
      _
    $region3: #{_lambda_.5} parent=1 // loop_header
      %s11 = sphi 0, %s15
      %p12 = scmp.ge.s32.totalorder %s11, 6
      %s18 = sphi 0, %s30
      %s19 = sphi 0, %s26
      %s20 = sphi 0, %s18
      %s21 = sphi 0, %s19
      %s22 = sphi 0, %s20
      %s23 = sphi 0, %s21
      %s37 = sphi 0, %s39
      %s40 = sphi 0, %s37
      %s41 = sphi 0, %s40
      %s57 = sphi 0, %s41
      %s61 = sphi 0, %s61
      %s63 = sphi 0, %s61
      %s64 = sphi 0, %s63
      %s78 = sphi 0, %s64
      %s82 = sphi 0, %s82
      %s84 = sphi 0, %s82
      %s85 = sphi 0, %s84
      %s99 = sphi 0, %s85
      %s109 = sphi 0, %s111
      %s112 = sphi 0, %s109
      %s113 = sphi 0, %s112
      %s129 = sphi 0, %s113
    $region4: #{_lambda_.5} parent=1 // loop_header_branch
      %14 = sbr.rel (%p12) target = $region8
    $region5: #{_lambda_.5} parent=1 // loop_body
      %s16 = ssub.s32 %s11, 1
      %s17 = ssub.s32 %s11, 2
      %s24 = sadd.s32 1, %s19
      %p25 = scmp.ge.s32.totalorder %s24, 2
      %s26 = scalar_select %p25, 0, %s24
      %s27 = sadd.s32 1, %s18
      %s28 = scalar_select %p25, %s27, %s18
      %p29 = scmp.ge.s32.totalorder %s28, 2
      %s30 = scalar_select %p29, 0, %s28
      %s31 = smul.u32 %s18, 2
      %s32 = sadd.s32 %s31, %s19
      %s33 = smul.u32 %s30, 2
      %s34 = sadd.s32 %s33, %s26
      %s35 = ssub.s32 %s32, %s34
      %p36 = scmp.eq.s32.totalorder %s35, 0
      %s38 = sadd.s32 %s37, 1
      %s39 = scalar_select %p36, %s37, %s38
      %p42 = pneg %p36
      %p43 = scmp.eq.s32.totalorder %s11, 3
      %p44 = por %p42, %p43
      %p45 = scmp.ne.s32.totalorder %s37, %s40
      %p46 = scmp.eq.s32.totalorder %s11, 0
      %p47 = por %p45, %p46
      %p48 = scmp.ne.s32.totalorder %s37, %s40
      %p49 = scmp.eq.s32.totalorder %s16, 3
      %p50 = por %p48, %p49
      %p51 = scmp.ne.s32.totalorder %s40, %s41
      %p52 = scmp.eq.s32.totalorder %s16, 0
      %p53 = por %p51, %p52
      %p54 = scmp.ne.s32.totalorder %s40, %s41
      %p55 = scmp.eq.s32.totalorder %s17, 3
      %p56 = por %p54, %p55
      %p58 = scmp.ne.s32.totalorder %s41, %s57
      %p59 = scmp.eq.s32.totalorder %s17, 0
      %p60 = por %p58, %p59
      %s62 = sadd.s32 %s61, 1
      %p65 = scmp.eq.s32.totalorder %s11, 3
      %p66 = scmp.ne.s32.totalorder %s61, %s63
      %p67 = scmp.eq.s32.totalorder %s11, 0
      %p68 = por %p66, %p67
      %p69 = scmp.ne.s32.totalorder %s61, %s63
      %p70 = scmp.eq.s32.totalorder %s16, 3
      %p71 = por %p69, %p70
      %p72 = scmp.ne.s32.totalorder %s63, %s64
      %p73 = scmp.eq.s32.totalorder %s16, 0
      %p74 = por %p72, %p73
      %p75 = scmp.ne.s32.totalorder %s63, %s64
      %p76 = scmp.eq.s32.totalorder %s17, 3
      %p77 = por %p75, %p76
      %p79 = scmp.ne.s32.totalorder %s64, %s78
      %p80 = scmp.eq.s32.totalorder %s17, 0
      %p81 = por %p79, %p80
      %s83 = sadd.s32 %s82, 1
      %p86 = scmp.eq.s32.totalorder %s11, 3
      %p87 = scmp.ne.s32.totalorder %s82, %s84
      %p88 = scmp.eq.s32.totalorder %s11, 0
      %p89 = por %p87, %p88
      %p90 = scmp.ne.s32.totalorder %s82, %s84
      %p91 = scmp.eq.s32.totalorder %s16, 3
      %p92 = por %p90, %p91
      %p93 = scmp.ne.s32.totalorder %s84, %s85
      %p94 = scmp.eq.s32.totalorder %s16, 0
      %p95 = por %p93, %p94
      %p96 = scmp.ne.s32.totalorder %s84, %s85
      %p97 = scmp.eq.s32.totalorder %s17, 3
      %p98 = por %p96, %p97
      %p100 = scmp.ne.s32.totalorder %s85, %s99
      %p101 = scmp.eq.s32.totalorder %s17, 0
      %p102 = por %p100, %p101
      %s103 = smul.u32 %s18, 2
      %s104 = sadd.s32 %s103, %s19
      %s105 = smul.u32 %s30, 2
      %s106 = sadd.s32 %s105, %s26
      %s107 = ssub.s32 %s104, %s106
      %p108 = scmp.eq.s32.totalorder %s107, 0
      %s110 = sadd.s32 %s109, 1
      %s111 = scalar_select %p108, %s109, %s110
      %p114 = pneg %p108
      %p115 = scmp.eq.s32.totalorder %s11, 3
      %p116 = por %p114, %p115
      %p117 = scmp.ne.s32.totalorder %s109, %s112
      %p118 = scmp.eq.s32.totalorder %s11, 0
      %p119 = por %p117, %p118
      %p120 = scmp.ne.s32.totalorder %s109, %s112
      %p121 = scmp.eq.s32.totalorder %s16, 3
      %p122 = por %p120, %p121
      %p123 = scmp.ne.s32.totalorder %s112, %s113
      %p124 = scmp.eq.s32.totalorder %s16, 0
      %p125 = por %p123, %p124
      %p126 = scmp.ne.s32.totalorder %s112, %s113
      %p127 = scmp.eq.s32.totalorder %s17, 3
      %p128 = por %p126, %p127
      %p130 = scmp.ne.s32.totalorder %s113, %s129
      %p131 = scmp.eq.s32.totalorder %s17, 0
      %p132 = por %p130, %p131
      %p133 = scmp.le.s32.totalorder 1, %s11
      %p134 = scmp.lt.s32.totalorder %s11, 5
      %p135 = pnand %p133, %p134
      %p136 = pneg %p135
      // Predicated region
      $region9: #{_lambda_.5} parent=5 // pred_check
        _
      $region10: #{_lambda_.5} parent=5 // pred_check_branch
        %138 = sbr.rel (%p135) target = $region12
      $region11: #{_lambda_.5} parent=5 // pred_region
        %s139 = ssub.s32 %s11, 1
        // Predicated region
        $region13: #{_lambda_.5} parent=11 // pred_check
          %p140 = pneg %p74
        $region14: #{_lambda_.5} parent=11 // pred_check_branch
          %142 = sbr.rel (%p140) target = $region16
        $region15: #{_lambda_.5} parent=11 // pred_region
          %s144 = ssub.s32 320, 320
          %145 = vsyncadd [#allocation3], %s144
          %s146 = sshll.u32 [#allocation2], 4
          %s147 = int_to_ptr.vmem [resolvable:$true] %s146
          %152 = dma.hbm_to_vmem [thread:$0]  %s1, 320, %s147, [#allocation3], 64, 64, 4
        $region16: #{_lambda_.5} parent=11 // pred_fallthru
          _
        // Predicated region
        $region17: #{_lambda_.5} parent=11 // pred_check
          %p153 = pneg %p95
        $region18: #{_lambda_.5} parent=11 // pred_check_branch
          %155 = sbr.rel (%p153) target = $region20
        $region19: #{_lambda_.5} parent=11 // pred_region
          %s157 = ssub.s32 16, 16
          %158 = vsyncadd [#allocation5], %s157
          %s160 = sshll.u32 [#allocation4], 4
          %s161 = int_to_ptr.vmem [resolvable:$true] %s160
          %163 = dma.hbm_to_vmem [thread:$0]  %s2, 16, %s161, [#allocation5]
        $region20: #{_lambda_.5} parent=11 // pred_fallthru
          _
      $region12: #{_lambda_.5} parent=5 // pred_fallthru
        _
      %p164 = scmp.lt.s32.totalorder %s11, 4
      // Predicated region
      $region21: #{_lambda_.5} parent=5 // pred_check
        %p165 = pneg %p164
      $region22: #{_lambda_.5} parent=5 // pred_check_branch
        %167 = sbr.rel (%p165) target = $region24
      $region23: #{_lambda_.5} parent=5 // pred_region
        // Predicated region
        $region25: #{_lambda_.5} parent=23 // pred_check
          %p168 = pneg %p47
        $region26: #{_lambda_.5} parent=23 // pred_check_branch
          %170 = sbr.rel (%p168) target = $region28
        $region27: #{_lambda_.5} parent=23 // pred_region
          %s171 = smul.u32 %s18, 2
          %s172 = sadd.s32 %s171, %s19
          %p173 = scmp.lt.s32.totalorder %s172, 3
          %s174 = scalar_select %p173, %s172, 3
          %s175 = smul.addr %s174, 30
          %s176 = smul.addr %s175, 4
          %s177 = scalar_lea.vmem %s0, %s176
          %s178 = smul.u32 %s18, 2
          %s179 = sadd.s32 %s178, %s19
        $region28: #{_lambda_.5} parent=23 // pred_fallthru
          _
      $region24: #{_lambda_.5} parent=5 // pred_fallthru
        _
      %p180 = scmp.le.s32.totalorder 1, %s11
      %p181 = scmp.lt.s32.totalorder %s11, 5
      %p182 = pnand %p180, %p181
      %p183 = pneg %p182
      // Predicated region
      $region29: #{_lambda_.5} parent=5 // pred_check
        _
      $region30: #{_lambda_.5} parent=5 // pred_check_branch
        %185 = sbr.rel (%p182) target = $region32
      $region31: #{_lambda_.5} parent=5 // pred_region
        %s186 = ssub.s32 %s11, 1
        // Predicated region
        $region33: #{_lambda_.5} parent=31 // pred_check
          %p187 = pneg %p74
        $region34: #{_lambda_.5} parent=31 // pred_check_branch
          %189 = sbr.rel (%p187) target = $region36
        $region35: #{_lambda_.5} parent=31 // pred_region
          %190 = dma.done [#allocation3], 320
        $region36: #{_lambda_.5} parent=31 // pred_fallthru
          _
        // Predicated region
        $region37: #{_lambda_.5} parent=31 // pred_check
          %p191 = pneg %p95
        $region38: #{_lambda_.5} parent=31 // pred_check_branch
          %193 = sbr.rel (%p191) target = $region40
        $region39: #{_lambda_.5} parent=31 // pred_region
          %194 = dma.done [#allocation5], 16
        $region40: #{_lambda_.5} parent=31 // pred_fallthru
          _
        %s195 = smul.u32 %s20, 2
        %s196 = sadd.s32 %s195, %s21
        %p197 = scmp.lt.s32.totalorder %s196, 3
        %s198 = scalar_select %p197, %s196, 3
        %s199 = smul.addr %s198, 30
        %s200 = smul.addr %s199, 4
        %s201 = scalar_lea.vmem %s0, %s200
        %p202 = pneg %p53
        %p203 = pneg %p50
        %p204 = pneg %p74
        %p205 = pneg %p71
        %p206 = pneg %p95
        %p207 = pneg %p92
        %p208 = pneg %p125
        %p209 = pneg %p122
        %s210 = smul.u32 %s20, 2
        %s211 = sadd.s32 %s210, %s21
        %p212 = scmp.lt.s32.totalorder %s211, 3
        %s213 = scalar_select %p212, %s211, 3
        %s214 = smul.addr %s213, 16
        %s215 = smul.addr %s214, 4
        %s216 = scalar_lea.vmem %s3, %s215
        %s217 = smul.u32 %s20, 2
        %s218 = sadd.s32 %s217, %s21
        %p219 = scmp.lt.s32.totalorder %s218, 3
        %s220 = scalar_select %p219, %s218, 3
        %s221 = smul.addr %s220, 30
        %s222 = smul.addr %s221, 4
        %s223 = scalar_lea.vmem %s0, %s222
        %s224 = smul.u32 %s20, 2
        %s225 = sadd.s32 %s224, %s21
        %s226 = smul.u32 %s20, 2
        %s227 = sadd.s32 %s226, %s21
        %p228 = scmp.lt.s32.totalorder %s227, 3
        %s229 = scalar_select %p228, %s227, 3
        %s230 = smul.addr %s229, 16
        %s231 = smul.addr %s230, 4
        %s232 = scalar_lea.vmem %s3, %s231
        %s233 = smul.u32 %s20, 2
        %s234 = sadd.s32 %s233, %s21
        %v236 = vld [vmem:[%s223] sm:$0xf]
        %v237 = vld [vmem:[%s223 + $0x4] sm:$0xf]
        %v238 = vld [vmem:[%s223 + $0x8] sm:$0x1]
        %v239 = vld [vmem:[%s223 + $0xc] sm:$0xf]
        %v240 = vld [vmem:[%s223 + $0x10] sm:$0xf]
        %v241 = vld [vmem:[%s223 + $0x14] sm:$0x1]
        %v242 = vld [vmem:[%s223 + $0x18] sm:$0xf]
        %v243 = vld [vmem:[%s223 + $0x1c] sm:$0xf]
        %v244 = vld [vmem:[%s223 + $0x20] sm:$0x1]
        %v245 = vld [vmem:[%s223 + $0x24] sm:$0xf]
        %v246 = vld [vmem:[%s223 + $0x28] sm:$0xf]
        %v247 = vld [vmem:[%s223 + $0x2c] sm:$0x1]
        %v248 = vld [vmem:[%s223 + $0x30] sm:$0xf]
        %v249 = vld [vmem:[%s223 + $0x34] sm:$0xf]
        %v250 = vld [vmem:[%s223 + $0x38] sm:$0x1]
        %v251 = vld [vmem:[%s223 + $0x3c] sm:$0xf]
        %v252 = vld [vmem:[%s223 + $0x40] sm:$0xf]
        %v253 = vld [vmem:[%s223 + $0x44] sm:$0x1]
        %v254 = vld [vmem:[%s223 + $0x48] sm:$0xf]
        %v255 = vld [vmem:[%s223 + $0x4c] sm:$0xf]
        %v256 = vld [vmem:[%s223 + $0x50] sm:$0x1]
        %v257 = vld [vmem:[%s223 + $0x54] sm:$0xf]
        %v258 = vld [vmem:[%s223 + $0x58] sm:$0xf]
        %v259 = vld [vmem:[%s223 + $0x5c] sm:$0x1]
        %v260 = vld [vmem:[%s223 + $0x60] sm:$0xf]
        %v261 = vld [vmem:[%s223 + $0x64] sm:$0xf]
        %v262 = vld [vmem:[%s223 + $0x68] sm:$0x1]
        %v263 = vld [vmem:[%s223 + $0x6c] sm:$0xf]
        %v264 = vld [vmem:[%s223 + $0x70] sm:$0xf]
        %v265 = vld [vmem:[%s223 + $0x74] sm:$0x1]
        %v266 = vunpack.c.l.bf16 %v236
        %v267 = vunpack.c.l.bf16 %v237
        %v268 = vunpack.c.l.bf16 %v238
        %v269 = vunpack.c.l.bf16 %v239
        %v270 = vunpack.c.l.bf16 %v240
        %v271 = vunpack.c.l.bf16 %v241
        %v272 = vunpack.c.l.bf16 %v242
        %v273 = vunpack.c.l.bf16 %v243
        %v274 = vunpack.c.l.bf16 %v244
        %v275 = vunpack.c.l.bf16 %v245
        %v276 = vunpack.c.l.bf16 %v246
        %v277 = vunpack.c.l.bf16 %v247
        %v278 = vunpack.c.l.bf16 %v248
        %v279 = vunpack.c.l.bf16 %v249
        %v280 = vunpack.c.l.bf16 %v250
        %v281 = vunpack.c.l.bf16 %v251
        %v282 = vunpack.c.l.bf16 %v252
        %v283 = vunpack.c.l.bf16 %v253
        %v284 = vunpack.c.l.bf16 %v254
        %v285 = vunpack.c.l.bf16 %v255
        %v286 = vunpack.c.l.bf16 %v256
        %v287 = vunpack.c.l.bf16 %v257
        %v288 = vunpack.c.l.bf16 %v258
        %v289 = vunpack.c.l.bf16 %v259
        %v290 = vunpack.c.l.bf16 %v260
        %v291 = vunpack.c.l.bf16 %v261
        %v292 = vunpack.c.l.bf16 %v262
        %v293 = vunpack.c.l.bf16 %v263
        %v294 = vunpack.c.l.bf16 %v264
        %v295 = vunpack.c.l.bf16 %v265
        %vm320 = vcmask 1046528
        %v321 = vrot.slane %v266, 1
        %v322 = vrot.slane %v267, 1
        %v323 = vsel %vm320, %v321, %v322
        %v324 = vrot.slane %v268, 1
        %v325 = vsel %vm320, %v322, %v324
        %v326 = vrot.slane %v269, 1
        %v327 = vrot.slane %v270, 1
        %v328 = vsel %vm320, %v326, %v327
        %v329 = vrot.slane %v271, 1
        %v330 = vsel %vm320, %v327, %v329
        %v331 = vrot.slane %v272, 1
        %v332 = vrot.slane %v273, 1
        %v333 = vsel %vm320, %v331, %v332
        %v334 = vrot.slane %v274, 1
        %v335 = vsel %vm320, %v332, %v334
        %v336 = vrot.slane %v275, 1
        %v337 = vrot.slane %v276, 1
        %v338 = vsel %vm320, %v336, %v337
        %v339 = vrot.slane %v277, 1
        %v340 = vsel %vm320, %v337, %v339
        %v341 = vrot.slane %v278, 1
        %v342 = vrot.slane %v279, 1
        %v343 = vsel %vm320, %v341, %v342
        %v344 = vrot.slane %v280, 1
        %v345 = vsel %vm320, %v342, %v344
        %v346 = vrot.slane %v281, 1
        %v347 = vrot.slane %v282, 1
        %v348 = vsel %vm320, %v346, %v347
        %v349 = vrot.slane %v283, 1
        %v350 = vsel %vm320, %v347, %v349
        %v351 = vrot.slane %v284, 1
        %v352 = vrot.slane %v285, 1
        %v353 = vsel %vm320, %v351, %v352
        %v354 = vrot.slane %v286, 1
        %v355 = vsel %vm320, %v352, %v354
        %v356 = vrot.slane %v287, 1
        %v357 = vrot.slane %v288, 1
        %v358 = vsel %vm320, %v356, %v357
        %v359 = vrot.slane %v289, 1
        %v360 = vsel %vm320, %v357, %v359
        %361 = vrot.lane.b32.xlu0 %v323, 4
        %v362 = vpop.permute.xlu0 %361
        %363 = vrot.lane.b32.xlu0 %v325, 4
        %v364 = vpop.permute.xlu0 %363
        %365 = vrot.lane.b32.xlu0 %v328, 4
        %v366 = vpop.permute.xlu0 %365
        %367 = vrot.lane.b32.xlu0 %v330, 4
        %v368 = vpop.permute.xlu0 %367
        %369 = vrot.lane.b32.xlu0 %v333, 4
        %v370 = vpop.permute.xlu0 %369
        %371 = vrot.lane.b32.xlu0 %v335, 4
        %v372 = vpop.permute.xlu0 %371
        %373 = vrot.lane.b32.xlu0 %v338, 4
        %v374 = vpop.permute.xlu0 %373
        %375 = vrot.lane.b32.xlu0 %v340, 4
        %v376 = vpop.permute.xlu0 %375
        %377 = vrot.lane.b32.xlu0 %v343, 4
        %v378 = vpop.permute.xlu0 %377
        %379 = vrot.lane.b32.xlu0 %v345, 4
        %v380 = vpop.permute.xlu0 %379
        %381 = vrot.lane.b32.xlu0 %v348, 4
        %v382 = vpop.permute.xlu0 %381
        %383 = vrot.lane.b32.xlu0 %v350, 4
        %v384 = vpop.permute.xlu0 %383
        %385 = vrot.lane.b32.xlu0 %v353, 4
        %v386 = vpop.permute.xlu0 %385
        %387 = vrot.lane.b32.xlu0 %v355, 4
        %v388 = vpop.permute.xlu0 %387
        %389 = vrot.lane.b32.xlu0 %v358, 4
        %v390 = vpop.permute.xlu0 %389
        %391 = vrot.lane.b32.xlu0 %v360, 4
        %v392 = vpop.permute.xlu0 %391
        %vm409 = vcmask 1045504
        %v410 = vrot.slane %v266, 2
        %v411 = vrot.slane %v267, 2
        %v412 = vsel %vm409, %v410, %v411
        %v413 = vrot.slane %v268, 2
        %v414 = vsel %vm409, %v411, %v413
        %v415 = vrot.slane %v269, 2
        %v416 = vrot.slane %v270, 2
        %v417 = vsel %vm409, %v415, %v416
        %v418 = vrot.slane %v271, 2
        %v419 = vsel %vm409, %v416, %v418
        %v420 = vrot.slane %v272, 2
        %v421 = vrot.slane %v273, 2
        %v422 = vsel %vm409, %v420, %v421
        %v423 = vrot.slane %v274, 2
        %v424 = vsel %vm409, %v421, %v423
        %v425 = vrot.slane %v275, 2
        %v426 = vrot.slane %v276, 2
        %v427 = vsel %vm409, %v425, %v426
        %v428 = vrot.slane %v277, 2
        %v429 = vsel %vm409, %v426, %v428
        %v430 = vrot.slane %v278, 2
        %v431 = vrot.slane %v279, 2
        %v432 = vsel %vm409, %v430, %v431
        %v433 = vrot.slane %v280, 2
        %v434 = vsel %vm409, %v431, %v433
        %v435 = vrot.slane %v281, 2
        %v436 = vrot.slane %v282, 2
        %v437 = vsel %vm409, %v435, %v436
        %v438 = vrot.slane %v283, 2
        %v439 = vsel %vm409, %v436, %v438
        %v440 = vrot.slane %v284, 2
        %v441 = vrot.slane %v285, 2
        %v442 = vsel %vm409, %v440, %v441
        %v443 = vrot.slane %v286, 2
        %v444 = vsel %vm409, %v441, %v443
        %v445 = vrot.slane %v287, 2
        %v446 = vrot.slane %v288, 2
        %v447 = vsel %vm409, %v445, %v446
        %v448 = vrot.slane %v289, 2
        %v449 = vsel %vm409, %v446, %v448
        %450 = vrot.lane.b32.xlu0 %v412, 8
        %v451 = vpop.permute.xlu0 %450
        %452 = vrot.lane.b32.xlu0 %v414, 8
        %v453 = vpop.permute.xlu0 %452
        %454 = vrot.lane.b32.xlu0 %v417, 8
        %v455 = vpop.permute.xlu0 %454
        %456 = vrot.lane.b32.xlu0 %v419, 8
        %v457 = vpop.permute.xlu0 %456
        %458 = vrot.lane.b32.xlu0 %v422, 8
        %v459 = vpop.permute.xlu0 %458
        %460 = vrot.lane.b32.xlu0 %v424, 8
        %v461 = vpop.permute.xlu0 %460
        %462 = vrot.lane.b32.xlu0 %v427, 8
        %v463 = vpop.permute.xlu0 %462
        %464 = vrot.lane.b32.xlu0 %v429, 8
        %v465 = vpop.permute.xlu0 %464
        %466 = vrot.lane.b32.xlu0 %v432, 8
        %v467 = vpop.permute.xlu0 %466
        %468 = vrot.lane.b32.xlu0 %v434, 8
        %v469 = vpop.permute.xlu0 %468
        %470 = vrot.lane.b32.xlu0 %v437, 8
        %v471 = vpop.permute.xlu0 %470
        %472 = vrot.lane.b32.xlu0 %v439, 8
        %v473 = vpop.permute.xlu0 %472
        %474 = vrot.lane.b32.xlu0 %v442, 8
        %v475 = vpop.permute.xlu0 %474
        %476 = vrot.lane.b32.xlu0 %v444, 8
        %v477 = vpop.permute.xlu0 %476
        %478 = vrot.lane.b32.xlu0 %v447, 8
        %v479 = vpop.permute.xlu0 %478
        %480 = vrot.lane.b32.xlu0 %v449, 8
        %v481 = vpop.permute.xlu0 %480
        %500 = vrot.lane.b32.xlu0 %v269, 12
        %v501 = vpop.permute.xlu0 %500
        %502 = vrot.lane.b32.xlu0 %v270, 12
        %v503 = vpop.permute.xlu0 %502
        %504 = vrot.lane.b32.xlu0 %v272, 12
        %v505 = vpop.permute.xlu0 %504
        %506 = vrot.lane.b32.xlu0 %v273, 12
        %v507 = vpop.permute.xlu0 %506
        %508 = vrot.lane.b32.xlu0 %v275, 12
        %v509 = vpop.permute.xlu0 %508
        %510 = vrot.lane.b32.xlu0 %v276, 12
        %v511 = vpop.permute.xlu0 %510
        %512 = vrot.lane.b32.xlu0 %v278, 12
        %v513 = vpop.permute.xlu0 %512
        %514 = vrot.lane.b32.xlu0 %v279, 12
        %v515 = vpop.permute.xlu0 %514
        %516 = vrot.lane.b32.xlu0 %v281, 12
        %v517 = vpop.permute.xlu0 %516
        %518 = vrot.lane.b32.xlu0 %v282, 12
        %v519 = vpop.permute.xlu0 %518
        %520 = vrot.lane.b32.xlu0 %v284, 12
        %v521 = vpop.permute.xlu0 %520
        %522 = vrot.lane.b32.xlu0 %v285, 12
        %v523 = vpop.permute.xlu0 %522
        %524 = vrot.lane.b32.xlu0 %v287, 12
        %v525 = vpop.permute.xlu0 %524
        %526 = vrot.lane.b32.xlu0 %v288, 12
        %v527 = vpop.permute.xlu0 %526
        %528 = vrot.lane.b32.xlu0 %v290, 12
        %v529 = vpop.permute.xlu0 %528
        %530 = vrot.lane.b32.xlu0 %v291, 12
        %v531 = vpop.permute.xlu0 %530
        %v549 = vrot.slane %v290, 1
        %v550 = vrot.slane %v291, 1
        %v551 = vsel %vm320, %v549, %v550
        %v552 = vrot.slane %v292, 1
        %v553 = vsel %vm320, %v550, %v552
        %554 = vrot.lane.b32.xlu0 %v328, 16
        %v555 = vpop.permute.xlu0 %554
        %556 = vrot.lane.b32.xlu0 %v330, 16
        %v557 = vpop.permute.xlu0 %556
        %558 = vrot.lane.b32.xlu0 %v333, 16
        %v559 = vpop.permute.xlu0 %558
        %560 = vrot.lane.b32.xlu0 %v335, 16
        %v561 = vpop.permute.xlu0 %560
        %562 = vrot.lane.b32.xlu0 %v338, 16
        %v563 = vpop.permute.xlu0 %562
        %564 = vrot.lane.b32.xlu0 %v340, 16
        %v565 = vpop.permute.xlu0 %564
        %566 = vrot.lane.b32.xlu0 %v343, 16
        %v567 = vpop.permute.xlu0 %566
        %568 = vrot.lane.b32.xlu0 %v345, 16
        %v569 = vpop.permute.xlu0 %568
        %570 = vrot.lane.b32.xlu0 %v348, 16
        %v571 = vpop.permute.xlu0 %570
        %572 = vrot.lane.b32.xlu0 %v350, 16
        %v573 = vpop.permute.xlu0 %572
        %574 = vrot.lane.b32.xlu0 %v353, 16
        %v575 = vpop.permute.xlu0 %574
        %576 = vrot.lane.b32.xlu0 %v355, 16
        %v577 = vpop.permute.xlu0 %576
        %578 = vrot.lane.b32.xlu0 %v358, 16
        %v579 = vpop.permute.xlu0 %578
        %580 = vrot.lane.b32.xlu0 %v360, 16
        %v581 = vpop.permute.xlu0 %580
        %582 = vrot.lane.b32.xlu0 %v551, 16
        %v583 = vpop.permute.xlu0 %582
        %584 = vrot.lane.b32.xlu0 %v553, 16
        %v585 = vpop.permute.xlu0 %584
        %v602 = vrot.slane %v290, 2
        %v603 = vrot.slane %v291, 2
        %v604 = vsel %vm409, %v602, %v603
        %v605 = vrot.slane %v292, 2
        %v606 = vsel %vm409, %v603, %v605
        %607 = vrot.lane.b32.xlu0 %v417, 20
        %v608 = vpop.permute.xlu0 %607
        %609 = vrot.lane.b32.xlu0 %v419, 20
        %v610 = vpop.permute.xlu0 %609
        %611 = vrot.lane.b32.xlu0 %v422, 20
        %v612 = vpop.permute.xlu0 %611
        %613 = vrot.lane.b32.xlu0 %v424, 20
        %v614 = vpop.permute.xlu0 %613
        %615 = vrot.lane.b32.xlu0 %v427, 20
        %v616 = vpop.permute.xlu0 %615
        %617 = vrot.lane.b32.xlu0 %v429, 20
        %v618 = vpop.permute.xlu0 %617
        %619 = vrot.lane.b32.xlu0 %v432, 20
        %v620 = vpop.permute.xlu0 %619
        %621 = vrot.lane.b32.xlu0 %v434, 20
        %v622 = vpop.permute.xlu0 %621
        %623 = vrot.lane.b32.xlu0 %v437, 20
        %v624 = vpop.permute.xlu0 %623
        %625 = vrot.lane.b32.xlu0 %v439, 20
        %v626 = vpop.permute.xlu0 %625
        %627 = vrot.lane.b32.xlu0 %v442, 20
        %v628 = vpop.permute.xlu0 %627
        %629 = vrot.lane.b32.xlu0 %v444, 20
        %v630 = vpop.permute.xlu0 %629
        %631 = vrot.lane.b32.xlu0 %v447, 20
        %v632 = vpop.permute.xlu0 %631
        %633 = vrot.lane.b32.xlu0 %v449, 20
        %v634 = vpop.permute.xlu0 %633
        %635 = vrot.lane.b32.xlu0 %v604, 20
        %v636 = vpop.permute.xlu0 %635
        %637 = vrot.lane.b32.xlu0 %v606, 20
        %v638 = vpop.permute.xlu0 %637
        %657 = vrot.lane.b32.xlu0 %v272, 24
        %v658 = vpop.permute.xlu0 %657
        %659 = vrot.lane.b32.xlu0 %v273, 24
        %v660 = vpop.permute.xlu0 %659
        %661 = vrot.lane.b32.xlu0 %v275, 24
        %v662 = vpop.permute.xlu0 %661
        %663 = vrot.lane.b32.xlu0 %v276, 24
        %v664 = vpop.permute.xlu0 %663
        %665 = vrot.lane.b32.xlu0 %v278, 24
        %v666 = vpop.permute.xlu0 %665
        %667 = vrot.lane.b32.xlu0 %v279, 24
        %v668 = vpop.permute.xlu0 %667
        %669 = vrot.lane.b32.xlu0 %v281, 24
        %v670 = vpop.permute.xlu0 %669
        %671 = vrot.lane.b32.xlu0 %v282, 24
        %v672 = vpop.permute.xlu0 %671
        %673 = vrot.lane.b32.xlu0 %v284, 24
        %v674 = vpop.permute.xlu0 %673
        %675 = vrot.lane.b32.xlu0 %v285, 24
        %v676 = vpop.permute.xlu0 %675
        %677 = vrot.lane.b32.xlu0 %v287, 24
        %v678 = vpop.permute.xlu0 %677
        %679 = vrot.lane.b32.xlu0 %v288, 24
        %v680 = vpop.permute.xlu0 %679
        %681 = vrot.lane.b32.xlu0 %v290, 24
        %v682 = vpop.permute.xlu0 %681
        %683 = vrot.lane.b32.xlu0 %v291, 24
        %v684 = vpop.permute.xlu0 %683
        %685 = vrot.lane.b32.xlu0 %v293, 24
        %v686 = vpop.permute.xlu0 %685
        %687 = vrot.lane.b32.xlu0 %v294, 24
        %v688 = vpop.permute.xlu0 %687
        %v706 = vrot.slane %v293, 1
        %v707 = vrot.slane %v294, 1
        %v708 = vsel %vm320, %v706, %v707
        %v709 = vrot.slane %v295, 1
        %v710 = vsel %vm320, %v707, %v709
        %711 = vrot.lane.b32.xlu0 %v333, 28
        %v712 = vpop.permute.xlu0 %711
        %713 = vrot.lane.b32.xlu0 %v335, 28
        %v714 = vpop.permute.xlu0 %713
        %715 = vrot.lane.b32.xlu0 %v338, 28
        %v716 = vpop.permute.xlu0 %715
        %717 = vrot.lane.b32.xlu0 %v340, 28
        %v718 = vpop.permute.xlu0 %717
        %719 = vrot.lane.b32.xlu0 %v343, 28
        %v720 = vpop.permute.xlu0 %719
        %721 = vrot.lane.b32.xlu0 %v345, 28
        %v722 = vpop.permute.xlu0 %721
        %723 = vrot.lane.b32.xlu0 %v348, 28
        %v724 = vpop.permute.xlu0 %723
        %725 = vrot.lane.b32.xlu0 %v350, 28
        %v726 = vpop.permute.xlu0 %725
        %727 = vrot.lane.b32.xlu0 %v353, 28
        %v728 = vpop.permute.xlu0 %727
        %729 = vrot.lane.b32.xlu0 %v355, 28
        %v730 = vpop.permute.xlu0 %729
        %731 = vrot.lane.b32.xlu0 %v358, 28
        %v732 = vpop.permute.xlu0 %731
        %733 = vrot.lane.b32.xlu0 %v360, 28
        %v734 = vpop.permute.xlu0 %733
        %735 = vrot.lane.b32.xlu0 %v551, 28
        %v736 = vpop.permute.xlu0 %735
        %737 = vrot.lane.b32.xlu0 %v553, 28
        %v738 = vpop.permute.xlu0 %737
        %739 = vrot.lane.b32.xlu0 %v708, 28
        %v740 = vpop.permute.xlu0 %739
        %741 = vrot.lane.b32.xlu0 %v710, 28
        %v742 = vpop.permute.xlu0 %741
        %v759 = vrot.slane %v293, 2
        %v760 = vrot.slane %v294, 2
        %v761 = vsel %vm409, %v759, %v760
        %v762 = vrot.slane %v295, 2
        %v763 = vsel %vm409, %v760, %v762
        %764 = vrot.lane.b32.xlu0 %v422, 32
        %v765 = vpop.permute.xlu0 %764
        %766 = vrot.lane.b32.xlu0 %v424, 32
        %v767 = vpop.permute.xlu0 %766
        %768 = vrot.lane.b32.xlu0 %v427, 32
        %v769 = vpop.permute.xlu0 %768
        %770 = vrot.lane.b32.xlu0 %v429, 32
        %v771 = vpop.permute.xlu0 %770
        %772 = vrot.lane.b32.xlu0 %v432, 32
        %v773 = vpop.permute.xlu0 %772
        %774 = vrot.lane.b32.xlu0 %v434, 32
        %v775 = vpop.permute.xlu0 %774
        %776 = vrot.lane.b32.xlu0 %v437, 32
        %v777 = vpop.permute.xlu0 %776
        %778 = vrot.lane.b32.xlu0 %v439, 32
        %v779 = vpop.permute.xlu0 %778
        %780 = vrot.lane.b32.xlu0 %v442, 32
        %v781 = vpop.permute.xlu0 %780
        %782 = vrot.lane.b32.xlu0 %v444, 32
        %v783 = vpop.permute.xlu0 %782
        %784 = vrot.lane.b32.xlu0 %v447, 32
        %v785 = vpop.permute.xlu0 %784
        %786 = vrot.lane.b32.xlu0 %v449, 32
        %v787 = vpop.permute.xlu0 %786
        %788 = vrot.lane.b32.xlu0 %v604, 32
        %v789 = vpop.permute.xlu0 %788
        %790 = vrot.lane.b32.xlu0 %v606, 32
        %v791 = vpop.permute.xlu0 %790
        %792 = vrot.lane.b32.xlu0 %v761, 32
        %v793 = vpop.permute.xlu0 %792
        %794 = vrot.lane.b32.xlu0 %v763, 32
        %v795 = vpop.permute.xlu0 %794
        %vm812 = vcmask 31744
        %v813 = vsel %vm812, %v266, %v362
        %v814 = vsel %vm812, %v267, %v364
        %v815 = vsel %vm812, %v269, %v366
        %v816 = vsel %vm812, %v270, %v368
        %v817 = vsel %vm812, %v272, %v370
        %v818 = vsel %vm812, %v273, %v372
        %v819 = vsel %vm812, %v275, %v374
        %v820 = vsel %vm812, %v276, %v376
        %v821 = vsel %vm812, %v278, %v378
        %v822 = vsel %vm812, %v279, %v380
        %v823 = vsel %vm812, %v281, %v382
        %v824 = vsel %vm812, %v282, %v384
        %v825 = vsel %vm812, %v284, %v386
        %v826 = vsel %vm812, %v285, %v388
        %v827 = vsel %vm812, %v287, %v390
        %v828 = vsel %vm812, %v288, %v392
        %vm829 = vcmask 64512
        %v830 = vsel %vm829, %v813, %v451
        %v831 = vsel %vm829, %v814, %v453
        %v832 = vsel %vm829, %v815, %v455
        %v833 = vsel %vm829, %v816, %v457
        %v834 = vsel %vm829, %v817, %v459
        %v835 = vsel %vm829, %v818, %v461
        %v836 = vsel %vm829, %v819, %v463
        %v837 = vsel %vm829, %v820, %v465
        %v838 = vsel %vm829, %v821, %v467
        %v839 = vsel %vm829, %v822, %v469
        %v840 = vsel %vm829, %v823, %v471
        %v841 = vsel %vm829, %v824, %v473
        %v842 = vsel %vm829, %v825, %v475
        %v843 = vsel %vm829, %v826, %v477
        %v844 = vsel %vm829, %v827, %v479
        %v845 = vsel %vm829, %v828, %v481
        %vm846 = vcmask 97280
        %v847 = vsel %vm846, %v830, %v501
        %v848 = vsel %vm846, %v831, %v503
        %v849 = vsel %vm846, %v832, %v505
        %v850 = vsel %vm846, %v833, %v507
        %v851 = vsel %vm846, %v834, %v509
        %v852 = vsel %vm846, %v835, %v511
        %v853 = vsel %vm846, %v836, %v513
        %v854 = vsel %vm846, %v837, %v515
        %v855 = vsel %vm846, %v838, %v517
        %v856 = vsel %vm846, %v839, %v519
        %v857 = vsel %vm846, %v840, %v521
        %v858 = vsel %vm846, %v841, %v523
        %v859 = vsel %vm846, %v842, %v525
        %v860 = vsel %vm846, %v843, %v527
        %v861 = vsel %vm846, %v844, %v529
        %v862 = vsel %vm846, %v845, %v531
        %vm863 = vcmask 130048
        %v864 = vsel %vm863, %v847, %v555
        %v865 = vsel %vm863, %v848, %v557
        %v866 = vsel %vm863, %v849, %v559
        %v867 = vsel %vm863, %v850, %v561
        %v868 = vsel %vm863, %v851, %v563
        %v869 = vsel %vm863, %v852, %v565
        %v870 = vsel %vm863, %v853, %v567
        %v871 = vsel %vm863, %v854, %v569
        %v872 = vsel %vm863, %v855, %v571
        %v873 = vsel %vm863, %v856, %v573
        %v874 = vsel %vm863, %v857, %v575
        %v875 = vsel %vm863, %v858, %v577
        %v876 = vsel %vm863, %v859, %v579
        %v877 = vsel %vm863, %v860, %v581
        %v878 = vsel %vm863, %v861, %v583
        %v879 = vsel %vm863, %v862, %v585
        %vm880 = vcmask 162816
        %v881 = vsel %vm880, %v864, %v608
        %v882 = vsel %vm880, %v865, %v610
        %v883 = vsel %vm880, %v866, %v612
        %v884 = vsel %vm880, %v867, %v614
        %v885 = vsel %vm880, %v868, %v616
        %v886 = vsel %vm880, %v869, %v618
        %v887 = vsel %vm880, %v870, %v620
        %v888 = vsel %vm880, %v871, %v622
        %v889 = vsel %vm880, %v872, %v624
        %v890 = vsel %vm880, %v873, %v626
        %v891 = vsel %vm880, %v874, %v628
        %v892 = vsel %vm880, %v875, %v630
        %v893 = vsel %vm880, %v876, %v632
        %v894 = vsel %vm880, %v877, %v634
        %v895 = vsel %vm880, %v878, %v636
        %v896 = vsel %vm880, %v879, %v638
        %vm897 = vcmask 195584
        %v898 = vsel %vm897, %v881, %v658
        %v899 = vsel %vm897, %v882, %v660
        %v900 = vsel %vm897, %v883, %v662
        %v901 = vsel %vm897, %v884, %v664
        %v902 = vsel %vm897, %v885, %v666
        %v903 = vsel %vm897, %v886, %v668
        %v904 = vsel %vm897, %v887, %v670
        %v905 = vsel %vm897, %v888, %v672
        %v906 = vsel %vm897, %v889, %v674
        %v907 = vsel %vm897, %v890, %v676
        %v908 = vsel %vm897, %v891, %v678
        %v909 = vsel %vm897, %v892, %v680
        %v910 = vsel %vm897, %v893, %v682
        %v911 = vsel %vm897, %v894, %v684
        %v912 = vsel %vm897, %v895, %v686
        %v913 = vsel %vm897, %v896, %v688
        %vm914 = vcmask 228352
        %v915 = vsel %vm914, %v898, %v712
        %v916 = vsel %vm914, %v899, %v714
        %v917 = vsel %vm914, %v900, %v716
        %v918 = vsel %vm914, %v901, %v718
        %v919 = vsel %vm914, %v902, %v720
        %v920 = vsel %vm914, %v903, %v722
        %v921 = vsel %vm914, %v904, %v724
        %v922 = vsel %vm914, %v905, %v726
        %v923 = vsel %vm914, %v906, %v728
        %v924 = vsel %vm914, %v907, %v730
        %v925 = vsel %vm914, %v908, %v732
        %v926 = vsel %vm914, %v909, %v734
        %v927 = vsel %vm914, %v910, %v736
        %v928 = vsel %vm914, %v911, %v738
        %v929 = vsel %vm914, %v912, %v740
        %v930 = vsel %vm914, %v913, %v742
        %vm931 = vcmask 261120
        %v932 = vsel %vm931, %v915, %v765
        %v933 = vsel %vm931, %v916, %v767
        %v934 = vsel %vm931, %v917, %v769
        %v935 = vsel %vm931, %v918, %v771
        %v936 = vsel %vm931, %v919, %v773
        %v937 = vsel %vm931, %v920, %v775
        %v938 = vsel %vm931, %v921, %v777
        %v939 = vsel %vm931, %v922, %v779
        %v940 = vsel %vm931, %v923, %v781
        %v941 = vsel %vm931, %v924, %v783
        %v942 = vsel %vm931, %v925, %v785
        %v943 = vsel %vm931, %v926, %v787
        %v944 = vsel %vm931, %v927, %v789
        %v945 = vsel %vm931, %v928, %v791
        %v946 = vsel %vm931, %v929, %v793
        %v947 = vsel %vm931, %v930, %v795
        %v948 = vpack.c.bf16 %v933, %v932
        %v949 = vpack.c.bf16 %v935, %v934
        %v950 = vpack.c.bf16 %v937, %v936
        %v951 = vpack.c.bf16 %v939, %v938
        %v952 = vpack.c.bf16 %v941, %v940
        %v953 = vpack.c.bf16 %v943, %v942
        %v954 = vpack.c.bf16 %v945, %v944
        %v955 = vpack.c.bf16 %v947, %v946
        %v956 = vld [vmem:[#allocation2] sm:$0xf]
        %v957 = vld [vmem:[#allocation2 + $0x4] sm:$0xf]
        %v958 = vld [vmem:[#allocation2 + $0x8] sm:$0xf]
        %v959 = vld [vmem:[#allocation2 + $0xc] sm:$0xf]
        %v960 = vld [vmem:[#allocation2 + $0x10] sm:$0x3]
        %v961 = vld [vmem:[#allocation4] sm:$0x1]
        %v963 = vlaneseq
        %v964 = vshrl.u32 %v963, 7
        %v965 = vsub.s32 0, %v964
        %v966 = vrot.slane %v961, %v965
        %v973 = vunpack.c.l.b16 %v956
        %v974 = vunpack.c.l.b16 %v957
        %v975 = vunpack.c.l.b16 %v958
        %v976 = vunpack.c.l.b16 %v959
        %v977 = vunpack.c.l.b16 %v960
        %v978 = vpack.c.b16 %v974, %v973
        %v979 = vpack.c.b16 %v976, %v975
        %v980 = vpack.c.b16 %v977, %v977
        %vm983 = vcmask 293888
        %v985 = vsel %vm983, %v948, 0
        %v988 = vsel %vm983, %v949, 0
        %v991 = vsel %vm983, %v950, 0
        %v994 = vsel %vm983, %v951, 0
        %v997 = vsel %vm983, %v952, 0
        %v1000 = vsel %vm983, %v953, 0
        %v1003 = vsel %vm983, %v954, 0
        %v1006 = vsel %vm983, %v955, 0
        %vm1008 = vcmask 1041408
        %v1010 = vsel %vm1008, %v980, 0
        %1012 = vmatprep.subr.bf16.mxu0 0
        %1013 = vmatpush1.bf16.msra.mxu0 %v978
        %1014 = vmatprep.subr.bf16.mxu0 0
        %1015 = vmatpush1.bf16.msra.mxu0 %v979
        %1016 = vmatprep.subr.bf16.mxu0 0
        %1017 = vmatpush1.bf16.msra.mxu0 %v1010
        %1018 = vmatprep.subr.bf16.mxu0 0
        %1019 = vmatpush1.bf16.msra.mxu0 0
        %1020 = vmatprep.subr.bf16.mxu0 0
        %1021 = vmatpush1.bf16.msra.mxu0 0
        %1022 = vmatprep.subr.bf16.mxu0 0
        %1023 = vmatpush1.bf16.msra.mxu0 0
        %1024 = vmatprep.subr.bf16.mxu0 0
        %1025 = vmatpush1.bf16.msra.mxu0 0
        %1026 = vmatprep.subr.bf16.mxu0 0
        %1027 = vmatpush1.bf16.msra.mxu0 0
        %1028 = vmatprep.subr.bf16.mxu0 0
        %1029 = vmatpush1.bf16.msra.mxu0 0
        %1030 = vmatprep.subr.bf16.mxu0 0
        %1031 = vmatpush1.bf16.msra.mxu0 0
        %1032 = vmatprep.subr.bf16.mxu0 0
        %1033 = vmatpush1.bf16.msra.mxu0 0
        %1034 = vmatprep.subr.bf16.mxu0 0
        %1035 = vmatpush1.bf16.msra.mxu0 0
        %1036 = vmatprep.subr.bf16.mxu0 0
        %1037 = vmatpush1.bf16.msra.mxu0 0
        %1038 = vmatprep.subr.bf16.mxu0 0
        %1039 = vmatpush1.bf16.msra.mxu0 0
        %1040 = vmatprep.subr.bf16.mxu0 0
        %1041 = vmatpush1.bf16.msra.mxu0 0
        %1042 = vmatprep.subr.bf16.mxu0 0
        %1043 = vmatpush1.bf16.msra.mxu0 0
        %1044 = vmatprep.mubr.bf16.mxu0 0
        %1045 = vmatmul.mubr.bf16.gmra.mrb[0].mxu0 %v985
        %v1046 = vpop.f32.mrb[0].mxu0
        %v1047 = vadd.f32 %v966, %v1046
        %v1048 = vpop.f32.mrb[0].mxu0
        %v1049 = vpop.f32.mrb[0].mxu0
        %v1050 = vadd.f32 %v966, %v1049
        %v1051 = vpop.f32.mrb[0].mxu0
        %1052 = vmatprep.mubr.bf16.mxu0 0
        %1053 = vmatmul.mubr.bf16.gmra.mrb[0].mxu0 %v988
        %v1054 = vpop.f32.mrb[0].mxu0
        %v1055 = vadd.f32 %v966, %v1054
        %v1056 = vpop.f32.mrb[0].mxu0
        %v1057 = vpop.f32.mrb[0].mxu0
        %v1058 = vadd.f32 %v966, %v1057
        %v1059 = vpop.f32.mrb[0].mxu0
        %1060 = vmatprep.mubr.bf16.mxu0 0
        %1061 = vmatmul.mubr.bf16.gmra.mrb[0].mxu0 %v991
        %v1062 = vpop.f32.mrb[0].mxu0
        %v1063 = vadd.f32 %v966, %v1062
        %v1064 = vpop.f32.mrb[0].mxu0
        %v1065 = vpop.f32.mrb[0].mxu0
        %v1066 = vadd.f32 %v966, %v1065
        %v1067 = vpop.f32.mrb[0].mxu0
        %1068 = vmatprep.mubr.bf16.mxu0 0
        %1069 = vmatmul.mubr.bf16.gmra.mrb[0].mxu0 %v994
        %v1070 = vpop.f32.mrb[0].mxu0
        %v1071 = vadd.f32 %v966, %v1070
        %v1072 = vpop.f32.mrb[0].mxu0
        %v1073 = vpop.f32.mrb[0].mxu0
        %v1074 = vadd.f32 %v966, %v1073
        %v1075 = vpop.f32.mrb[0].mxu0
        %1076 = vmatprep.mubr.bf16.mxu0 0
        %1077 = vmatmul.mubr.bf16.gmra.mrb[0].mxu0 %v997
        %v1078 = vpop.f32.mrb[0].mxu0
        %v1079 = vadd.f32 %v966, %v1078
        %v1080 = vpop.f32.mrb[0].mxu0
        %v1081 = vpop.f32.mrb[0].mxu0
        %v1082 = vadd.f32 %v966, %v1081
        %v1083 = vpop.f32.mrb[0].mxu0
        %1084 = vmatprep.mubr.bf16.mxu0 0
        %1085 = vmatmul.mubr.bf16.gmra.mrb[0].mxu0 %v1000
        %v1086 = vpop.f32.mrb[0].mxu0
        %v1087 = vadd.f32 %v966, %v1086
        %v1088 = vpop.f32.mrb[0].mxu0
        %v1089 = vpop.f32.mrb[0].mxu0
        %v1090 = vadd.f32 %v966, %v1089
        %v1091 = vpop.f32.mrb[0].mxu0
        %1092 = vmatprep.mubr.bf16.mxu0 0
        %1093 = vmatmul.mubr.bf16.gmra.mrb[0].mxu0 %v1003
        %v1094 = vpop.f32.mrb[0].mxu0
        %v1095 = vadd.f32 %v966, %v1094
        %v1096 = vpop.f32.mrb[0].mxu0
        %v1097 = vpop.f32.mrb[0].mxu0
        %v1098 = vadd.f32 %v966, %v1097
        %v1099 = vpop.f32.mrb[0].mxu0
        %1100 = vmatprep.mubr.bf16.mxu0 0
        %1101 = vmatmul.mubr.bf16.gmra.mrb[0].mxu0 %v1006
        %v1102 = vpop.f32.mrb[0].mxu0
        %v1103 = vadd.f32 %v966, %v1102
        %v1104 = vpop.f32.mrb[0].mxu0
        %v1105 = vpop.f32.mrb[0].mxu0
        %v1106 = vadd.f32 %v966, %v1105
        %v1107 = vpop.f32.mrb[0].mxu0
        %1108 = vdwg.mxu0
        %v1109 = vpack.c.bf16 %v1050, %v1047
        %v1110 = vpack.c.bf16 %v1058, %v1055
        %v1111 = vpack.c.bf16 %v1066, %v1063
        %v1112 = vpack.c.bf16 %v1074, %v1071
        %v1113 = vpack.c.bf16 %v1082, %v1079
        %v1114 = vpack.c.bf16 %v1090, %v1087
        %v1115 = vpack.c.bf16 %v1098, %v1095
        %v1116 = vpack.c.bf16 %v1106, %v1103
        %v1125 = vunpack.c.l.b16 %v1109
        %v1126 = vunpack.c.h.b16 %v1109
        %v1127 = vunpack.c.l.b16 %v1110
        %v1128 = vunpack.c.h.b16 %v1110
        %v1129 = vunpack.c.l.b16 %v1111
        %v1130 = vunpack.c.h.b16 %v1111
        %v1131 = vunpack.c.l.b16 %v1112
        %v1132 = vunpack.c.h.b16 %v1112
        %v1133 = vunpack.c.l.b16 %v1113
        %v1134 = vunpack.c.h.b16 %v1113
        %v1135 = vunpack.c.l.b16 %v1114
        %v1136 = vunpack.c.h.b16 %v1114
        %v1137 = vunpack.c.l.b16 %v1115
        %v1138 = vunpack.c.h.b16 %v1115
        %v1139 = vunpack.c.l.b16 %v1116
        %v1140 = vunpack.c.h.b16 %v1116
        %v1141 = vpack.c.b16 %v1125, %v1125
        %v1142 = vpack.c.b16 %v1126, %v1126
        %v1143 = vpack.c.b16 %v1127, %v1127
        %v1144 = vpack.c.b16 %v1128, %v1128
        %v1145 = vpack.c.b16 %v1129, %v1129
        %v1146 = vpack.c.b16 %v1130, %v1130
        %v1147 = vpack.c.b16 %v1131, %v1131
        %v1148 = vpack.c.b16 %v1132, %v1132
        %v1149 = vpack.c.b16 %v1133, %v1133
        %v1150 = vpack.c.b16 %v1134, %v1134
        %v1151 = vpack.c.b16 %v1135, %v1135
        %v1152 = vpack.c.b16 %v1136, %v1136
        %v1153 = vpack.c.b16 %v1137, %v1137
        %v1154 = vpack.c.b16 %v1138, %v1138
        %v1155 = vpack.c.b16 %v1139, %v1139
        %v1156 = vpack.c.b16 %v1140, %v1140
        %vm1173 = vcmask 257024
        %1174 = vst.msk [vmem:[%s232] sm:$0xf] %vm1173, %v1141
        %1175 = vst.msk [vmem:[%s232 + $0x4] sm:$0xf] %vm1173, %v1142
        %1176 = vst.msk [vmem:[%s232 + $0x8] sm:$0xf] %vm1173, %v1143
        %1177 = vst.msk [vmem:[%s232 + $0xc] sm:$0xf] %vm1173, %v1144
        %1178 = vst.msk [vmem:[%s232 + $0x10] sm:$0xf] %vm1173, %v1145
        %1179 = vst.msk [vmem:[%s232 + $0x14] sm:$0xf] %vm1173, %v1146
        %1180 = vst.msk [vmem:[%s232 + $0x18] sm:$0xf] %vm1173, %v1147
        %1181 = vst.msk [vmem:[%s232 + $0x1c] sm:$0xf] %vm1173, %v1148
        %1182 = vst.msk [vmem:[%s232 + $0x20] sm:$0xf] %vm1173, %v1149
        %1183 = vst.msk [vmem:[%s232 + $0x24] sm:$0xf] %vm1173, %v1150
        %1184 = vst.msk [vmem:[%s232 + $0x28] sm:$0xf] %vm1173, %v1151
        %1185 = vst.msk [vmem:[%s232 + $0x2c] sm:$0xf] %vm1173, %v1152
        %1186 = vst.msk [vmem:[%s232 + $0x30] sm:$0xf] %vm1173, %v1153
        %1187 = vst.msk [vmem:[%s232 + $0x34] sm:$0xf] %vm1173, %v1154
        %1188 = vst.msk [vmem:[%s232 + $0x38] sm:$0xf] %vm1173, %v1155
        %1189 = vst.msk [vmem:[%s232 + $0x3c] sm:$0xf] %vm1173, %v1156
        %s1190 = smul.u32 %s20, 2
        %s1191 = sadd.s32 %s1190, %s21
        %p1192 = scmp.lt.s32.totalorder %s1191, 3
        %s1193 = scalar_select %p1192, %s1191, 3
        %s1194 = smul.addr %s1193, 16
        %s1195 = smul.addr %s1194, 4
        %s1196 = scalar_lea.vmem %s3, %s1195
        // Predicated region
        $region41: #{_lambda_.5} parent=31 // pred_check
          %p1197 = pneg %p122
        $region42: #{_lambda_.5} parent=31 // pred_check_branch
          %1199 = sbr.rel (%p1197) target = $region44
        $region43: #{_lambda_.5} parent=31 // pred_region
          %s1200 = smul.u32 %s20, 2
          %s1201 = sadd.s32 %s1200, %s21
        $region44: #{_lambda_.5} parent=31 // pred_fallthru
          _
      $region32: #{_lambda_.5} parent=5 // pred_fallthru
        _
      %p1202 = scmp.le.s32.totalorder 2, %s11
      // Predicated region
      $region45: #{_lambda_.5} parent=5 // pred_check
        %p1203 = pneg %p1202
      $region46: #{_lambda_.5} parent=5 // pred_check_branch
        %1205 = sbr.rel (%p1203) target = $region48
      $region47: #{_lambda_.5} parent=5 // pred_region
        %s1206 = ssub.s32 %s11, 2
        // Predicated region
        $region49: #{_lambda_.5} parent=47 // pred_check
          %p1207 = pneg %p128
        $region50: #{_lambda_.5} parent=47 // pred_check_branch
          %1209 = sbr.rel (%p1207) target = $region52
        $region51: #{_lambda_.5} parent=47 // pred_region
          %s1210 = smul.u32 %s22, 2
          %s1211 = sadd.s32 %s1210, %s23
          %p1212 = scmp.lt.s32.totalorder %s1211, 3
          %s1213 = scalar_select %p1212, %s1211, 3
          %s1214 = smul.addr %s1213, 16
          %s1215 = smul.addr %s1214, 4
          %s1216 = scalar_lea.vmem %s3, %s1215
        $region52: #{_lambda_.5} parent=47 // pred_fallthru
          _
      $region48: #{_lambda_.5} parent=5 // pred_fallthru
        _
    $region6: #{_lambda_.5} parent=1 // loop_footer
      %s15 = sadd.s32 1, %s11
    $region7: #{_lambda_.5} parent=1 // loop_footer_branch
      %10 = sbr.rel target = $region3
    $region8: #{_lambda_.5} parent=1 // loop_exit
      _
    %1217 = vsyncpa [#allocation3], 1
    %s1218 = scalar_lea.sflag [#allocation3], 1
    %1219 = vsyncpa %s1218, 1
    %1220 = vsyncpa [#allocation5], 1

// kernel: _lambda_.8
$region0: #{_lambda_.8}
  #allocation0 [shape = 'u32[]', space=smem, size = 0x4, offset = 0x4, fixed_abs, tag = 'smem constant byte address 0x4 - core index']
  #allocation1 [shape = 'u32[144,128]{1,0:T(1,128)}', space=vmem, size = 0x12000, scoped, tag = 'internal scratch']
  %s0 = inlined_call_operand.vmem [shape: bf16[4,10,18,32], index: 0, kind: input, shape index: {}]
  %s1 = inlined_call_operand.hbm [shape: bf16[288,64], index: 1, kind: input, shape index: {}]
  %s2 = inlined_call_operand.hbm [shape: f32[1,64], index: 2, kind: input, shape index: {}]
  %s3 = inlined_call_operand.vmem [shape: bf16[4,128,64], index: 3, kind: output, shape index: {}]
  %s4 = sld [smem:[#allocation0]]
  $region53: #{_lambda_.8} parent=0
    _
  %s6 = ssub.s32 1, %s4
  %s7 = scalar_select 0, %s6, %s4
  $region1: #{_lambda_.8} parent=0
    #allocation2 [shape = 'u8[73728]{0}', space=vmem, size = 0x12000, scoped, tag = 'input window, operand 1, single buffered']
    #allocation3 [shape = 's32[2]{0}', space=sflag, size = 0x8, scoped, tag = 'scoped memory for _lambda_.8']
    #allocation4 [shape = 'u8[512]{0}', space=vmem, size = 0x400, scoped, tag = 'input window, operand 2, single buffered']
    #allocation5 [shape = 's32[1]{0}', space=sflag, size = 0x4, scoped, tag = 'scoped memory for _lambda_.8']
    %8 = vsyncpa [#allocation3], 0
    %9 = vsyncpa [#allocation5], 0
    loop: start=0, step=1, limit=6
    $region2: #{_lambda_.8} parent=1 // loop_pre_header
      _
    $region3: #{_lambda_.8} parent=1 // loop_header
      %s11 = sphi 0, %s15
      %p12 = scmp.ge.s32.totalorder %s11, 6
      %s18 = sphi 0, %s30
      %s19 = sphi 0, %s26
      %s20 = sphi 0, %s18
      %s21 = sphi 0, %s19
      %s22 = sphi 0, %s20
      %s23 = sphi 0, %s21
      %s37 = sphi 0, %s39
      %s40 = sphi 0, %s37
      %s41 = sphi 0, %s40
      %s57 = sphi 0, %s41
      %s61 = sphi 0, %s61
      %s63 = sphi 0, %s61
      %s64 = sphi 0, %s63
      %s78 = sphi 0, %s64
      %s82 = sphi 0, %s82
      %s84 = sphi 0, %s82
      %s85 = sphi 0, %s84
      %s99 = sphi 0, %s85
      %s109 = sphi 0, %s111
      %s112 = sphi 0, %s109
      %s113 = sphi 0, %s112
      %s129 = sphi 0, %s113
    $region4: #{_lambda_.8} parent=1 // loop_header_branch
      %14 = sbr.rel (%p12) target = $region8
    $region5: #{_lambda_.8} parent=1 // loop_body
      %s16 = ssub.s32 %s11, 1
      %s17 = ssub.s32 %s11, 2
      %s24 = sadd.s32 1, %s19
      %p25 = scmp.ge.s32.totalorder %s24, 2
      %s26 = scalar_select %p25, 0, %s24
      %s27 = sadd.s32 1, %s18
      %s28 = scalar_select %p25, %s27, %s18
      %p29 = scmp.ge.s32.totalorder %s28, 2
      %s30 = scalar_select %p29, 0, %s28
      %s31 = smul.u32 %s18, 2
      %s32 = sadd.s32 %s31, %s19
      %s33 = smul.u32 %s30, 2
      %s34 = sadd.s32 %s33, %s26
      %s35 = ssub.s32 %s32, %s34
      %p36 = scmp.eq.s32.totalorder %s35, 0
      %s38 = sadd.s32 %s37, 1
      %s39 = scalar_select %p36, %s37, %s38
      %p42 = pneg %p36
      %p43 = scmp.eq.s32.totalorder %s11, 3
      %p44 = por %p42, %p43
      %p45 = scmp.ne.s32.totalorder %s37, %s40
      %p46 = scmp.eq.s32.totalorder %s11, 0
      %p47 = por %p45, %p46
      %p48 = scmp.ne.s32.totalorder %s37, %s40
      %p49 = scmp.eq.s32.totalorder %s16, 3
      %p50 = por %p48, %p49
      %p51 = scmp.ne.s32.totalorder %s40, %s41
      %p52 = scmp.eq.s32.totalorder %s16, 0
      %p53 = por %p51, %p52
      %p54 = scmp.ne.s32.totalorder %s40, %s41
      %p55 = scmp.eq.s32.totalorder %s17, 3
      %p56 = por %p54, %p55
      %p58 = scmp.ne.s32.totalorder %s41, %s57
      %p59 = scmp.eq.s32.totalorder %s17, 0
      %p60 = por %p58, %p59
      %s62 = sadd.s32 %s61, 1
      %p65 = scmp.eq.s32.totalorder %s11, 3
      %p66 = scmp.ne.s32.totalorder %s61, %s63
      %p67 = scmp.eq.s32.totalorder %s11, 0
      %p68 = por %p66, %p67
      %p69 = scmp.ne.s32.totalorder %s61, %s63
      %p70 = scmp.eq.s32.totalorder %s16, 3
      %p71 = por %p69, %p70
      %p72 = scmp.ne.s32.totalorder %s63, %s64
      %p73 = scmp.eq.s32.totalorder %s16, 0
      %p74 = por %p72, %p73
      %p75 = scmp.ne.s32.totalorder %s63, %s64
      %p76 = scmp.eq.s32.totalorder %s17, 3
      %p77 = por %p75, %p76
      %p79 = scmp.ne.s32.totalorder %s64, %s78
      %p80 = scmp.eq.s32.totalorder %s17, 0
      %p81 = por %p79, %p80
      %s83 = sadd.s32 %s82, 1
      %p86 = scmp.eq.s32.totalorder %s11, 3
      %p87 = scmp.ne.s32.totalorder %s82, %s84
      %p88 = scmp.eq.s32.totalorder %s11, 0
      %p89 = por %p87, %p88
      %p90 = scmp.ne.s32.totalorder %s82, %s84
      %p91 = scmp.eq.s32.totalorder %s16, 3
      %p92 = por %p90, %p91
      %p93 = scmp.ne.s32.totalorder %s84, %s85
      %p94 = scmp.eq.s32.totalorder %s16, 0
      %p95 = por %p93, %p94
      %p96 = scmp.ne.s32.totalorder %s84, %s85
      %p97 = scmp.eq.s32.totalorder %s17, 3
      %p98 = por %p96, %p97
      %p100 = scmp.ne.s32.totalorder %s85, %s99
      %p101 = scmp.eq.s32.totalorder %s17, 0
      %p102 = por %p100, %p101
      %s103 = smul.u32 %s18, 2
      %s104 = sadd.s32 %s103, %s19
      %s105 = smul.u32 %s30, 2
      %s106 = sadd.s32 %s105, %s26
      %s107 = ssub.s32 %s104, %s106
      %p108 = scmp.eq.s32.totalorder %s107, 0
      %s110 = sadd.s32 %s109, 1
      %s111 = scalar_select %p108, %s109, %s110
      %p114 = pneg %p108
      %p115 = scmp.eq.s32.totalorder %s11, 3
      %p116 = por %p114, %p115
      %p117 = scmp.ne.s32.totalorder %s109, %s112
      %p118 = scmp.eq.s32.totalorder %s11, 0
      %p119 = por %p117, %p118
      %p120 = scmp.ne.s32.totalorder %s109, %s112
      %p121 = scmp.eq.s32.totalorder %s16, 3
      %p122 = por %p120, %p121
      %p123 = scmp.ne.s32.totalorder %s112, %s113
      %p124 = scmp.eq.s32.totalorder %s16, 0
      %p125 = por %p123, %p124
      %p126 = scmp.ne.s32.totalorder %s112, %s113
      %p127 = scmp.eq.s32.totalorder %s17, 3
      %p128 = por %p126, %p127
      %p130 = scmp.ne.s32.totalorder %s113, %s129
      %p131 = scmp.eq.s32.totalorder %s17, 0
      %p132 = por %p130, %p131
      %p133 = scmp.le.s32.totalorder 1, %s11
      %p134 = scmp.lt.s32.totalorder %s11, 5
      %p135 = pnand %p133, %p134
      %p136 = pneg %p135
      // Predicated region
      $region9: #{_lambda_.8} parent=5 // pred_check
        _
      $region10: #{_lambda_.8} parent=5 // pred_check_branch
        %138 = sbr.rel (%p135) target = $region12
      $region11: #{_lambda_.8} parent=5 // pred_region
        %s139 = ssub.s32 %s11, 1
        // Predicated region
        $region13: #{_lambda_.8} parent=11 // pred_check
          %p140 = pneg %p74
        $region14: #{_lambda_.8} parent=11 // pred_check_branch
          %142 = sbr.rel (%p140) target = $region16
        $region15: #{_lambda_.8} parent=11 // pred_region
          %s144 = ssub.s32 2304, 2304
          %145 = vsyncadd [#allocation3], %s144
          %s146 = sshll.u32 [#allocation2], 4
          %s147 = int_to_ptr.vmem [resolvable:$true] %s146
          %152 = dma.hbm_to_vmem [thread:$0]  %s1, 2304, %s147, [#allocation3], 64, 64, 4
        $region16: #{_lambda_.8} parent=11 // pred_fallthru
          _
        // Predicated region
        $region17: #{_lambda_.8} parent=11 // pred_check
          %p153 = pneg %p95
        $region18: #{_lambda_.8} parent=11 // pred_check_branch
          %155 = sbr.rel (%p153) target = $region20
        $region19: #{_lambda_.8} parent=11 // pred_region
          %s157 = ssub.s32 16, 16
          %158 = vsyncadd [#allocation5], %s157
          %s160 = sshll.u32 [#allocation4], 4
          %s161 = int_to_ptr.vmem [resolvable:$true] %s160
          %163 = dma.hbm_to_vmem [thread:$0]  %s2, 16, %s161, [#allocation5]
        $region20: #{_lambda_.8} parent=11 // pred_fallthru
          _
      $region12: #{_lambda_.8} parent=5 // pred_fallthru
        _
      %p164 = scmp.lt.s32.totalorder %s11, 4
      // Predicated region
      $region21: #{_lambda_.8} parent=5 // pred_check
        %p165 = pneg %p164
      $region22: #{_lambda_.8} parent=5 // pred_check_branch
        %167 = sbr.rel (%p165) target = $region24
      $region23: #{_lambda_.8} parent=5 // pred_region
        // Predicated region
        $region25: #{_lambda_.8} parent=23 // pred_check
          %p168 = pneg %p47
        $region26: #{_lambda_.8} parent=23 // pred_check_branch
          %170 = sbr.rel (%p168) target = $region28
        $region27: #{_lambda_.8} parent=23 // pred_region
          %s171 = smul.u32 %s18, 2
          %s172 = sadd.s32 %s171, %s19
          %p173 = scmp.lt.s32.totalorder %s172, 3
          %s174 = scalar_select %p173, %s172, 3
          %s175 = smul.addr %s174, 30
          %s176 = smul.addr %s175, 4
          %s177 = scalar_lea.vmem %s0, %s176
          %s178 = smul.u32 %s18, 2
          %s179 = sadd.s32 %s178, %s19
        $region28: #{_lambda_.8} parent=23 // pred_fallthru
          _
      $region24: #{_lambda_.8} parent=5 // pred_fallthru
        _
      %p180 = scmp.le.s32.totalorder 1, %s11
      %p181 = scmp.lt.s32.totalorder %s11, 5
      %p182 = pnand %p180, %p181
      %p183 = pneg %p182
      // Predicated region
      $region29: #{_lambda_.8} parent=5 // pred_check
        _
      $region30: #{_lambda_.8} parent=5 // pred_check_branch
        %185 = sbr.rel (%p182) target = $region32
      $region31: #{_lambda_.8} parent=5 // pred_region
        %s186 = ssub.s32 %s11, 1
        // Predicated region
        $region33: #{_lambda_.8} parent=31 // pred_check
          %p187 = pneg %p74
        $region34: #{_lambda_.8} parent=31 // pred_check_branch
          %189 = sbr.rel (%p187) target = $region36
        $region35: #{_lambda_.8} parent=31 // pred_region
          %190 = dma.done [#allocation3], 2304
        $region36: #{_lambda_.8} parent=31 // pred_fallthru
          _
        // Predicated region
        $region37: #{_lambda_.8} parent=31 // pred_check
          %p191 = pneg %p95
        $region38: #{_lambda_.8} parent=31 // pred_check_branch
          %193 = sbr.rel (%p191) target = $region40
        $region39: #{_lambda_.8} parent=31 // pred_region
          %194 = dma.done [#allocation5], 16
        $region40: #{_lambda_.8} parent=31 // pred_fallthru
          _
        %s195 = smul.u32 %s20, 2
        %s196 = sadd.s32 %s195, %s21
        %p197 = scmp.lt.s32.totalorder %s196, 3
        %s198 = scalar_select %p197, %s196, 3
        %s199 = smul.addr %s198, 30
        %s200 = smul.addr %s199, 4
        %s201 = scalar_lea.vmem %s0, %s200
        %p202 = pneg %p53
        %p203 = pneg %p50
        %p204 = pneg %p74
        %p205 = pneg %p71
        %p206 = pneg %p95
        %p207 = pneg %p92
        %p208 = pneg %p125
        %p209 = pneg %p122
        %s210 = smul.u32 %s20, 2
        %s211 = sadd.s32 %s210, %s21
        %p212 = scmp.lt.s32.totalorder %s211, 3
        %s213 = scalar_select %p212, %s211, 3
        %s214 = smul.addr %s213, 16
        %s215 = smul.addr %s214, 4
        %s216 = scalar_lea.vmem %s3, %s215
        %s217 = smul.u32 %s20, 2
        %s218 = sadd.s32 %s217, %s21
        %p219 = scmp.lt.s32.totalorder %s218, 3
        %s220 = scalar_select %p219, %s218, 3
        %s221 = smul.addr %s220, 30
        %s222 = smul.addr %s221, 4
        %s223 = scalar_lea.vmem %s0, %s222
        %s224 = smul.u32 %s20, 2
        %s225 = sadd.s32 %s224, %s21
        %s226 = smul.u32 %s20, 2
        %s227 = sadd.s32 %s226, %s21
        %p228 = scmp.lt.s32.totalorder %s227, 3
        %s229 = scalar_select %p228, %s227, 3
        %s230 = smul.addr %s229, 16
        %s231 = smul.addr %s230, 4
        %s232 = scalar_lea.vmem %s3, %s231
        %s233 = smul.u32 %s20, 2
        %s234 = sadd.s32 %s233, %s21
        %v236 = vld [vmem:[%s223] sm:$0xf]
        %v237 = vld [vmem:[%s223 + $0x4] sm:$0xf]
        %v238 = vld [vmem:[%s223 + $0x8] sm:$0x1]
        %v239 = vld [vmem:[%s223 + $0xc] sm:$0xf]
        %v240 = vld [vmem:[%s223 + $0x10] sm:$0xf]
        %v241 = vld [vmem:[%s223 + $0x14] sm:$0x1]
        %v242 = vld [vmem:[%s223 + $0x18] sm:$0xf]
        %v243 = vld [vmem:[%s223 + $0x1c] sm:$0xf]
        %v244 = vld [vmem:[%s223 + $0x20] sm:$0x1]
        %v245 = vld [vmem:[%s223 + $0x24] sm:$0xf]
        %v246 = vld [vmem:[%s223 + $0x28] sm:$0xf]
        %v247 = vld [vmem:[%s223 + $0x2c] sm:$0x1]
        %v248 = vld [vmem:[%s223 + $0x30] sm:$0xf]
        %v249 = vld [vmem:[%s223 + $0x34] sm:$0xf]
        %v250 = vld [vmem:[%s223 + $0x38] sm:$0x1]
        %v251 = vld [vmem:[%s223 + $0x3c] sm:$0xf]
        %v252 = vld [vmem:[%s223 + $0x40] sm:$0xf]
        %v253 = vld [vmem:[%s223 + $0x44] sm:$0x1]
        %v254 = vld [vmem:[%s223 + $0x48] sm:$0xf]
        %v255 = vld [vmem:[%s223 + $0x4c] sm:$0xf]
        %v256 = vld [vmem:[%s223 + $0x50] sm:$0x1]
        %v257 = vld [vmem:[%s223 + $0x54] sm:$0xf]
        %v258 = vld [vmem:[%s223 + $0x58] sm:$0xf]
        %v259 = vld [vmem:[%s223 + $0x5c] sm:$0x1]
        %v260 = vld [vmem:[%s223 + $0x60] sm:$0xf]
        %v261 = vld [vmem:[%s223 + $0x64] sm:$0xf]
        %v262 = vld [vmem:[%s223 + $0x68] sm:$0x1]
        %v263 = vld [vmem:[%s223 + $0x6c] sm:$0xf]
        %v264 = vld [vmem:[%s223 + $0x70] sm:$0xf]
        %v265 = vld [vmem:[%s223 + $0x74] sm:$0x1]
        %v266 = vunpack.c.l.bf16 %v236
        %v267 = vunpack.c.l.bf16 %v237
        %v268 = vunpack.c.l.bf16 %v238
        %v269 = vunpack.c.l.bf16 %v239
        %v270 = vunpack.c.l.bf16 %v240
        %v271 = vunpack.c.l.bf16 %v241
        %v272 = vunpack.c.l.bf16 %v242
        %v273 = vunpack.c.l.bf16 %v243
        %v274 = vunpack.c.l.bf16 %v244
        %v275 = vunpack.c.l.bf16 %v245
        %v276 = vunpack.c.l.bf16 %v246
        %v277 = vunpack.c.l.bf16 %v247
        %v278 = vunpack.c.l.bf16 %v248
        %v279 = vunpack.c.l.bf16 %v249
        %v280 = vunpack.c.l.bf16 %v250
        %v281 = vunpack.c.l.bf16 %v251
        %v282 = vunpack.c.l.bf16 %v252
        %v283 = vunpack.c.l.bf16 %v253
        %v284 = vunpack.c.l.bf16 %v254
        %v285 = vunpack.c.l.bf16 %v255
        %v286 = vunpack.c.l.bf16 %v256
        %v287 = vunpack.c.l.bf16 %v257
        %v288 = vunpack.c.l.bf16 %v258
        %v289 = vunpack.c.l.bf16 %v259
        %v290 = vunpack.c.l.bf16 %v260
        %v291 = vunpack.c.l.bf16 %v261
        %v292 = vunpack.c.l.bf16 %v262
        %v293 = vunpack.c.l.bf16 %v263
        %v294 = vunpack.c.l.bf16 %v264
        %v295 = vunpack.c.l.bf16 %v265
        %v296 = vmax.f32 %v266, 0.0
        %v297 = vmax.f32 %v267, 0.0
        %v298 = vmax.f32 %v268, 0.0
        %v299 = vmax.f32 %v269, 0.0
        %v300 = vmax.f32 %v270, 0.0
        %v301 = vmax.f32 %v271, 0.0
        %v302 = vmax.f32 %v272, 0.0
        %v303 = vmax.f32 %v273, 0.0
        %v304 = vmax.f32 %v274, 0.0
        %v305 = vmax.f32 %v275, 0.0
        %v306 = vmax.f32 %v276, 0.0
        %v307 = vmax.f32 %v277, 0.0
        %v308 = vmax.f32 %v278, 0.0
        %v309 = vmax.f32 %v279, 0.0
        %v310 = vmax.f32 %v280, 0.0
        %v311 = vmax.f32 %v281, 0.0
        %v312 = vmax.f32 %v282, 0.0
        %v313 = vmax.f32 %v283, 0.0
        %v314 = vmax.f32 %v284, 0.0
        %v315 = vmax.f32 %v285, 0.0
        %v316 = vmax.f32 %v286, 0.0
        %v317 = vmax.f32 %v287, 0.0
        %v318 = vmax.f32 %v288, 0.0
        %v319 = vmax.f32 %v289, 0.0
        %v320 = vmax.f32 %v290, 0.0
        %v321 = vmax.f32 %v291, 0.0
        %v322 = vmax.f32 %v292, 0.0
        %v323 = vmax.f32 %v293, 0.0
        %v324 = vmax.f32 %v294, 0.0
        %v325 = vmax.f32 %v295, 0.0
        %vm350 = vcmask 1046528
        %v351 = vrot.slane %v296, 1
        %v352 = vrot.slane %v297, 1
        %v353 = vsel %vm350, %v351, %v352
        %v354 = vrot.slane %v298, 1
        %v355 = vsel %vm350, %v352, %v354
        %v356 = vrot.slane %v299, 1
        %v357 = vrot.slane %v300, 1
        %v358 = vsel %vm350, %v356, %v357
        %v359 = vrot.slane %v301, 1
        %v360 = vsel %vm350, %v357, %v359
        %v361 = vrot.slane %v302, 1
        %v362 = vrot.slane %v303, 1
        %v363 = vsel %vm350, %v361, %v362
        %v364 = vrot.slane %v304, 1
        %v365 = vsel %vm350, %v362, %v364
        %v366 = vrot.slane %v305, 1
        %v367 = vrot.slane %v306, 1
        %v368 = vsel %vm350, %v366, %v367
        %v369 = vrot.slane %v307, 1
        %v370 = vsel %vm350, %v367, %v369
        %v371 = vrot.slane %v308, 1
        %v372 = vrot.slane %v309, 1
        %v373 = vsel %vm350, %v371, %v372
        %v374 = vrot.slane %v310, 1
        %v375 = vsel %vm350, %v372, %v374
        %v376 = vrot.slane %v311, 1
        %v377 = vrot.slane %v312, 1
        %v378 = vsel %vm350, %v376, %v377
        %v379 = vrot.slane %v313, 1
        %v380 = vsel %vm350, %v377, %v379
        %v381 = vrot.slane %v314, 1
        %v382 = vrot.slane %v315, 1
        %v383 = vsel %vm350, %v381, %v382
        %v384 = vrot.slane %v316, 1
        %v385 = vsel %vm350, %v382, %v384
        %v386 = vrot.slane %v317, 1
        %v387 = vrot.slane %v318, 1
        %v388 = vsel %vm350, %v386, %v387
        %v389 = vrot.slane %v319, 1
        %v390 = vsel %vm350, %v387, %v389
        %391 = vrot.lane.b32.xlu0 %v353, 32
        %v392 = vpop.permute.xlu0 %391
        %393 = vrot.lane.b32.xlu0 %v355, 32
        %v394 = vpop.permute.xlu0 %393
        %395 = vrot.lane.b32.xlu0 %v358, 32
        %v396 = vpop.permute.xlu0 %395
        %397 = vrot.lane.b32.xlu0 %v360, 32
        %v398 = vpop.permute.xlu0 %397
        %399 = vrot.lane.b32.xlu0 %v363, 32
        %v400 = vpop.permute.xlu0 %399
        %401 = vrot.lane.b32.xlu0 %v365, 32
        %v402 = vpop.permute.xlu0 %401
        %403 = vrot.lane.b32.xlu0 %v368, 32
        %v404 = vpop.permute.xlu0 %403
        %405 = vrot.lane.b32.xlu0 %v370, 32
        %v406 = vpop.permute.xlu0 %405
        %407 = vrot.lane.b32.xlu0 %v373, 32
        %v408 = vpop.permute.xlu0 %407
        %409 = vrot.lane.b32.xlu0 %v375, 32
        %v410 = vpop.permute.xlu0 %409
        %411 = vrot.lane.b32.xlu0 %v378, 32
        %v412 = vpop.permute.xlu0 %411
        %413 = vrot.lane.b32.xlu0 %v380, 32
        %v414 = vpop.permute.xlu0 %413
        %415 = vrot.lane.b32.xlu0 %v383, 32
        %v416 = vpop.permute.xlu0 %415
        %417 = vrot.lane.b32.xlu0 %v385, 32
        %v418 = vpop.permute.xlu0 %417
        %419 = vrot.lane.b32.xlu0 %v388, 32
        %v420 = vpop.permute.xlu0 %419
        %421 = vrot.lane.b32.xlu0 %v390, 32
        %v422 = vpop.permute.xlu0 %421
        %vm439 = vcmask 1045504
        %v440 = vrot.slane %v296, 2
        %v441 = vrot.slane %v297, 2
        %v442 = vsel %vm439, %v440, %v441
        %v443 = vrot.slane %v298, 2
        %v444 = vsel %vm439, %v441, %v443
        %v445 = vrot.slane %v299, 2
        %v446 = vrot.slane %v300, 2
        %v447 = vsel %vm439, %v445, %v446
        %v448 = vrot.slane %v301, 2
        %v449 = vsel %vm439, %v446, %v448
        %v450 = vrot.slane %v302, 2
        %v451 = vrot.slane %v303, 2
        %v452 = vsel %vm439, %v450, %v451
        %v453 = vrot.slane %v304, 2
        %v454 = vsel %vm439, %v451, %v453
        %v455 = vrot.slane %v305, 2
        %v456 = vrot.slane %v306, 2
        %v457 = vsel %vm439, %v455, %v456
        %v458 = vrot.slane %v307, 2
        %v459 = vsel %vm439, %v456, %v458
        %v460 = vrot.slane %v308, 2
        %v461 = vrot.slane %v309, 2
        %v462 = vsel %vm439, %v460, %v461
        %v463 = vrot.slane %v310, 2
        %v464 = vsel %vm439, %v461, %v463
        %v465 = vrot.slane %v311, 2
        %v466 = vrot.slane %v312, 2
        %v467 = vsel %vm439, %v465, %v466
        %v468 = vrot.slane %v313, 2
        %v469 = vsel %vm439, %v466, %v468
        %v470 = vrot.slane %v314, 2
        %v471 = vrot.slane %v315, 2
        %v472 = vsel %vm439, %v470, %v471
        %v473 = vrot.slane %v316, 2
        %v474 = vsel %vm439, %v471, %v473
        %v475 = vrot.slane %v317, 2
        %v476 = vrot.slane %v318, 2
        %v477 = vsel %vm439, %v475, %v476
        %v478 = vrot.slane %v319, 2
        %v479 = vsel %vm439, %v476, %v478
        %480 = vrot.lane.b32.xlu0 %v442, 64
        %v481 = vpop.permute.xlu0 %480
        %482 = vrot.lane.b32.xlu0 %v444, 64
        %v483 = vpop.permute.xlu0 %482
        %484 = vrot.lane.b32.xlu0 %v447, 64
        %v485 = vpop.permute.xlu0 %484
        %486 = vrot.lane.b32.xlu0 %v449, 64
        %v487 = vpop.permute.xlu0 %486
        %488 = vrot.lane.b32.xlu0 %v452, 64
        %v489 = vpop.permute.xlu0 %488
        %490 = vrot.lane.b32.xlu0 %v454, 64
        %v491 = vpop.permute.xlu0 %490
        %492 = vrot.lane.b32.xlu0 %v457, 64
        %v493 = vpop.permute.xlu0 %492
        %494 = vrot.lane.b32.xlu0 %v459, 64
        %v495 = vpop.permute.xlu0 %494
        %496 = vrot.lane.b32.xlu0 %v462, 64
        %v497 = vpop.permute.xlu0 %496
        %498 = vrot.lane.b32.xlu0 %v464, 64
        %v499 = vpop.permute.xlu0 %498
        %500 = vrot.lane.b32.xlu0 %v467, 64
        %v501 = vpop.permute.xlu0 %500
        %502 = vrot.lane.b32.xlu0 %v469, 64
        %v503 = vpop.permute.xlu0 %502
        %504 = vrot.lane.b32.xlu0 %v472, 64
        %v505 = vpop.permute.xlu0 %504
        %506 = vrot.lane.b32.xlu0 %v474, 64
        %v507 = vpop.permute.xlu0 %506
        %508 = vrot.lane.b32.xlu0 %v477, 64
        %v509 = vpop.permute.xlu0 %508
        %510 = vrot.lane.b32.xlu0 %v479, 64
        %v511 = vpop.permute.xlu0 %510
        %530 = vrot.lane.b32.xlu0 %v299, 96
        %v531 = vpop.permute.xlu0 %530
        %532 = vrot.lane.b32.xlu0 %v300, 96
        %v533 = vpop.permute.xlu0 %532
        %534 = vrot.lane.b32.xlu0 %v302, 96
        %v535 = vpop.permute.xlu0 %534
        %536 = vrot.lane.b32.xlu0 %v303, 96
        %v537 = vpop.permute.xlu0 %536
        %538 = vrot.lane.b32.xlu0 %v305, 96
        %v539 = vpop.permute.xlu0 %538
        %540 = vrot.lane.b32.xlu0 %v306, 96
        %v541 = vpop.permute.xlu0 %540
        %542 = vrot.lane.b32.xlu0 %v308, 96
        %v543 = vpop.permute.xlu0 %542
        %544 = vrot.lane.b32.xlu0 %v309, 96
        %v545 = vpop.permute.xlu0 %544
        %546 = vrot.lane.b32.xlu0 %v311, 96
        %v547 = vpop.permute.xlu0 %546
        %548 = vrot.lane.b32.xlu0 %v312, 96
        %v549 = vpop.permute.xlu0 %548
        %550 = vrot.lane.b32.xlu0 %v314, 96
        %v551 = vpop.permute.xlu0 %550
        %552 = vrot.lane.b32.xlu0 %v315, 96
        %v553 = vpop.permute.xlu0 %552
        %554 = vrot.lane.b32.xlu0 %v317, 96
        %v555 = vpop.permute.xlu0 %554
        %556 = vrot.lane.b32.xlu0 %v318, 96
        %v557 = vpop.permute.xlu0 %556
        %558 = vrot.lane.b32.xlu0 %v320, 96
        %v559 = vpop.permute.xlu0 %558
        %560 = vrot.lane.b32.xlu0 %v321, 96
        %v561 = vpop.permute.xlu0 %560
        %v579 = vrot.slane %v320, 1
        %v580 = vrot.slane %v321, 1
        %v581 = vsel %vm350, %v579, %v580
        %v582 = vrot.slane %v322, 1
        %v583 = vsel %vm350, %v580, %v582
        %v600 = vrot.slane %v320, 2
        %v601 = vrot.slane %v321, 2
        %v602 = vsel %vm439, %v600, %v601
        %v603 = vrot.slane %v322, 2
        %v604 = vsel %vm439, %v601, %v603
        %605 = vrot.lane.b32.xlu0 %v447, 32
        %v606 = vpop.permute.xlu0 %605
        %607 = vrot.lane.b32.xlu0 %v449, 32
        %v608 = vpop.permute.xlu0 %607
        %609 = vrot.lane.b32.xlu0 %v452, 32
        %v610 = vpop.permute.xlu0 %609
        %611 = vrot.lane.b32.xlu0 %v454, 32
        %v612 = vpop.permute.xlu0 %611
        %613 = vrot.lane.b32.xlu0 %v457, 32
        %v614 = vpop.permute.xlu0 %613
        %615 = vrot.lane.b32.xlu0 %v459, 32
        %v616 = vpop.permute.xlu0 %615
        %617 = vrot.lane.b32.xlu0 %v462, 32
        %v618 = vpop.permute.xlu0 %617
        %619 = vrot.lane.b32.xlu0 %v464, 32
        %v620 = vpop.permute.xlu0 %619
        %621 = vrot.lane.b32.xlu0 %v467, 32
        %v622 = vpop.permute.xlu0 %621
        %623 = vrot.lane.b32.xlu0 %v469, 32
        %v624 = vpop.permute.xlu0 %623
        %625 = vrot.lane.b32.xlu0 %v472, 32
        %v626 = vpop.permute.xlu0 %625
        %627 = vrot.lane.b32.xlu0 %v474, 32
        %v628 = vpop.permute.xlu0 %627
        %629 = vrot.lane.b32.xlu0 %v477, 32
        %v630 = vpop.permute.xlu0 %629
        %631 = vrot.lane.b32.xlu0 %v479, 32
        %v632 = vpop.permute.xlu0 %631
        %633 = vrot.lane.b32.xlu0 %v602, 32
        %v634 = vpop.permute.xlu0 %633
        %635 = vrot.lane.b32.xlu0 %v604, 32
        %v636 = vpop.permute.xlu0 %635
        %655 = vrot.lane.b32.xlu0 %v302, 64
        %v656 = vpop.permute.xlu0 %655
        %657 = vrot.lane.b32.xlu0 %v303, 64
        %v658 = vpop.permute.xlu0 %657
        %659 = vrot.lane.b32.xlu0 %v305, 64
        %v660 = vpop.permute.xlu0 %659
        %661 = vrot.lane.b32.xlu0 %v306, 64
        %v662 = vpop.permute.xlu0 %661
        %663 = vrot.lane.b32.xlu0 %v308, 64
        %v664 = vpop.permute.xlu0 %663
        %665 = vrot.lane.b32.xlu0 %v309, 64
        %v666 = vpop.permute.xlu0 %665
        %667 = vrot.lane.b32.xlu0 %v311, 64
        %v668 = vpop.permute.xlu0 %667
        %669 = vrot.lane.b32.xlu0 %v312, 64
        %v670 = vpop.permute.xlu0 %669
        %671 = vrot.lane.b32.xlu0 %v314, 64
        %v672 = vpop.permute.xlu0 %671
        %673 = vrot.lane.b32.xlu0 %v315, 64
        %v674 = vpop.permute.xlu0 %673
        %675 = vrot.lane.b32.xlu0 %v317, 64
        %v676 = vpop.permute.xlu0 %675
        %677 = vrot.lane.b32.xlu0 %v318, 64
        %v678 = vpop.permute.xlu0 %677
        %679 = vrot.lane.b32.xlu0 %v320, 64
        %v680 = vpop.permute.xlu0 %679
        %681 = vrot.lane.b32.xlu0 %v321, 64
        %v682 = vpop.permute.xlu0 %681
        %683 = vrot.lane.b32.xlu0 %v323, 64
        %v684 = vpop.permute.xlu0 %683
        %685 = vrot.lane.b32.xlu0 %v324, 64
        %v686 = vpop.permute.xlu0 %685
        %v704 = vrot.slane %v323, 1
        %v705 = vrot.slane %v324, 1
        %v706 = vsel %vm350, %v704, %v705
        %v707 = vrot.slane %v325, 1
        %v708 = vsel %vm350, %v705, %v707
        %709 = vrot.lane.b32.xlu0 %v363, 96
        %v710 = vpop.permute.xlu0 %709
        %711 = vrot.lane.b32.xlu0 %v365, 96
        %v712 = vpop.permute.xlu0 %711
        %713 = vrot.lane.b32.xlu0 %v368, 96
        %v714 = vpop.permute.xlu0 %713
        %715 = vrot.lane.b32.xlu0 %v370, 96
        %v716 = vpop.permute.xlu0 %715
        %717 = vrot.lane.b32.xlu0 %v373, 96
        %v718 = vpop.permute.xlu0 %717
        %719 = vrot.lane.b32.xlu0 %v375, 96
        %v720 = vpop.permute.xlu0 %719
        %721 = vrot.lane.b32.xlu0 %v378, 96
        %v722 = vpop.permute.xlu0 %721
        %723 = vrot.lane.b32.xlu0 %v380, 96
        %v724 = vpop.permute.xlu0 %723
        %725 = vrot.lane.b32.xlu0 %v383, 96
        %v726 = vpop.permute.xlu0 %725
        %727 = vrot.lane.b32.xlu0 %v385, 96
        %v728 = vpop.permute.xlu0 %727
        %729 = vrot.lane.b32.xlu0 %v388, 96
        %v730 = vpop.permute.xlu0 %729
        %731 = vrot.lane.b32.xlu0 %v390, 96
        %v732 = vpop.permute.xlu0 %731
        %733 = vrot.lane.b32.xlu0 %v581, 96
        %v734 = vpop.permute.xlu0 %733
        %735 = vrot.lane.b32.xlu0 %v583, 96
        %v736 = vpop.permute.xlu0 %735
        %737 = vrot.lane.b32.xlu0 %v706, 96
        %v738 = vpop.permute.xlu0 %737
        %739 = vrot.lane.b32.xlu0 %v708, 96
        %v740 = vpop.permute.xlu0 %739
        %v757 = vrot.slane %v323, 2
        %v758 = vrot.slane %v324, 2
        %v759 = vsel %vm439, %v757, %v758
        %v760 = vrot.slane %v325, 2
        %v761 = vsel %vm439, %v758, %v760
        %vm778 = vcmask 261120
        %v779 = vsel %vm778, %v296, %v392
        %v780 = vsel %vm778, %v297, %v394
        %v781 = vsel %vm778, %v299, %v396
        %v782 = vsel %vm778, %v300, %v398
        %v783 = vsel %vm778, %v302, %v400
        %v784 = vsel %vm778, %v303, %v402
        %v785 = vsel %vm778, %v305, %v404
        %v786 = vsel %vm778, %v306, %v406
        %v787 = vsel %vm778, %v308, %v408
        %v788 = vsel %vm778, %v309, %v410
        %v789 = vsel %vm778, %v311, %v412
        %v790 = vsel %vm778, %v312, %v414
        %v791 = vsel %vm778, %v314, %v416
        %v792 = vsel %vm778, %v315, %v418
        %v793 = vsel %vm778, %v317, %v420
        %v794 = vsel %vm778, %v318, %v422
        %vm795 = vcmask 523264
        %v796 = vsel %vm795, %v779, %v481
        %v797 = vsel %vm795, %v780, %v483
        %v798 = vsel %vm795, %v781, %v485
        %v799 = vsel %vm795, %v782, %v487
        %v800 = vsel %vm795, %v783, %v489
        %v801 = vsel %vm795, %v784, %v491
        %v802 = vsel %vm795, %v785, %v493
        %v803 = vsel %vm795, %v786, %v495
        %v804 = vsel %vm795, %v787, %v497
        %v805 = vsel %vm795, %v788, %v499
        %v806 = vsel %vm795, %v789, %v501
        %v807 = vsel %vm795, %v790, %v503
        %v808 = vsel %vm795, %v791, %v505
        %v809 = vsel %vm795, %v792, %v507
        %v810 = vsel %vm795, %v793, %v509
        %v811 = vsel %vm795, %v794, %v511
        %vm812 = vcmask 785408
        %v813 = vsel %vm812, %v796, %v531
        %v814 = vsel %vm812, %v797, %v533
        %v815 = vsel %vm812, %v798, %v535
        %v816 = vsel %vm812, %v799, %v537
        %v817 = vsel %vm812, %v800, %v539
        %v818 = vsel %vm812, %v801, %v541
        %v819 = vsel %vm812, %v802, %v543
        %v820 = vsel %vm812, %v803, %v545
        %v821 = vsel %vm812, %v804, %v547
        %v822 = vsel %vm812, %v805, %v549
        %v823 = vsel %vm812, %v806, %v551
        %v824 = vsel %vm812, %v807, %v553
        %v825 = vsel %vm812, %v808, %v555
        %v826 = vsel %vm812, %v809, %v557
        %v827 = vsel %vm812, %v810, %v559
        %v828 = vsel %vm812, %v811, %v561
        %v829 = vsel %vm778, %v358, %v606
        %v830 = vsel %vm778, %v360, %v608
        %v831 = vsel %vm778, %v363, %v610
        %v832 = vsel %vm778, %v365, %v612
        %v833 = vsel %vm778, %v368, %v614
        %v834 = vsel %vm778, %v370, %v616
        %v835 = vsel %vm778, %v373, %v618
        %v836 = vsel %vm778, %v375, %v620
        %v837 = vsel %vm778, %v378, %v622
        %v838 = vsel %vm778, %v380, %v624
        %v839 = vsel %vm778, %v383, %v626
        %v840 = vsel %vm778, %v385, %v628
        %v841 = vsel %vm778, %v388, %v630
        %v842 = vsel %vm778, %v390, %v632
        %v843 = vsel %vm778, %v581, %v634
        %v844 = vsel %vm778, %v583, %v636
        %v845 = vsel %vm795, %v829, %v656
        %v846 = vsel %vm795, %v830, %v658
        %v847 = vsel %vm795, %v831, %v660
        %v848 = vsel %vm795, %v832, %v662
        %v849 = vsel %vm795, %v833, %v664
        %v850 = vsel %vm795, %v834, %v666
        %v851 = vsel %vm795, %v835, %v668
        %v852 = vsel %vm795, %v836, %v670
        %v853 = vsel %vm795, %v837, %v672
        %v854 = vsel %vm795, %v838, %v674
        %v855 = vsel %vm795, %v839, %v676
        %v856 = vsel %vm795, %v840, %v678
        %v857 = vsel %vm795, %v841, %v680
        %v858 = vsel %vm795, %v842, %v682
        %v859 = vsel %vm795, %v843, %v684
        %v860 = vsel %vm795, %v844, %v686
        %v861 = vsel %vm812, %v845, %v710
        %v862 = vsel %vm812, %v846, %v712
        %v863 = vsel %vm812, %v847, %v714
        %v864 = vsel %vm812, %v848, %v716
        %v865 = vsel %vm812, %v849, %v718
        %v866 = vsel %vm812, %v850, %v720
        %v867 = vsel %vm812, %v851, %v722
        %v868 = vsel %vm812, %v852, %v724
        %v869 = vsel %vm812, %v853, %v726
        %v870 = vsel %vm812, %v854, %v728
        %v871 = vsel %vm812, %v855, %v730
        %v872 = vsel %vm812, %v856, %v732
        %v873 = vsel %vm812, %v857, %v734
        %v874 = vsel %vm812, %v858, %v736
        %v875 = vsel %vm812, %v859, %v738
        %v876 = vsel %vm812, %v860, %v740
        %v877 = vpack.c.bf16 %v814, %v813
        %v878 = vpack.c.bf16 %v862, %v861
        %v879 = vpack.c.bf16 %v454, %v452
        %v880 = vpack.c.bf16 %v816, %v815
        %v881 = vpack.c.bf16 %v864, %v863
        %v882 = vpack.c.bf16 %v459, %v457
        %v883 = vpack.c.bf16 %v818, %v817
        %v884 = vpack.c.bf16 %v866, %v865
        %v885 = vpack.c.bf16 %v464, %v462
        %v886 = vpack.c.bf16 %v820, %v819
        %v887 = vpack.c.bf16 %v868, %v867
        %v888 = vpack.c.bf16 %v469, %v467
        %v889 = vpack.c.bf16 %v822, %v821
        %v890 = vpack.c.bf16 %v870, %v869
        %v891 = vpack.c.bf16 %v474, %v472
        %v892 = vpack.c.bf16 %v824, %v823
        %v893 = vpack.c.bf16 %v872, %v871
        %v894 = vpack.c.bf16 %v479, %v477
        %v895 = vpack.c.bf16 %v826, %v825
        %v896 = vpack.c.bf16 %v874, %v873
        %v897 = vpack.c.bf16 %v604, %v602
        %v898 = vpack.c.bf16 %v828, %v827
        %v899 = vpack.c.bf16 %v876, %v875
        %v900 = vpack.c.bf16 %v761, %v759
        %v901 = vld [vmem:[#allocation2] sm:$0xf]
        %v902 = vld [vmem:[#allocation2 + $0x4] sm:$0xf]
        %v903 = vld [vmem:[#allocation2 + $0x8] sm:$0xf]
        %v904 = vld [vmem:[#allocation2 + $0xc] sm:$0xf]
        %v905 = vld [vmem:[#allocation2 + $0x10] sm:$0xf]
        %v906 = vld [vmem:[#allocation2 + $0x14] sm:$0xf]
        %v907 = vld [vmem:[#allocation2 + $0x18] sm:$0xf]
        %v908 = vld [vmem:[#allocation2 + $0x1c] sm:$0xf]
        %v909 = vld [vmem:[#allocation2 + $0x20] sm:$0xf]
        %v910 = vld [vmem:[#allocation2 + $0x24] sm:$0xf]
        %v911 = vld [vmem:[#allocation2 + $0x28] sm:$0xf]
        %v912 = vld [vmem:[#allocation2 + $0x2c] sm:$0xf]
        %v913 = vld [vmem:[#allocation2 + $0x30] sm:$0xf]
        %v914 = vld [vmem:[#allocation2 + $0x34] sm:$0xf]
        %v915 = vld [vmem:[#allocation2 + $0x38] sm:$0xf]
        %v916 = vld [vmem:[#allocation2 + $0x3c] sm:$0xf]
        %v917 = vld [vmem:[#allocation2 + $0x40] sm:$0xf]
        %v918 = vld [vmem:[#allocation2 + $0x44] sm:$0xf]
        %v919 = vld [vmem:[#allocation2 + $0x48] sm:$0xf]
        %v920 = vld [vmem:[#allocation2 + $0x4c] sm:$0xf]
        %v921 = vld [vmem:[#allocation2 + $0x50] sm:$0xf]
        %v922 = vld [vmem:[#allocation2 + $0x54] sm:$0xf]
        %v923 = vld [vmem:[#allocation2 + $0x58] sm:$0xf]
        %v924 = vld [vmem:[#allocation2 + $0x5c] sm:$0xf]
        %v925 = vld [vmem:[#allocation2 + $0x60] sm:$0xf]
        %v926 = vld [vmem:[#allocation2 + $0x64] sm:$0xf]
        %v927 = vld [vmem:[#allocation2 + $0x68] sm:$0xf]
        %v928 = vld [vmem:[#allocation2 + $0x6c] sm:$0xf]
        %v929 = vld [vmem:[#allocation2 + $0x70] sm:$0xf]
        %v930 = vld [vmem:[#allocation2 + $0x74] sm:$0xf]
        %v931 = vld [vmem:[#allocation2 + $0x78] sm:$0xf]
        %v932 = vld [vmem:[#allocation2 + $0x7c] sm:$0xf]
        %v933 = vld [vmem:[#allocation2 + $0x80] sm:$0xf]
        %v934 = vld [vmem:[#allocation2 + $0x84] sm:$0xf]
        %v935 = vld [vmem:[#allocation2 + $0x88] sm:$0xf]
        %v936 = vld [vmem:[#allocation2 + $0x8c] sm:$0xf]
        %v937 = vld [vmem:[#allocation4] sm:$0x1]
        %v939 = vlaneseq
        %v940 = vshrl.u32 %v939, 7
        %v941 = vsub.s32 0, %v940
        %v942 = vrot.slane %v937, %v941
        %v980 = vunpack.c.l.b16 %v901
        %v981 = vunpack.c.l.b16 %v902
        %v982 = vunpack.c.l.b16 %v903
        %v983 = vunpack.c.l.b16 %v904
        %v984 = vunpack.c.l.b16 %v905
        %v985 = vunpack.c.l.b16 %v906
        %v986 = vunpack.c.l.b16 %v907
        %v987 = vunpack.c.l.b16 %v908
        %v988 = vunpack.c.l.b16 %v909
        %v989 = vunpack.c.l.b16 %v910
        %v990 = vunpack.c.l.b16 %v911
        %v991 = vunpack.c.l.b16 %v912
        %v992 = vunpack.c.l.b16 %v913
        %v993 = vunpack.c.l.b16 %v914
        %v994 = vunpack.c.l.b16 %v915
        %v995 = vunpack.c.l.b16 %v916
        %v996 = vunpack.c.l.b16 %v917
        %v997 = vunpack.c.l.b16 %v918
        %v998 = vunpack.c.l.b16 %v919
        %v999 = vunpack.c.l.b16 %v920
        %v1000 = vunpack.c.l.b16 %v921
        %v1001 = vunpack.c.l.b16 %v922
        %v1002 = vunpack.c.l.b16 %v923
        %v1003 = vunpack.c.l.b16 %v924
        %v1004 = vunpack.c.l.b16 %v925
        %v1005 = vunpack.c.l.b16 %v926
        %v1006 = vunpack.c.l.b16 %v927
        %v1007 = vunpack.c.l.b16 %v928
        %v1008 = vunpack.c.l.b16 %v929
        %v1009 = vunpack.c.l.b16 %v930
        %v1010 = vunpack.c.l.b16 %v931
        %v1011 = vunpack.c.l.b16 %v932
        %v1012 = vunpack.c.l.b16 %v933
        %v1013 = vunpack.c.l.b16 %v934
        %v1014 = vunpack.c.l.b16 %v935
        %v1015 = vunpack.c.l.b16 %v936
        %v1016 = vpack.c.b16 %v981, %v980
        %v1017 = vpack.c.b16 %v983, %v982
        %v1018 = vpack.c.b16 %v985, %v984
        %v1019 = vpack.c.b16 %v987, %v986
        %v1020 = vpack.c.b16 %v989, %v988
        %v1021 = vpack.c.b16 %v991, %v990
        %v1022 = vpack.c.b16 %v993, %v992
        %v1023 = vpack.c.b16 %v995, %v994
        %v1024 = vpack.c.b16 %v997, %v996
        %v1025 = vpack.c.b16 %v999, %v998
        %v1026 = vpack.c.b16 %v1001, %v1000
        %v1027 = vpack.c.b16 %v1003, %v1002
        %v1028 = vpack.c.b16 %v1005, %v1004
        %v1029 = vpack.c.b16 %v1007, %v1006
        %v1030 = vpack.c.b16 %v1009, %v1008
        %v1031 = vpack.c.b16 %v1011, %v1010
        %v1032 = vpack.c.b16 %v1013, %v1012
        %v1033 = vpack.c.b16 %v1015, %v1014
        %v1053 = vsel %vm778, %v879, 0
        %v1056 = vsel %vm778, %v882, 0
        %v1059 = vsel %vm778, %v885, 0
        %v1062 = vsel %vm778, %v888, 0
        %v1065 = vsel %vm778, %v891, 0
        %v1068 = vsel %vm778, %v894, 0
        %v1071 = vsel %vm778, %v897, 0
        %v1074 = vsel %vm778, %v900, 0
        %1076 = vmatprep.subr.bf16.mxu0 0
        %1077 = vmatpush1.bf16.msra.mxu0 %v1016
        %1078 = vmatprep.subr.bf16.mxu0 0
        %1079 = vmatpush1.bf16.msra.mxu0 %v1017
        %1080 = vmatprep.subr.bf16.mxu0 0
        %1081 = vmatpush1.bf16.msra.mxu0 %v1018
        %1082 = vmatprep.subr.bf16.mxu0 0
        %1083 = vmatpush1.bf16.msra.mxu0 %v1019
        %1084 = vmatprep.subr.bf16.mxu0 0
        %1085 = vmatpush1.bf16.msra.mxu0 %v1020
        %1086 = vmatprep.subr.bf16.mxu0 0
        %1087 = vmatpush1.bf16.msra.mxu0 %v1021
        %1088 = vmatprep.subr.bf16.mxu0 0
        %1089 = vmatpush1.bf16.msra.mxu0 %v1022
        %1090 = vmatprep.subr.bf16.mxu0 0
        %1091 = vmatpush1.bf16.msra.mxu0 %v1023
        %1092 = vmatprep.subr.bf16.mxu0 0
        %1093 = vmatpush1.bf16.msra.mxu0 %v1024
        %1094 = vmatprep.subr.bf16.mxu0 0
        %1095 = vmatpush1.bf16.msra.mxu0 %v1025
        %1096 = vmatprep.subr.bf16.mxu0 0
        %1097 = vmatpush1.bf16.msra.mxu0 %v1026
        %1098 = vmatprep.subr.bf16.mxu0 0
        %1099 = vmatpush1.bf16.msra.mxu0 %v1027
        %1100 = vmatprep.subr.bf16.mxu0 0
        %1101 = vmatpush1.bf16.msra.mxu0 %v1028
        %1102 = vmatprep.subr.bf16.mxu0 0
        %1103 = vmatpush1.bf16.msra.mxu0 %v1029
        %1104 = vmatprep.subr.bf16.mxu0 0
        %1105 = vmatpush1.bf16.msra.mxu0 %v1030
        %1106 = vmatprep.subr.bf16.mxu0 0
        %1107 = vmatpush1.bf16.msra.mxu0 %v1031
        %1108 = vmatprep.mubr.bf16.mxu0 %v878
        %1109 = vmatmul.mubr.bf16.gmra.mrb[0].mxu0 %v877
        %v1110 = vpop.f32.mrb[0].mxu0
        %v1111 = vadd.f32 %v942, %v1110
        %v1112 = vpop.f32.mrb[0].mxu0
        %v1113 = vpop.f32.mrb[0].mxu0
        %v1114 = vadd.f32 %v942, %v1113
        %v1115 = vpop.f32.mrb[0].mxu0
        %1116 = vmatprep.mubr.bf16.mxu0 %v881
        %1117 = vmatmul.mubr.bf16.gmra.mrb[0].mxu0 %v880
        %v1118 = vpop.f32.mrb[0].mxu0
        %v1119 = vadd.f32 %v942, %v1118
        %v1120 = vpop.f32.mrb[0].mxu0
        %v1121 = vpop.f32.mrb[0].mxu0
        %v1122 = vadd.f32 %v942, %v1121
        %v1123 = vpop.f32.mrb[0].mxu0
        %1124 = vmatprep.mubr.bf16.mxu0 %v884
        %1125 = vmatmul.mubr.bf16.gmra.mrb[0].mxu0 %v883
        %v1126 = vpop.f32.mrb[0].mxu0
        %v1127 = vadd.f32 %v942, %v1126
        %v1128 = vpop.f32.mrb[0].mxu0
        %v1129 = vpop.f32.mrb[0].mxu0
        %v1130 = vadd.f32 %v942, %v1129
        %v1131 = vpop.f32.mrb[0].mxu0
        %1132 = vmatprep.mubr.bf16.mxu0 %v887
        %1133 = vmatmul.mubr.bf16.gmra.mrb[0].mxu0 %v886
        %v1134 = vpop.f32.mrb[0].mxu0
        %v1135 = vadd.f32 %v942, %v1134
        %v1136 = vpop.f32.mrb[0].mxu0
        %v1137 = vpop.f32.mrb[0].mxu0
        %v1138 = vadd.f32 %v942, %v1137
        %v1139 = vpop.f32.mrb[0].mxu0
        %1140 = vmatprep.mubr.bf16.mxu0 %v890
        %1141 = vmatmul.mubr.bf16.gmra.mrb[0].mxu0 %v889
        %v1142 = vpop.f32.mrb[0].mxu0
        %v1143 = vadd.f32 %v942, %v1142
        %v1144 = vpop.f32.mrb[0].mxu0
        %v1145 = vpop.f32.mrb[0].mxu0
        %v1146 = vadd.f32 %v942, %v1145
        %v1147 = vpop.f32.mrb[0].mxu0
        %1148 = vmatprep.mubr.bf16.mxu0 %v893
        %1149 = vmatmul.mubr.bf16.gmra.mrb[0].mxu0 %v892
        %v1150 = vpop.f32.mrb[0].mxu0
        %v1151 = vadd.f32 %v942, %v1150
        %v1152 = vpop.f32.mrb[0].mxu0
        %v1153 = vpop.f32.mrb[0].mxu0
        %v1154 = vadd.f32 %v942, %v1153
        %v1155 = vpop.f32.mrb[0].mxu0
        %1156 = vmatprep.mubr.bf16.mxu0 %v896
        %1157 = vmatmul.mubr.bf16.gmra.mrb[0].mxu0 %v895
        %v1158 = vpop.f32.mrb[0].mxu0
        %v1159 = vadd.f32 %v942, %v1158
        %v1160 = vpop.f32.mrb[0].mxu0
        %v1161 = vpop.f32.mrb[0].mxu0
        %v1162 = vadd.f32 %v942, %v1161
        %v1163 = vpop.f32.mrb[0].mxu0
        %1164 = vmatprep.mubr.bf16.mxu0 %v899
        %1165 = vmatmul.mubr.bf16.gmra.mrb[0].mxu0 %v898
        %v1166 = vpop.f32.mrb[0].mxu0
        %v1167 = vadd.f32 %v942, %v1166
        %v1168 = vpop.f32.mrb[0].mxu0
        %v1169 = vpop.f32.mrb[0].mxu0
        %v1170 = vadd.f32 %v942, %v1169
        %v1171 = vpop.f32.mrb[0].mxu0
        %1172 = vdwg.mxu0
        %1173 = vmatprep.subr.bf16.mxu0 0
        %1174 = vmatpush1.bf16.msra.mxu0 %v1032
        %1175 = vmatprep.subr.bf16.mxu0 0
        %1176 = vmatpush1.bf16.msra.mxu0 %v1033
        %1177 = vmatprep.subr.bf16.mxu0 0
        %1178 = vmatpush1.bf16.msra.mxu0 0
        %1179 = vmatprep.subr.bf16.mxu0 0
        %1180 = vmatpush1.bf16.msra.mxu0 0
        %1181 = vmatprep.subr.bf16.mxu0 0
        %1182 = vmatpush1.bf16.msra.mxu0 0
        %1183 = vmatprep.subr.bf16.mxu0 0
        %1184 = vmatpush1.bf16.msra.mxu0 0
        %1185 = vmatprep.subr.bf16.mxu0 0
        %1186 = vmatpush1.bf16.msra.mxu0 0
        %1187 = vmatprep.subr.bf16.mxu0 0
        %1188 = vmatpush1.bf16.msra.mxu0 0
        %1189 = vmatprep.subr.bf16.mxu0 0
        %1190 = vmatpush1.bf16.msra.mxu0 0
        %1191 = vmatprep.subr.bf16.mxu0 0
        %1192 = vmatpush1.bf16.msra.mxu0 0
        %1193 = vmatprep.subr.bf16.mxu0 0
        %1194 = vmatpush1.bf16.msra.mxu0 0
        %1195 = vmatprep.subr.bf16.mxu0 0
        %1196 = vmatpush1.bf16.msra.mxu0 0
        %1197 = vmatprep.subr.bf16.mxu0 0
        %1198 = vmatpush1.bf16.msra.mxu0 0
        %1199 = vmatprep.subr.bf16.mxu0 0
        %1200 = vmatpush1.bf16.msra.mxu0 0
        %1201 = vmatprep.subr.bf16.mxu0 0
        %1202 = vmatpush1.bf16.msra.mxu0 0
        %1203 = vmatprep.subr.bf16.mxu0 0
        %1204 = vmatpush1.bf16.msra.mxu0 0
        %1205 = vmatprep.mubr.bf16.mxu0 0
        %1206 = vmatmul.mubr.bf16.gmra.mrb[0].mxu0 %v1053
        %v1207 = vpop.f32.mrb[0].mxu0
        %v1208 = vadd.f32 %v1111, %v1207
        %v1209 = vpop.f32.mrb[0].mxu0
        %v1210 = vpop.f32.mrb[0].mxu0
        %v1211 = vadd.f32 %v1114, %v1210
        %v1212 = vpop.f32.mrb[0].mxu0
        %1213 = vmatprep.mubr.bf16.mxu0 0
        %1214 = vmatmul.mubr.bf16.gmra.mrb[0].mxu0 %v1056
        %v1215 = vpop.f32.mrb[0].mxu0
        %v1216 = vadd.f32 %v1119, %v1215
        %v1217 = vpop.f32.mrb[0].mxu0
        %v1218 = vpop.f32.mrb[0].mxu0
        %v1219 = vadd.f32 %v1122, %v1218
        %v1220 = vpop.f32.mrb[0].mxu0
        %1221 = vmatprep.mubr.bf16.mxu0 0
        %1222 = vmatmul.mubr.bf16.gmra.mrb[0].mxu0 %v1059
        %v1223 = vpop.f32.mrb[0].mxu0
        %v1224 = vadd.f32 %v1127, %v1223
        %v1225 = vpop.f32.mrb[0].mxu0
        %v1226 = vpop.f32.mrb[0].mxu0
        %v1227 = vadd.f32 %v1130, %v1226
        %v1228 = vpop.f32.mrb[0].mxu0
        %1229 = vmatprep.mubr.bf16.mxu0 0
        %1230 = vmatmul.mubr.bf16.gmra.mrb[0].mxu0 %v1062
        %v1231 = vpop.f32.mrb[0].mxu0
        %v1232 = vadd.f32 %v1135, %v1231
        %v1233 = vpop.f32.mrb[0].mxu0
        %v1234 = vpop.f32.mrb[0].mxu0
        %v1235 = vadd.f32 %v1138, %v1234
        %v1236 = vpop.f32.mrb[0].mxu0
        %1237 = vmatprep.mubr.bf16.mxu0 0
        %1238 = vmatmul.mubr.bf16.gmra.mrb[0].mxu0 %v1065
        %v1239 = vpop.f32.mrb[0].mxu0
        %v1240 = vadd.f32 %v1143, %v1239
        %v1241 = vpop.f32.mrb[0].mxu0
        %v1242 = vpop.f32.mrb[0].mxu0
        %v1243 = vadd.f32 %v1146, %v1242
        %v1244 = vpop.f32.mrb[0].mxu0
        %1245 = vmatprep.mubr.bf16.mxu0 0
        %1246 = vmatmul.mubr.bf16.gmra.mrb[0].mxu0 %v1068
        %v1247 = vpop.f32.mrb[0].mxu0
        %v1248 = vadd.f32 %v1151, %v1247
        %v1249 = vpop.f32.mrb[0].mxu0
        %v1250 = vpop.f32.mrb[0].mxu0
        %v1251 = vadd.f32 %v1154, %v1250
        %v1252 = vpop.f32.mrb[0].mxu0
        %1253 = vmatprep.mubr.bf16.mxu0 0
        %1254 = vmatmul.mubr.bf16.gmra.mrb[0].mxu0 %v1071
        %v1255 = vpop.f32.mrb[0].mxu0
        %v1256 = vadd.f32 %v1159, %v1255
        %v1257 = vpop.f32.mrb[0].mxu0
        %v1258 = vpop.f32.mrb[0].mxu0
        %v1259 = vadd.f32 %v1162, %v1258
        %v1260 = vpop.f32.mrb[0].mxu0
        %1261 = vmatprep.mubr.bf16.mxu0 0
        %1262 = vmatmul.mubr.bf16.gmra.mrb[0].mxu0 %v1074
        %v1263 = vpop.f32.mrb[0].mxu0
        %v1264 = vadd.f32 %v1167, %v1263
        %v1265 = vpop.f32.mrb[0].mxu0
        %v1266 = vpop.f32.mrb[0].mxu0
        %v1267 = vadd.f32 %v1170, %v1266
        %v1268 = vpop.f32.mrb[0].mxu0
        %1269 = vdwg.mxu0
        %v1270 = vpack.c.bf16 %v1211, %v1208
        %v1271 = vpack.c.bf16 %v1219, %v1216
        %v1272 = vpack.c.bf16 %v1227, %v1224
        %v1273 = vpack.c.bf16 %v1235, %v1232
        %v1274 = vpack.c.bf16 %v1243, %v1240
        %v1275 = vpack.c.bf16 %v1251, %v1248
        %v1276 = vpack.c.bf16 %v1259, %v1256
        %v1277 = vpack.c.bf16 %v1267, %v1264
        %v1286 = vunpack.c.l.b16 %v1270
        %v1287 = vunpack.c.h.b16 %v1270
        %v1288 = vunpack.c.l.b16 %v1271
        %v1289 = vunpack.c.h.b16 %v1271
        %v1290 = vunpack.c.l.b16 %v1272
        %v1291 = vunpack.c.h.b16 %v1272
        %v1292 = vunpack.c.l.b16 %v1273
        %v1293 = vunpack.c.h.b16 %v1273
        %v1294 = vunpack.c.l.b16 %v1274
        %v1295 = vunpack.c.h.b16 %v1274
        %v1296 = vunpack.c.l.b16 %v1275
        %v1297 = vunpack.c.h.b16 %v1275
        %v1298 = vunpack.c.l.b16 %v1276
        %v1299 = vunpack.c.h.b16 %v1276
        %v1300 = vunpack.c.l.b16 %v1277
        %v1301 = vunpack.c.h.b16 %v1277
        %v1302 = vpack.c.b16 %v1286, %v1286
        %v1303 = vpack.c.b16 %v1287, %v1287
        %v1304 = vpack.c.b16 %v1288, %v1288
        %v1305 = vpack.c.b16 %v1289, %v1289
        %v1306 = vpack.c.b16 %v1290, %v1290
        %v1307 = vpack.c.b16 %v1291, %v1291
        %v1308 = vpack.c.b16 %v1292, %v1292
        %v1309 = vpack.c.b16 %v1293, %v1293
        %v1310 = vpack.c.b16 %v1294, %v1294
        %v1311 = vpack.c.b16 %v1295, %v1295
        %v1312 = vpack.c.b16 %v1296, %v1296
        %v1313 = vpack.c.b16 %v1297, %v1297
        %v1314 = vpack.c.b16 %v1298, %v1298
        %v1315 = vpack.c.b16 %v1299, %v1299
        %v1316 = vpack.c.b16 %v1300, %v1300
        %v1317 = vpack.c.b16 %v1301, %v1301
        %vm1334 = vcmask 519168
        %1335 = vst.msk [vmem:[%s232] sm:$0xf] %vm1334, %v1302
        %1336 = vst.msk [vmem:[%s232 + $0x4] sm:$0xf] %vm1334, %v1303
        %1337 = vst.msk [vmem:[%s232 + $0x8] sm:$0xf] %vm1334, %v1304
        %1338 = vst.msk [vmem:[%s232 + $0xc] sm:$0xf] %vm1334, %v1305
        %1339 = vst.msk [vmem:[%s232 + $0x10] sm:$0xf] %vm1334, %v1306
        %1340 = vst.msk [vmem:[%s232 + $0x14] sm:$0xf] %vm1334, %v1307
        %1341 = vst.msk [vmem:[%s232 + $0x18] sm:$0xf] %vm1334, %v1308
        %1342 = vst.msk [vmem:[%s232 + $0x1c] sm:$0xf] %vm1334, %v1309
        %1343 = vst.msk [vmem:[%s232 + $0x20] sm:$0xf] %vm1334, %v1310
        %1344 = vst.msk [vmem:[%s232 + $0x24] sm:$0xf] %vm1334, %v1311
        %1345 = vst.msk [vmem:[%s232 + $0x28] sm:$0xf] %vm1334, %v1312
        %1346 = vst.msk [vmem:[%s232 + $0x2c] sm:$0xf] %vm1334, %v1313
        %1347 = vst.msk [vmem:[%s232 + $0x30] sm:$0xf] %vm1334, %v1314
        %1348 = vst.msk [vmem:[%s232 + $0x34] sm:$0xf] %vm1334, %v1315
        %1349 = vst.msk [vmem:[%s232 + $0x38] sm:$0xf] %vm1334, %v1316
        %1350 = vst.msk [vmem:[%s232 + $0x3c] sm:$0xf] %vm1334, %v1317
        %s1351 = smul.u32 %s20, 2
        %s1352 = sadd.s32 %s1351, %s21
        %p1353 = scmp.lt.s32.totalorder %s1352, 3
        %s1354 = scalar_select %p1353, %s1352, 3
        %s1355 = smul.addr %s1354, 16
        %s1356 = smul.addr %s1355, 4
        %s1357 = scalar_lea.vmem %s3, %s1356
        // Predicated region
        $region41: #{_lambda_.8} parent=31 // pred_check
          %p1358 = pneg %p122
        $region42: #{_lambda_.8} parent=31 // pred_check_branch
          %1360 = sbr.rel (%p1358) target = $region44
        $region43: #{_lambda_.8} parent=31 // pred_region
          %s1361 = smul.u32 %s20, 2
          %s1362 = sadd.s32 %s1361, %s21
        $region44: #{_lambda_.8} parent=31 // pred_fallthru
          _
      $region32: #{_lambda_.8} parent=5 // pred_fallthru
        _
      %p1363 = scmp.le.s32.totalorder 2, %s11
      // Predicated region
      $region45: #{_lambda_.8} parent=5 // pred_check
        %p1364 = pneg %p1363
      $region46: #{_lambda_.8} parent=5 // pred_check_branch
        %1366 = sbr.rel (%p1364) target = $region48
      $region47: #{_lambda_.8} parent=5 // pred_region
        %s1367 = ssub.s32 %s11, 2
        // Predicated region
        $region49: #{_lambda_.8} parent=47 // pred_check
          %p1368 = pneg %p128
        $region50: #{_lambda_.8} parent=47 // pred_check_branch
          %1370 = sbr.rel (%p1368) target = $region52
        $region51: #{_lambda_.8} parent=47 // pred_region
          %s1371 = smul.u32 %s22, 2
          %s1372 = sadd.s32 %s1371, %s23
          %p1373 = scmp.lt.s32.totalorder %s1372, 3
          %s1374 = scalar_select %p1373, %s1372, 3
          %s1375 = smul.addr %s1374, 16
          %s1376 = smul.addr %s1375, 4
          %s1377 = scalar_lea.vmem %s3, %s1376
        $region52: #{_lambda_.8} parent=47 // pred_fallthru
          _
      $region48: #{_lambda_.8} parent=5 // pred_fallthru
        _
    $region6: #{_lambda_.8} parent=1 // loop_footer
      %s15 = sadd.s32 1, %s11
    $region7: #{_lambda_.8} parent=1 // loop_footer_branch
      %10 = sbr.rel target = $region3
    $region8: #{_lambda_.8} parent=1 // loop_exit
      _
    %1378 = vsyncpa [#allocation3], 1
    %s1379 = scalar_lea.sflag [#allocation3], 1
    %1380 = vsyncpa %s1379, 1
    %1381 = vsyncpa [#allocation5], 1

// kernel: _lambda_.6
$region0: #{_lambda_.6}
  #allocation0 [shape = 'u32[]', space=smem, size = 0x4, offset = 0x4, fixed_abs, tag = 'smem constant byte address 0x4 - core index']
  #allocation1 [shape = 'u32[144,128]{1,0:T(1,128)}', space=vmem, size = 0x12000, scoped, tag = 'internal scratch']
  %s0 = inlined_call_operand.vmem [shape: bf16[4,10,18,32], index: 0, kind: input, shape index: {}]
  %s1 = inlined_call_operand.hbm [shape: bf16[288,16], index: 1, kind: input, shape index: {}]
  %s2 = inlined_call_operand.hbm [shape: bf16[16,32], index: 2, kind: input, shape index: {}]
  %s3 = inlined_call_operand.vmem [shape: bf16[4,128,32], index: 3, kind: output, shape index: {}]
  %s4 = sld [smem:[#allocation0]]
  $region53: #{_lambda_.6} parent=0
    _
  %s6 = ssub.s32 1, %s4
  %s7 = scalar_select 0, %s6, %s4
  $region1: #{_lambda_.6} parent=0
    #allocation2 [shape = 'u8[73728]{0}', space=vmem, size = 0x12000, scoped, tag = 'input window, operand 1, single buffered']
    #allocation3 [shape = 's32[2]{0}', space=sflag, size = 0x8, scoped, tag = 'scoped memory for _lambda_.6']
    #allocation4 [shape = 'u8[4096]{0}', space=vmem, size = 0x1000, scoped, tag = 'input window, operand 2, single buffered']
    #allocation5 [shape = 's32[1]{0}', space=sflag, size = 0x4, scoped, tag = 'scoped memory for _lambda_.6']
    %8 = vsyncpa [#allocation3], 0
    %9 = vsyncpa [#allocation5], 0
    loop: start=0, step=1, limit=6
    $region2: #{_lambda_.6} parent=1 // loop_pre_header
      _
    $region3: #{_lambda_.6} parent=1 // loop_header
      %s11 = sphi 0, %s15
      %p12 = scmp.ge.s32.totalorder %s11, 6
      %s18 = sphi 0, %s30
      %s19 = sphi 0, %s26
      %s20 = sphi 0, %s18
      %s21 = sphi 0, %s19
      %s22 = sphi 0, %s20
      %s23 = sphi 0, %s21
      %s37 = sphi 0, %s39
      %s40 = sphi 0, %s37
      %s41 = sphi 0, %s40
      %s57 = sphi 0, %s41
      %s61 = sphi 0, %s61
      %s63 = sphi 0, %s61
      %s64 = sphi 0, %s63
      %s78 = sphi 0, %s64
      %s82 = sphi 0, %s82
      %s84 = sphi 0, %s82
      %s85 = sphi 0, %s84
      %s99 = sphi 0, %s85
      %s109 = sphi 0, %s111
      %s112 = sphi 0, %s109
      %s113 = sphi 0, %s112
      %s129 = sphi 0, %s113
    $region4: #{_lambda_.6} parent=1 // loop_header_branch
      %14 = sbr.rel (%p12) target = $region8
    $region5: #{_lambda_.6} parent=1 // loop_body
      %s16 = ssub.s32 %s11, 1
      %s17 = ssub.s32 %s11, 2
      %s24 = sadd.s32 1, %s19
      %p25 = scmp.ge.s32.totalorder %s24, 2
      %s26 = scalar_select %p25, 0, %s24
      %s27 = sadd.s32 1, %s18
      %s28 = scalar_select %p25, %s27, %s18
      %p29 = scmp.ge.s32.totalorder %s28, 2
      %s30 = scalar_select %p29, 0, %s28
      %s31 = smul.u32 %s18, 2
      %s32 = sadd.s32 %s31, %s19
      %s33 = smul.u32 %s30, 2
      %s34 = sadd.s32 %s33, %s26
      %s35 = ssub.s32 %s32, %s34
      %p36 = scmp.eq.s32.totalorder %s35, 0
      %s38 = sadd.s32 %s37, 1
      %s39 = scalar_select %p36, %s37, %s38
      %p42 = pneg %p36
      %p43 = scmp.eq.s32.totalorder %s11, 3
      %p44 = por %p42, %p43
      %p45 = scmp.ne.s32.totalorder %s37, %s40
      %p46 = scmp.eq.s32.totalorder %s11, 0
      %p47 = por %p45, %p46
      %p48 = scmp.ne.s32.totalorder %s37, %s40
      %p49 = scmp.eq.s32.totalorder %s16, 3
      %p50 = por %p48, %p49
      %p51 = scmp.ne.s32.totalorder %s40, %s41
      %p52 = scmp.eq.s32.totalorder %s16, 0
      %p53 = por %p51, %p52
      %p54 = scmp.ne.s32.totalorder %s40, %s41
      %p55 = scmp.eq.s32.totalorder %s17, 3
      %p56 = por %p54, %p55
      %p58 = scmp.ne.s32.totalorder %s41, %s57
      %p59 = scmp.eq.s32.totalorder %s17, 0
      %p60 = por %p58, %p59
      %s62 = sadd.s32 %s61, 1
      %p65 = scmp.eq.s32.totalorder %s11, 3
      %p66 = scmp.ne.s32.totalorder %s61, %s63
      %p67 = scmp.eq.s32.totalorder %s11, 0
      %p68 = por %p66, %p67
      %p69 = scmp.ne.s32.totalorder %s61, %s63
      %p70 = scmp.eq.s32.totalorder %s16, 3
      %p71 = por %p69, %p70
      %p72 = scmp.ne.s32.totalorder %s63, %s64
      %p73 = scmp.eq.s32.totalorder %s16, 0
      %p74 = por %p72, %p73
      %p75 = scmp.ne.s32.totalorder %s63, %s64
      %p76 = scmp.eq.s32.totalorder %s17, 3
      %p77 = por %p75, %p76
      %p79 = scmp.ne.s32.totalorder %s64, %s78
      %p80 = scmp.eq.s32.totalorder %s17, 0
      %p81 = por %p79, %p80
      %s83 = sadd.s32 %s82, 1
      %p86 = scmp.eq.s32.totalorder %s11, 3
      %p87 = scmp.ne.s32.totalorder %s82, %s84
      %p88 = scmp.eq.s32.totalorder %s11, 0
      %p89 = por %p87, %p88
      %p90 = scmp.ne.s32.totalorder %s82, %s84
      %p91 = scmp.eq.s32.totalorder %s16, 3
      %p92 = por %p90, %p91
      %p93 = scmp.ne.s32.totalorder %s84, %s85
      %p94 = scmp.eq.s32.totalorder %s16, 0
      %p95 = por %p93, %p94
      %p96 = scmp.ne.s32.totalorder %s84, %s85
      %p97 = scmp.eq.s32.totalorder %s17, 3
      %p98 = por %p96, %p97
      %p100 = scmp.ne.s32.totalorder %s85, %s99
      %p101 = scmp.eq.s32.totalorder %s17, 0
      %p102 = por %p100, %p101
      %s103 = smul.u32 %s18, 2
      %s104 = sadd.s32 %s103, %s19
      %s105 = smul.u32 %s30, 2
      %s106 = sadd.s32 %s105, %s26
      %s107 = ssub.s32 %s104, %s106
      %p108 = scmp.eq.s32.totalorder %s107, 0
      %s110 = sadd.s32 %s109, 1
      %s111 = scalar_select %p108, %s109, %s110
      %p114 = pneg %p108
      %p115 = scmp.eq.s32.totalorder %s11, 3
      %p116 = por %p114, %p115
      %p117 = scmp.ne.s32.totalorder %s109, %s112
      %p118 = scmp.eq.s32.totalorder %s11, 0
      %p119 = por %p117, %p118
      %p120 = scmp.ne.s32.totalorder %s109, %s112
      %p121 = scmp.eq.s32.totalorder %s16, 3
      %p122 = por %p120, %p121
      %p123 = scmp.ne.s32.totalorder %s112, %s113
      %p124 = scmp.eq.s32.totalorder %s16, 0
      %p125 = por %p123, %p124
      %p126 = scmp.ne.s32.totalorder %s112, %s113
      %p127 = scmp.eq.s32.totalorder %s17, 3
      %p128 = por %p126, %p127
      %p130 = scmp.ne.s32.totalorder %s113, %s129
      %p131 = scmp.eq.s32.totalorder %s17, 0
      %p132 = por %p130, %p131
      %p133 = scmp.le.s32.totalorder 1, %s11
      %p134 = scmp.lt.s32.totalorder %s11, 5
      %p135 = pnand %p133, %p134
      %p136 = pneg %p135
      // Predicated region
      $region9: #{_lambda_.6} parent=5 // pred_check
        _
      $region10: #{_lambda_.6} parent=5 // pred_check_branch
        %138 = sbr.rel (%p135) target = $region12
      $region11: #{_lambda_.6} parent=5 // pred_region
        %s139 = ssub.s32 %s11, 1
        // Predicated region
        $region13: #{_lambda_.6} parent=11 // pred_check
          %p140 = pneg %p74
        $region14: #{_lambda_.6} parent=11 // pred_check_branch
          %142 = sbr.rel (%p140) target = $region16
        $region15: #{_lambda_.6} parent=11 // pred_region
          %s144 = ssub.s32 2304, 2304
          %145 = vsyncadd [#allocation3], %s144
          %s146 = sshll.u32 [#allocation2], 4
          %s147 = int_to_ptr.vmem [resolvable:$true] %s146
          %152 = dma.hbm_to_vmem [thread:$0]  %s1, 2304, %s147, [#allocation3], 64, 64, 4
        $region16: #{_lambda_.6} parent=11 // pred_fallthru
          _
        // Predicated region
        $region17: #{_lambda_.6} parent=11 // pred_check
          %p153 = pneg %p95
        $region18: #{_lambda_.6} parent=11 // pred_check_branch
          %155 = sbr.rel (%p153) target = $region20
        $region19: #{_lambda_.6} parent=11 // pred_region
          %s157 = ssub.s32 128, 128
          %158 = vsyncadd [#allocation5], %s157
          %s159 = sshll.u32 [#allocation4], 4
          %s160 = int_to_ptr.vmem [resolvable:$true] %s159
          %165 = dma.hbm_to_vmem [thread:$0]  %s2, 128, %s160, [#allocation5], 64, 64, 4
        $region20: #{_lambda_.6} parent=11 // pred_fallthru
          _
      $region12: #{_lambda_.6} parent=5 // pred_fallthru
        _
      %p166 = scmp.lt.s32.totalorder %s11, 4
      // Predicated region
      $region21: #{_lambda_.6} parent=5 // pred_check
        %p167 = pneg %p166
      $region22: #{_lambda_.6} parent=5 // pred_check_branch
        %169 = sbr.rel (%p167) target = $region24
      $region23: #{_lambda_.6} parent=5 // pred_region
        // Predicated region
        $region25: #{_lambda_.6} parent=23 // pred_check
          %p170 = pneg %p47
        $region26: #{_lambda_.6} parent=23 // pred_check_branch
          %172 = sbr.rel (%p170) target = $region28
        $region27: #{_lambda_.6} parent=23 // pred_region
          %s173 = smul.u32 %s18, 2
          %s174 = sadd.s32 %s173, %s19
          %p175 = scmp.lt.s32.totalorder %s174, 3
          %s176 = scalar_select %p175, %s174, 3
          %s177 = smul.addr %s176, 30
          %s178 = smul.addr %s177, 4
          %s179 = scalar_lea.vmem %s0, %s178
          %s180 = smul.u32 %s18, 2
          %s181 = sadd.s32 %s180, %s19
        $region28: #{_lambda_.6} parent=23 // pred_fallthru
          _
      $region24: #{_lambda_.6} parent=5 // pred_fallthru
        _
      %p182 = scmp.le.s32.totalorder 1, %s11
      %p183 = scmp.lt.s32.totalorder %s11, 5
      %p184 = pnand %p182, %p183
      %p185 = pneg %p184
      // Predicated region
      $region29: #{_lambda_.6} parent=5 // pred_check
        _
      $region30: #{_lambda_.6} parent=5 // pred_check_branch
        %187 = sbr.rel (%p184) target = $region32
      $region31: #{_lambda_.6} parent=5 // pred_region
        %s188 = ssub.s32 %s11, 1
        // Predicated region
        $region33: #{_lambda_.6} parent=31 // pred_check
          %p189 = pneg %p74
        $region34: #{_lambda_.6} parent=31 // pred_check_branch
          %191 = sbr.rel (%p189) target = $region36
        $region35: #{_lambda_.6} parent=31 // pred_region
          %192 = dma.done [#allocation3], 2304
        $region36: #{_lambda_.6} parent=31 // pred_fallthru
          _
        // Predicated region
        $region37: #{_lambda_.6} parent=31 // pred_check
          %p193 = pneg %p95
        $region38: #{_lambda_.6} parent=31 // pred_check_branch
          %195 = sbr.rel (%p193) target = $region40
        $region39: #{_lambda_.6} parent=31 // pred_region
          %196 = dma.done [#allocation5], 128
        $region40: #{_lambda_.6} parent=31 // pred_fallthru
          _
        %s197 = smul.u32 %s20, 2
        %s198 = sadd.s32 %s197, %s21
        %p199 = scmp.lt.s32.totalorder %s198, 3
        %s200 = scalar_select %p199, %s198, 3
        %s201 = smul.addr %s200, 30
        %s202 = smul.addr %s201, 4
        %s203 = scalar_lea.vmem %s0, %s202
        %p204 = pneg %p53
        %p205 = pneg %p50
        %p206 = pneg %p74
        %p207 = pneg %p71
        %p208 = pneg %p95
        %p209 = pneg %p92
        %p210 = pneg %p125
        %p211 = pneg %p122
        %s212 = smul.u32 %s20, 2
        %s213 = sadd.s32 %s212, %s21
        %p214 = scmp.lt.s32.totalorder %s213, 3
        %s215 = scalar_select %p214, %s213, 3
        %s216 = smul.addr %s215, 16
        %s217 = smul.addr %s216, 4
        %s218 = scalar_lea.vmem %s3, %s217
        %s219 = smul.u32 %s20, 2
        %s220 = sadd.s32 %s219, %s21
        %p221 = scmp.lt.s32.totalorder %s220, 3
        %s222 = scalar_select %p221, %s220, 3
        %s223 = smul.addr %s222, 30
        %s224 = smul.addr %s223, 4
        %s225 = scalar_lea.vmem %s0, %s224
        %s226 = smul.u32 %s20, 2
        %s227 = sadd.s32 %s226, %s21
        %s228 = smul.u32 %s20, 2
        %s229 = sadd.s32 %s228, %s21
        %p230 = scmp.lt.s32.totalorder %s229, 3
        %s231 = scalar_select %p230, %s229, 3
        %s232 = smul.addr %s231, 16
        %s233 = smul.addr %s232, 4
        %s234 = scalar_lea.vmem %s3, %s233
        %s235 = smul.u32 %s20, 2
        %s236 = sadd.s32 %s235, %s21
        %v238 = vld [vmem:[%s225] sm:$0xf]
        %v239 = vld [vmem:[%s225 + $0x4] sm:$0xf]
        %v240 = vld [vmem:[%s225 + $0x8] sm:$0x1]
        %v241 = vld [vmem:[%s225 + $0xc] sm:$0xf]
        %v242 = vld [vmem:[%s225 + $0x10] sm:$0xf]
        %v243 = vld [vmem:[%s225 + $0x14] sm:$0x1]
        %v244 = vld [vmem:[%s225 + $0x18] sm:$0xf]
        %v245 = vld [vmem:[%s225 + $0x1c] sm:$0xf]
        %v246 = vld [vmem:[%s225 + $0x20] sm:$0x1]
        %v247 = vld [vmem:[%s225 + $0x24] sm:$0xf]
        %v248 = vld [vmem:[%s225 + $0x28] sm:$0xf]
        %v249 = vld [vmem:[%s225 + $0x2c] sm:$0x1]
        %v250 = vld [vmem:[%s225 + $0x30] sm:$0xf]
        %v251 = vld [vmem:[%s225 + $0x34] sm:$0xf]
        %v252 = vld [vmem:[%s225 + $0x38] sm:$0x1]
        %v253 = vld [vmem:[%s225 + $0x3c] sm:$0xf]
        %v254 = vld [vmem:[%s225 + $0x40] sm:$0xf]
        %v255 = vld [vmem:[%s225 + $0x44] sm:$0x1]
        %v256 = vld [vmem:[%s225 + $0x48] sm:$0xf]
        %v257 = vld [vmem:[%s225 + $0x4c] sm:$0xf]
        %v258 = vld [vmem:[%s225 + $0x50] sm:$0x1]
        %v259 = vld [vmem:[%s225 + $0x54] sm:$0xf]
        %v260 = vld [vmem:[%s225 + $0x58] sm:$0xf]
        %v261 = vld [vmem:[%s225 + $0x5c] sm:$0x1]
        %v262 = vld [vmem:[%s225 + $0x60] sm:$0xf]
        %v263 = vld [vmem:[%s225 + $0x64] sm:$0xf]
        %v264 = vld [vmem:[%s225 + $0x68] sm:$0x1]
        %v265 = vld [vmem:[%s225 + $0x6c] sm:$0xf]
        %v266 = vld [vmem:[%s225 + $0x70] sm:$0xf]
        %v267 = vld [vmem:[%s225 + $0x74] sm:$0x1]
        %v268 = vunpack.c.l.bf16 %v238
        %v269 = vunpack.c.l.bf16 %v239
        %v270 = vunpack.c.l.bf16 %v240
        %v271 = vunpack.c.l.bf16 %v241
        %v272 = vunpack.c.l.bf16 %v242
        %v273 = vunpack.c.l.bf16 %v243
        %v274 = vunpack.c.l.bf16 %v244
        %v275 = vunpack.c.l.bf16 %v245
        %v276 = vunpack.c.l.bf16 %v246
        %v277 = vunpack.c.l.bf16 %v247
        %v278 = vunpack.c.l.bf16 %v248
        %v279 = vunpack.c.l.bf16 %v249
        %v280 = vunpack.c.l.bf16 %v250
        %v281 = vunpack.c.l.bf16 %v251
        %v282 = vunpack.c.l.bf16 %v252
        %v283 = vunpack.c.l.bf16 %v253
        %v284 = vunpack.c.l.bf16 %v254
        %v285 = vunpack.c.l.bf16 %v255
        %v286 = vunpack.c.l.bf16 %v256
        %v287 = vunpack.c.l.bf16 %v257
        %v288 = vunpack.c.l.bf16 %v258
        %v289 = vunpack.c.l.bf16 %v259
        %v290 = vunpack.c.l.bf16 %v260
        %v291 = vunpack.c.l.bf16 %v261
        %v292 = vunpack.c.l.bf16 %v262
        %v293 = vunpack.c.l.bf16 %v263
        %v294 = vunpack.c.l.bf16 %v264
        %v295 = vunpack.c.l.bf16 %v265
        %v296 = vunpack.c.l.bf16 %v266
        %v297 = vunpack.c.l.bf16 %v267
        %v298 = vmax.f32 %v268, 0.0
        %v299 = vmax.f32 %v269, 0.0
        %v300 = vmax.f32 %v270, 0.0
        %v301 = vmax.f32 %v271, 0.0
        %v302 = vmax.f32 %v272, 0.0
        %v303 = vmax.f32 %v273, 0.0
        %v304 = vmax.f32 %v274, 0.0
        %v305 = vmax.f32 %v275, 0.0
        %v306 = vmax.f32 %v276, 0.0
        %v307 = vmax.f32 %v277, 0.0
        %v308 = vmax.f32 %v278, 0.0
        %v309 = vmax.f32 %v279, 0.0
        %v310 = vmax.f32 %v280, 0.0
        %v311 = vmax.f32 %v281, 0.0
        %v312 = vmax.f32 %v282, 0.0
        %v313 = vmax.f32 %v283, 0.0
        %v314 = vmax.f32 %v284, 0.0
        %v315 = vmax.f32 %v285, 0.0
        %v316 = vmax.f32 %v286, 0.0
        %v317 = vmax.f32 %v287, 0.0
        %v318 = vmax.f32 %v288, 0.0
        %v319 = vmax.f32 %v289, 0.0
        %v320 = vmax.f32 %v290, 0.0
        %v321 = vmax.f32 %v291, 0.0
        %v322 = vmax.f32 %v292, 0.0
        %v323 = vmax.f32 %v293, 0.0
        %v324 = vmax.f32 %v294, 0.0
        %v325 = vmax.f32 %v295, 0.0
        %v326 = vmax.f32 %v296, 0.0
        %v327 = vmax.f32 %v297, 0.0
        %vm352 = vcmask 1046528
        %v353 = vrot.slane %v298, 1
        %v354 = vrot.slane %v299, 1
        %v355 = vsel %vm352, %v353, %v354
        %v356 = vrot.slane %v300, 1
        %v357 = vsel %vm352, %v354, %v356
        %v358 = vrot.slane %v301, 1
        %v359 = vrot.slane %v302, 1
        %v360 = vsel %vm352, %v358, %v359
        %v361 = vrot.slane %v303, 1
        %v362 = vsel %vm352, %v359, %v361
        %v363 = vrot.slane %v304, 1
        %v364 = vrot.slane %v305, 1
        %v365 = vsel %vm352, %v363, %v364
        %v366 = vrot.slane %v306, 1
        %v367 = vsel %vm352, %v364, %v366
        %v368 = vrot.slane %v307, 1
        %v369 = vrot.slane %v308, 1
        %v370 = vsel %vm352, %v368, %v369
        %v371 = vrot.slane %v309, 1
        %v372 = vsel %vm352, %v369, %v371
        %v373 = vrot.slane %v310, 1
        %v374 = vrot.slane %v311, 1
        %v375 = vsel %vm352, %v373, %v374
        %v376 = vrot.slane %v312, 1
        %v377 = vsel %vm352, %v374, %v376
        %v378 = vrot.slane %v313, 1
        %v379 = vrot.slane %v314, 1
        %v380 = vsel %vm352, %v378, %v379
        %v381 = vrot.slane %v315, 1
        %v382 = vsel %vm352, %v379, %v381
        %v383 = vrot.slane %v316, 1
        %v384 = vrot.slane %v317, 1
        %v385 = vsel %vm352, %v383, %v384
        %v386 = vrot.slane %v318, 1
        %v387 = vsel %vm352, %v384, %v386
        %v388 = vrot.slane %v319, 1
        %v389 = vrot.slane %v320, 1
        %v390 = vsel %vm352, %v388, %v389
        %v391 = vrot.slane %v321, 1
        %v392 = vsel %vm352, %v389, %v391
        %393 = vrot.lane.b32.xlu0 %v355, 32
        %v394 = vpop.permute.xlu0 %393
        %395 = vrot.lane.b32.xlu0 %v357, 32
        %v396 = vpop.permute.xlu0 %395
        %397 = vrot.lane.b32.xlu0 %v360, 32
        %v398 = vpop.permute.xlu0 %397
        %399 = vrot.lane.b32.xlu0 %v362, 32
        %v400 = vpop.permute.xlu0 %399
        %401 = vrot.lane.b32.xlu0 %v365, 32
        %v402 = vpop.permute.xlu0 %401
        %403 = vrot.lane.b32.xlu0 %v367, 32
        %v404 = vpop.permute.xlu0 %403
        %405 = vrot.lane.b32.xlu0 %v370, 32
        %v406 = vpop.permute.xlu0 %405
        %407 = vrot.lane.b32.xlu0 %v372, 32
        %v408 = vpop.permute.xlu0 %407
        %409 = vrot.lane.b32.xlu0 %v375, 32
        %v410 = vpop.permute.xlu0 %409
        %411 = vrot.lane.b32.xlu0 %v377, 32
        %v412 = vpop.permute.xlu0 %411
        %413 = vrot.lane.b32.xlu0 %v380, 32
        %v414 = vpop.permute.xlu0 %413
        %415 = vrot.lane.b32.xlu0 %v382, 32
        %v416 = vpop.permute.xlu0 %415
        %417 = vrot.lane.b32.xlu0 %v385, 32
        %v418 = vpop.permute.xlu0 %417
        %419 = vrot.lane.b32.xlu0 %v387, 32
        %v420 = vpop.permute.xlu0 %419
        %421 = vrot.lane.b32.xlu0 %v390, 32
        %v422 = vpop.permute.xlu0 %421
        %423 = vrot.lane.b32.xlu0 %v392, 32
        %v424 = vpop.permute.xlu0 %423
        %vm441 = vcmask 1045504
        %v442 = vrot.slane %v298, 2
        %v443 = vrot.slane %v299, 2
        %v444 = vsel %vm441, %v442, %v443
        %v445 = vrot.slane %v300, 2
        %v446 = vsel %vm441, %v443, %v445
        %v447 = vrot.slane %v301, 2
        %v448 = vrot.slane %v302, 2
        %v449 = vsel %vm441, %v447, %v448
        %v450 = vrot.slane %v303, 2
        %v451 = vsel %vm441, %v448, %v450
        %v452 = vrot.slane %v304, 2
        %v453 = vrot.slane %v305, 2
        %v454 = vsel %vm441, %v452, %v453
        %v455 = vrot.slane %v306, 2
        %v456 = vsel %vm441, %v453, %v455
        %v457 = vrot.slane %v307, 2
        %v458 = vrot.slane %v308, 2
        %v459 = vsel %vm441, %v457, %v458
        %v460 = vrot.slane %v309, 2
        %v461 = vsel %vm441, %v458, %v460
        %v462 = vrot.slane %v310, 2
        %v463 = vrot.slane %v311, 2
        %v464 = vsel %vm441, %v462, %v463
        %v465 = vrot.slane %v312, 2
        %v466 = vsel %vm441, %v463, %v465
        %v467 = vrot.slane %v313, 2
        %v468 = vrot.slane %v314, 2
        %v469 = vsel %vm441, %v467, %v468
        %v470 = vrot.slane %v315, 2
        %v471 = vsel %vm441, %v468, %v470
        %v472 = vrot.slane %v316, 2
        %v473 = vrot.slane %v317, 2
        %v474 = vsel %vm441, %v472, %v473
        %v475 = vrot.slane %v318, 2
        %v476 = vsel %vm441, %v473, %v475
        %v477 = vrot.slane %v319, 2
        %v478 = vrot.slane %v320, 2
        %v479 = vsel %vm441, %v477, %v478
        %v480 = vrot.slane %v321, 2
        %v481 = vsel %vm441, %v478, %v480
        %482 = vrot.lane.b32.xlu0 %v444, 64
        %v483 = vpop.permute.xlu0 %482
        %484 = vrot.lane.b32.xlu0 %v446, 64
        %v485 = vpop.permute.xlu0 %484
        %486 = vrot.lane.b32.xlu0 %v449, 64
        %v487 = vpop.permute.xlu0 %486
        %488 = vrot.lane.b32.xlu0 %v451, 64
        %v489 = vpop.permute.xlu0 %488
        %490 = vrot.lane.b32.xlu0 %v454, 64
        %v491 = vpop.permute.xlu0 %490
        %492 = vrot.lane.b32.xlu0 %v456, 64
        %v493 = vpop.permute.xlu0 %492
        %494 = vrot.lane.b32.xlu0 %v459, 64
        %v495 = vpop.permute.xlu0 %494
        %496 = vrot.lane.b32.xlu0 %v461, 64
        %v497 = vpop.permute.xlu0 %496
        %498 = vrot.lane.b32.xlu0 %v464, 64
        %v499 = vpop.permute.xlu0 %498
        %500 = vrot.lane.b32.xlu0 %v466, 64
        %v501 = vpop.permute.xlu0 %500
        %502 = vrot.lane.b32.xlu0 %v469, 64
        %v503 = vpop.permute.xlu0 %502
        %504 = vrot.lane.b32.xlu0 %v471, 64
        %v505 = vpop.permute.xlu0 %504
        %506 = vrot.lane.b32.xlu0 %v474, 64
        %v507 = vpop.permute.xlu0 %506
        %508 = vrot.lane.b32.xlu0 %v476, 64
        %v509 = vpop.permute.xlu0 %508
        %510 = vrot.lane.b32.xlu0 %v479, 64
        %v511 = vpop.permute.xlu0 %510
        %512 = vrot.lane.b32.xlu0 %v481, 64
        %v513 = vpop.permute.xlu0 %512
        %532 = vrot.lane.b32.xlu0 %v301, 96
        %v533 = vpop.permute.xlu0 %532
        %534 = vrot.lane.b32.xlu0 %v302, 96
        %v535 = vpop.permute.xlu0 %534
        %536 = vrot.lane.b32.xlu0 %v304, 96
        %v537 = vpop.permute.xlu0 %536
        %538 = vrot.lane.b32.xlu0 %v305, 96
        %v539 = vpop.permute.xlu0 %538
        %540 = vrot.lane.b32.xlu0 %v307, 96
        %v541 = vpop.permute.xlu0 %540
        %542 = vrot.lane.b32.xlu0 %v308, 96
        %v543 = vpop.permute.xlu0 %542
        %544 = vrot.lane.b32.xlu0 %v310, 96
        %v545 = vpop.permute.xlu0 %544
        %546 = vrot.lane.b32.xlu0 %v311, 96
        %v547 = vpop.permute.xlu0 %546
        %548 = vrot.lane.b32.xlu0 %v313, 96
        %v549 = vpop.permute.xlu0 %548
        %550 = vrot.lane.b32.xlu0 %v314, 96
        %v551 = vpop.permute.xlu0 %550
        %552 = vrot.lane.b32.xlu0 %v316, 96
        %v553 = vpop.permute.xlu0 %552
        %554 = vrot.lane.b32.xlu0 %v317, 96
        %v555 = vpop.permute.xlu0 %554
        %556 = vrot.lane.b32.xlu0 %v319, 96
        %v557 = vpop.permute.xlu0 %556
        %558 = vrot.lane.b32.xlu0 %v320, 96
        %v559 = vpop.permute.xlu0 %558
        %560 = vrot.lane.b32.xlu0 %v322, 96
        %v561 = vpop.permute.xlu0 %560
        %562 = vrot.lane.b32.xlu0 %v323, 96
        %v563 = vpop.permute.xlu0 %562
        %v581 = vrot.slane %v322, 1
        %v582 = vrot.slane %v323, 1
        %v583 = vsel %vm352, %v581, %v582
        %v584 = vrot.slane %v324, 1
        %v585 = vsel %vm352, %v582, %v584
        %v602 = vrot.slane %v322, 2
        %v603 = vrot.slane %v323, 2
        %v604 = vsel %vm441, %v602, %v603
        %v605 = vrot.slane %v324, 2
        %v606 = vsel %vm441, %v603, %v605
        %607 = vrot.lane.b32.xlu0 %v449, 32
        %v608 = vpop.permute.xlu0 %607
        %609 = vrot.lane.b32.xlu0 %v451, 32
        %v610 = vpop.permute.xlu0 %609
        %611 = vrot.lane.b32.xlu0 %v454, 32
        %v612 = vpop.permute.xlu0 %611
        %613 = vrot.lane.b32.xlu0 %v456, 32
        %v614 = vpop.permute.xlu0 %613
        %615 = vrot.lane.b32.xlu0 %v459, 32
        %v616 = vpop.permute.xlu0 %615
        %617 = vrot.lane.b32.xlu0 %v461, 32
        %v618 = vpop.permute.xlu0 %617
        %619 = vrot.lane.b32.xlu0 %v464, 32
        %v620 = vpop.permute.xlu0 %619
        %621 = vrot.lane.b32.xlu0 %v466, 32
        %v622 = vpop.permute.xlu0 %621
        %623 = vrot.lane.b32.xlu0 %v469, 32
        %v624 = vpop.permute.xlu0 %623
        %625 = vrot.lane.b32.xlu0 %v471, 32
        %v626 = vpop.permute.xlu0 %625
        %627 = vrot.lane.b32.xlu0 %v474, 32
        %v628 = vpop.permute.xlu0 %627
        %629 = vrot.lane.b32.xlu0 %v476, 32
        %v630 = vpop.permute.xlu0 %629
        %631 = vrot.lane.b32.xlu0 %v479, 32
        %v632 = vpop.permute.xlu0 %631
        %633 = vrot.lane.b32.xlu0 %v481, 32
        %v634 = vpop.permute.xlu0 %633
        %635 = vrot.lane.b32.xlu0 %v604, 32
        %v636 = vpop.permute.xlu0 %635
        %637 = vrot.lane.b32.xlu0 %v606, 32
        %v638 = vpop.permute.xlu0 %637
        %657 = vrot.lane.b32.xlu0 %v304, 64
        %v658 = vpop.permute.xlu0 %657
        %659 = vrot.lane.b32.xlu0 %v305, 64
        %v660 = vpop.permute.xlu0 %659
        %661 = vrot.lane.b32.xlu0 %v307, 64
        %v662 = vpop.permute.xlu0 %661
        %663 = vrot.lane.b32.xlu0 %v308, 64
        %v664 = vpop.permute.xlu0 %663
        %665 = vrot.lane.b32.xlu0 %v310, 64
        %v666 = vpop.permute.xlu0 %665
        %667 = vrot.lane.b32.xlu0 %v311, 64
        %v668 = vpop.permute.xlu0 %667
        %669 = vrot.lane.b32.xlu0 %v313, 64
        %v670 = vpop.permute.xlu0 %669
        %671 = vrot.lane.b32.xlu0 %v314, 64
        %v672 = vpop.permute.xlu0 %671
        %673 = vrot.lane.b32.xlu0 %v316, 64
        %v674 = vpop.permute.xlu0 %673
        %675 = vrot.lane.b32.xlu0 %v317, 64
        %v676 = vpop.permute.xlu0 %675
        %677 = vrot.lane.b32.xlu0 %v319, 64
        %v678 = vpop.permute.xlu0 %677
        %679 = vrot.lane.b32.xlu0 %v320, 64
        %v680 = vpop.permute.xlu0 %679
        %681 = vrot.lane.b32.xlu0 %v322, 64
        %v682 = vpop.permute.xlu0 %681
        %683 = vrot.lane.b32.xlu0 %v323, 64
        %v684 = vpop.permute.xlu0 %683
        %685 = vrot.lane.b32.xlu0 %v325, 64
        %v686 = vpop.permute.xlu0 %685
        %687 = vrot.lane.b32.xlu0 %v326, 64
        %v688 = vpop.permute.xlu0 %687
        %v706 = vrot.slane %v325, 1
        %v707 = vrot.slane %v326, 1
        %v708 = vsel %vm352, %v706, %v707
        %v709 = vrot.slane %v327, 1
        %v710 = vsel %vm352, %v707, %v709
        %711 = vrot.lane.b32.xlu0 %v365, 96
        %v712 = vpop.permute.xlu0 %711
        %713 = vrot.lane.b32.xlu0 %v367, 96
        %v714 = vpop.permute.xlu0 %713
        %715 = vrot.lane.b32.xlu0 %v370, 96
        %v716 = vpop.permute.xlu0 %715
        %717 = vrot.lane.b32.xlu0 %v372, 96
        %v718 = vpop.permute.xlu0 %717
        %719 = vrot.lane.b32.xlu0 %v375, 96
        %v720 = vpop.permute.xlu0 %719
        %721 = vrot.lane.b32.xlu0 %v377, 96
        %v722 = vpop.permute.xlu0 %721
        %723 = vrot.lane.b32.xlu0 %v380, 96
        %v724 = vpop.permute.xlu0 %723
        %725 = vrot.lane.b32.xlu0 %v382, 96
        %v726 = vpop.permute.xlu0 %725
        %727 = vrot.lane.b32.xlu0 %v385, 96
        %v728 = vpop.permute.xlu0 %727
        %729 = vrot.lane.b32.xlu0 %v387, 96
        %v730 = vpop.permute.xlu0 %729
        %731 = vrot.lane.b32.xlu0 %v390, 96
        %v732 = vpop.permute.xlu0 %731
        %733 = vrot.lane.b32.xlu0 %v392, 96
        %v734 = vpop.permute.xlu0 %733
        %735 = vrot.lane.b32.xlu0 %v583, 96
        %v736 = vpop.permute.xlu0 %735
        %737 = vrot.lane.b32.xlu0 %v585, 96
        %v738 = vpop.permute.xlu0 %737
        %739 = vrot.lane.b32.xlu0 %v708, 96
        %v740 = vpop.permute.xlu0 %739
        %741 = vrot.lane.b32.xlu0 %v710, 96
        %v742 = vpop.permute.xlu0 %741
        %v759 = vrot.slane %v325, 2
        %v760 = vrot.slane %v326, 2
        %v761 = vsel %vm441, %v759, %v760
        %v762 = vrot.slane %v327, 2
        %v763 = vsel %vm441, %v760, %v762
        %vm780 = vcmask 261120
        %v781 = vsel %vm780, %v298, %v394
        %v782 = vsel %vm780, %v299, %v396
        %v783 = vsel %vm780, %v301, %v398
        %v784 = vsel %vm780, %v302, %v400
        %v785 = vsel %vm780, %v304, %v402
        %v786 = vsel %vm780, %v305, %v404
        %v787 = vsel %vm780, %v307, %v406
        %v788 = vsel %vm780, %v308, %v408
        %v789 = vsel %vm780, %v310, %v410
        %v790 = vsel %vm780, %v311, %v412
        %v791 = vsel %vm780, %v313, %v414
        %v792 = vsel %vm780, %v314, %v416
        %v793 = vsel %vm780, %v316, %v418
        %v794 = vsel %vm780, %v317, %v420
        %v795 = vsel %vm780, %v319, %v422
        %v796 = vsel %vm780, %v320, %v424
        %vm797 = vcmask 523264
        %v798 = vsel %vm797, %v781, %v483
        %v799 = vsel %vm797, %v782, %v485
        %v800 = vsel %vm797, %v783, %v487
        %v801 = vsel %vm797, %v784, %v489
        %v802 = vsel %vm797, %v785, %v491
        %v803 = vsel %vm797, %v786, %v493
        %v804 = vsel %vm797, %v787, %v495
        %v805 = vsel %vm797, %v788, %v497
        %v806 = vsel %vm797, %v789, %v499
        %v807 = vsel %vm797, %v790, %v501
        %v808 = vsel %vm797, %v791, %v503
        %v809 = vsel %vm797, %v792, %v505
        %v810 = vsel %vm797, %v793, %v507
        %v811 = vsel %vm797, %v794, %v509
        %v812 = vsel %vm797, %v795, %v511
        %v813 = vsel %vm797, %v796, %v513
        %vm814 = vcmask 785408
        %v815 = vsel %vm814, %v798, %v533
        %v816 = vsel %vm814, %v799, %v535
        %v817 = vsel %vm814, %v800, %v537
        %v818 = vsel %vm814, %v801, %v539
        %v819 = vsel %vm814, %v802, %v541
        %v820 = vsel %vm814, %v803, %v543
        %v821 = vsel %vm814, %v804, %v545
        %v822 = vsel %vm814, %v805, %v547
        %v823 = vsel %vm814, %v806, %v549
        %v824 = vsel %vm814, %v807, %v551
        %v825 = vsel %vm814, %v808, %v553
        %v826 = vsel %vm814, %v809, %v555
        %v827 = vsel %vm814, %v810, %v557
        %v828 = vsel %vm814, %v811, %v559
        %v829 = vsel %vm814, %v812, %v561
        %v830 = vsel %vm814, %v813, %v563
        %v831 = vsel %vm780, %v360, %v608
        %v832 = vsel %vm780, %v362, %v610
        %v833 = vsel %vm780, %v365, %v612
        %v834 = vsel %vm780, %v367, %v614
        %v835 = vsel %vm780, %v370, %v616
        %v836 = vsel %vm780, %v372, %v618
        %v837 = vsel %vm780, %v375, %v620
        %v838 = vsel %vm780, %v377, %v622
        %v839 = vsel %vm780, %v380, %v624
        %v840 = vsel %vm780, %v382, %v626
        %v841 = vsel %vm780, %v385, %v628
        %v842 = vsel %vm780, %v387, %v630
        %v843 = vsel %vm780, %v390, %v632
        %v844 = vsel %vm780, %v392, %v634
        %v845 = vsel %vm780, %v583, %v636
        %v846 = vsel %vm780, %v585, %v638
        %v847 = vsel %vm797, %v831, %v658
        %v848 = vsel %vm797, %v832, %v660
        %v849 = vsel %vm797, %v833, %v662
        %v850 = vsel %vm797, %v834, %v664
        %v851 = vsel %vm797, %v835, %v666
        %v852 = vsel %vm797, %v836, %v668
        %v853 = vsel %vm797, %v837, %v670
        %v854 = vsel %vm797, %v838, %v672
        %v855 = vsel %vm797, %v839, %v674
        %v856 = vsel %vm797, %v840, %v676
        %v857 = vsel %vm797, %v841, %v678
        %v858 = vsel %vm797, %v842, %v680
        %v859 = vsel %vm797, %v843, %v682
        %v860 = vsel %vm797, %v844, %v684
        %v861 = vsel %vm797, %v845, %v686
        %v862 = vsel %vm797, %v846, %v688
        %v863 = vsel %vm814, %v847, %v712
        %v864 = vsel %vm814, %v848, %v714
        %v865 = vsel %vm814, %v849, %v716
        %v866 = vsel %vm814, %v850, %v718
        %v867 = vsel %vm814, %v851, %v720
        %v868 = vsel %vm814, %v852, %v722
        %v869 = vsel %vm814, %v853, %v724
        %v870 = vsel %vm814, %v854, %v726
        %v871 = vsel %vm814, %v855, %v728
        %v872 = vsel %vm814, %v856, %v730
        %v873 = vsel %vm814, %v857, %v732
        %v874 = vsel %vm814, %v858, %v734
        %v875 = vsel %vm814, %v859, %v736
        %v876 = vsel %vm814, %v860, %v738
        %v877 = vsel %vm814, %v861, %v740
        %v878 = vsel %vm814, %v862, %v742
        %v879 = vpack.c.bf16 %v816, %v815
        %v880 = vpack.c.bf16 %v864, %v863
        %v881 = vpack.c.bf16 %v456, %v454
        %v882 = vpack.c.bf16 %v818, %v817
        %v883 = vpack.c.bf16 %v866, %v865
        %v884 = vpack.c.bf16 %v461, %v459
        %v885 = vpack.c.bf16 %v820, %v819
        %v886 = vpack.c.bf16 %v868, %v867
        %v887 = vpack.c.bf16 %v466, %v464
        %v888 = vpack.c.bf16 %v822, %v821
        %v889 = vpack.c.bf16 %v870, %v869
        %v890 = vpack.c.bf16 %v471, %v469
        %v891 = vpack.c.bf16 %v824, %v823
        %v892 = vpack.c.bf16 %v872, %v871
        %v893 = vpack.c.bf16 %v476, %v474
        %v894 = vpack.c.bf16 %v826, %v825
        %v895 = vpack.c.bf16 %v874, %v873
        %v896 = vpack.c.bf16 %v481, %v479
        %v897 = vpack.c.bf16 %v828, %v827
        %v898 = vpack.c.bf16 %v876, %v875
        %v899 = vpack.c.bf16 %v606, %v604
        %v900 = vpack.c.bf16 %v830, %v829
        %v901 = vpack.c.bf16 %v878, %v877
        %v902 = vpack.c.bf16 %v763, %v761
        %v903 = vld [vmem:[#allocation2] sm:$0xf]
        %v904 = vld [vmem:[#allocation2 + $0x4] sm:$0xf]
        %v905 = vld [vmem:[#allocation2 + $0x8] sm:$0xf]
        %v906 = vld [vmem:[#allocation2 + $0xc] sm:$0xf]
        %v907 = vld [vmem:[#allocation2 + $0x10] sm:$0xf]
        %v908 = vld [vmem:[#allocation2 + $0x14] sm:$0xf]
        %v909 = vld [vmem:[#allocation2 + $0x18] sm:$0xf]
        %v910 = vld [vmem:[#allocation2 + $0x1c] sm:$0xf]
        %v911 = vld [vmem:[#allocation2 + $0x20] sm:$0xf]
        %v912 = vld [vmem:[#allocation2 + $0x24] sm:$0xf]
        %v913 = vld [vmem:[#allocation2 + $0x28] sm:$0xf]
        %v914 = vld [vmem:[#allocation2 + $0x2c] sm:$0xf]
        %v915 = vld [vmem:[#allocation2 + $0x30] sm:$0xf]
        %v916 = vld [vmem:[#allocation2 + $0x34] sm:$0xf]
        %v917 = vld [vmem:[#allocation2 + $0x38] sm:$0xf]
        %v918 = vld [vmem:[#allocation2 + $0x3c] sm:$0xf]
        %v919 = vld [vmem:[#allocation2 + $0x40] sm:$0xf]
        %v920 = vld [vmem:[#allocation2 + $0x44] sm:$0xf]
        %v921 = vld [vmem:[#allocation2 + $0x48] sm:$0xf]
        %v922 = vld [vmem:[#allocation2 + $0x4c] sm:$0xf]
        %v923 = vld [vmem:[#allocation2 + $0x50] sm:$0xf]
        %v924 = vld [vmem:[#allocation2 + $0x54] sm:$0xf]
        %v925 = vld [vmem:[#allocation2 + $0x58] sm:$0xf]
        %v926 = vld [vmem:[#allocation2 + $0x5c] sm:$0xf]
        %v927 = vld [vmem:[#allocation2 + $0x60] sm:$0xf]
        %v928 = vld [vmem:[#allocation2 + $0x64] sm:$0xf]
        %v929 = vld [vmem:[#allocation2 + $0x68] sm:$0xf]
        %v930 = vld [vmem:[#allocation2 + $0x6c] sm:$0xf]
        %v931 = vld [vmem:[#allocation2 + $0x70] sm:$0xf]
        %v932 = vld [vmem:[#allocation2 + $0x74] sm:$0xf]
        %v933 = vld [vmem:[#allocation2 + $0x78] sm:$0xf]
        %v934 = vld [vmem:[#allocation2 + $0x7c] sm:$0xf]
        %v935 = vld [vmem:[#allocation2 + $0x80] sm:$0xf]
        %v936 = vld [vmem:[#allocation2 + $0x84] sm:$0xf]
        %v937 = vld [vmem:[#allocation2 + $0x88] sm:$0xf]
        %v938 = vld [vmem:[#allocation2 + $0x8c] sm:$0xf]
        %v975 = vunpack.c.l.b16 %v903
        %v976 = vunpack.c.l.b16 %v904
        %v977 = vunpack.c.l.b16 %v905
        %v978 = vunpack.c.l.b16 %v906
        %v979 = vunpack.c.l.b16 %v907
        %v980 = vunpack.c.l.b16 %v908
        %v981 = vunpack.c.l.b16 %v909
        %v982 = vunpack.c.l.b16 %v910
        %v983 = vunpack.c.l.b16 %v911
        %v984 = vunpack.c.l.b16 %v912
        %v985 = vunpack.c.l.b16 %v913
        %v986 = vunpack.c.l.b16 %v914
        %v987 = vunpack.c.l.b16 %v915
        %v988 = vunpack.c.l.b16 %v916
        %v989 = vunpack.c.l.b16 %v917
        %v990 = vunpack.c.l.b16 %v918
        %v991 = vunpack.c.l.b16 %v919
        %v992 = vunpack.c.l.b16 %v920
        %v993 = vunpack.c.l.b16 %v921
        %v994 = vunpack.c.l.b16 %v922
        %v995 = vunpack.c.l.b16 %v923
        %v996 = vunpack.c.l.b16 %v924
        %v997 = vunpack.c.l.b16 %v925
        %v998 = vunpack.c.l.b16 %v926
        %v999 = vunpack.c.l.b16 %v927
        %v1000 = vunpack.c.l.b16 %v928
        %v1001 = vunpack.c.l.b16 %v929
        %v1002 = vunpack.c.l.b16 %v930
        %v1003 = vunpack.c.l.b16 %v931
        %v1004 = vunpack.c.l.b16 %v932
        %v1005 = vunpack.c.l.b16 %v933
        %v1006 = vunpack.c.l.b16 %v934
        %v1007 = vunpack.c.l.b16 %v935
        %v1008 = vunpack.c.l.b16 %v936
        %v1009 = vunpack.c.l.b16 %v937
        %v1010 = vunpack.c.l.b16 %v938
        %v1011 = vpack.c.b16 %v976, %v975
        %v1012 = vpack.c.b16 %v978, %v977
        %v1013 = vpack.c.b16 %v980, %v979
        %v1014 = vpack.c.b16 %v982, %v981
        %v1015 = vpack.c.b16 %v984, %v983
        %v1016 = vpack.c.b16 %v986, %v985
        %v1017 = vpack.c.b16 %v988, %v987
        %v1018 = vpack.c.b16 %v990, %v989
        %v1019 = vpack.c.b16 %v992, %v991
        %v1020 = vpack.c.b16 %v994, %v993
        %v1021 = vpack.c.b16 %v996, %v995
        %v1022 = vpack.c.b16 %v998, %v997
        %v1023 = vpack.c.b16 %v1000, %v999
        %v1024 = vpack.c.b16 %v1002, %v1001
        %v1025 = vpack.c.b16 %v1004, %v1003
        %v1026 = vpack.c.b16 %v1006, %v1005
        %v1027 = vpack.c.b16 %v1008, %v1007
        %v1028 = vpack.c.b16 %v1010, %v1009
        %v1048 = vsel %vm780, %v881, 0
        %v1051 = vsel %vm780, %v884, 0
        %v1054 = vsel %vm780, %v887, 0
        %v1057 = vsel %vm780, %v890, 0
        %v1060 = vsel %vm780, %v893, 0
        %v1063 = vsel %vm780, %v896, 0
        %v1066 = vsel %vm780, %v899, 0
        %v1069 = vsel %vm780, %v902, 0
        %1071 = vmatprep.subr.bf16.mxu0 0
        %1072 = vmatpush1.bf16.msra.mxu0 %v1011
        %1073 = vmatprep.subr.bf16.mxu0 0
        %1074 = vmatpush1.bf16.msra.mxu0 %v1012
        %1075 = vmatprep.subr.bf16.mxu0 0
        %1076 = vmatpush1.bf16.msra.mxu0 %v1013
        %1077 = vmatprep.subr.bf16.mxu0 0
        %1078 = vmatpush1.bf16.msra.mxu0 %v1014
        %1079 = vmatprep.subr.bf16.mxu0 0
        %1080 = vmatpush1.bf16.msra.mxu0 %v1015
        %1081 = vmatprep.subr.bf16.mxu0 0
        %1082 = vmatpush1.bf16.msra.mxu0 %v1016
        %1083 = vmatprep.subr.bf16.mxu0 0
        %1084 = vmatpush1.bf16.msra.mxu0 %v1017
        %1085 = vmatprep.subr.bf16.mxu0 0
        %1086 = vmatpush1.bf16.msra.mxu0 %v1018
        %1087 = vmatprep.subr.bf16.mxu0 0
        %1088 = vmatpush1.bf16.msra.mxu0 %v1019
        %1089 = vmatprep.subr.bf16.mxu0 0
        %1090 = vmatpush1.bf16.msra.mxu0 %v1020
        %1091 = vmatprep.subr.bf16.mxu0 0
        %1092 = vmatpush1.bf16.msra.mxu0 %v1021
        %1093 = vmatprep.subr.bf16.mxu0 0
        %1094 = vmatpush1.bf16.msra.mxu0 %v1022
        %1095 = vmatprep.subr.bf16.mxu0 0
        %1096 = vmatpush1.bf16.msra.mxu0 %v1023
        %1097 = vmatprep.subr.bf16.mxu0 0
        %1098 = vmatpush1.bf16.msra.mxu0 %v1024
        %1099 = vmatprep.subr.bf16.mxu0 0
        %1100 = vmatpush1.bf16.msra.mxu0 %v1025
        %1101 = vmatprep.subr.bf16.mxu0 0
        %1102 = vmatpush1.bf16.msra.mxu0 %v1026
        %1103 = vmatprep.mubr.bf16.mxu0 %v880
        %1104 = vmatmul.mubr.bf16.gmra.mrb[0].mxu0 %v879
        %v1105 = vpop.f32.mrb[0].mxu0
        %v1106 = vadd.f32 0.0, %v1105
        %v1107 = vpop.f32.mrb[0].mxu0
        %v1108 = vpop.f32.mrb[0].mxu0
        %v1109 = vadd.f32 0.0, %v1108
        %v1110 = vpop.f32.mrb[0].mxu0
        %1111 = vmatprep.mubr.bf16.mxu0 %v883
        %1112 = vmatmul.mubr.bf16.gmra.mrb[0].mxu0 %v882
        %v1113 = vpop.f32.mrb[0].mxu0
        %v1114 = vadd.f32 0.0, %v1113
        %v1115 = vpop.f32.mrb[0].mxu0
        %v1116 = vpop.f32.mrb[0].mxu0
        %v1117 = vadd.f32 0.0, %v1116
        %v1118 = vpop.f32.mrb[0].mxu0
        %1119 = vmatprep.mubr.bf16.mxu0 %v886
        %1120 = vmatmul.mubr.bf16.gmra.mrb[0].mxu0 %v885
        %v1121 = vpop.f32.mrb[0].mxu0
        %v1122 = vadd.f32 0.0, %v1121
        %v1123 = vpop.f32.mrb[0].mxu0
        %v1124 = vpop.f32.mrb[0].mxu0
        %v1125 = vadd.f32 0.0, %v1124
        %v1126 = vpop.f32.mrb[0].mxu0
        %1127 = vmatprep.mubr.bf16.mxu0 %v889
        %1128 = vmatmul.mubr.bf16.gmra.mrb[0].mxu0 %v888
        %v1129 = vpop.f32.mrb[0].mxu0
        %v1130 = vadd.f32 0.0, %v1129
        %v1131 = vpop.f32.mrb[0].mxu0
        %v1132 = vpop.f32.mrb[0].mxu0
        %v1133 = vadd.f32 0.0, %v1132
        %v1134 = vpop.f32.mrb[0].mxu0
        %1135 = vmatprep.mubr.bf16.mxu0 %v892
        %1136 = vmatmul.mubr.bf16.gmra.mrb[0].mxu0 %v891
        %v1137 = vpop.f32.mrb[0].mxu0
        %v1138 = vadd.f32 0.0, %v1137
        %v1139 = vpop.f32.mrb[0].mxu0
        %v1140 = vpop.f32.mrb[0].mxu0
        %v1141 = vadd.f32 0.0, %v1140
        %v1142 = vpop.f32.mrb[0].mxu0
        %1143 = vmatprep.mubr.bf16.mxu0 %v895
        %1144 = vmatmul.mubr.bf16.gmra.mrb[0].mxu0 %v894
        %v1145 = vpop.f32.mrb[0].mxu0
        %v1146 = vadd.f32 0.0, %v1145
        %v1147 = vpop.f32.mrb[0].mxu0
        %v1148 = vpop.f32.mrb[0].mxu0
        %v1149 = vadd.f32 0.0, %v1148
        %v1150 = vpop.f32.mrb[0].mxu0
        %1151 = vmatprep.mubr.bf16.mxu0 %v898
        %1152 = vmatmul.mubr.bf16.gmra.mrb[0].mxu0 %v897
        %v1153 = vpop.f32.mrb[0].mxu0
        %v1154 = vadd.f32 0.0, %v1153
        %v1155 = vpop.f32.mrb[0].mxu0
        %v1156 = vpop.f32.mrb[0].mxu0
        %v1157 = vadd.f32 0.0, %v1156
        %v1158 = vpop.f32.mrb[0].mxu0
        %1159 = vmatprep.mubr.bf16.mxu0 %v901
        %1160 = vmatmul.mubr.bf16.gmra.mrb[0].mxu0 %v900
        %v1161 = vpop.f32.mrb[0].mxu0
        %v1162 = vadd.f32 0.0, %v1161
        %v1163 = vpop.f32.mrb[0].mxu0
        %v1164 = vpop.f32.mrb[0].mxu0
        %v1165 = vadd.f32 0.0, %v1164
        %v1166 = vpop.f32.mrb[0].mxu0
        %1167 = vdwg.mxu0
        %1168 = vmatprep.subr.bf16.mxu0 0
        %1169 = vmatpush1.bf16.msra.mxu0 %v1027
        %1170 = vmatprep.subr.bf16.mxu0 0
        %1171 = vmatpush1.bf16.msra.mxu0 %v1028
        %1172 = vmatprep.subr.bf16.mxu0 0
        %1173 = vmatpush1.bf16.msra.mxu0 0
        %1174 = vmatprep.subr.bf16.mxu0 0
        %1175 = vmatpush1.bf16.msra.mxu0 0
        %1176 = vmatprep.subr.bf16.mxu0 0
        %1177 = vmatpush1.bf16.msra.mxu0 0
        %1178 = vmatprep.subr.bf16.mxu0 0
        %1179 = vmatpush1.bf16.msra.mxu0 0
        %1180 = vmatprep.subr.bf16.mxu0 0
        %1181 = vmatpush1.bf16.msra.mxu0 0
        %1182 = vmatprep.subr.bf16.mxu0 0
        %1183 = vmatpush1.bf16.msra.mxu0 0
        %1184 = vmatprep.subr.bf16.mxu0 0
        %1185 = vmatpush1.bf16.msra.mxu0 0
        %1186 = vmatprep.subr.bf16.mxu0 0
        %1187 = vmatpush1.bf16.msra.mxu0 0
        %1188 = vmatprep.subr.bf16.mxu0 0
        %1189 = vmatpush1.bf16.msra.mxu0 0
        %1190 = vmatprep.subr.bf16.mxu0 0
        %1191 = vmatpush1.bf16.msra.mxu0 0
        %1192 = vmatprep.subr.bf16.mxu0 0
        %1193 = vmatpush1.bf16.msra.mxu0 0
        %1194 = vmatprep.subr.bf16.mxu0 0
        %1195 = vmatpush1.bf16.msra.mxu0 0
        %1196 = vmatprep.subr.bf16.mxu0 0
        %1197 = vmatpush1.bf16.msra.mxu0 0
        %1198 = vmatprep.subr.bf16.mxu0 0
        %1199 = vmatpush1.bf16.msra.mxu0 0
        %1200 = vmatprep.mubr.bf16.mxu0 0
        %1201 = vmatmul.mubr.bf16.gmra.mrb[0].mxu0 %v1048
        %v1202 = vpop.f32.mrb[0].mxu0
        %v1203 = vadd.f32 %v1106, %v1202
        %v1204 = vpop.f32.mrb[0].mxu0
        %v1205 = vpop.f32.mrb[0].mxu0
        %v1206 = vadd.f32 %v1109, %v1205
        %v1207 = vpop.f32.mrb[0].mxu0
        %1208 = vmatprep.mubr.bf16.mxu0 0
        %1209 = vmatmul.mubr.bf16.gmra.mrb[0].mxu0 %v1051
        %v1210 = vpop.f32.mrb[0].mxu0
        %v1211 = vadd.f32 %v1114, %v1210
        %v1212 = vpop.f32.mrb[0].mxu0
        %v1213 = vpop.f32.mrb[0].mxu0
        %v1214 = vadd.f32 %v1117, %v1213
        %v1215 = vpop.f32.mrb[0].mxu0
        %1216 = vmatprep.mubr.bf16.mxu0 0
        %1217 = vmatmul.mubr.bf16.gmra.mrb[0].mxu0 %v1054
        %v1218 = vpop.f32.mrb[0].mxu0
        %v1219 = vadd.f32 %v1122, %v1218
        %v1220 = vpop.f32.mrb[0].mxu0
        %v1221 = vpop.f32.mrb[0].mxu0
        %v1222 = vadd.f32 %v1125, %v1221
        %v1223 = vpop.f32.mrb[0].mxu0
        %1224 = vmatprep.mubr.bf16.mxu0 0
        %1225 = vmatmul.mubr.bf16.gmra.mrb[0].mxu0 %v1057
        %v1226 = vpop.f32.mrb[0].mxu0
        %v1227 = vadd.f32 %v1130, %v1226
        %v1228 = vpop.f32.mrb[0].mxu0
        %v1229 = vpop.f32.mrb[0].mxu0
        %v1230 = vadd.f32 %v1133, %v1229
        %v1231 = vpop.f32.mrb[0].mxu0
        %1232 = vmatprep.mubr.bf16.mxu0 0
        %1233 = vmatmul.mubr.bf16.gmra.mrb[0].mxu0 %v1060
        %v1234 = vpop.f32.mrb[0].mxu0
        %v1235 = vadd.f32 %v1138, %v1234
        %v1236 = vpop.f32.mrb[0].mxu0
        %v1237 = vpop.f32.mrb[0].mxu0
        %v1238 = vadd.f32 %v1141, %v1237
        %v1239 = vpop.f32.mrb[0].mxu0
        %1240 = vmatprep.mubr.bf16.mxu0 0
        %1241 = vmatmul.mubr.bf16.gmra.mrb[0].mxu0 %v1063
        %v1242 = vpop.f32.mrb[0].mxu0
        %v1243 = vadd.f32 %v1146, %v1242
        %v1244 = vpop.f32.mrb[0].mxu0
        %v1245 = vpop.f32.mrb[0].mxu0
        %v1246 = vadd.f32 %v1149, %v1245
        %v1247 = vpop.f32.mrb[0].mxu0
        %1248 = vmatprep.mubr.bf16.mxu0 0
        %1249 = vmatmul.mubr.bf16.gmra.mrb[0].mxu0 %v1066
        %v1250 = vpop.f32.mrb[0].mxu0
        %v1251 = vadd.f32 %v1154, %v1250
        %v1252 = vpop.f32.mrb[0].mxu0
        %v1253 = vpop.f32.mrb[0].mxu0
        %v1254 = vadd.f32 %v1157, %v1253
        %v1255 = vpop.f32.mrb[0].mxu0
        %1256 = vmatprep.mubr.bf16.mxu0 0
        %1257 = vmatmul.mubr.bf16.gmra.mrb[0].mxu0 %v1069
        %v1258 = vpop.f32.mrb[0].mxu0
        %v1259 = vadd.f32 %v1162, %v1258
        %v1260 = vpop.f32.mrb[0].mxu0
        %v1261 = vpop.f32.mrb[0].mxu0
        %v1262 = vadd.f32 %v1165, %v1261
        %v1263 = vpop.f32.mrb[0].mxu0
        %1264 = vdwg.mxu0
        %v1265 = vmax.f32 %v1203, 0.0
        %v1266 = vmax.f32 %v1206, 0.0
        %v1267 = vmax.f32 %v1211, 0.0
        %v1268 = vmax.f32 %v1214, 0.0
        %v1269 = vmax.f32 %v1219, 0.0
        %v1270 = vmax.f32 %v1222, 0.0
        %v1271 = vmax.f32 %v1227, 0.0
        %v1272 = vmax.f32 %v1230, 0.0
        %v1273 = vmax.f32 %v1235, 0.0
        %v1274 = vmax.f32 %v1238, 0.0
        %v1275 = vmax.f32 %v1243, 0.0
        %v1276 = vmax.f32 %v1246, 0.0
        %v1277 = vmax.f32 %v1251, 0.0
        %v1278 = vmax.f32 %v1254, 0.0
        %v1279 = vmax.f32 %v1259, 0.0
        %v1280 = vmax.f32 %v1262, 0.0
        %v1281 = vpack.c.bf16 %v1266, %v1265
        %v1282 = vpack.c.bf16 %v1268, %v1267
        %v1283 = vpack.c.bf16 %v1270, %v1269
        %v1284 = vpack.c.bf16 %v1272, %v1271
        %v1285 = vpack.c.bf16 %v1274, %v1273
        %v1286 = vpack.c.bf16 %v1276, %v1275
        %v1287 = vpack.c.bf16 %v1278, %v1277
        %v1288 = vpack.c.bf16 %v1280, %v1279
        %v1289 = vld [vmem:[#allocation4] sm:$0xf]
        %v1290 = vld [vmem:[#allocation4 + $0x4] sm:$0xf]
        %v1293 = vunpack.c.l.b16 %v1289
        %v1294 = vunpack.c.l.b16 %v1290
        %v1295 = vpack.c.b16 %v1294, %v1293
        %vm1297 = vcmask 130048
        %v1299 = vsel %vm1297, %v1281, 0
        %v1302 = vsel %vm1297, %v1282, 0
        %v1305 = vsel %vm1297, %v1283, 0
        %v1308 = vsel %vm1297, %v1284, 0
        %v1311 = vsel %vm1297, %v1285, 0
        %v1314 = vsel %vm1297, %v1286, 0
        %v1317 = vsel %vm1297, %v1287, 0
        %v1320 = vsel %vm1297, %v1288, 0
        %1322 = vmatprep.subr.bf16.mxu0 0
        %1323 = vmatpush1.bf16.msra.mxu0 %v1295
        %1324 = vmatprep.subr.bf16.mxu0 0
        %1325 = vmatpush1.bf16.msra.mxu0 0
        %1326 = vmatprep.subr.bf16.mxu0 0
        %1327 = vmatpush1.bf16.msra.mxu0 0
        %1328 = vmatprep.subr.bf16.mxu0 0
        %1329 = vmatpush1.bf16.msra.mxu0 0
        %1330 = vmatprep.subr.bf16.mxu0 0
        %1331 = vmatpush1.bf16.msra.mxu0 0
        %1332 = vmatprep.subr.bf16.mxu0 0
        %1333 = vmatpush1.bf16.msra.mxu0 0
        %1334 = vmatprep.subr.bf16.mxu0 0
        %1335 = vmatpush1.bf16.msra.mxu0 0
        %1336 = vmatprep.subr.bf16.mxu0 0
        %1337 = vmatpush1.bf16.msra.mxu0 0
        %1338 = vmatprep.subr.bf16.mxu0 0
        %1339 = vmatpush1.bf16.msra.mxu0 0
        %1340 = vmatprep.subr.bf16.mxu0 0
        %1341 = vmatpush1.bf16.msra.mxu0 0
        %1342 = vmatprep.subr.bf16.mxu0 0
        %1343 = vmatpush1.bf16.msra.mxu0 0
        %1344 = vmatprep.subr.bf16.mxu0 0
        %1345 = vmatpush1.bf16.msra.mxu0 0
        %1346 = vmatprep.subr.bf16.mxu0 0
        %1347 = vmatpush1.bf16.msra.mxu0 0
        %1348 = vmatprep.subr.bf16.mxu0 0
        %1349 = vmatpush1.bf16.msra.mxu0 0
        %1350 = vmatprep.subr.bf16.mxu0 0
        %1351 = vmatpush1.bf16.msra.mxu0 0
        %1352 = vmatprep.subr.bf16.mxu0 0
        %1353 = vmatpush1.bf16.msra.mxu0 0
        %1354 = vmatprep.mubr.bf16.mxu0 0
        %1355 = vmatmul.mubr.bf16.gmra.mrb[0].mxu0 %v1299
        %v1356 = vpop.f32.mrb[0].mxu0
        %v1357 = vadd.f32 0.0, %v1356
        %v1358 = vpop.f32.mrb[0].mxu0
        %v1359 = vpop.f32.mrb[0].mxu0
        %v1360 = vadd.f32 0.0, %v1359
        %v1361 = vpop.f32.mrb[0].mxu0
        %1362 = vmatprep.mubr.bf16.mxu0 0
        %1363 = vmatmul.mubr.bf16.gmra.mrb[0].mxu0 %v1302
        %v1364 = vpop.f32.mrb[0].mxu0
        %v1365 = vadd.f32 0.0, %v1364
        %v1366 = vpop.f32.mrb[0].mxu0
        %v1367 = vpop.f32.mrb[0].mxu0
        %v1368 = vadd.f32 0.0, %v1367
        %v1369 = vpop.f32.mrb[0].mxu0
        %1370 = vmatprep.mubr.bf16.mxu0 0
        %1371 = vmatmul.mubr.bf16.gmra.mrb[0].mxu0 %v1305
        %v1372 = vpop.f32.mrb[0].mxu0
        %v1373 = vadd.f32 0.0, %v1372
        %v1374 = vpop.f32.mrb[0].mxu0
        %v1375 = vpop.f32.mrb[0].mxu0
        %v1376 = vadd.f32 0.0, %v1375
        %v1377 = vpop.f32.mrb[0].mxu0
        %1378 = vmatprep.mubr.bf16.mxu0 0
        %1379 = vmatmul.mubr.bf16.gmra.mrb[0].mxu0 %v1308
        %v1380 = vpop.f32.mrb[0].mxu0
        %v1381 = vadd.f32 0.0, %v1380
        %v1382 = vpop.f32.mrb[0].mxu0
        %v1383 = vpop.f32.mrb[0].mxu0
        %v1384 = vadd.f32 0.0, %v1383
        %v1385 = vpop.f32.mrb[0].mxu0
        %1386 = vmatprep.mubr.bf16.mxu0 0
        %1387 = vmatmul.mubr.bf16.gmra.mrb[0].mxu0 %v1311
        %v1388 = vpop.f32.mrb[0].mxu0
        %v1389 = vadd.f32 0.0, %v1388
        %v1390 = vpop.f32.mrb[0].mxu0
        %v1391 = vpop.f32.mrb[0].mxu0
        %v1392 = vadd.f32 0.0, %v1391
        %v1393 = vpop.f32.mrb[0].mxu0
        %1394 = vmatprep.mubr.bf16.mxu0 0
        %1395 = vmatmul.mubr.bf16.gmra.mrb[0].mxu0 %v1314
        %v1396 = vpop.f32.mrb[0].mxu0
        %v1397 = vadd.f32 0.0, %v1396
        %v1398 = vpop.f32.mrb[0].mxu0
        %v1399 = vpop.f32.mrb[0].mxu0
        %v1400 = vadd.f32 0.0, %v1399
        %v1401 = vpop.f32.mrb[0].mxu0
        %1402 = vmatprep.mubr.bf16.mxu0 0
        %1403 = vmatmul.mubr.bf16.gmra.mrb[0].mxu0 %v1317
        %v1404 = vpop.f32.mrb[0].mxu0
        %v1405 = vadd.f32 0.0, %v1404
        %v1406 = vpop.f32.mrb[0].mxu0
        %v1407 = vpop.f32.mrb[0].mxu0
        %v1408 = vadd.f32 0.0, %v1407
        %v1409 = vpop.f32.mrb[0].mxu0
        %1410 = vmatprep.mubr.bf16.mxu0 0
        %1411 = vmatmul.mubr.bf16.gmra.mrb[0].mxu0 %v1320
        %v1412 = vpop.f32.mrb[0].mxu0
        %v1413 = vadd.f32 0.0, %v1412
        %v1414 = vpop.f32.mrb[0].mxu0
        %v1415 = vpop.f32.mrb[0].mxu0
        %v1416 = vadd.f32 0.0, %v1415
        %v1417 = vpop.f32.mrb[0].mxu0
        %1418 = vdwg.mxu0
        %v1443 = vrot.slane %v271, 1
        %v1444 = vrot.slane %v272, 1
        %v1445 = vsel %vm352, %v1443, %v1444
        %v1446 = vrot.slane %v273, 1
        %v1447 = vsel %vm352, %v1444, %v1446
        %v1448 = vrot.slane %v274, 1
        %v1449 = vrot.slane %v275, 1
        %v1450 = vsel %vm352, %v1448, %v1449
        %v1451 = vrot.slane %v276, 1
        %v1452 = vsel %vm352, %v1449, %v1451
        %v1453 = vrot.slane %v277, 1
        %v1454 = vrot.slane %v278, 1
        %v1455 = vsel %vm352, %v1453, %v1454
        %v1456 = vrot.slane %v279, 1
        %v1457 = vsel %vm352, %v1454, %v1456
        %v1458 = vrot.slane %v280, 1
        %v1459 = vrot.slane %v281, 1
        %v1460 = vsel %vm352, %v1458, %v1459
        %v1461 = vrot.slane %v282, 1
        %v1462 = vsel %vm352, %v1459, %v1461
        %v1463 = vrot.slane %v283, 1
        %v1464 = vrot.slane %v284, 1
        %v1465 = vsel %vm352, %v1463, %v1464
        %v1466 = vrot.slane %v285, 1
        %v1467 = vsel %vm352, %v1464, %v1466
        %v1468 = vrot.slane %v286, 1
        %v1469 = vrot.slane %v287, 1
        %v1470 = vsel %vm352, %v1468, %v1469
        %v1471 = vrot.slane %v288, 1
        %v1472 = vsel %vm352, %v1469, %v1471
        %v1473 = vrot.slane %v289, 1
        %v1474 = vrot.slane %v290, 1
        %v1475 = vsel %vm352, %v1473, %v1474
        %v1476 = vrot.slane %v291, 1
        %v1477 = vsel %vm352, %v1474, %v1476
        %v1478 = vrot.slane %v292, 1
        %v1479 = vrot.slane %v293, 1
        %v1480 = vsel %vm352, %v1478, %v1479
        %v1481 = vrot.slane %v294, 1
        %v1482 = vsel %vm352, %v1479, %v1481
        %v1499 = vadd.f32 %v1445, %v1357
        %v1500 = vadd.f32 %v1447, %v1360
        %v1501 = vadd.f32 %v1450, %v1365
        %v1502 = vadd.f32 %v1452, %v1368
        %v1503 = vadd.f32 %v1455, %v1373
        %v1504 = vadd.f32 %v1457, %v1376
        %v1505 = vadd.f32 %v1460, %v1381
        %v1506 = vadd.f32 %v1462, %v1384
        %v1507 = vadd.f32 %v1465, %v1389
        %v1508 = vadd.f32 %v1467, %v1392
        %v1509 = vadd.f32 %v1470, %v1397
        %v1510 = vadd.f32 %v1472, %v1400
        %v1511 = vadd.f32 %v1475, %v1405
        %v1512 = vadd.f32 %v1477, %v1408
        %v1513 = vadd.f32 %v1480, %v1413
        %v1514 = vadd.f32 %v1482, %v1416
        %v1515 = vpack.c.bf16 %v1500, %v1499
        %v1516 = vpack.c.bf16 %v1502, %v1501
        %v1517 = vpack.c.bf16 %v1504, %v1503
        %v1518 = vpack.c.bf16 %v1506, %v1505
        %v1519 = vpack.c.bf16 %v1508, %v1507
        %v1520 = vpack.c.bf16 %v1510, %v1509
        %v1521 = vpack.c.bf16 %v1512, %v1511
        %v1522 = vpack.c.bf16 %v1514, %v1513
        %v1531 = vunpack.c.l.b16 %v1515
        %v1532 = vunpack.c.h.b16 %v1515
        %v1533 = vunpack.c.l.b16 %v1516
        %v1534 = vunpack.c.h.b16 %v1516
        %v1535 = vunpack.c.l.b16 %v1517
        %v1536 = vunpack.c.h.b16 %v1517
        %v1537 = vunpack.c.l.b16 %v1518
        %v1538 = vunpack.c.h.b16 %v1518
        %v1539 = vunpack.c.l.b16 %v1519
        %v1540 = vunpack.c.h.b16 %v1519
        %v1541 = vunpack.c.l.b16 %v1520
        %v1542 = vunpack.c.h.b16 %v1520
        %v1543 = vunpack.c.l.b16 %v1521
        %v1544 = vunpack.c.h.b16 %v1521
        %v1545 = vunpack.c.l.b16 %v1522
        %v1546 = vunpack.c.h.b16 %v1522
        %v1547 = vpack.c.b16 %v1531, %v1531
        %v1548 = vpack.c.b16 %v1532, %v1532
        %v1549 = vpack.c.b16 %v1533, %v1533
        %v1550 = vpack.c.b16 %v1534, %v1534
        %v1551 = vpack.c.b16 %v1535, %v1535
        %v1552 = vpack.c.b16 %v1536, %v1536
        %v1553 = vpack.c.b16 %v1537, %v1537
        %v1554 = vpack.c.b16 %v1538, %v1538
        %v1555 = vpack.c.b16 %v1539, %v1539
        %v1556 = vpack.c.b16 %v1540, %v1540
        %v1557 = vpack.c.b16 %v1541, %v1541
        %v1558 = vpack.c.b16 %v1542, %v1542
        %v1559 = vpack.c.b16 %v1543, %v1543
        %v1560 = vpack.c.b16 %v1544, %v1544
        %v1561 = vpack.c.b16 %v1545, %v1545
        %v1562 = vpack.c.b16 %v1546, %v1546
        %vm1579 = vcmask 257024
        %1580 = vst.msk [vmem:[%s234] sm:$0xf] %vm1579, %v1547
        %1581 = vst.msk [vmem:[%s234 + $0x4] sm:$0xf] %vm1579, %v1548
        %1582 = vst.msk [vmem:[%s234 + $0x8] sm:$0xf] %vm1579, %v1549
        %1583 = vst.msk [vmem:[%s234 + $0xc] sm:$0xf] %vm1579, %v1550
        %1584 = vst.msk [vmem:[%s234 + $0x10] sm:$0xf] %vm1579, %v1551
        %1585 = vst.msk [vmem:[%s234 + $0x14] sm:$0xf] %vm1579, %v1552
        %1586 = vst.msk [vmem:[%s234 + $0x18] sm:$0xf] %vm1579, %v1553
        %1587 = vst.msk [vmem:[%s234 + $0x1c] sm:$0xf] %vm1579, %v1554
        %1588 = vst.msk [vmem:[%s234 + $0x20] sm:$0xf] %vm1579, %v1555
        %1589 = vst.msk [vmem:[%s234 + $0x24] sm:$0xf] %vm1579, %v1556
        %1590 = vst.msk [vmem:[%s234 + $0x28] sm:$0xf] %vm1579, %v1557
        %1591 = vst.msk [vmem:[%s234 + $0x2c] sm:$0xf] %vm1579, %v1558
        %1592 = vst.msk [vmem:[%s234 + $0x30] sm:$0xf] %vm1579, %v1559
        %1593 = vst.msk [vmem:[%s234 + $0x34] sm:$0xf] %vm1579, %v1560
        %1594 = vst.msk [vmem:[%s234 + $0x38] sm:$0xf] %vm1579, %v1561
        %1595 = vst.msk [vmem:[%s234 + $0x3c] sm:$0xf] %vm1579, %v1562
        %s1596 = smul.u32 %s20, 2
        %s1597 = sadd.s32 %s1596, %s21
        %p1598 = scmp.lt.s32.totalorder %s1597, 3
        %s1599 = scalar_select %p1598, %s1597, 3
        %s1600 = smul.addr %s1599, 16
        %s1601 = smul.addr %s1600, 4
        %s1602 = scalar_lea.vmem %s3, %s1601
        // Predicated region
        $region41: #{_lambda_.6} parent=31 // pred_check
          %p1603 = pneg %p122
        $region42: #{_lambda_.6} parent=31 // pred_check_branch
          %1605 = sbr.rel (%p1603) target = $region44
        $region43: #{_lambda_.6} parent=31 // pred_region
          %s1606 = smul.u32 %s20, 2
          %s1607 = sadd.s32 %s1606, %s21
        $region44: #{_lambda_.6} parent=31 // pred_fallthru
          _
      $region32: #{_lambda_.6} parent=5 // pred_fallthru
        _
      %p1608 = scmp.le.s32.totalorder 2, %s11
      // Predicated region
      $region45: #{_lambda_.6} parent=5 // pred_check
        %p1609 = pneg %p1608
      $region46: #{_lambda_.6} parent=5 // pred_check_branch
        %1611 = sbr.rel (%p1609) target = $region48
      $region47: #{_lambda_.6} parent=5 // pred_region
        %s1612 = ssub.s32 %s11, 2
        // Predicated region
        $region49: #{_lambda_.6} parent=47 // pred_check
          %p1613 = pneg %p128
        $region50: #{_lambda_.6} parent=47 // pred_check_branch
          %1615 = sbr.rel (%p1613) target = $region52
        $region51: #{_lambda_.6} parent=47 // pred_region
          %s1616 = smul.u32 %s22, 2
          %s1617 = sadd.s32 %s1616, %s23
          %p1618 = scmp.lt.s32.totalorder %s1617, 3
          %s1619 = scalar_select %p1618, %s1617, 3
          %s1620 = smul.addr %s1619, 16
          %s1621 = smul.addr %s1620, 4
          %s1622 = scalar_lea.vmem %s3, %s1621
        $region52: #{_lambda_.6} parent=47 // pred_fallthru
          _
      $region48: #{_lambda_.6} parent=5 // pred_fallthru
        _
    $region6: #{_lambda_.6} parent=1 // loop_footer
      %s15 = sadd.s32 1, %s11
    $region7: #{_lambda_.6} parent=1 // loop_footer_branch
      %10 = sbr.rel target = $region3
    $region8: #{_lambda_.6} parent=1 // loop_exit
      _
    %1623 = vsyncpa [#allocation3], 1
    %s1624 = scalar_lea.sflag [#allocation3], 1
    %1625 = vsyncpa %s1624, 1
    %1626 = vsyncpa [#allocation5], 1

// kernel: _lambda_.9
$region0: #{_lambda_.9}
  #allocation0 [shape = 'u32[]', space=smem, size = 0x4, offset = 0x4, fixed_abs, tag = 'smem constant byte address 0x4 - core index']
  #allocation1 [shape = 'u32[144,128]{1,0:T(1,128)}', space=vmem, size = 0x12000, scoped, tag = 'internal scratch']
  %s0 = inlined_call_operand.vmem [shape: bf16[4,18,34,16], index: 0, kind: input, shape index: {}]
  %s1 = inlined_call_operand.vmem [shape: bf16[144,12], index: 1, kind: input, shape index: {}]
  %s2 = inlined_call_operand.vmem [shape: f32[1,12], index: 2, kind: input, shape index: {}]
  %s3 = inlined_call_operand.vmem [shape: f32[4,512,12], index: 3, kind: output, shape index: {}]
  %s4 = sld [smem:[#allocation0]]
  $region45: #{_lambda_.9} parent=0
    _
  %s6 = ssub.s32 1, %s4
  %s7 = scalar_select 0, %s6, %s4
  loop: start=0, step=1, limit=6
  $region2: #{_lambda_.9} parent=0 // loop_pre_header
    _
  $region3: #{_lambda_.9} parent=0 // loop_header
    %s9 = sphi 0, %s13
    %p10 = scmp.ge.s32.totalorder %s9, 6
    %s16 = sphi 0, %s28
    %s17 = sphi 0, %s24
    %s18 = sphi 0, %s16
    %s19 = sphi 0, %s17
    %s20 = sphi 0, %s18
    %s21 = sphi 0, %s19
    %s35 = sphi 0, %s37
    %s38 = sphi 0, %s35
    %s39 = sphi 0, %s38
    %s55 = sphi 0, %s39
    %s59 = sphi 0, %s59
    %s61 = sphi 0, %s59
    %s62 = sphi 0, %s61
    %s76 = sphi 0, %s62
    %s80 = sphi 0, %s80
    %s82 = sphi 0, %s80
    %s83 = sphi 0, %s82
    %s97 = sphi 0, %s83
    %s107 = sphi 0, %s109
    %s110 = sphi 0, %s107
    %s111 = sphi 0, %s110
    %s127 = sphi 0, %s111
  $region4: #{_lambda_.9} parent=0 // loop_header_branch
    %12 = sbr.rel (%p10) target = $region8
  $region5: #{_lambda_.9} parent=0 // loop_body
    %s14 = ssub.s32 %s9, 1
    %s15 = ssub.s32 %s9, 2
    %s22 = sadd.s32 1, %s17
    %p23 = scmp.ge.s32.totalorder %s22, 2
    %s24 = scalar_select %p23, 0, %s22
    %s25 = sadd.s32 1, %s16
    %s26 = scalar_select %p23, %s25, %s16
    %p27 = scmp.ge.s32.totalorder %s26, 2
    %s28 = scalar_select %p27, 0, %s26
    %s29 = smul.u32 %s16, 2
    %s30 = sadd.s32 %s29, %s17
    %s31 = smul.u32 %s28, 2
    %s32 = sadd.s32 %s31, %s24
    %s33 = ssub.s32 %s30, %s32
    %p34 = scmp.eq.s32.totalorder %s33, 0
    %s36 = sadd.s32 %s35, 1
    %s37 = scalar_select %p34, %s35, %s36
    %p40 = pneg %p34
    %p41 = scmp.eq.s32.totalorder %s9, 3
    %p42 = por %p40, %p41
    %p43 = scmp.ne.s32.totalorder %s35, %s38
    %p44 = scmp.eq.s32.totalorder %s9, 0
    %p45 = por %p43, %p44
    %p46 = scmp.ne.s32.totalorder %s35, %s38
    %p47 = scmp.eq.s32.totalorder %s14, 3
    %p48 = por %p46, %p47
    %p49 = scmp.ne.s32.totalorder %s38, %s39
    %p50 = scmp.eq.s32.totalorder %s14, 0
    %p51 = por %p49, %p50
    %p52 = scmp.ne.s32.totalorder %s38, %s39
    %p53 = scmp.eq.s32.totalorder %s15, 3
    %p54 = por %p52, %p53
    %p56 = scmp.ne.s32.totalorder %s39, %s55
    %p57 = scmp.eq.s32.totalorder %s15, 0
    %p58 = por %p56, %p57
    %s60 = sadd.s32 %s59, 1
    %p63 = scmp.eq.s32.totalorder %s9, 3
    %p64 = scmp.ne.s32.totalorder %s59, %s61
    %p65 = scmp.eq.s32.totalorder %s9, 0
    %p66 = por %p64, %p65
    %p67 = scmp.ne.s32.totalorder %s59, %s61
    %p68 = scmp.eq.s32.totalorder %s14, 3
    %p69 = por %p67, %p68
    %p70 = scmp.ne.s32.totalorder %s61, %s62
    %p71 = scmp.eq.s32.totalorder %s14, 0
    %p72 = por %p70, %p71
    %p73 = scmp.ne.s32.totalorder %s61, %s62
    %p74 = scmp.eq.s32.totalorder %s15, 3
    %p75 = por %p73, %p74
    %p77 = scmp.ne.s32.totalorder %s62, %s76
    %p78 = scmp.eq.s32.totalorder %s15, 0
    %p79 = por %p77, %p78
    %s81 = sadd.s32 %s80, 1
    %p84 = scmp.eq.s32.totalorder %s9, 3
    %p85 = scmp.ne.s32.totalorder %s80, %s82
    %p86 = scmp.eq.s32.totalorder %s9, 0
    %p87 = por %p85, %p86
    %p88 = scmp.ne.s32.totalorder %s80, %s82
    %p89 = scmp.eq.s32.totalorder %s14, 3
    %p90 = por %p88, %p89
    %p91 = scmp.ne.s32.totalorder %s82, %s83
    %p92 = scmp.eq.s32.totalorder %s14, 0
    %p93 = por %p91, %p92
    %p94 = scmp.ne.s32.totalorder %s82, %s83
    %p95 = scmp.eq.s32.totalorder %s15, 3
    %p96 = por %p94, %p95
    %p98 = scmp.ne.s32.totalorder %s83, %s97
    %p99 = scmp.eq.s32.totalorder %s15, 0
    %p100 = por %p98, %p99
    %s101 = smul.u32 %s16, 2
    %s102 = sadd.s32 %s101, %s17
    %s103 = smul.u32 %s28, 2
    %s104 = sadd.s32 %s103, %s24
    %s105 = ssub.s32 %s102, %s104
    %p106 = scmp.eq.s32.totalorder %s105, 0
    %s108 = sadd.s32 %s107, 1
    %s109 = scalar_select %p106, %s107, %s108
    %p112 = pneg %p106
    %p113 = scmp.eq.s32.totalorder %s9, 3
    %p114 = por %p112, %p113
    %p115 = scmp.ne.s32.totalorder %s107, %s110
    %p116 = scmp.eq.s32.totalorder %s9, 0
    %p117 = por %p115, %p116
    %p118 = scmp.ne.s32.totalorder %s107, %s110
    %p119 = scmp.eq.s32.totalorder %s14, 3
    %p120 = por %p118, %p119
    %p121 = scmp.ne.s32.totalorder %s110, %s111
    %p122 = scmp.eq.s32.totalorder %s14, 0
    %p123 = por %p121, %p122
    %p124 = scmp.ne.s32.totalorder %s110, %s111
    %p125 = scmp.eq.s32.totalorder %s15, 3
    %p126 = por %p124, %p125
    %p128 = scmp.ne.s32.totalorder %s111, %s127
    %p129 = scmp.eq.s32.totalorder %s15, 0
    %p130 = por %p128, %p129
    %p131 = scmp.le.s32.totalorder 1, %s9
    %p132 = scmp.lt.s32.totalorder %s9, 5
    %p133 = pnand %p131, %p132
    %p134 = pneg %p133
    // Predicated region
    $region9: #{_lambda_.9} parent=5 // pred_check
      _
    $region10: #{_lambda_.9} parent=5 // pred_check_branch
      %136 = sbr.rel (%p133) target = $region12
    $region11: #{_lambda_.9} parent=5 // pred_region
      %s137 = ssub.s32 %s9, 1
      // Predicated region
      $region13: #{_lambda_.9} parent=11 // pred_check
        %p138 = pneg %p72
      $region14: #{_lambda_.9} parent=11 // pred_check_branch
        %140 = sbr.rel (%p138) target = $region16
      $region15: #{_lambda_.9} parent=11 // pred_region
        _
      $region16: #{_lambda_.9} parent=11 // pred_fallthru
        _
      // Predicated region
      $region17: #{_lambda_.9} parent=11 // pred_check
        %p141 = pneg %p93
      $region18: #{_lambda_.9} parent=11 // pred_check_branch
        %143 = sbr.rel (%p141) target = $region20
      $region19: #{_lambda_.9} parent=11 // pred_region
        _
      $region20: #{_lambda_.9} parent=11 // pred_fallthru
        _
    $region12: #{_lambda_.9} parent=5 // pred_fallthru
      _
    %p144 = scmp.lt.s32.totalorder %s9, 4
    // Predicated region
    $region21: #{_lambda_.9} parent=5 // pred_check
      %p145 = pneg %p144
    $region22: #{_lambda_.9} parent=5 // pred_check_branch
      %147 = sbr.rel (%p145) target = $region24
    $region23: #{_lambda_.9} parent=5 // pred_region
      // Predicated region
      $region25: #{_lambda_.9} parent=23 // pred_check
        %p148 = pneg %p45
      $region26: #{_lambda_.9} parent=23 // pred_check_branch
        %150 = sbr.rel (%p148) target = $region28
      $region27: #{_lambda_.9} parent=23 // pred_region
        %s151 = smul.u32 %s16, 2
        %s152 = sadd.s32 %s151, %s17
        %p153 = scmp.lt.s32.totalorder %s152, 3
        %s154 = scalar_select %p153, %s152, 3
        %s155 = smul.addr %s154, 90
        %s156 = smul.addr %s155, 4
        %s157 = scalar_lea.vmem %s0, %s156
        %s158 = smul.u32 %s16, 2
        %s159 = sadd.s32 %s158, %s17
      $region28: #{_lambda_.9} parent=23 // pred_fallthru
        _
    $region24: #{_lambda_.9} parent=5 // pred_fallthru
      _
    %p160 = scmp.le.s32.totalorder 1, %s9
    %p161 = scmp.lt.s32.totalorder %s9, 5
    %p162 = pnand %p160, %p161
    %p163 = pneg %p162
    // Predicated region
    $region29: #{_lambda_.9} parent=5 // pred_check
      _
    $region30: #{_lambda_.9} parent=5 // pred_check_branch
      %165 = sbr.rel (%p162) target = $region32
    $region31: #{_lambda_.9} parent=5 // pred_region
      %s166 = ssub.s32 %s9, 1
      %s167 = smul.u32 %s18, 2
      %s168 = sadd.s32 %s167, %s19
      %p169 = scmp.lt.s32.totalorder %s168, 3
      %s170 = scalar_select %p169, %s168, 3
      %s171 = smul.addr %s170, 90
      %s172 = smul.addr %s171, 4
      %s173 = scalar_lea.vmem %s0, %s172
      %p174 = pneg %p51
      %p175 = pneg %p48
      %p176 = pneg %p72
      %p177 = pneg %p69
      %p178 = pneg %p93
      %p179 = pneg %p90
      %p180 = pneg %p123
      %p181 = pneg %p120
      %s182 = smul.u32 %s18, 2
      %s183 = sadd.s32 %s182, %s19
      %p184 = scmp.lt.s32.totalorder %s183, 3
      %s185 = scalar_select %p184, %s183, 3
      %s186 = smul.addr %s185, 64
      %s187 = smul.addr %s186, 8
      %s188 = scalar_lea.vmem %s3, %s187
      %s189 = smul.u32 %s18, 2
      %s190 = sadd.s32 %s189, %s19
      %p191 = scmp.lt.s32.totalorder %s190, 3
      %s192 = scalar_select %p191, %s190, 3
      %s193 = smul.addr %s192, 90
      %s194 = smul.addr %s193, 4
      %s195 = scalar_lea.vmem %s0, %s194
      %s196 = smul.u32 %s18, 2
      %s197 = sadd.s32 %s196, %s19
      %s198 = smul.u32 %s18, 2
      %s199 = sadd.s32 %s198, %s19
      %p200 = scmp.lt.s32.totalorder %s199, 3
      %s201 = scalar_select %p200, %s199, 3
      %s202 = smul.addr %s201, 64
      %s203 = smul.addr %s202, 8
      %s204 = scalar_lea.vmem %s3, %s203
      %s205 = smul.u32 %s18, 2
      %s206 = sadd.s32 %s205, %s19
      %v208 = vld [vmem:[%s195] sm:$0xf]
      %v209 = vld [vmem:[%s195 + $0x4] sm:$0xf]
      %v210 = vld [vmem:[%s195 + $0x8] sm:$0xf]
      %v211 = vld [vmem:[%s195 + $0xc] sm:$0xf]
      %v212 = vld [vmem:[%s195 + $0x10] sm:$0x1]
      %v213 = vld [vmem:[%s195 + $0x14] sm:$0xf]
      %v214 = vld [vmem:[%s195 + $0x18] sm:$0xf]
      %v215 = vld [vmem:[%s195 + $0x1c] sm:$0xf]
      %v216 = vld [vmem:[%s195 + $0x20] sm:$0xf]
      %v217 = vld [vmem:[%s195 + $0x24] sm:$0x1]
      %v218 = vld [vmem:[%s195 + $0x28] sm:$0xf]
      %v219 = vld [vmem:[%s195 + $0x2c] sm:$0xf]
      %v220 = vld [vmem:[%s195 + $0x30] sm:$0xf]
      %v221 = vld [vmem:[%s195 + $0x34] sm:$0xf]
      %v222 = vld [vmem:[%s195 + $0x38] sm:$0x1]
      %v223 = vld [vmem:[%s195 + $0x3c] sm:$0xf]
      %v224 = vld [vmem:[%s195 + $0x40] sm:$0xf]
      %v225 = vld [vmem:[%s195 + $0x44] sm:$0xf]
      %v226 = vld [vmem:[%s195 + $0x48] sm:$0xf]
      %v227 = vld [vmem:[%s195 + $0x4c] sm:$0x1]
      %v228 = vld [vmem:[%s195 + $0x50] sm:$0xf]
      %v229 = vld [vmem:[%s195 + $0x54] sm:$0xf]
      %v230 = vld [vmem:[%s195 + $0x58] sm:$0xf]
      %v231 = vld [vmem:[%s195 + $0x5c] sm:$0xf]
      %v232 = vld [vmem:[%s195 + $0x60] sm:$0x1]
      %v233 = vld [vmem:[%s195 + $0x64] sm:$0xf]
      %v234 = vld [vmem:[%s195 + $0x68] sm:$0xf]
      %v235 = vld [vmem:[%s195 + $0x6c] sm:$0xf]
      %v236 = vld [vmem:[%s195 + $0x70] sm:$0xf]
      %v237 = vld [vmem:[%s195 + $0x74] sm:$0x1]
      %v238 = vld [vmem:[%s195 + $0x78] sm:$0xf]
      %v239 = vld [vmem:[%s195 + $0x7c] sm:$0xf]
      %v240 = vld [vmem:[%s195 + $0x80] sm:$0xf]
      %v241 = vld [vmem:[%s195 + $0x84] sm:$0xf]
      %v242 = vld [vmem:[%s195 + $0x88] sm:$0x1]
      %v243 = vld [vmem:[%s195 + $0x8c] sm:$0xf]
      %v244 = vld [vmem:[%s195 + $0x90] sm:$0xf]
      %v245 = vld [vmem:[%s195 + $0x94] sm:$0xf]
      %v246 = vld [vmem:[%s195 + $0x98] sm:$0xf]
      %v247 = vld [vmem:[%s195 + $0x9c] sm:$0x1]
      %v248 = vld [vmem:[%s195 + $0xa0] sm:$0xf]
      %v249 = vld [vmem:[%s195 + $0xa4] sm:$0xf]
      %v250 = vld [vmem:[%s195 + $0xa8] sm:$0xf]
      %v251 = vld [vmem:[%s195 + $0xac] sm:$0xf]
      %v252 = vld [vmem:[%s195 + $0xb0] sm:$0x1]
      %v253 = vld [vmem:[%s195 + $0xb4] sm:$0xf]
      %v254 = vld [vmem:[%s195 + $0xb8] sm:$0xf]
      %v255 = vld [vmem:[%s195 + $0xbc] sm:$0xf]
      %v256 = vld [vmem:[%s195 + $0xc0] sm:$0xf]
      %v257 = vld [vmem:[%s195 + $0xc4] sm:$0x1]
      %v258 = vld [vmem:[%s195 + $0xc8] sm:$0xf]
      %v259 = vld [vmem:[%s195 + $0xcc] sm:$0xf]
      %v260 = vld [vmem:[%s195 + $0xd0] sm:$0xf]
      %v261 = vld [vmem:[%s195 + $0xd4] sm:$0xf]
      %v262 = vld [vmem:[%s195 + $0xd8] sm:$0x1]
      %v263 = vld [vmem:[%s195 + $0xdc] sm:$0xf]
      %v264 = vld [vmem:[%s195 + $0xe0] sm:$0xf]
      %v265 = vld [vmem:[%s195 + $0xe4] sm:$0xf]
      %v266 = vld [vmem:[%s195 + $0xe8] sm:$0xf]
      %v267 = vld [vmem:[%s195 + $0xec] sm:$0x1]
      %v268 = vld [vmem:[%s195 + $0xf0] sm:$0xf]
      %v269 = vld [vmem:[%s195 + $0xf4] sm:$0xf]
      %v270 = vld [vmem:[%s195 + $0xf8] sm:$0xf]
      %v271 = vld [vmem:[%s195 + $0xfc] sm:$0xf]
      %v272 = vld [vmem:[%s195 + $0x100] sm:$0x1]
      %v273 = vld [vmem:[%s195 + $0x104] sm:$0xf]
      %v274 = vld [vmem:[%s195 + $0x108] sm:$0xf]
      %v275 = vld [vmem:[%s195 + $0x10c] sm:$0xf]
      %v276 = vld [vmem:[%s195 + $0x110] sm:$0xf]
      %v277 = vld [vmem:[%s195 + $0x114] sm:$0x1]
      %v278 = vld [vmem:[%s195 + $0x118] sm:$0xf]
      %v279 = vld [vmem:[%s195 + $0x11c] sm:$0xf]
      %v280 = vld [vmem:[%s195 + $0x120] sm:$0xf]
      %v281 = vld [vmem:[%s195 + $0x124] sm:$0xf]
      %v282 = vld [vmem:[%s195 + $0x128] sm:$0x1]
      %v283 = vld [vmem:[%s195 + $0x12c] sm:$0xf]
      %v284 = vld [vmem:[%s195 + $0x130] sm:$0xf]
      %v285 = vld [vmem:[%s195 + $0x134] sm:$0xf]
      %v286 = vld [vmem:[%s195 + $0x138] sm:$0xf]
      %v287 = vld [vmem:[%s195 + $0x13c] sm:$0x1]
      %v288 = vld [vmem:[%s195 + $0x140] sm:$0xf]
      %v289 = vld [vmem:[%s195 + $0x144] sm:$0xf]
      %v290 = vld [vmem:[%s195 + $0x148] sm:$0xf]
      %v291 = vld [vmem:[%s195 + $0x14c] sm:$0xf]
      %v292 = vld [vmem:[%s195 + $0x150] sm:$0x1]
      %v293 = vld [vmem:[%s195 + $0x154] sm:$0xf]
      %v294 = vld [vmem:[%s195 + $0x158] sm:$0xf]
      %v295 = vld [vmem:[%s195 + $0x15c] sm:$0xf]
      %v296 = vld [vmem:[%s195 + $0x160] sm:$0xf]
      %v297 = vld [vmem:[%s195 + $0x164] sm:$0x1]
      %v298 = vunpack.c.l.bf16 %v208
      %v299 = vunpack.c.l.bf16 %v209
      %v300 = vunpack.c.l.bf16 %v210
      %v301 = vunpack.c.l.bf16 %v211
      %v302 = vunpack.c.l.bf16 %v212
      %v303 = vunpack.c.l.bf16 %v213
      %v304 = vunpack.c.l.bf16 %v214
      %v305 = vunpack.c.l.bf16 %v215
      %v306 = vunpack.c.l.bf16 %v216
      %v307 = vunpack.c.l.bf16 %v217
      %v308 = vunpack.c.l.bf16 %v218
      %v309 = vunpack.c.l.bf16 %v219
      %v310 = vunpack.c.l.bf16 %v220
      %v311 = vunpack.c.l.bf16 %v221
      %v312 = vunpack.c.l.bf16 %v222
      %v313 = vunpack.c.l.bf16 %v223
      %v314 = vunpack.c.l.bf16 %v224
      %v315 = vunpack.c.l.bf16 %v225
      %v316 = vunpack.c.l.bf16 %v226
      %v317 = vunpack.c.l.bf16 %v227
      %v318 = vunpack.c.l.bf16 %v228
      %v319 = vunpack.c.l.bf16 %v229
      %v320 = vunpack.c.l.bf16 %v230
      %v321 = vunpack.c.l.bf16 %v231
      %v322 = vunpack.c.l.bf16 %v232
      %v323 = vunpack.c.l.bf16 %v233
      %v324 = vunpack.c.l.bf16 %v234
      %v325 = vunpack.c.l.bf16 %v235
      %v326 = vunpack.c.l.bf16 %v236
      %v327 = vunpack.c.l.bf16 %v237
      %v328 = vunpack.c.l.bf16 %v238
      %v329 = vunpack.c.l.bf16 %v239
      %v330 = vunpack.c.l.bf16 %v240
      %v331 = vunpack.c.l.bf16 %v241
      %v332 = vunpack.c.l.bf16 %v242
      %v333 = vunpack.c.l.bf16 %v243
      %v334 = vunpack.c.l.bf16 %v244
      %v335 = vunpack.c.l.bf16 %v245
      %v336 = vunpack.c.l.bf16 %v246
      %v337 = vunpack.c.l.bf16 %v247
      %v338 = vunpack.c.l.bf16 %v248
      %v339 = vunpack.c.l.bf16 %v249
      %v340 = vunpack.c.l.bf16 %v250
      %v341 = vunpack.c.l.bf16 %v251
      %v342 = vunpack.c.l.bf16 %v252
      %v343 = vunpack.c.l.bf16 %v253
      %v344 = vunpack.c.l.bf16 %v254
      %v345 = vunpack.c.l.bf16 %v255
      %v346 = vunpack.c.l.bf16 %v256
      %v347 = vunpack.c.l.bf16 %v257
      %v348 = vunpack.c.l.bf16 %v258
      %v349 = vunpack.c.l.bf16 %v259
      %v350 = vunpack.c.l.bf16 %v260
      %v351 = vunpack.c.l.bf16 %v261
      %v352 = vunpack.c.l.bf16 %v262
      %v353 = vunpack.c.l.bf16 %v263
      %v354 = vunpack.c.l.bf16 %v264
      %v355 = vunpack.c.l.bf16 %v265
      %v356 = vunpack.c.l.bf16 %v266
      %v357 = vunpack.c.l.bf16 %v267
      %v358 = vunpack.c.l.bf16 %v268
      %v359 = vunpack.c.l.bf16 %v269
      %v360 = vunpack.c.l.bf16 %v270
      %v361 = vunpack.c.l.bf16 %v271
      %v362 = vunpack.c.l.bf16 %v272
      %v363 = vunpack.c.l.bf16 %v273
      %v364 = vunpack.c.l.bf16 %v274
      %v365 = vunpack.c.l.bf16 %v275
      %v366 = vunpack.c.l.bf16 %v276
      %v367 = vunpack.c.l.bf16 %v277
      %v368 = vunpack.c.l.bf16 %v278
      %v369 = vunpack.c.l.bf16 %v279
      %v370 = vunpack.c.l.bf16 %v280
      %v371 = vunpack.c.l.bf16 %v281
      %v372 = vunpack.c.l.bf16 %v282
      %v373 = vunpack.c.l.bf16 %v283
      %v374 = vunpack.c.l.bf16 %v284
      %v375 = vunpack.c.l.bf16 %v285
      %v376 = vunpack.c.l.bf16 %v286
      %v377 = vunpack.c.l.bf16 %v287
      %v378 = vunpack.c.l.bf16 %v288
      %v379 = vunpack.c.l.bf16 %v289
      %v380 = vunpack.c.l.bf16 %v290
      %v381 = vunpack.c.l.bf16 %v291
      %v382 = vunpack.c.l.bf16 %v292
      %v383 = vunpack.c.l.bf16 %v293
      %v384 = vunpack.c.l.bf16 %v294
      %v385 = vunpack.c.l.bf16 %v295
      %v386 = vunpack.c.l.bf16 %v296
      %v387 = vunpack.c.l.bf16 %v297
      %v388 = vmax.f32 %v298, 0.0
      %v389 = vmax.f32 %v299, 0.0
      %v390 = vmax.f32 %v300, 0.0
      %v391 = vmax.f32 %v301, 0.0
      %v392 = vmax.f32 %v302, 0.0
      %v393 = vmax.f32 %v303, 0.0
      %v394 = vmax.f32 %v304, 0.0
      %v395 = vmax.f32 %v305, 0.0
      %v396 = vmax.f32 %v306, 0.0
      %v397 = vmax.f32 %v307, 0.0
      %v398 = vmax.f32 %v308, 0.0
      %v399 = vmax.f32 %v309, 0.0
      %v400 = vmax.f32 %v310, 0.0
      %v401 = vmax.f32 %v311, 0.0
      %v402 = vmax.f32 %v312, 0.0
      %v403 = vmax.f32 %v313, 0.0
      %v404 = vmax.f32 %v314, 0.0
      %v405 = vmax.f32 %v315, 0.0
      %v406 = vmax.f32 %v316, 0.0
      %v407 = vmax.f32 %v317, 0.0
      %v408 = vmax.f32 %v318, 0.0
      %v409 = vmax.f32 %v319, 0.0
      %v410 = vmax.f32 %v320, 0.0
      %v411 = vmax.f32 %v321, 0.0
      %v412 = vmax.f32 %v322, 0.0
      %v413 = vmax.f32 %v323, 0.0
      %v414 = vmax.f32 %v324, 0.0
      %v415 = vmax.f32 %v325, 0.0
      %v416 = vmax.f32 %v326, 0.0
      %v417 = vmax.f32 %v327, 0.0
      %v418 = vmax.f32 %v328, 0.0
      %v419 = vmax.f32 %v329, 0.0
      %v420 = vmax.f32 %v330, 0.0
      %v421 = vmax.f32 %v331, 0.0
      %v422 = vmax.f32 %v332, 0.0
      %v423 = vmax.f32 %v333, 0.0
      %v424 = vmax.f32 %v334, 0.0
      %v425 = vmax.f32 %v335, 0.0
      %v426 = vmax.f32 %v336, 0.0
      %v427 = vmax.f32 %v337, 0.0
      %v428 = vmax.f32 %v338, 0.0
      %v429 = vmax.f32 %v339, 0.0
      %v430 = vmax.f32 %v340, 0.0
      %v431 = vmax.f32 %v341, 0.0
      %v432 = vmax.f32 %v342, 0.0
      %v433 = vmax.f32 %v343, 0.0
      %v434 = vmax.f32 %v344, 0.0
      %v435 = vmax.f32 %v345, 0.0
      %v436 = vmax.f32 %v346, 0.0
      %v437 = vmax.f32 %v347, 0.0
      %v438 = vmax.f32 %v348, 0.0
      %v439 = vmax.f32 %v349, 0.0
      %v440 = vmax.f32 %v350, 0.0
      %v441 = vmax.f32 %v351, 0.0
      %v442 = vmax.f32 %v352, 0.0
      %v443 = vmax.f32 %v353, 0.0
      %v444 = vmax.f32 %v354, 0.0
      %v445 = vmax.f32 %v355, 0.0
      %v446 = vmax.f32 %v356, 0.0
      %v447 = vmax.f32 %v357, 0.0
      %v448 = vmax.f32 %v358, 0.0
      %v449 = vmax.f32 %v359, 0.0
      %v450 = vmax.f32 %v360, 0.0
      %v451 = vmax.f32 %v361, 0.0
      %v452 = vmax.f32 %v362, 0.0
      %v453 = vmax.f32 %v363, 0.0
      %v454 = vmax.f32 %v364, 0.0
      %v455 = vmax.f32 %v365, 0.0
      %v456 = vmax.f32 %v366, 0.0
      %v457 = vmax.f32 %v367, 0.0
      %v458 = vmax.f32 %v368, 0.0
      %v459 = vmax.f32 %v369, 0.0
      %v460 = vmax.f32 %v370, 0.0
      %v461 = vmax.f32 %v371, 0.0
      %v462 = vmax.f32 %v372, 0.0
      %v463 = vmax.f32 %v373, 0.0
      %v464 = vmax.f32 %v374, 0.0
      %v465 = vmax.f32 %v375, 0.0
      %v466 = vmax.f32 %v376, 0.0
      %v467 = vmax.f32 %v377, 0.0
      %v468 = vmax.f32 %v378, 0.0
      %v469 = vmax.f32 %v379, 0.0
      %v470 = vmax.f32 %v380, 0.0
      %v471 = vmax.f32 %v381, 0.0
      %v472 = vmax.f32 %v382, 0.0
      %v473 = vmax.f32 %v383, 0.0
      %v474 = vmax.f32 %v384, 0.0
      %v475 = vmax.f32 %v385, 0.0
      %v476 = vmax.f32 %v386, 0.0
      %v477 = vmax.f32 %v387, 0.0
      %vm558 = vcmask 1046528
      %v559 = vrot.slane %v388, 1
      %v560 = vrot.slane %v389, 1
      %v561 = vsel %vm558, %v559, %v560
      %v562 = vrot.slane %v390, 1
      %v563 = vsel %vm558, %v560, %v562
      %v564 = vrot.slane %v391, 1
      %v565 = vsel %vm558, %v562, %v564
      %v566 = vrot.slane %v392, 1
      %v567 = vsel %vm558, %v564, %v566
      %v568 = vrot.slane %v393, 1
      %v569 = vrot.slane %v394, 1
      %v570 = vsel %vm558, %v568, %v569
      %v571 = vrot.slane %v395, 1
      %v572 = vsel %vm558, %v569, %v571
      %v573 = vrot.slane %v396, 1
      %v574 = vsel %vm558, %v571, %v573
      %v575 = vrot.slane %v397, 1
      %v576 = vsel %vm558, %v573, %v575
      %v577 = vrot.slane %v398, 1
      %v578 = vrot.slane %v399, 1
      %v579 = vsel %vm558, %v577, %v578
      %v580 = vrot.slane %v400, 1
      %v581 = vsel %vm558, %v578, %v580
      %v582 = vrot.slane %v401, 1
      %v583 = vsel %vm558, %v580, %v582
      %v584 = vrot.slane %v402, 1
      %v585 = vsel %vm558, %v582, %v584
      %v586 = vrot.slane %v403, 1
      %v587 = vrot.slane %v404, 1
      %v588 = vsel %vm558, %v586, %v587
      %v589 = vrot.slane %v405, 1
      %v590 = vsel %vm558, %v587, %v589
      %v591 = vrot.slane %v406, 1
      %v592 = vsel %vm558, %v589, %v591
      %v593 = vrot.slane %v407, 1
      %v594 = vsel %vm558, %v591, %v593
      %v595 = vrot.slane %v408, 1
      %v596 = vrot.slane %v409, 1
      %v597 = vsel %vm558, %v595, %v596
      %v598 = vrot.slane %v410, 1
      %v599 = vsel %vm558, %v596, %v598
      %v600 = vrot.slane %v411, 1
      %v601 = vsel %vm558, %v598, %v600
      %v602 = vrot.slane %v412, 1
      %v603 = vsel %vm558, %v600, %v602
      %v604 = vrot.slane %v413, 1
      %v605 = vrot.slane %v414, 1
      %v606 = vsel %vm558, %v604, %v605
      %v607 = vrot.slane %v415, 1
      %v608 = vsel %vm558, %v605, %v607
      %v609 = vrot.slane %v416, 1
      %v610 = vsel %vm558, %v607, %v609
      %v611 = vrot.slane %v417, 1
      %v612 = vsel %vm558, %v609, %v611
      %v613 = vrot.slane %v418, 1
      %v614 = vrot.slane %v419, 1
      %v615 = vsel %vm558, %v613, %v614
      %v616 = vrot.slane %v420, 1
      %v617 = vsel %vm558, %v614, %v616
      %v618 = vrot.slane %v421, 1
      %v619 = vsel %vm558, %v616, %v618
      %v620 = vrot.slane %v422, 1
      %v621 = vsel %vm558, %v618, %v620
      %v622 = vrot.slane %v423, 1
      %v623 = vrot.slane %v424, 1
      %v624 = vsel %vm558, %v622, %v623
      %v625 = vrot.slane %v425, 1
      %v626 = vsel %vm558, %v623, %v625
      %v627 = vrot.slane %v426, 1
      %v628 = vsel %vm558, %v625, %v627
      %v629 = vrot.slane %v427, 1
      %v630 = vsel %vm558, %v627, %v629
      %v631 = vrot.slane %v428, 1
      %v632 = vrot.slane %v429, 1
      %v633 = vsel %vm558, %v631, %v632
      %v634 = vrot.slane %v430, 1
      %v635 = vsel %vm558, %v632, %v634
      %v636 = vrot.slane %v431, 1
      %v637 = vsel %vm558, %v634, %v636
      %v638 = vrot.slane %v432, 1
      %v639 = vsel %vm558, %v636, %v638
      %v640 = vrot.slane %v433, 1
      %v641 = vrot.slane %v434, 1
      %v642 = vsel %vm558, %v640, %v641
      %v643 = vrot.slane %v435, 1
      %v644 = vsel %vm558, %v641, %v643
      %v645 = vrot.slane %v436, 1
      %v646 = vsel %vm558, %v643, %v645
      %v647 = vrot.slane %v437, 1
      %v648 = vsel %vm558, %v645, %v647
      %v649 = vrot.slane %v438, 1
      %v650 = vrot.slane %v439, 1
      %v651 = vsel %vm558, %v649, %v650
      %v652 = vrot.slane %v440, 1
      %v653 = vsel %vm558, %v650, %v652
      %v654 = vrot.slane %v441, 1
      %v655 = vsel %vm558, %v652, %v654
      %v656 = vrot.slane %v442, 1
      %v657 = vsel %vm558, %v654, %v656
      %v658 = vrot.slane %v443, 1
      %v659 = vrot.slane %v444, 1
      %v660 = vsel %vm558, %v658, %v659
      %v661 = vrot.slane %v445, 1
      %v662 = vsel %vm558, %v659, %v661
      %v663 = vrot.slane %v446, 1
      %v664 = vsel %vm558, %v661, %v663
      %v665 = vrot.slane %v447, 1
      %v666 = vsel %vm558, %v663, %v665
      %v667 = vrot.slane %v448, 1
      %v668 = vrot.slane %v449, 1
      %v669 = vsel %vm558, %v667, %v668
      %v670 = vrot.slane %v450, 1
      %v671 = vsel %vm558, %v668, %v670
      %v672 = vrot.slane %v451, 1
      %v673 = vsel %vm558, %v670, %v672
      %v674 = vrot.slane %v452, 1
      %v675 = vsel %vm558, %v672, %v674
      %v676 = vrot.slane %v453, 1
      %v677 = vrot.slane %v454, 1
      %v678 = vsel %vm558, %v676, %v677
      %v679 = vrot.slane %v455, 1
      %v680 = vsel %vm558, %v677, %v679
      %v681 = vrot.slane %v456, 1
      %v682 = vsel %vm558, %v679, %v681
      %v683 = vrot.slane %v457, 1
      %v684 = vsel %vm558, %v681, %v683
      %v685 = vrot.slane %v458, 1
      %v686 = vrot.slane %v459, 1
      %v687 = vsel %vm558, %v685, %v686
      %v688 = vrot.slane %v460, 1
      %v689 = vsel %vm558, %v686, %v688
      %v690 = vrot.slane %v461, 1
      %v691 = vsel %vm558, %v688, %v690
      %v692 = vrot.slane %v462, 1
      %v693 = vsel %vm558, %v690, %v692
      %v694 = vrot.slane %v463, 1
      %v695 = vrot.slane %v464, 1
      %v696 = vsel %vm558, %v694, %v695
      %v697 = vrot.slane %v465, 1
      %v698 = vsel %vm558, %v695, %v697
      %v699 = vrot.slane %v466, 1
      %v700 = vsel %vm558, %v697, %v699
      %v701 = vrot.slane %v467, 1
      %v702 = vsel %vm558, %v699, %v701
      %703 = vrot.lane.b32.xlu0 %v561, 16
      %v704 = vpop.permute.xlu0 %703
      %705 = vrot.lane.b32.xlu0 %v563, 16
      %v706 = vpop.permute.xlu0 %705
      %707 = vrot.lane.b32.xlu0 %v565, 16
      %v708 = vpop.permute.xlu0 %707
      %709 = vrot.lane.b32.xlu0 %v567, 16
      %v710 = vpop.permute.xlu0 %709
      %711 = vrot.lane.b32.xlu0 %v570, 16
      %v712 = vpop.permute.xlu0 %711
      %713 = vrot.lane.b32.xlu0 %v572, 16
      %v714 = vpop.permute.xlu0 %713
      %715 = vrot.lane.b32.xlu0 %v574, 16
      %v716 = vpop.permute.xlu0 %715
      %717 = vrot.lane.b32.xlu0 %v576, 16
      %v718 = vpop.permute.xlu0 %717
      %719 = vrot.lane.b32.xlu0 %v579, 16
      %v720 = vpop.permute.xlu0 %719
      %721 = vrot.lane.b32.xlu0 %v581, 16
      %v722 = vpop.permute.xlu0 %721
      %723 = vrot.lane.b32.xlu0 %v583, 16
      %v724 = vpop.permute.xlu0 %723
      %725 = vrot.lane.b32.xlu0 %v585, 16
      %v726 = vpop.permute.xlu0 %725
      %727 = vrot.lane.b32.xlu0 %v588, 16
      %v728 = vpop.permute.xlu0 %727
      %729 = vrot.lane.b32.xlu0 %v590, 16
      %v730 = vpop.permute.xlu0 %729
      %731 = vrot.lane.b32.xlu0 %v592, 16
      %v732 = vpop.permute.xlu0 %731
      %733 = vrot.lane.b32.xlu0 %v594, 16
      %v734 = vpop.permute.xlu0 %733
      %735 = vrot.lane.b32.xlu0 %v597, 16
      %v736 = vpop.permute.xlu0 %735
      %737 = vrot.lane.b32.xlu0 %v599, 16
      %v738 = vpop.permute.xlu0 %737
      %739 = vrot.lane.b32.xlu0 %v601, 16
      %v740 = vpop.permute.xlu0 %739
      %741 = vrot.lane.b32.xlu0 %v603, 16
      %v742 = vpop.permute.xlu0 %741
      %743 = vrot.lane.b32.xlu0 %v606, 16
      %v744 = vpop.permute.xlu0 %743
      %745 = vrot.lane.b32.xlu0 %v608, 16
      %v746 = vpop.permute.xlu0 %745
      %747 = vrot.lane.b32.xlu0 %v610, 16
      %v748 = vpop.permute.xlu0 %747
      %749 = vrot.lane.b32.xlu0 %v612, 16
      %v750 = vpop.permute.xlu0 %749
      %751 = vrot.lane.b32.xlu0 %v615, 16
      %v752 = vpop.permute.xlu0 %751
      %753 = vrot.lane.b32.xlu0 %v617, 16
      %v754 = vpop.permute.xlu0 %753
      %755 = vrot.lane.b32.xlu0 %v619, 16
      %v756 = vpop.permute.xlu0 %755
      %757 = vrot.lane.b32.xlu0 %v621, 16
      %v758 = vpop.permute.xlu0 %757
      %759 = vrot.lane.b32.xlu0 %v624, 16
      %v760 = vpop.permute.xlu0 %759
      %761 = vrot.lane.b32.xlu0 %v626, 16
      %v762 = vpop.permute.xlu0 %761
      %763 = vrot.lane.b32.xlu0 %v628, 16
      %v764 = vpop.permute.xlu0 %763
      %765 = vrot.lane.b32.xlu0 %v630, 16
      %v766 = vpop.permute.xlu0 %765
      %767 = vrot.lane.b32.xlu0 %v633, 16
      %v768 = vpop.permute.xlu0 %767
      %769 = vrot.lane.b32.xlu0 %v635, 16
      %v770 = vpop.permute.xlu0 %769
      %771 = vrot.lane.b32.xlu0 %v637, 16
      %v772 = vpop.permute.xlu0 %771
      %773 = vrot.lane.b32.xlu0 %v639, 16
      %v774 = vpop.permute.xlu0 %773
      %775 = vrot.lane.b32.xlu0 %v642, 16
      %v776 = vpop.permute.xlu0 %775
      %777 = vrot.lane.b32.xlu0 %v644, 16
      %v778 = vpop.permute.xlu0 %777
      %779 = vrot.lane.b32.xlu0 %v646, 16
      %v780 = vpop.permute.xlu0 %779
      %781 = vrot.lane.b32.xlu0 %v648, 16
      %v782 = vpop.permute.xlu0 %781
      %783 = vrot.lane.b32.xlu0 %v651, 16
      %v784 = vpop.permute.xlu0 %783
      %785 = vrot.lane.b32.xlu0 %v653, 16
      %v786 = vpop.permute.xlu0 %785
      %787 = vrot.lane.b32.xlu0 %v655, 16
      %v788 = vpop.permute.xlu0 %787
      %789 = vrot.lane.b32.xlu0 %v657, 16
      %v790 = vpop.permute.xlu0 %789
      %791 = vrot.lane.b32.xlu0 %v660, 16
      %v792 = vpop.permute.xlu0 %791
      %793 = vrot.lane.b32.xlu0 %v662, 16
      %v794 = vpop.permute.xlu0 %793
      %795 = vrot.lane.b32.xlu0 %v664, 16
      %v796 = vpop.permute.xlu0 %795
      %797 = vrot.lane.b32.xlu0 %v666, 16
      %v798 = vpop.permute.xlu0 %797
      %799 = vrot.lane.b32.xlu0 %v669, 16
      %v800 = vpop.permute.xlu0 %799
      %801 = vrot.lane.b32.xlu0 %v671, 16
      %v802 = vpop.permute.xlu0 %801
      %803 = vrot.lane.b32.xlu0 %v673, 16
      %v804 = vpop.permute.xlu0 %803
      %805 = vrot.lane.b32.xlu0 %v675, 16
      %v806 = vpop.permute.xlu0 %805
      %807 = vrot.lane.b32.xlu0 %v678, 16
      %v808 = vpop.permute.xlu0 %807
      %809 = vrot.lane.b32.xlu0 %v680, 16
      %v810 = vpop.permute.xlu0 %809
      %811 = vrot.lane.b32.xlu0 %v682, 16
      %v812 = vpop.permute.xlu0 %811
      %813 = vrot.lane.b32.xlu0 %v684, 16
      %v814 = vpop.permute.xlu0 %813
      %815 = vrot.lane.b32.xlu0 %v687, 16
      %v816 = vpop.permute.xlu0 %815
      %817 = vrot.lane.b32.xlu0 %v689, 16
      %v818 = vpop.permute.xlu0 %817
      %819 = vrot.lane.b32.xlu0 %v691, 16
      %v820 = vpop.permute.xlu0 %819
      %821 = vrot.lane.b32.xlu0 %v693, 16
      %v822 = vpop.permute.xlu0 %821
      %823 = vrot.lane.b32.xlu0 %v696, 16
      %v824 = vpop.permute.xlu0 %823
      %825 = vrot.lane.b32.xlu0 %v698, 16
      %v826 = vpop.permute.xlu0 %825
      %827 = vrot.lane.b32.xlu0 %v700, 16
      %v828 = vpop.permute.xlu0 %827
      %829 = vrot.lane.b32.xlu0 %v702, 16
      %v830 = vpop.permute.xlu0 %829
      %vm895 = vcmask 1045504
      %v896 = vrot.slane %v388, 2
      %v897 = vrot.slane %v389, 2
      %v898 = vsel %vm895, %v896, %v897
      %v899 = vrot.slane %v390, 2
      %v900 = vsel %vm895, %v897, %v899
      %v901 = vrot.slane %v391, 2
      %v902 = vsel %vm895, %v899, %v901
      %v903 = vrot.slane %v392, 2
      %v904 = vsel %vm895, %v901, %v903
      %v905 = vrot.slane %v393, 2
      %v906 = vrot.slane %v394, 2
      %v907 = vsel %vm895, %v905, %v906
      %v908 = vrot.slane %v395, 2
      %v909 = vsel %vm895, %v906, %v908
      %v910 = vrot.slane %v396, 2
      %v911 = vsel %vm895, %v908, %v910
      %v912 = vrot.slane %v397, 2
      %v913 = vsel %vm895, %v910, %v912
      %v914 = vrot.slane %v398, 2
      %v915 = vrot.slane %v399, 2
      %v916 = vsel %vm895, %v914, %v915
      %v917 = vrot.slane %v400, 2
      %v918 = vsel %vm895, %v915, %v917
      %v919 = vrot.slane %v401, 2
      %v920 = vsel %vm895, %v917, %v919
      %v921 = vrot.slane %v402, 2
      %v922 = vsel %vm895, %v919, %v921
      %v923 = vrot.slane %v403, 2
      %v924 = vrot.slane %v404, 2
      %v925 = vsel %vm895, %v923, %v924
      %v926 = vrot.slane %v405, 2
      %v927 = vsel %vm895, %v924, %v926
      %v928 = vrot.slane %v406, 2
      %v929 = vsel %vm895, %v926, %v928
      %v930 = vrot.slane %v407, 2
      %v931 = vsel %vm895, %v928, %v930
      %v932 = vrot.slane %v408, 2
      %v933 = vrot.slane %v409, 2
      %v934 = vsel %vm895, %v932, %v933
      %v935 = vrot.slane %v410, 2
      %v936 = vsel %vm895, %v933, %v935
      %v937 = vrot.slane %v411, 2
      %v938 = vsel %vm895, %v935, %v937
      %v939 = vrot.slane %v412, 2
      %v940 = vsel %vm895, %v937, %v939
      %v941 = vrot.slane %v413, 2
      %v942 = vrot.slane %v414, 2
      %v943 = vsel %vm895, %v941, %v942
      %v944 = vrot.slane %v415, 2
      %v945 = vsel %vm895, %v942, %v944
      %v946 = vrot.slane %v416, 2
      %v947 = vsel %vm895, %v944, %v946
      %v948 = vrot.slane %v417, 2
      %v949 = vsel %vm895, %v946, %v948
      %v950 = vrot.slane %v418, 2
      %v951 = vrot.slane %v419, 2
      %v952 = vsel %vm895, %v950, %v951
      %v953 = vrot.slane %v420, 2
      %v954 = vsel %vm895, %v951, %v953
      %v955 = vrot.slane %v421, 2
      %v956 = vsel %vm895, %v953, %v955
      %v957 = vrot.slane %v422, 2
      %v958 = vsel %vm895, %v955, %v957
      %v959 = vrot.slane %v423, 2
      %v960 = vrot.slane %v424, 2
      %v961 = vsel %vm895, %v959, %v960
      %v962 = vrot.slane %v425, 2
      %v963 = vsel %vm895, %v960, %v962
      %v964 = vrot.slane %v426, 2
      %v965 = vsel %vm895, %v962, %v964
      %v966 = vrot.slane %v427, 2
      %v967 = vsel %vm895, %v964, %v966
      %v968 = vrot.slane %v428, 2
      %v969 = vrot.slane %v429, 2
      %v970 = vsel %vm895, %v968, %v969
      %v971 = vrot.slane %v430, 2
      %v972 = vsel %vm895, %v969, %v971
      %v973 = vrot.slane %v431, 2
      %v974 = vsel %vm895, %v971, %v973
      %v975 = vrot.slane %v432, 2
      %v976 = vsel %vm895, %v973, %v975
      %v977 = vrot.slane %v433, 2
      %v978 = vrot.slane %v434, 2
      %v979 = vsel %vm895, %v977, %v978
      %v980 = vrot.slane %v435, 2
      %v981 = vsel %vm895, %v978, %v980
      %v982 = vrot.slane %v436, 2
      %v983 = vsel %vm895, %v980, %v982
      %v984 = vrot.slane %v437, 2
      %v985 = vsel %vm895, %v982, %v984
      %v986 = vrot.slane %v438, 2
      %v987 = vrot.slane %v439, 2
      %v988 = vsel %vm895, %v986, %v987
      %v989 = vrot.slane %v440, 2
      %v990 = vsel %vm895, %v987, %v989
      %v991 = vrot.slane %v441, 2
      %v992 = vsel %vm895, %v989, %v991
      %v993 = vrot.slane %v442, 2
      %v994 = vsel %vm895, %v991, %v993
      %v995 = vrot.slane %v443, 2
      %v996 = vrot.slane %v444, 2
      %v997 = vsel %vm895, %v995, %v996
      %v998 = vrot.slane %v445, 2
      %v999 = vsel %vm895, %v996, %v998
      %v1000 = vrot.slane %v446, 2
      %v1001 = vsel %vm895, %v998, %v1000
      %v1002 = vrot.slane %v447, 2
      %v1003 = vsel %vm895, %v1000, %v1002
      %v1004 = vrot.slane %v448, 2
      %v1005 = vrot.slane %v449, 2
      %v1006 = vsel %vm895, %v1004, %v1005
      %v1007 = vrot.slane %v450, 2
      %v1008 = vsel %vm895, %v1005, %v1007
      %v1009 = vrot.slane %v451, 2
      %v1010 = vsel %vm895, %v1007, %v1009
      %v1011 = vrot.slane %v452, 2
      %v1012 = vsel %vm895, %v1009, %v1011
      %v1013 = vrot.slane %v453, 2
      %v1014 = vrot.slane %v454, 2
      %v1015 = vsel %vm895, %v1013, %v1014
      %v1016 = vrot.slane %v455, 2
      %v1017 = vsel %vm895, %v1014, %v1016
      %v1018 = vrot.slane %v456, 2
      %v1019 = vsel %vm895, %v1016, %v1018
      %v1020 = vrot.slane %v457, 2
      %v1021 = vsel %vm895, %v1018, %v1020
      %v1022 = vrot.slane %v458, 2
      %v1023 = vrot.slane %v459, 2
      %v1024 = vsel %vm895, %v1022, %v1023
      %v1025 = vrot.slane %v460, 2
      %v1026 = vsel %vm895, %v1023, %v1025
      %v1027 = vrot.slane %v461, 2
      %v1028 = vsel %vm895, %v1025, %v1027
      %v1029 = vrot.slane %v462, 2
      %v1030 = vsel %vm895, %v1027, %v1029
      %v1031 = vrot.slane %v463, 2
      %v1032 = vrot.slane %v464, 2
      %v1033 = vsel %vm895, %v1031, %v1032
      %v1034 = vrot.slane %v465, 2
      %v1035 = vsel %vm895, %v1032, %v1034
      %v1036 = vrot.slane %v466, 2
      %v1037 = vsel %vm895, %v1034, %v1036
      %v1038 = vrot.slane %v467, 2
      %v1039 = vsel %vm895, %v1036, %v1038
      %1040 = vrot.lane.b32.xlu0 %v898, 32
      %v1041 = vpop.permute.xlu0 %1040
      %1042 = vrot.lane.b32.xlu0 %v900, 32
      %v1043 = vpop.permute.xlu0 %1042
      %1044 = vrot.lane.b32.xlu0 %v902, 32
      %v1045 = vpop.permute.xlu0 %1044
      %1046 = vrot.lane.b32.xlu0 %v904, 32
      %v1047 = vpop.permute.xlu0 %1046
      %1048 = vrot.lane.b32.xlu0 %v907, 32
      %v1049 = vpop.permute.xlu0 %1048
      %1050 = vrot.lane.b32.xlu0 %v909, 32
      %v1051 = vpop.permute.xlu0 %1050
      %1052 = vrot.lane.b32.xlu0 %v911, 32
      %v1053 = vpop.permute.xlu0 %1052
      %1054 = vrot.lane.b32.xlu0 %v913, 32
      %v1055 = vpop.permute.xlu0 %1054
      %1056 = vrot.lane.b32.xlu0 %v916, 32
      %v1057 = vpop.permute.xlu0 %1056
      %1058 = vrot.lane.b32.xlu0 %v918, 32
      %v1059 = vpop.permute.xlu0 %1058
      %1060 = vrot.lane.b32.xlu0 %v920, 32
      %v1061 = vpop.permute.xlu0 %1060
      %1062 = vrot.lane.b32.xlu0 %v922, 32
      %v1063 = vpop.permute.xlu0 %1062
      %1064 = vrot.lane.b32.xlu0 %v925, 32
      %v1065 = vpop.permute.xlu0 %1064
      %1066 = vrot.lane.b32.xlu0 %v927, 32
      %v1067 = vpop.permute.xlu0 %1066
      %1068 = vrot.lane.b32.xlu0 %v929, 32
      %v1069 = vpop.permute.xlu0 %1068
      %1070 = vrot.lane.b32.xlu0 %v931, 32
      %v1071 = vpop.permute.xlu0 %1070
      %1072 = vrot.lane.b32.xlu0 %v934, 32
      %v1073 = vpop.permute.xlu0 %1072
      %1074 = vrot.lane.b32.xlu0 %v936, 32
      %v1075 = vpop.permute.xlu0 %1074
      %1076 = vrot.lane.b32.xlu0 %v938, 32
      %v1077 = vpop.permute.xlu0 %1076
      %1078 = vrot.lane.b32.xlu0 %v940, 32
      %v1079 = vpop.permute.xlu0 %1078
      %1080 = vrot.lane.b32.xlu0 %v943, 32
      %v1081 = vpop.permute.xlu0 %1080
      %1082 = vrot.lane.b32.xlu0 %v945, 32
      %v1083 = vpop.permute.xlu0 %1082
      %1084 = vrot.lane.b32.xlu0 %v947, 32
      %v1085 = vpop.permute.xlu0 %1084
      %1086 = vrot.lane.b32.xlu0 %v949, 32
      %v1087 = vpop.permute.xlu0 %1086
      %1088 = vrot.lane.b32.xlu0 %v952, 32
      %v1089 = vpop.permute.xlu0 %1088
      %1090 = vrot.lane.b32.xlu0 %v954, 32
      %v1091 = vpop.permute.xlu0 %1090
      %1092 = vrot.lane.b32.xlu0 %v956, 32
      %v1093 = vpop.permute.xlu0 %1092
      %1094 = vrot.lane.b32.xlu0 %v958, 32
      %v1095 = vpop.permute.xlu0 %1094
      %1096 = vrot.lane.b32.xlu0 %v961, 32
      %v1097 = vpop.permute.xlu0 %1096
      %1098 = vrot.lane.b32.xlu0 %v963, 32
      %v1099 = vpop.permute.xlu0 %1098
      %1100 = vrot.lane.b32.xlu0 %v965, 32
      %v1101 = vpop.permute.xlu0 %1100
      %1102 = vrot.lane.b32.xlu0 %v967, 32
      %v1103 = vpop.permute.xlu0 %1102
      %1104 = vrot.lane.b32.xlu0 %v970, 32
      %v1105 = vpop.permute.xlu0 %1104
      %1106 = vrot.lane.b32.xlu0 %v972, 32
      %v1107 = vpop.permute.xlu0 %1106
      %1108 = vrot.lane.b32.xlu0 %v974, 32
      %v1109 = vpop.permute.xlu0 %1108
      %1110 = vrot.lane.b32.xlu0 %v976, 32
      %v1111 = vpop.permute.xlu0 %1110
      %1112 = vrot.lane.b32.xlu0 %v979, 32
      %v1113 = vpop.permute.xlu0 %1112
      %1114 = vrot.lane.b32.xlu0 %v981, 32
      %v1115 = vpop.permute.xlu0 %1114
      %1116 = vrot.lane.b32.xlu0 %v983, 32
      %v1117 = vpop.permute.xlu0 %1116
      %1118 = vrot.lane.b32.xlu0 %v985, 32
      %v1119 = vpop.permute.xlu0 %1118
      %1120 = vrot.lane.b32.xlu0 %v988, 32
      %v1121 = vpop.permute.xlu0 %1120
      %1122 = vrot.lane.b32.xlu0 %v990, 32
      %v1123 = vpop.permute.xlu0 %1122
      %1124 = vrot.lane.b32.xlu0 %v992, 32
      %v1125 = vpop.permute.xlu0 %1124
      %1126 = vrot.lane.b32.xlu0 %v994, 32
      %v1127 = vpop.permute.xlu0 %1126
      %1128 = vrot.lane.b32.xlu0 %v997, 32
      %v1129 = vpop.permute.xlu0 %1128
      %1130 = vrot.lane.b32.xlu0 %v999, 32
      %v1131 = vpop.permute.xlu0 %1130
      %1132 = vrot.lane.b32.xlu0 %v1001, 32
      %v1133 = vpop.permute.xlu0 %1132
      %1134 = vrot.lane.b32.xlu0 %v1003, 32
      %v1135 = vpop.permute.xlu0 %1134
      %1136 = vrot.lane.b32.xlu0 %v1006, 32
      %v1137 = vpop.permute.xlu0 %1136
      %1138 = vrot.lane.b32.xlu0 %v1008, 32
      %v1139 = vpop.permute.xlu0 %1138
      %1140 = vrot.lane.b32.xlu0 %v1010, 32
      %v1141 = vpop.permute.xlu0 %1140
      %1142 = vrot.lane.b32.xlu0 %v1012, 32
      %v1143 = vpop.permute.xlu0 %1142
      %1144 = vrot.lane.b32.xlu0 %v1015, 32
      %v1145 = vpop.permute.xlu0 %1144
      %1146 = vrot.lane.b32.xlu0 %v1017, 32
      %v1147 = vpop.permute.xlu0 %1146
      %1148 = vrot.lane.b32.xlu0 %v1019, 32
      %v1149 = vpop.permute.xlu0 %1148
      %1150 = vrot.lane.b32.xlu0 %v1021, 32
      %v1151 = vpop.permute.xlu0 %1150
      %1152 = vrot.lane.b32.xlu0 %v1024, 32
      %v1153 = vpop.permute.xlu0 %1152
      %1154 = vrot.lane.b32.xlu0 %v1026, 32
      %v1155 = vpop.permute.xlu0 %1154
      %1156 = vrot.lane.b32.xlu0 %v1028, 32
      %v1157 = vpop.permute.xlu0 %1156
      %1158 = vrot.lane.b32.xlu0 %v1030, 32
      %v1159 = vpop.permute.xlu0 %1158
      %1160 = vrot.lane.b32.xlu0 %v1033, 32
      %v1161 = vpop.permute.xlu0 %1160
      %1162 = vrot.lane.b32.xlu0 %v1035, 32
      %v1163 = vpop.permute.xlu0 %1162
      %1164 = vrot.lane.b32.xlu0 %v1037, 32
      %v1165 = vpop.permute.xlu0 %1164
      %1166 = vrot.lane.b32.xlu0 %v1039, 32
      %v1167 = vpop.permute.xlu0 %1166
      %1236 = vrot.lane.b32.xlu0 %v393, 48
      %v1237 = vpop.permute.xlu0 %1236
      %1238 = vrot.lane.b32.xlu0 %v394, 48
      %v1239 = vpop.permute.xlu0 %1238
      %1240 = vrot.lane.b32.xlu0 %v395, 48
      %v1241 = vpop.permute.xlu0 %1240
      %1242 = vrot.lane.b32.xlu0 %v396, 48
      %v1243 = vpop.permute.xlu0 %1242
      %1244 = vrot.lane.b32.xlu0 %v398, 48
      %v1245 = vpop.permute.xlu0 %1244
      %1246 = vrot.lane.b32.xlu0 %v399, 48
      %v1247 = vpop.permute.xlu0 %1246
      %1248 = vrot.lane.b32.xlu0 %v400, 48
      %v1249 = vpop.permute.xlu0 %1248
      %1250 = vrot.lane.b32.xlu0 %v401, 48
      %v1251 = vpop.permute.xlu0 %1250
      %1252 = vrot.lane.b32.xlu0 %v403, 48
      %v1253 = vpop.permute.xlu0 %1252
      %1254 = vrot.lane.b32.xlu0 %v404, 48
      %v1255 = vpop.permute.xlu0 %1254
      %1256 = vrot.lane.b32.xlu0 %v405, 48
      %v1257 = vpop.permute.xlu0 %1256
      %1258 = vrot.lane.b32.xlu0 %v406, 48
      %v1259 = vpop.permute.xlu0 %1258
      %1260 = vrot.lane.b32.xlu0 %v408, 48
      %v1261 = vpop.permute.xlu0 %1260
      %1262 = vrot.lane.b32.xlu0 %v409, 48
      %v1263 = vpop.permute.xlu0 %1262
      %1264 = vrot.lane.b32.xlu0 %v410, 48
      %v1265 = vpop.permute.xlu0 %1264
      %1266 = vrot.lane.b32.xlu0 %v411, 48
      %v1267 = vpop.permute.xlu0 %1266
      %1268 = vrot.lane.b32.xlu0 %v413, 48
      %v1269 = vpop.permute.xlu0 %1268
      %1270 = vrot.lane.b32.xlu0 %v414, 48
      %v1271 = vpop.permute.xlu0 %1270
      %1272 = vrot.lane.b32.xlu0 %v415, 48
      %v1273 = vpop.permute.xlu0 %1272
      %1274 = vrot.lane.b32.xlu0 %v416, 48
      %v1275 = vpop.permute.xlu0 %1274
      %1276 = vrot.lane.b32.xlu0 %v418, 48
      %v1277 = vpop.permute.xlu0 %1276
      %1278 = vrot.lane.b32.xlu0 %v419, 48
      %v1279 = vpop.permute.xlu0 %1278
      %1280 = vrot.lane.b32.xlu0 %v420, 48
      %v1281 = vpop.permute.xlu0 %1280
      %1282 = vrot.lane.b32.xlu0 %v421, 48
      %v1283 = vpop.permute.xlu0 %1282
      %1284 = vrot.lane.b32.xlu0 %v423, 48
      %v1285 = vpop.permute.xlu0 %1284
      %1286 = vrot.lane.b32.xlu0 %v424, 48
      %v1287 = vpop.permute.xlu0 %1286
      %1288 = vrot.lane.b32.xlu0 %v425, 48
      %v1289 = vpop.permute.xlu0 %1288
      %1290 = vrot.lane.b32.xlu0 %v426, 48
      %v1291 = vpop.permute.xlu0 %1290
      %1292 = vrot.lane.b32.xlu0 %v428, 48
      %v1293 = vpop.permute.xlu0 %1292
      %1294 = vrot.lane.b32.xlu0 %v429, 48
      %v1295 = vpop.permute.xlu0 %1294
      %1296 = vrot.lane.b32.xlu0 %v430, 48
      %v1297 = vpop.permute.xlu0 %1296
      %1298 = vrot.lane.b32.xlu0 %v431, 48
      %v1299 = vpop.permute.xlu0 %1298
      %1300 = vrot.lane.b32.xlu0 %v433, 48
      %v1301 = vpop.permute.xlu0 %1300
      %1302 = vrot.lane.b32.xlu0 %v434, 48
      %v1303 = vpop.permute.xlu0 %1302
      %1304 = vrot.lane.b32.xlu0 %v435, 48
      %v1305 = vpop.permute.xlu0 %1304
      %1306 = vrot.lane.b32.xlu0 %v436, 48
      %v1307 = vpop.permute.xlu0 %1306
      %1308 = vrot.lane.b32.xlu0 %v438, 48
      %v1309 = vpop.permute.xlu0 %1308
      %1310 = vrot.lane.b32.xlu0 %v439, 48
      %v1311 = vpop.permute.xlu0 %1310
      %1312 = vrot.lane.b32.xlu0 %v440, 48
      %v1313 = vpop.permute.xlu0 %1312
      %1314 = vrot.lane.b32.xlu0 %v441, 48
      %v1315 = vpop.permute.xlu0 %1314
      %1316 = vrot.lane.b32.xlu0 %v443, 48
      %v1317 = vpop.permute.xlu0 %1316
      %1318 = vrot.lane.b32.xlu0 %v444, 48
      %v1319 = vpop.permute.xlu0 %1318
      %1320 = vrot.lane.b32.xlu0 %v445, 48
      %v1321 = vpop.permute.xlu0 %1320
      %1322 = vrot.lane.b32.xlu0 %v446, 48
      %v1323 = vpop.permute.xlu0 %1322
      %1324 = vrot.lane.b32.xlu0 %v448, 48
      %v1325 = vpop.permute.xlu0 %1324
      %1326 = vrot.lane.b32.xlu0 %v449, 48
      %v1327 = vpop.permute.xlu0 %1326
      %1328 = vrot.lane.b32.xlu0 %v450, 48
      %v1329 = vpop.permute.xlu0 %1328
      %1330 = vrot.lane.b32.xlu0 %v451, 48
      %v1331 = vpop.permute.xlu0 %1330
      %1332 = vrot.lane.b32.xlu0 %v453, 48
      %v1333 = vpop.permute.xlu0 %1332
      %1334 = vrot.lane.b32.xlu0 %v454, 48
      %v1335 = vpop.permute.xlu0 %1334
      %1336 = vrot.lane.b32.xlu0 %v455, 48
      %v1337 = vpop.permute.xlu0 %1336
      %1338 = vrot.lane.b32.xlu0 %v456, 48
      %v1339 = vpop.permute.xlu0 %1338
      %1340 = vrot.lane.b32.xlu0 %v458, 48
      %v1341 = vpop.permute.xlu0 %1340
      %1342 = vrot.lane.b32.xlu0 %v459, 48
      %v1343 = vpop.permute.xlu0 %1342
      %1344 = vrot.lane.b32.xlu0 %v460, 48
      %v1345 = vpop.permute.xlu0 %1344
      %1346 = vrot.lane.b32.xlu0 %v461, 48
      %v1347 = vpop.permute.xlu0 %1346
      %1348 = vrot.lane.b32.xlu0 %v463, 48
      %v1349 = vpop.permute.xlu0 %1348
      %1350 = vrot.lane.b32.xlu0 %v464, 48
      %v1351 = vpop.permute.xlu0 %1350
      %1352 = vrot.lane.b32.xlu0 %v465, 48
      %v1353 = vpop.permute.xlu0 %1352
      %1354 = vrot.lane.b32.xlu0 %v466, 48
      %v1355 = vpop.permute.xlu0 %1354
      %1356 = vrot.lane.b32.xlu0 %v468, 48
      %v1357 = vpop.permute.xlu0 %1356
      %1358 = vrot.lane.b32.xlu0 %v469, 48
      %v1359 = vpop.permute.xlu0 %1358
      %1360 = vrot.lane.b32.xlu0 %v470, 48
      %v1361 = vpop.permute.xlu0 %1360
      %1362 = vrot.lane.b32.xlu0 %v471, 48
      %v1363 = vpop.permute.xlu0 %1362
      %v1429 = vrot.slane %v468, 1
      %v1430 = vrot.slane %v469, 1
      %v1431 = vsel %vm558, %v1429, %v1430
      %v1432 = vrot.slane %v470, 1
      %v1433 = vsel %vm558, %v1430, %v1432
      %v1434 = vrot.slane %v471, 1
      %v1435 = vsel %vm558, %v1432, %v1434
      %v1436 = vrot.slane %v472, 1
      %v1437 = vsel %vm558, %v1434, %v1436
      %1438 = vrot.lane.b32.xlu0 %v570, 64
      %v1439 = vpop.permute.xlu0 %1438
      %1440 = vrot.lane.b32.xlu0 %v572, 64
      %v1441 = vpop.permute.xlu0 %1440
      %1442 = vrot.lane.b32.xlu0 %v574, 64
      %v1443 = vpop.permute.xlu0 %1442
      %1444 = vrot.lane.b32.xlu0 %v576, 64
      %v1445 = vpop.permute.xlu0 %1444
      %1446 = vrot.lane.b32.xlu0 %v579, 64
      %v1447 = vpop.permute.xlu0 %1446
      %1448 = vrot.lane.b32.xlu0 %v581, 64
      %v1449 = vpop.permute.xlu0 %1448
      %1450 = vrot.lane.b32.xlu0 %v583, 64
      %v1451 = vpop.permute.xlu0 %1450
      %1452 = vrot.lane.b32.xlu0 %v585, 64
      %v1453 = vpop.permute.xlu0 %1452
      %1454 = vrot.lane.b32.xlu0 %v588, 64
      %v1455 = vpop.permute.xlu0 %1454
      %1456 = vrot.lane.b32.xlu0 %v590, 64
      %v1457 = vpop.permute.xlu0 %1456
      %1458 = vrot.lane.b32.xlu0 %v592, 64
      %v1459 = vpop.permute.xlu0 %1458
      %1460 = vrot.lane.b32.xlu0 %v594, 64
      %v1461 = vpop.permute.xlu0 %1460
      %1462 = vrot.lane.b32.xlu0 %v597, 64
      %v1463 = vpop.permute.xlu0 %1462
      %1464 = vrot.lane.b32.xlu0 %v599, 64
      %v1465 = vpop.permute.xlu0 %1464
      %1466 = vrot.lane.b32.xlu0 %v601, 64
      %v1467 = vpop.permute.xlu0 %1466
      %1468 = vrot.lane.b32.xlu0 %v603, 64
      %v1469 = vpop.permute.xlu0 %1468
      %1470 = vrot.lane.b32.xlu0 %v606, 64
      %v1471 = vpop.permute.xlu0 %1470
      %1472 = vrot.lane.b32.xlu0 %v608, 64
      %v1473 = vpop.permute.xlu0 %1472
      %1474 = vrot.lane.b32.xlu0 %v610, 64
      %v1475 = vpop.permute.xlu0 %1474
      %1476 = vrot.lane.b32.xlu0 %v612, 64
      %v1477 = vpop.permute.xlu0 %1476
      %1478 = vrot.lane.b32.xlu0 %v615, 64
      %v1479 = vpop.permute.xlu0 %1478
      %1480 = vrot.lane.b32.xlu0 %v617, 64
      %v1481 = vpop.permute.xlu0 %1480
      %1482 = vrot.lane.b32.xlu0 %v619, 64
      %v1483 = vpop.permute.xlu0 %1482
      %1484 = vrot.lane.b32.xlu0 %v621, 64
      %v1485 = vpop.permute.xlu0 %1484
      %1486 = vrot.lane.b32.xlu0 %v624, 64
      %v1487 = vpop.permute.xlu0 %1486
      %1488 = vrot.lane.b32.xlu0 %v626, 64
      %v1489 = vpop.permute.xlu0 %1488
      %1490 = vrot.lane.b32.xlu0 %v628, 64
      %v1491 = vpop.permute.xlu0 %1490
      %1492 = vrot.lane.b32.xlu0 %v630, 64
      %v1493 = vpop.permute.xlu0 %1492
      %1494 = vrot.lane.b32.xlu0 %v633, 64
      %v1495 = vpop.permute.xlu0 %1494
      %1496 = vrot.lane.b32.xlu0 %v635, 64
      %v1497 = vpop.permute.xlu0 %1496
      %1498 = vrot.lane.b32.xlu0 %v637, 64
      %v1499 = vpop.permute.xlu0 %1498
      %1500 = vrot.lane.b32.xlu0 %v639, 64
      %v1501 = vpop.permute.xlu0 %1500
      %1502 = vrot.lane.b32.xlu0 %v642, 64
      %v1503 = vpop.permute.xlu0 %1502
      %1504 = vrot.lane.b32.xlu0 %v644, 64
      %v1505 = vpop.permute.xlu0 %1504
      %1506 = vrot.lane.b32.xlu0 %v646, 64
      %v1507 = vpop.permute.xlu0 %1506
      %1508 = vrot.lane.b32.xlu0 %v648, 64
      %v1509 = vpop.permute.xlu0 %1508
      %1510 = vrot.lane.b32.xlu0 %v651, 64
      %v1511 = vpop.permute.xlu0 %1510
      %1512 = vrot.lane.b32.xlu0 %v653, 64
      %v1513 = vpop.permute.xlu0 %1512
      %1514 = vrot.lane.b32.xlu0 %v655, 64
      %v1515 = vpop.permute.xlu0 %1514
      %1516 = vrot.lane.b32.xlu0 %v657, 64
      %v1517 = vpop.permute.xlu0 %1516
      %1518 = vrot.lane.b32.xlu0 %v660, 64
      %v1519 = vpop.permute.xlu0 %1518
      %1520 = vrot.lane.b32.xlu0 %v662, 64
      %v1521 = vpop.permute.xlu0 %1520
      %1522 = vrot.lane.b32.xlu0 %v664, 64
      %v1523 = vpop.permute.xlu0 %1522
      %1524 = vrot.lane.b32.xlu0 %v666, 64
      %v1525 = vpop.permute.xlu0 %1524
      %1526 = vrot.lane.b32.xlu0 %v669, 64
      %v1527 = vpop.permute.xlu0 %1526
      %1528 = vrot.lane.b32.xlu0 %v671, 64
      %v1529 = vpop.permute.xlu0 %1528
      %1530 = vrot.lane.b32.xlu0 %v673, 64
      %v1531 = vpop.permute.xlu0 %1530
      %1532 = vrot.lane.b32.xlu0 %v675, 64
      %v1533 = vpop.permute.xlu0 %1532
      %1534 = vrot.lane.b32.xlu0 %v678, 64
      %v1535 = vpop.permute.xlu0 %1534
      %1536 = vrot.lane.b32.xlu0 %v680, 64
      %v1537 = vpop.permute.xlu0 %1536
      %1538 = vrot.lane.b32.xlu0 %v682, 64
      %v1539 = vpop.permute.xlu0 %1538
      %1540 = vrot.lane.b32.xlu0 %v684, 64
      %v1541 = vpop.permute.xlu0 %1540
      %1542 = vrot.lane.b32.xlu0 %v687, 64
      %v1543 = vpop.permute.xlu0 %1542
      %1544 = vrot.lane.b32.xlu0 %v689, 64
      %v1545 = vpop.permute.xlu0 %1544
      %1546 = vrot.lane.b32.xlu0 %v691, 64
      %v1547 = vpop.permute.xlu0 %1546
      %1548 = vrot.lane.b32.xlu0 %v693, 64
      %v1549 = vpop.permute.xlu0 %1548
      %1550 = vrot.lane.b32.xlu0 %v696, 64
      %v1551 = vpop.permute.xlu0 %1550
      %1552 = vrot.lane.b32.xlu0 %v698, 64
      %v1553 = vpop.permute.xlu0 %1552
      %1554 = vrot.lane.b32.xlu0 %v700, 64
      %v1555 = vpop.permute.xlu0 %1554
      %1556 = vrot.lane.b32.xlu0 %v702, 64
      %v1557 = vpop.permute.xlu0 %1556
      %1558 = vrot.lane.b32.xlu0 %v1431, 64
      %v1559 = vpop.permute.xlu0 %1558
      %1560 = vrot.lane.b32.xlu0 %v1433, 64
      %v1561 = vpop.permute.xlu0 %1560
      %1562 = vrot.lane.b32.xlu0 %v1435, 64
      %v1563 = vpop.permute.xlu0 %1562
      %1564 = vrot.lane.b32.xlu0 %v1437, 64
      %v1565 = vpop.permute.xlu0 %1564
      %v1630 = vrot.slane %v468, 2
      %v1631 = vrot.slane %v469, 2
      %v1632 = vsel %vm895, %v1630, %v1631
      %v1633 = vrot.slane %v470, 2
      %v1634 = vsel %vm895, %v1631, %v1633
      %v1635 = vrot.slane %v471, 2
      %v1636 = vsel %vm895, %v1633, %v1635
      %v1637 = vrot.slane %v472, 2
      %v1638 = vsel %vm895, %v1635, %v1637
      %1639 = vrot.lane.b32.xlu0 %v907, 80
      %v1640 = vpop.permute.xlu0 %1639
      %1641 = vrot.lane.b32.xlu0 %v909, 80
      %v1642 = vpop.permute.xlu0 %1641
      %1643 = vrot.lane.b32.xlu0 %v911, 80
      %v1644 = vpop.permute.xlu0 %1643
      %1645 = vrot.lane.b32.xlu0 %v913, 80
      %v1646 = vpop.permute.xlu0 %1645
      %1647 = vrot.lane.b32.xlu0 %v916, 80
      %v1648 = vpop.permute.xlu0 %1647
      %1649 = vrot.lane.b32.xlu0 %v918, 80
      %v1650 = vpop.permute.xlu0 %1649
      %1651 = vrot.lane.b32.xlu0 %v920, 80
      %v1652 = vpop.permute.xlu0 %1651
      %1653 = vrot.lane.b32.xlu0 %v922, 80
      %v1654 = vpop.permute.xlu0 %1653
      %1655 = vrot.lane.b32.xlu0 %v925, 80
      %v1656 = vpop.permute.xlu0 %1655
      %1657 = vrot.lane.b32.xlu0 %v927, 80
      %v1658 = vpop.permute.xlu0 %1657
      %1659 = vrot.lane.b32.xlu0 %v929, 80
      %v1660 = vpop.permute.xlu0 %1659
      %1661 = vrot.lane.b32.xlu0 %v931, 80
      %v1662 = vpop.permute.xlu0 %1661
      %1663 = vrot.lane.b32.xlu0 %v934, 80
      %v1664 = vpop.permute.xlu0 %1663
      %1665 = vrot.lane.b32.xlu0 %v936, 80
      %v1666 = vpop.permute.xlu0 %1665
      %1667 = vrot.lane.b32.xlu0 %v938, 80
      %v1668 = vpop.permute.xlu0 %1667
      %1669 = vrot.lane.b32.xlu0 %v940, 80
      %v1670 = vpop.permute.xlu0 %1669
      %1671 = vrot.lane.b32.xlu0 %v943, 80
      %v1672 = vpop.permute.xlu0 %1671
      %1673 = vrot.lane.b32.xlu0 %v945, 80
      %v1674 = vpop.permute.xlu0 %1673
      %1675 = vrot.lane.b32.xlu0 %v947, 80
      %v1676 = vpop.permute.xlu0 %1675
      %1677 = vrot.lane.b32.xlu0 %v949, 80
      %v1678 = vpop.permute.xlu0 %1677
      %1679 = vrot.lane.b32.xlu0 %v952, 80
      %v1680 = vpop.permute.xlu0 %1679
      %1681 = vrot.lane.b32.xlu0 %v954, 80
      %v1682 = vpop.permute.xlu0 %1681
      %1683 = vrot.lane.b32.xlu0 %v956, 80
      %v1684 = vpop.permute.xlu0 %1683
      %1685 = vrot.lane.b32.xlu0 %v958, 80
      %v1686 = vpop.permute.xlu0 %1685
      %1687 = vrot.lane.b32.xlu0 %v961, 80
      %v1688 = vpop.permute.xlu0 %1687
      %1689 = vrot.lane.b32.xlu0 %v963, 80
      %v1690 = vpop.permute.xlu0 %1689
      %1691 = vrot.lane.b32.xlu0 %v965, 80
      %v1692 = vpop.permute.xlu0 %1691
      %1693 = vrot.lane.b32.xlu0 %v967, 80
      %v1694 = vpop.permute.xlu0 %1693
      %1695 = vrot.lane.b32.xlu0 %v970, 80
      %v1696 = vpop.permute.xlu0 %1695
      %1697 = vrot.lane.b32.xlu0 %v972, 80
      %v1698 = vpop.permute.xlu0 %1697
      %1699 = vrot.lane.b32.xlu0 %v974, 80
      %v1700 = vpop.permute.xlu0 %1699
      %1701 = vrot.lane.b32.xlu0 %v976, 80
      %v1702 = vpop.permute.xlu0 %1701
      %1703 = vrot.lane.b32.xlu0 %v979, 80
      %v1704 = vpop.permute.xlu0 %1703
      %1705 = vrot.lane.b32.xlu0 %v981, 80
      %v1706 = vpop.permute.xlu0 %1705
      %1707 = vrot.lane.b32.xlu0 %v983, 80
      %v1708 = vpop.permute.xlu0 %1707
      %1709 = vrot.lane.b32.xlu0 %v985, 80
      %v1710 = vpop.permute.xlu0 %1709
      %1711 = vrot.lane.b32.xlu0 %v988, 80
      %v1712 = vpop.permute.xlu0 %1711
      %1713 = vrot.lane.b32.xlu0 %v990, 80
      %v1714 = vpop.permute.xlu0 %1713
      %1715 = vrot.lane.b32.xlu0 %v992, 80
      %v1716 = vpop.permute.xlu0 %1715
      %1717 = vrot.lane.b32.xlu0 %v994, 80
      %v1718 = vpop.permute.xlu0 %1717
      %1719 = vrot.lane.b32.xlu0 %v997, 80
      %v1720 = vpop.permute.xlu0 %1719
      %1721 = vrot.lane.b32.xlu0 %v999, 80
      %v1722 = vpop.permute.xlu0 %1721
      %1723 = vrot.lane.b32.xlu0 %v1001, 80
      %v1724 = vpop.permute.xlu0 %1723
      %1725 = vrot.lane.b32.xlu0 %v1003, 80
      %v1726 = vpop.permute.xlu0 %1725
      %1727 = vrot.lane.b32.xlu0 %v1006, 80
      %v1728 = vpop.permute.xlu0 %1727
      %1729 = vrot.lane.b32.xlu0 %v1008, 80
      %v1730 = vpop.permute.xlu0 %1729
      %1731 = vrot.lane.b32.xlu0 %v1010, 80
      %v1732 = vpop.permute.xlu0 %1731
      %1733 = vrot.lane.b32.xlu0 %v1012, 80
      %v1734 = vpop.permute.xlu0 %1733
      %1735 = vrot.lane.b32.xlu0 %v1015, 80
      %v1736 = vpop.permute.xlu0 %1735
      %1737 = vrot.lane.b32.xlu0 %v1017, 80
      %v1738 = vpop.permute.xlu0 %1737
      %1739 = vrot.lane.b32.xlu0 %v1019, 80
      %v1740 = vpop.permute.xlu0 %1739
      %1741 = vrot.lane.b32.xlu0 %v1021, 80
      %v1742 = vpop.permute.xlu0 %1741
      %1743 = vrot.lane.b32.xlu0 %v1024, 80
      %v1744 = vpop.permute.xlu0 %1743
      %1745 = vrot.lane.b32.xlu0 %v1026, 80
      %v1746 = vpop.permute.xlu0 %1745
      %1747 = vrot.lane.b32.xlu0 %v1028, 80
      %v1748 = vpop.permute.xlu0 %1747
      %1749 = vrot.lane.b32.xlu0 %v1030, 80
      %v1750 = vpop.permute.xlu0 %1749
      %1751 = vrot.lane.b32.xlu0 %v1033, 80
      %v1752 = vpop.permute.xlu0 %1751
      %1753 = vrot.lane.b32.xlu0 %v1035, 80
      %v1754 = vpop.permute.xlu0 %1753
      %1755 = vrot.lane.b32.xlu0 %v1037, 80
      %v1756 = vpop.permute.xlu0 %1755
      %1757 = vrot.lane.b32.xlu0 %v1039, 80
      %v1758 = vpop.permute.xlu0 %1757
      %1759 = vrot.lane.b32.xlu0 %v1632, 80
      %v1760 = vpop.permute.xlu0 %1759
      %1761 = vrot.lane.b32.xlu0 %v1634, 80
      %v1762 = vpop.permute.xlu0 %1761
      %1763 = vrot.lane.b32.xlu0 %v1636, 80
      %v1764 = vpop.permute.xlu0 %1763
      %1765 = vrot.lane.b32.xlu0 %v1638, 80
      %v1766 = vpop.permute.xlu0 %1765
      %1835 = vrot.lane.b32.xlu0 %v398, 96
      %v1836 = vpop.permute.xlu0 %1835
      %1837 = vrot.lane.b32.xlu0 %v399, 96
      %v1838 = vpop.permute.xlu0 %1837
      %1839 = vrot.lane.b32.xlu0 %v400, 96
      %v1840 = vpop.permute.xlu0 %1839
      %1841 = vrot.lane.b32.xlu0 %v401, 96
      %v1842 = vpop.permute.xlu0 %1841
      %1843 = vrot.lane.b32.xlu0 %v403, 96
      %v1844 = vpop.permute.xlu0 %1843
      %1845 = vrot.lane.b32.xlu0 %v404, 96
      %v1846 = vpop.permute.xlu0 %1845
      %1847 = vrot.lane.b32.xlu0 %v405, 96
      %v1848 = vpop.permute.xlu0 %1847
      %1849 = vrot.lane.b32.xlu0 %v406, 96
      %v1850 = vpop.permute.xlu0 %1849
      %1851 = vrot.lane.b32.xlu0 %v408, 96
      %v1852 = vpop.permute.xlu0 %1851
      %1853 = vrot.lane.b32.xlu0 %v409, 96
      %v1854 = vpop.permute.xlu0 %1853
      %1855 = vrot.lane.b32.xlu0 %v410, 96
      %v1856 = vpop.permute.xlu0 %1855
      %1857 = vrot.lane.b32.xlu0 %v411, 96
      %v1858 = vpop.permute.xlu0 %1857
      %1859 = vrot.lane.b32.xlu0 %v413, 96
      %v1860 = vpop.permute.xlu0 %1859
      %1861 = vrot.lane.b32.xlu0 %v414, 96
      %v1862 = vpop.permute.xlu0 %1861
      %1863 = vrot.lane.b32.xlu0 %v415, 96
      %v1864 = vpop.permute.xlu0 %1863
      %1865 = vrot.lane.b32.xlu0 %v416, 96
      %v1866 = vpop.permute.xlu0 %1865
      %1867 = vrot.lane.b32.xlu0 %v418, 96
      %v1868 = vpop.permute.xlu0 %1867
      %1869 = vrot.lane.b32.xlu0 %v419, 96
      %v1870 = vpop.permute.xlu0 %1869
      %1871 = vrot.lane.b32.xlu0 %v420, 96
      %v1872 = vpop.permute.xlu0 %1871
      %1873 = vrot.lane.b32.xlu0 %v421, 96
      %v1874 = vpop.permute.xlu0 %1873
      %1875 = vrot.lane.b32.xlu0 %v423, 96
      %v1876 = vpop.permute.xlu0 %1875
      %1877 = vrot.lane.b32.xlu0 %v424, 96
      %v1878 = vpop.permute.xlu0 %1877
      %1879 = vrot.lane.b32.xlu0 %v425, 96
      %v1880 = vpop.permute.xlu0 %1879
      %1881 = vrot.lane.b32.xlu0 %v426, 96
      %v1882 = vpop.permute.xlu0 %1881
      %1883 = vrot.lane.b32.xlu0 %v428, 96
      %v1884 = vpop.permute.xlu0 %1883
      %1885 = vrot.lane.b32.xlu0 %v429, 96
      %v1886 = vpop.permute.xlu0 %1885
      %1887 = vrot.lane.b32.xlu0 %v430, 96
      %v1888 = vpop.permute.xlu0 %1887
      %1889 = vrot.lane.b32.xlu0 %v431, 96
      %v1890 = vpop.permute.xlu0 %1889
      %1891 = vrot.lane.b32.xlu0 %v433, 96
      %v1892 = vpop.permute.xlu0 %1891
      %1893 = vrot.lane.b32.xlu0 %v434, 96
      %v1894 = vpop.permute.xlu0 %1893
      %1895 = vrot.lane.b32.xlu0 %v435, 96
      %v1896 = vpop.permute.xlu0 %1895
      %1897 = vrot.lane.b32.xlu0 %v436, 96
      %v1898 = vpop.permute.xlu0 %1897
      %1899 = vrot.lane.b32.xlu0 %v438, 96
      %v1900 = vpop.permute.xlu0 %1899
      %1901 = vrot.lane.b32.xlu0 %v439, 96
      %v1902 = vpop.permute.xlu0 %1901
      %1903 = vrot.lane.b32.xlu0 %v440, 96
      %v1904 = vpop.permute.xlu0 %1903
      %1905 = vrot.lane.b32.xlu0 %v441, 96
      %v1906 = vpop.permute.xlu0 %1905
      %1907 = vrot.lane.b32.xlu0 %v443, 96
      %v1908 = vpop.permute.xlu0 %1907
      %1909 = vrot.lane.b32.xlu0 %v444, 96
      %v1910 = vpop.permute.xlu0 %1909
      %1911 = vrot.lane.b32.xlu0 %v445, 96
      %v1912 = vpop.permute.xlu0 %1911
      %1913 = vrot.lane.b32.xlu0 %v446, 96
      %v1914 = vpop.permute.xlu0 %1913
      %1915 = vrot.lane.b32.xlu0 %v448, 96
      %v1916 = vpop.permute.xlu0 %1915
      %1917 = vrot.lane.b32.xlu0 %v449, 96
      %v1918 = vpop.permute.xlu0 %1917
      %1919 = vrot.lane.b32.xlu0 %v450, 96
      %v1920 = vpop.permute.xlu0 %1919
      %1921 = vrot.lane.b32.xlu0 %v451, 96
      %v1922 = vpop.permute.xlu0 %1921
      %1923 = vrot.lane.b32.xlu0 %v453, 96
      %v1924 = vpop.permute.xlu0 %1923
      %1925 = vrot.lane.b32.xlu0 %v454, 96
      %v1926 = vpop.permute.xlu0 %1925
      %1927 = vrot.lane.b32.xlu0 %v455, 96
      %v1928 = vpop.permute.xlu0 %1927
      %1929 = vrot.lane.b32.xlu0 %v456, 96
      %v1930 = vpop.permute.xlu0 %1929
      %1931 = vrot.lane.b32.xlu0 %v458, 96
      %v1932 = vpop.permute.xlu0 %1931
      %1933 = vrot.lane.b32.xlu0 %v459, 96
      %v1934 = vpop.permute.xlu0 %1933
      %1935 = vrot.lane.b32.xlu0 %v460, 96
      %v1936 = vpop.permute.xlu0 %1935
      %1937 = vrot.lane.b32.xlu0 %v461, 96
      %v1938 = vpop.permute.xlu0 %1937
      %1939 = vrot.lane.b32.xlu0 %v463, 96
      %v1940 = vpop.permute.xlu0 %1939
      %1941 = vrot.lane.b32.xlu0 %v464, 96
      %v1942 = vpop.permute.xlu0 %1941
      %1943 = vrot.lane.b32.xlu0 %v465, 96
      %v1944 = vpop.permute.xlu0 %1943
      %1945 = vrot.lane.b32.xlu0 %v466, 96
      %v1946 = vpop.permute.xlu0 %1945
      %1947 = vrot.lane.b32.xlu0 %v468, 96
      %v1948 = vpop.permute.xlu0 %1947
      %1949 = vrot.lane.b32.xlu0 %v469, 96
      %v1950 = vpop.permute.xlu0 %1949
      %1951 = vrot.lane.b32.xlu0 %v470, 96
      %v1952 = vpop.permute.xlu0 %1951
      %1953 = vrot.lane.b32.xlu0 %v471, 96
      %v1954 = vpop.permute.xlu0 %1953
      %1955 = vrot.lane.b32.xlu0 %v473, 96
      %v1956 = vpop.permute.xlu0 %1955
      %1957 = vrot.lane.b32.xlu0 %v474, 96
      %v1958 = vpop.permute.xlu0 %1957
      %1959 = vrot.lane.b32.xlu0 %v475, 96
      %v1960 = vpop.permute.xlu0 %1959
      %1961 = vrot.lane.b32.xlu0 %v476, 96
      %v1962 = vpop.permute.xlu0 %1961
      %v2028 = vrot.slane %v473, 1
      %v2029 = vrot.slane %v474, 1
      %v2030 = vsel %vm558, %v2028, %v2029
      %v2031 = vrot.slane %v475, 1
      %v2032 = vsel %vm558, %v2029, %v2031
      %v2033 = vrot.slane %v476, 1
      %v2034 = vsel %vm558, %v2031, %v2033
      %v2035 = vrot.slane %v477, 1
      %v2036 = vsel %vm558, %v2033, %v2035
      %2037 = vrot.lane.b32.xlu0 %v579, 112
      %v2038 = vpop.permute.xlu0 %2037
      %2039 = vrot.lane.b32.xlu0 %v581, 112
      %v2040 = vpop.permute.xlu0 %2039
      %2041 = vrot.lane.b32.xlu0 %v583, 112
      %v2042 = vpop.permute.xlu0 %2041
      %2043 = vrot.lane.b32.xlu0 %v585, 112
      %v2044 = vpop.permute.xlu0 %2043
      %2045 = vrot.lane.b32.xlu0 %v588, 112
      %v2046 = vpop.permute.xlu0 %2045
      %2047 = vrot.lane.b32.xlu0 %v590, 112
      %v2048 = vpop.permute.xlu0 %2047
      %2049 = vrot.lane.b32.xlu0 %v592, 112
      %v2050 = vpop.permute.xlu0 %2049
      %2051 = vrot.lane.b32.xlu0 %v594, 112
      %v2052 = vpop.permute.xlu0 %2051
      %2053 = vrot.lane.b32.xlu0 %v597, 112
      %v2054 = vpop.permute.xlu0 %2053
      %2055 = vrot.lane.b32.xlu0 %v599, 112
      %v2056 = vpop.permute.xlu0 %2055
      %2057 = vrot.lane.b32.xlu0 %v601, 112
      %v2058 = vpop.permute.xlu0 %2057
      %2059 = vrot.lane.b32.xlu0 %v603, 112
      %v2060 = vpop.permute.xlu0 %2059
      %2061 = vrot.lane.b32.xlu0 %v606, 112
      %v2062 = vpop.permute.xlu0 %2061
      %2063 = vrot.lane.b32.xlu0 %v608, 112
      %v2064 = vpop.permute.xlu0 %2063
      %2065 = vrot.lane.b32.xlu0 %v610, 112
      %v2066 = vpop.permute.xlu0 %2065
      %2067 = vrot.lane.b32.xlu0 %v612, 112
      %v2068 = vpop.permute.xlu0 %2067
      %2069 = vrot.lane.b32.xlu0 %v615, 112
      %v2070 = vpop.permute.xlu0 %2069
      %2071 = vrot.lane.b32.xlu0 %v617, 112
      %v2072 = vpop.permute.xlu0 %2071
      %2073 = vrot.lane.b32.xlu0 %v619, 112
      %v2074 = vpop.permute.xlu0 %2073
      %2075 = vrot.lane.b32.xlu0 %v621, 112
      %v2076 = vpop.permute.xlu0 %2075
      %2077 = vrot.lane.b32.xlu0 %v624, 112
      %v2078 = vpop.permute.xlu0 %2077
      %2079 = vrot.lane.b32.xlu0 %v626, 112
      %v2080 = vpop.permute.xlu0 %2079
      %2081 = vrot.lane.b32.xlu0 %v628, 112
      %v2082 = vpop.permute.xlu0 %2081
      %2083 = vrot.lane.b32.xlu0 %v630, 112
      %v2084 = vpop.permute.xlu0 %2083
      %2085 = vrot.lane.b32.xlu0 %v633, 112
      %v2086 = vpop.permute.xlu0 %2085
      %2087 = vrot.lane.b32.xlu0 %v635, 112
      %v2088 = vpop.permute.xlu0 %2087
      %2089 = vrot.lane.b32.xlu0 %v637, 112
      %v2090 = vpop.permute.xlu0 %2089
      %2091 = vrot.lane.b32.xlu0 %v639, 112
      %v2092 = vpop.permute.xlu0 %2091
      %2093 = vrot.lane.b32.xlu0 %v642, 112
      %v2094 = vpop.permute.xlu0 %2093
      %2095 = vrot.lane.b32.xlu0 %v644, 112
      %v2096 = vpop.permute.xlu0 %2095
      %2097 = vrot.lane.b32.xlu0 %v646, 112
      %v2098 = vpop.permute.xlu0 %2097
      %2099 = vrot.lane.b32.xlu0 %v648, 112
      %v2100 = vpop.permute.xlu0 %2099
      %2101 = vrot.lane.b32.xlu0 %v651, 112
      %v2102 = vpop.permute.xlu0 %2101
      %2103 = vrot.lane.b32.xlu0 %v653, 112
      %v2104 = vpop.permute.xlu0 %2103
      %2105 = vrot.lane.b32.xlu0 %v655, 112
      %v2106 = vpop.permute.xlu0 %2105
      %2107 = vrot.lane.b32.xlu0 %v657, 112
      %v2108 = vpop.permute.xlu0 %2107
      %2109 = vrot.lane.b32.xlu0 %v660, 112
      %v2110 = vpop.permute.xlu0 %2109
      %2111 = vrot.lane.b32.xlu0 %v662, 112
      %v2112 = vpop.permute.xlu0 %2111
      %2113 = vrot.lane.b32.xlu0 %v664, 112
      %v2114 = vpop.permute.xlu0 %2113
      %2115 = vrot.lane.b32.xlu0 %v666, 112
      %v2116 = vpop.permute.xlu0 %2115
      %2117 = vrot.lane.b32.xlu0 %v669, 112
      %v2118 = vpop.permute.xlu0 %2117
      %2119 = vrot.lane.b32.xlu0 %v671, 112
      %v2120 = vpop.permute.xlu0 %2119
      %2121 = vrot.lane.b32.xlu0 %v673, 112
      %v2122 = vpop.permute.xlu0 %2121
      %2123 = vrot.lane.b32.xlu0 %v675, 112
      %v2124 = vpop.permute.xlu0 %2123
      %2125 = vrot.lane.b32.xlu0 %v678, 112
      %v2126 = vpop.permute.xlu0 %2125
      %2127 = vrot.lane.b32.xlu0 %v680, 112
      %v2128 = vpop.permute.xlu0 %2127
      %2129 = vrot.lane.b32.xlu0 %v682, 112
      %v2130 = vpop.permute.xlu0 %2129
      %2131 = vrot.lane.b32.xlu0 %v684, 112
      %v2132 = vpop.permute.xlu0 %2131
      %2133 = vrot.lane.b32.xlu0 %v687, 112
      %v2134 = vpop.permute.xlu0 %2133
      %2135 = vrot.lane.b32.xlu0 %v689, 112
      %v2136 = vpop.permute.xlu0 %2135
      %2137 = vrot.lane.b32.xlu0 %v691, 112
      %v2138 = vpop.permute.xlu0 %2137
      %2139 = vrot.lane.b32.xlu0 %v693, 112
      %v2140 = vpop.permute.xlu0 %2139
      %2141 = vrot.lane.b32.xlu0 %v696, 112
      %v2142 = vpop.permute.xlu0 %2141
      %2143 = vrot.lane.b32.xlu0 %v698, 112
      %v2144 = vpop.permute.xlu0 %2143
      %2145 = vrot.lane.b32.xlu0 %v700, 112
      %v2146 = vpop.permute.xlu0 %2145
      %2147 = vrot.lane.b32.xlu0 %v702, 112
      %v2148 = vpop.permute.xlu0 %2147
      %2149 = vrot.lane.b32.xlu0 %v1431, 112
      %v2150 = vpop.permute.xlu0 %2149
      %2151 = vrot.lane.b32.xlu0 %v1433, 112
      %v2152 = vpop.permute.xlu0 %2151
      %2153 = vrot.lane.b32.xlu0 %v1435, 112
      %v2154 = vpop.permute.xlu0 %2153
      %2155 = vrot.lane.b32.xlu0 %v1437, 112
      %v2156 = vpop.permute.xlu0 %2155
      %2157 = vrot.lane.b32.xlu0 %v2030, 112
      %v2158 = vpop.permute.xlu0 %2157
      %2159 = vrot.lane.b32.xlu0 %v2032, 112
      %v2160 = vpop.permute.xlu0 %2159
      %2161 = vrot.lane.b32.xlu0 %v2034, 112
      %v2162 = vpop.permute.xlu0 %2161
      %2163 = vrot.lane.b32.xlu0 %v2036, 112
      %v2164 = vpop.permute.xlu0 %2163
      %v2229 = vrot.slane %v473, 2
      %v2230 = vrot.slane %v474, 2
      %v2231 = vsel %vm895, %v2229, %v2230
      %v2232 = vrot.slane %v475, 2
      %v2233 = vsel %vm895, %v2230, %v2232
      %v2234 = vrot.slane %v476, 2
      %v2235 = vsel %vm895, %v2232, %v2234
      %v2236 = vrot.slane %v477, 2
      %v2237 = vsel %vm895, %v2234, %v2236
      %vm2302 = vcmask 130048
      %v2303 = vsel %vm2302, %v388, %v704
      %v2304 = vsel %vm2302, %v389, %v706
      %v2305 = vsel %vm2302, %v390, %v708
      %v2306 = vsel %vm2302, %v391, %v710
      %v2307 = vsel %vm2302, %v393, %v712
      %v2308 = vsel %vm2302, %v394, %v714
      %v2309 = vsel %vm2302, %v395, %v716
      %v2310 = vsel %vm2302, %v396, %v718
      %v2311 = vsel %vm2302, %v398, %v720
      %v2312 = vsel %vm2302, %v399, %v722
      %v2313 = vsel %vm2302, %v400, %v724
      %v2314 = vsel %vm2302, %v401, %v726
      %v2315 = vsel %vm2302, %v403, %v728
      %v2316 = vsel %vm2302, %v404, %v730
      %v2317 = vsel %vm2302, %v405, %v732
      %v2318 = vsel %vm2302, %v406, %v734
      %v2319 = vsel %vm2302, %v408, %v736
      %v2320 = vsel %vm2302, %v409, %v738
      %v2321 = vsel %vm2302, %v410, %v740
      %v2322 = vsel %vm2302, %v411, %v742
      %v2323 = vsel %vm2302, %v413, %v744
      %v2324 = vsel %vm2302, %v414, %v746
      %v2325 = vsel %vm2302, %v415, %v748
      %v2326 = vsel %vm2302, %v416, %v750
      %v2327 = vsel %vm2302, %v418, %v752
      %v2328 = vsel %vm2302, %v419, %v754
      %v2329 = vsel %vm2302, %v420, %v756
      %v2330 = vsel %vm2302, %v421, %v758
      %v2331 = vsel %vm2302, %v423, %v760
      %v2332 = vsel %vm2302, %v424, %v762
      %v2333 = vsel %vm2302, %v425, %v764
      %v2334 = vsel %vm2302, %v426, %v766
      %v2335 = vsel %vm2302, %v428, %v768
      %v2336 = vsel %vm2302, %v429, %v770
      %v2337 = vsel %vm2302, %v430, %v772
      %v2338 = vsel %vm2302, %v431, %v774
      %v2339 = vsel %vm2302, %v433, %v776
      %v2340 = vsel %vm2302, %v434, %v778
      %v2341 = vsel %vm2302, %v435, %v780
      %v2342 = vsel %vm2302, %v436, %v782
      %v2343 = vsel %vm2302, %v438, %v784
      %v2344 = vsel %vm2302, %v439, %v786
      %v2345 = vsel %vm2302, %v440, %v788
      %v2346 = vsel %vm2302, %v441, %v790
      %v2347 = vsel %vm2302, %v443, %v792
      %v2348 = vsel %vm2302, %v444, %v794
      %v2349 = vsel %vm2302, %v445, %v796
      %v2350 = vsel %vm2302, %v446, %v798
      %v2351 = vsel %vm2302, %v448, %v800
      %v2352 = vsel %vm2302, %v449, %v802
      %v2353 = vsel %vm2302, %v450, %v804
      %v2354 = vsel %vm2302, %v451, %v806
      %v2355 = vsel %vm2302, %v453, %v808
      %v2356 = vsel %vm2302, %v454, %v810
      %v2357 = vsel %vm2302, %v455, %v812
      %v2358 = vsel %vm2302, %v456, %v814
      %v2359 = vsel %vm2302, %v458, %v816
      %v2360 = vsel %vm2302, %v459, %v818
      %v2361 = vsel %vm2302, %v460, %v820
      %v2362 = vsel %vm2302, %v461, %v822
      %v2363 = vsel %vm2302, %v463, %v824
      %v2364 = vsel %vm2302, %v464, %v826
      %v2365 = vsel %vm2302, %v465, %v828
      %v2366 = vsel %vm2302, %v466, %v830
      %vm2367 = vcmask 261120
      %v2368 = vsel %vm2367, %v2303, %v1041
      %v2369 = vsel %vm2367, %v2304, %v1043
      %v2370 = vsel %vm2367, %v2305, %v1045
      %v2371 = vsel %vm2367, %v2306, %v1047
      %v2372 = vsel %vm2367, %v2307, %v1049
      %v2373 = vsel %vm2367, %v2308, %v1051
      %v2374 = vsel %vm2367, %v2309, %v1053
      %v2375 = vsel %vm2367, %v2310, %v1055
      %v2376 = vsel %vm2367, %v2311, %v1057
      %v2377 = vsel %vm2367, %v2312, %v1059
      %v2378 = vsel %vm2367, %v2313, %v1061
      %v2379 = vsel %vm2367, %v2314, %v1063
      %v2380 = vsel %vm2367, %v2315, %v1065
      %v2381 = vsel %vm2367, %v2316, %v1067
      %v2382 = vsel %vm2367, %v2317, %v1069
      %v2383 = vsel %vm2367, %v2318, %v1071
      %v2384 = vsel %vm2367, %v2319, %v1073
      %v2385 = vsel %vm2367, %v2320, %v1075
      %v2386 = vsel %vm2367, %v2321, %v1077
      %v2387 = vsel %vm2367, %v2322, %v1079
      %v2388 = vsel %vm2367, %v2323, %v1081
      %v2389 = vsel %vm2367, %v2324, %v1083
      %v2390 = vsel %vm2367, %v2325, %v1085
      %v2391 = vsel %vm2367, %v2326, %v1087
      %v2392 = vsel %vm2367, %v2327, %v1089
      %v2393 = vsel %vm2367, %v2328, %v1091
      %v2394 = vsel %vm2367, %v2329, %v1093
      %v2395 = vsel %vm2367, %v2330, %v1095
      %v2396 = vsel %vm2367, %v2331, %v1097
      %v2397 = vsel %vm2367, %v2332, %v1099
      %v2398 = vsel %vm2367, %v2333, %v1101
      %v2399 = vsel %vm2367, %v2334, %v1103
      %v2400 = vsel %vm2367, %v2335, %v1105
      %v2401 = vsel %vm2367, %v2336, %v1107
      %v2402 = vsel %vm2367, %v2337, %v1109
      %v2403 = vsel %vm2367, %v2338, %v1111
      %v2404 = vsel %vm2367, %v2339, %v1113
      %v2405 = vsel %vm2367, %v2340, %v1115
      %v2406 = vsel %vm2367, %v2341, %v1117
      %v2407 = vsel %vm2367, %v2342, %v1119
      %v2408 = vsel %vm2367, %v2343, %v1121
      %v2409 = vsel %vm2367, %v2344, %v1123
      %v2410 = vsel %vm2367, %v2345, %v1125
      %v2411 = vsel %vm2367, %v2346, %v1127
      %v2412 = vsel %vm2367, %v2347, %v1129
      %v2413 = vsel %vm2367, %v2348, %v1131
      %v2414 = vsel %vm2367, %v2349, %v1133
      %v2415 = vsel %vm2367, %v2350, %v1135
      %v2416 = vsel %vm2367, %v2351, %v1137
      %v2417 = vsel %vm2367, %v2352, %v1139
      %v2418 = vsel %vm2367, %v2353, %v1141
      %v2419 = vsel %vm2367, %v2354, %v1143
      %v2420 = vsel %vm2367, %v2355, %v1145
      %v2421 = vsel %vm2367, %v2356, %v1147
      %v2422 = vsel %vm2367, %v2357, %v1149
      %v2423 = vsel %vm2367, %v2358, %v1151
      %v2424 = vsel %vm2367, %v2359, %v1153
      %v2425 = vsel %vm2367, %v2360, %v1155
      %v2426 = vsel %vm2367, %v2361, %v1157
      %v2427 = vsel %vm2367, %v2362, %v1159
      %v2428 = vsel %vm2367, %v2363, %v1161
      %v2429 = vsel %vm2367, %v2364, %v1163
      %v2430 = vsel %vm2367, %v2365, %v1165
      %v2431 = vsel %vm2367, %v2366, %v1167
      %vm2432 = vcmask 392192
      %v2433 = vsel %vm2432, %v2368, %v1237
      %v2434 = vsel %vm2432, %v2369, %v1239
      %v2435 = vsel %vm2432, %v2370, %v1241
      %v2436 = vsel %vm2432, %v2371, %v1243
      %v2437 = vsel %vm2432, %v2372, %v1245
      %v2438 = vsel %vm2432, %v2373, %v1247
      %v2439 = vsel %vm2432, %v2374, %v1249
      %v2440 = vsel %vm2432, %v2375, %v1251
      %v2441 = vsel %vm2432, %v2376, %v1253
      %v2442 = vsel %vm2432, %v2377, %v1255
      %v2443 = vsel %vm2432, %v2378, %v1257
      %v2444 = vsel %vm2432, %v2379, %v1259
      %v2445 = vsel %vm2432, %v2380, %v1261
      %v2446 = vsel %vm2432, %v2381, %v1263
      %v2447 = vsel %vm2432, %v2382, %v1265
      %v2448 = vsel %vm2432, %v2383, %v1267
      %v2449 = vsel %vm2432, %v2384, %v1269
      %v2450 = vsel %vm2432, %v2385, %v1271
      %v2451 = vsel %vm2432, %v2386, %v1273
      %v2452 = vsel %vm2432, %v2387, %v1275
      %v2453 = vsel %vm2432, %v2388, %v1277
      %v2454 = vsel %vm2432, %v2389, %v1279
      %v2455 = vsel %vm2432, %v2390, %v1281
      %v2456 = vsel %vm2432, %v2391, %v1283
      %v2457 = vsel %vm2432, %v2392, %v1285
      %v2458 = vsel %vm2432, %v2393, %v1287
      %v2459 = vsel %vm2432, %v2394, %v1289
      %v2460 = vsel %vm2432, %v2395, %v1291
      %v2461 = vsel %vm2432, %v2396, %v1293
      %v2462 = vsel %vm2432, %v2397, %v1295
      %v2463 = vsel %vm2432, %v2398, %v1297
      %v2464 = vsel %vm2432, %v2399, %v1299
      %v2465 = vsel %vm2432, %v2400, %v1301
      %v2466 = vsel %vm2432, %v2401, %v1303
      %v2467 = vsel %vm2432, %v2402, %v1305
      %v2468 = vsel %vm2432, %v2403, %v1307
      %v2469 = vsel %vm2432, %v2404, %v1309
      %v2470 = vsel %vm2432, %v2405, %v1311
      %v2471 = vsel %vm2432, %v2406, %v1313
      %v2472 = vsel %vm2432, %v2407, %v1315
      %v2473 = vsel %vm2432, %v2408, %v1317
      %v2474 = vsel %vm2432, %v2409, %v1319
      %v2475 = vsel %vm2432, %v2410, %v1321
      %v2476 = vsel %vm2432, %v2411, %v1323
      %v2477 = vsel %vm2432, %v2412, %v1325
      %v2478 = vsel %vm2432, %v2413, %v1327
      %v2479 = vsel %vm2432, %v2414, %v1329
      %v2480 = vsel %vm2432, %v2415, %v1331
      %v2481 = vsel %vm2432, %v2416, %v1333
      %v2482 = vsel %vm2432, %v2417, %v1335
      %v2483 = vsel %vm2432, %v2418, %v1337
      %v2484 = vsel %vm2432, %v2419, %v1339
      %v2485 = vsel %vm2432, %v2420, %v1341
      %v2486 = vsel %vm2432, %v2421, %v1343
      %v2487 = vsel %vm2432, %v2422, %v1345
      %v2488 = vsel %vm2432, %v2423, %v1347
      %v2489 = vsel %vm2432, %v2424, %v1349
      %v2490 = vsel %vm2432, %v2425, %v1351
      %v2491 = vsel %vm2432, %v2426, %v1353
      %v2492 = vsel %vm2432, %v2427, %v1355
      %v2493 = vsel %vm2432, %v2428, %v1357
      %v2494 = vsel %vm2432, %v2429, %v1359
      %v2495 = vsel %vm2432, %v2430, %v1361
      %v2496 = vsel %vm2432, %v2431, %v1363
      %vm2497 = vcmask 523264
      %v2498 = vsel %vm2497, %v2433, %v1439
      %v2499 = vsel %vm2497, %v2434, %v1441
      %v2500 = vsel %vm2497, %v2435, %v1443
      %v2501 = vsel %vm2497, %v2436, %v1445
      %v2502 = vsel %vm2497, %v2437, %v1447
      %v2503 = vsel %vm2497, %v2438, %v1449
      %v2504 = vsel %vm2497, %v2439, %v1451
      %v2505 = vsel %vm2497, %v2440, %v1453
      %v2506 = vsel %vm2497, %v2441, %v1455
      %v2507 = vsel %vm2497, %v2442, %v1457
      %v2508 = vsel %vm2497, %v2443, %v1459
      %v2509 = vsel %vm2497, %v2444, %v1461
      %v2510 = vsel %vm2497, %v2445, %v1463
      %v2511 = vsel %vm2497, %v2446, %v1465
      %v2512 = vsel %vm2497, %v2447, %v1467
      %v2513 = vsel %vm2497, %v2448, %v1469
      %v2514 = vsel %vm2497, %v2449, %v1471
      %v2515 = vsel %vm2497, %v2450, %v1473
      %v2516 = vsel %vm2497, %v2451, %v1475
      %v2517 = vsel %vm2497, %v2452, %v1477
      %v2518 = vsel %vm2497, %v2453, %v1479
      %v2519 = vsel %vm2497, %v2454, %v1481
      %v2520 = vsel %vm2497, %v2455, %v1483
      %v2521 = vsel %vm2497, %v2456, %v1485
      %v2522 = vsel %vm2497, %v2457, %v1487
      %v2523 = vsel %vm2497, %v2458, %v1489
      %v2524 = vsel %vm2497, %v2459, %v1491
      %v2525 = vsel %vm2497, %v2460, %v1493
      %v2526 = vsel %vm2497, %v2461, %v1495
      %v2527 = vsel %vm2497, %v2462, %v1497
      %v2528 = vsel %vm2497, %v2463, %v1499
      %v2529 = vsel %vm2497, %v2464, %v1501
      %v2530 = vsel %vm2497, %v2465, %v1503
      %v2531 = vsel %vm2497, %v2466, %v1505
      %v2532 = vsel %vm2497, %v2467, %v1507
      %v2533 = vsel %vm2497, %v2468, %v1509
      %v2534 = vsel %vm2497, %v2469, %v1511
      %v2535 = vsel %vm2497, %v2470, %v1513
      %v2536 = vsel %vm2497, %v2471, %v1515
      %v2537 = vsel %vm2497, %v2472, %v1517
      %v2538 = vsel %vm2497, %v2473, %v1519
      %v2539 = vsel %vm2497, %v2474, %v1521
      %v2540 = vsel %vm2497, %v2475, %v1523
      %v2541 = vsel %vm2497, %v2476, %v1525
      %v2542 = vsel %vm2497, %v2477, %v1527
      %v2543 = vsel %vm2497, %v2478, %v1529
      %v2544 = vsel %vm2497, %v2479, %v1531
      %v2545 = vsel %vm2497, %v2480, %v1533
      %v2546 = vsel %vm2497, %v2481, %v1535
      %v2547 = vsel %vm2497, %v2482, %v1537
      %v2548 = vsel %vm2497, %v2483, %v1539
      %v2549 = vsel %vm2497, %v2484, %v1541
      %v2550 = vsel %vm2497, %v2485, %v1543
      %v2551 = vsel %vm2497, %v2486, %v1545
      %v2552 = vsel %vm2497, %v2487, %v1547
      %v2553 = vsel %vm2497, %v2488, %v1549
      %v2554 = vsel %vm2497, %v2489, %v1551
      %v2555 = vsel %vm2497, %v2490, %v1553
      %v2556 = vsel %vm2497, %v2491, %v1555
      %v2557 = vsel %vm2497, %v2492, %v1557
      %v2558 = vsel %vm2497, %v2493, %v1559
      %v2559 = vsel %vm2497, %v2494, %v1561
      %v2560 = vsel %vm2497, %v2495, %v1563
      %v2561 = vsel %vm2497, %v2496, %v1565
      %vm2562 = vcmask 654336
      %v2563 = vsel %vm2562, %v2498, %v1640
      %v2564 = vsel %vm2562, %v2499, %v1642
      %v2565 = vsel %vm2562, %v2500, %v1644
      %v2566 = vsel %vm2562, %v2501, %v1646
      %v2567 = vsel %vm2562, %v2502, %v1648
      %v2568 = vsel %vm2562, %v2503, %v1650
      %v2569 = vsel %vm2562, %v2504, %v1652
      %v2570 = vsel %vm2562, %v2505, %v1654
      %v2571 = vsel %vm2562, %v2506, %v1656
      %v2572 = vsel %vm2562, %v2507, %v1658
      %v2573 = vsel %vm2562, %v2508, %v1660
      %v2574 = vsel %vm2562, %v2509, %v1662
      %v2575 = vsel %vm2562, %v2510, %v1664
      %v2576 = vsel %vm2562, %v2511, %v1666
      %v2577 = vsel %vm2562, %v2512, %v1668
      %v2578 = vsel %vm2562, %v2513, %v1670
      %v2579 = vsel %vm2562, %v2514, %v1672
      %v2580 = vsel %vm2562, %v2515, %v1674
      %v2581 = vsel %vm2562, %v2516, %v1676
      %v2582 = vsel %vm2562, %v2517, %v1678
      %v2583 = vsel %vm2562, %v2518, %v1680
      %v2584 = vsel %vm2562, %v2519, %v1682
      %v2585 = vsel %vm2562, %v2520, %v1684
      %v2586 = vsel %vm2562, %v2521, %v1686
      %v2587 = vsel %vm2562, %v2522, %v1688
      %v2588 = vsel %vm2562, %v2523, %v1690
      %v2589 = vsel %vm2562, %v2524, %v1692
      %v2590 = vsel %vm2562, %v2525, %v1694
      %v2591 = vsel %vm2562, %v2526, %v1696
      %v2592 = vsel %vm2562, %v2527, %v1698
      %v2593 = vsel %vm2562, %v2528, %v1700
      %v2594 = vsel %vm2562, %v2529, %v1702
      %v2595 = vsel %vm2562, %v2530, %v1704
      %v2596 = vsel %vm2562, %v2531, %v1706
      %v2597 = vsel %vm2562, %v2532, %v1708
      %v2598 = vsel %vm2562, %v2533, %v1710
      %v2599 = vsel %vm2562, %v2534, %v1712
      %v2600 = vsel %vm2562, %v2535, %v1714
      %v2601 = vsel %vm2562, %v2536, %v1716
      %v2602 = vsel %vm2562, %v2537, %v1718
      %v2603 = vsel %vm2562, %v2538, %v1720
      %v2604 = vsel %vm2562, %v2539, %v1722
      %v2605 = vsel %vm2562, %v2540, %v1724
      %v2606 = vsel %vm2562, %v2541, %v1726
      %v2607 = vsel %vm2562, %v2542, %v1728
      %v2608 = vsel %vm2562, %v2543, %v1730
      %v2609 = vsel %vm2562, %v2544, %v1732
      %v2610 = vsel %vm2562, %v2545, %v1734
      %v2611 = vsel %vm2562, %v2546, %v1736
      %v2612 = vsel %vm2562, %v2547, %v1738
      %v2613 = vsel %vm2562, %v2548, %v1740
      %v2614 = vsel %vm2562, %v2549, %v1742
      %v2615 = vsel %vm2562, %v2550, %v1744
      %v2616 = vsel %vm2562, %v2551, %v1746
      %v2617 = vsel %vm2562, %v2552, %v1748
      %v2618 = vsel %vm2562, %v2553, %v1750
      %v2619 = vsel %vm2562, %v2554, %v1752
      %v2620 = vsel %vm2562, %v2555, %v1754
      %v2621 = vsel %vm2562, %v2556, %v1756
      %v2622 = vsel %vm2562, %v2557, %v1758
      %v2623 = vsel %vm2562, %v2558, %v1760
      %v2624 = vsel %vm2562, %v2559, %v1762
      %v2625 = vsel %vm2562, %v2560, %v1764
      %v2626 = vsel %vm2562, %v2561, %v1766
      %vm2627 = vcmask 785408
      %v2628 = vsel %vm2627, %v2563, %v1836
      %v2629 = vsel %vm2627, %v2564, %v1838
      %v2630 = vsel %vm2627, %v2565, %v1840
      %v2631 = vsel %vm2627, %v2566, %v1842
      %v2632 = vsel %vm2627, %v2567, %v1844
      %v2633 = vsel %vm2627, %v2568, %v1846
      %v2634 = vsel %vm2627, %v2569, %v1848
      %v2635 = vsel %vm2627, %v2570, %v1850
      %v2636 = vsel %vm2627, %v2571, %v1852
      %v2637 = vsel %vm2627, %v2572, %v1854
      %v2638 = vsel %vm2627, %v2573, %v1856
      %v2639 = vsel %vm2627, %v2574, %v1858
      %v2640 = vsel %vm2627, %v2575, %v1860
      %v2641 = vsel %vm2627, %v2576, %v1862
      %v2642 = vsel %vm2627, %v2577, %v1864
      %v2643 = vsel %vm2627, %v2578, %v1866
      %v2644 = vsel %vm2627, %v2579, %v1868
      %v2645 = vsel %vm2627, %v2580, %v1870
      %v2646 = vsel %vm2627, %v2581, %v1872
      %v2647 = vsel %vm2627, %v2582, %v1874
      %v2648 = vsel %vm2627, %v2583, %v1876
      %v2649 = vsel %vm2627, %v2584, %v1878
      %v2650 = vsel %vm2627, %v2585, %v1880
      %v2651 = vsel %vm2627, %v2586, %v1882
      %v2652 = vsel %vm2627, %v2587, %v1884
      %v2653 = vsel %vm2627, %v2588, %v1886
      %v2654 = vsel %vm2627, %v2589, %v1888
      %v2655 = vsel %vm2627, %v2590, %v1890
      %v2656 = vsel %vm2627, %v2591, %v1892
      %v2657 = vsel %vm2627, %v2592, %v1894
      %v2658 = vsel %vm2627, %v2593, %v1896
      %v2659 = vsel %vm2627, %v2594, %v1898
      %v2660 = vsel %vm2627, %v2595, %v1900
      %v2661 = vsel %vm2627, %v2596, %v1902
      %v2662 = vsel %vm2627, %v2597, %v1904
      %v2663 = vsel %vm2627, %v2598, %v1906
      %v2664 = vsel %vm2627, %v2599, %v1908
      %v2665 = vsel %vm2627, %v2600, %v1910
      %v2666 = vsel %vm2627, %v2601, %v1912
      %v2667 = vsel %vm2627, %v2602, %v1914
      %v2668 = vsel %vm2627, %v2603, %v1916
      %v2669 = vsel %vm2627, %v2604, %v1918
      %v2670 = vsel %vm2627, %v2605, %v1920
      %v2671 = vsel %vm2627, %v2606, %v1922
      %v2672 = vsel %vm2627, %v2607, %v1924
      %v2673 = vsel %vm2627, %v2608, %v1926
      %v2674 = vsel %vm2627, %v2609, %v1928
      %v2675 = vsel %vm2627, %v2610, %v1930
      %v2676 = vsel %vm2627, %v2611, %v1932
      %v2677 = vsel %vm2627, %v2612, %v1934
      %v2678 = vsel %vm2627, %v2613, %v1936
      %v2679 = vsel %vm2627, %v2614, %v1938
      %v2680 = vsel %vm2627, %v2615, %v1940
      %v2681 = vsel %vm2627, %v2616, %v1942
      %v2682 = vsel %vm2627, %v2617, %v1944
      %v2683 = vsel %vm2627, %v2618, %v1946
      %v2684 = vsel %vm2627, %v2619, %v1948
      %v2685 = vsel %vm2627, %v2620, %v1950
      %v2686 = vsel %vm2627, %v2621, %v1952
      %v2687 = vsel %vm2627, %v2622, %v1954
      %v2688 = vsel %vm2627, %v2623, %v1956
      %v2689 = vsel %vm2627, %v2624, %v1958
      %v2690 = vsel %vm2627, %v2625, %v1960
      %v2691 = vsel %vm2627, %v2626, %v1962
      %vm2692 = vcmask 916480
      %v2693 = vsel %vm2692, %v2628, %v2038
      %v2694 = vsel %vm2692, %v2629, %v2040
      %v2695 = vsel %vm2692, %v2630, %v2042
      %v2696 = vsel %vm2692, %v2631, %v2044
      %v2697 = vsel %vm2692, %v2632, %v2046
      %v2698 = vsel %vm2692, %v2633, %v2048
      %v2699 = vsel %vm2692, %v2634, %v2050
      %v2700 = vsel %vm2692, %v2635, %v2052
      %v2701 = vsel %vm2692, %v2636, %v2054
      %v2702 = vsel %vm2692, %v2637, %v2056
      %v2703 = vsel %vm2692, %v2638, %v2058
      %v2704 = vsel %vm2692, %v2639, %v2060
      %v2705 = vsel %vm2692, %v2640, %v2062
      %v2706 = vsel %vm2692, %v2641, %v2064
      %v2707 = vsel %vm2692, %v2642, %v2066
      %v2708 = vsel %vm2692, %v2643, %v2068
      %v2709 = vsel %vm2692, %v2644, %v2070
      %v2710 = vsel %vm2692, %v2645, %v2072
      %v2711 = vsel %vm2692, %v2646, %v2074
      %v2712 = vsel %vm2692, %v2647, %v2076
      %v2713 = vsel %vm2692, %v2648, %v2078
      %v2714 = vsel %vm2692, %v2649, %v2080
      %v2715 = vsel %vm2692, %v2650, %v2082
      %v2716 = vsel %vm2692, %v2651, %v2084
      %v2717 = vsel %vm2692, %v2652, %v2086
      %v2718 = vsel %vm2692, %v2653, %v2088
      %v2719 = vsel %vm2692, %v2654, %v2090
      %v2720 = vsel %vm2692, %v2655, %v2092
      %v2721 = vsel %vm2692, %v2656, %v2094
      %v2722 = vsel %vm2692, %v2657, %v2096
      %v2723 = vsel %vm2692, %v2658, %v2098
      %v2724 = vsel %vm2692, %v2659, %v2100
      %v2725 = vsel %vm2692, %v2660, %v2102
      %v2726 = vsel %vm2692, %v2661, %v2104
      %v2727 = vsel %vm2692, %v2662, %v2106
      %v2728 = vsel %vm2692, %v2663, %v2108
      %v2729 = vsel %vm2692, %v2664, %v2110
      %v2730 = vsel %vm2692, %v2665, %v2112
      %v2731 = vsel %vm2692, %v2666, %v2114
      %v2732 = vsel %vm2692, %v2667, %v2116
      %v2733 = vsel %vm2692, %v2668, %v2118
      %v2734 = vsel %vm2692, %v2669, %v2120
      %v2735 = vsel %vm2692, %v2670, %v2122
      %v2736 = vsel %vm2692, %v2671, %v2124
      %v2737 = vsel %vm2692, %v2672, %v2126
      %v2738 = vsel %vm2692, %v2673, %v2128
      %v2739 = vsel %vm2692, %v2674, %v2130
      %v2740 = vsel %vm2692, %v2675, %v2132
      %v2741 = vsel %vm2692, %v2676, %v2134
      %v2742 = vsel %vm2692, %v2677, %v2136
      %v2743 = vsel %vm2692, %v2678, %v2138
      %v2744 = vsel %vm2692, %v2679, %v2140
      %v2745 = vsel %vm2692, %v2680, %v2142
      %v2746 = vsel %vm2692, %v2681, %v2144
      %v2747 = vsel %vm2692, %v2682, %v2146
      %v2748 = vsel %vm2692, %v2683, %v2148
      %v2749 = vsel %vm2692, %v2684, %v2150
      %v2750 = vsel %vm2692, %v2685, %v2152
      %v2751 = vsel %vm2692, %v2686, %v2154
      %v2752 = vsel %vm2692, %v2687, %v2156
      %v2753 = vsel %vm2692, %v2688, %v2158
      %v2754 = vsel %vm2692, %v2689, %v2160
      %v2755 = vsel %vm2692, %v2690, %v2162
      %v2756 = vsel %vm2692, %v2691, %v2164
      %v2757 = vpack.c.bf16 %v2694, %v2693
      %v2758 = vpack.c.bf16 %v918, %v916
      %v2759 = vpack.c.bf16 %v2696, %v2695
      %v2760 = vpack.c.bf16 %v922, %v920
      %v2761 = vpack.c.bf16 %v2698, %v2697
      %v2762 = vpack.c.bf16 %v927, %v925
      %v2763 = vpack.c.bf16 %v2700, %v2699
      %v2764 = vpack.c.bf16 %v931, %v929
      %v2765 = vpack.c.bf16 %v2702, %v2701
      %v2766 = vpack.c.bf16 %v936, %v934
      %v2767 = vpack.c.bf16 %v2704, %v2703
      %v2768 = vpack.c.bf16 %v940, %v938
      %v2769 = vpack.c.bf16 %v2706, %v2705
      %v2770 = vpack.c.bf16 %v945, %v943
      %v2771 = vpack.c.bf16 %v2708, %v2707
      %v2772 = vpack.c.bf16 %v949, %v947
      %v2773 = vpack.c.bf16 %v2710, %v2709
      %v2774 = vpack.c.bf16 %v954, %v952
      %v2775 = vpack.c.bf16 %v2712, %v2711
      %v2776 = vpack.c.bf16 %v958, %v956
      %v2777 = vpack.c.bf16 %v2714, %v2713
      %v2778 = vpack.c.bf16 %v963, %v961
      %v2779 = vpack.c.bf16 %v2716, %v2715
      %v2780 = vpack.c.bf16 %v967, %v965
      %v2781 = vpack.c.bf16 %v2718, %v2717
      %v2782 = vpack.c.bf16 %v972, %v970
      %v2783 = vpack.c.bf16 %v2720, %v2719
      %v2784 = vpack.c.bf16 %v976, %v974
      %v2785 = vpack.c.bf16 %v2722, %v2721
      %v2786 = vpack.c.bf16 %v981, %v979
      %v2787 = vpack.c.bf16 %v2724, %v2723
      %v2788 = vpack.c.bf16 %v985, %v983
      %v2789 = vpack.c.bf16 %v2726, %v2725
      %v2790 = vpack.c.bf16 %v990, %v988
      %v2791 = vpack.c.bf16 %v2728, %v2727
      %v2792 = vpack.c.bf16 %v994, %v992
      %v2793 = vpack.c.bf16 %v2730, %v2729
      %v2794 = vpack.c.bf16 %v999, %v997
      %v2795 = vpack.c.bf16 %v2732, %v2731
      %v2796 = vpack.c.bf16 %v1003, %v1001
      %v2797 = vpack.c.bf16 %v2734, %v2733
      %v2798 = vpack.c.bf16 %v1008, %v1006
      %v2799 = vpack.c.bf16 %v2736, %v2735
      %v2800 = vpack.c.bf16 %v1012, %v1010
      %v2801 = vpack.c.bf16 %v2738, %v2737
      %v2802 = vpack.c.bf16 %v1017, %v1015
      %v2803 = vpack.c.bf16 %v2740, %v2739
      %v2804 = vpack.c.bf16 %v1021, %v1019
      %v2805 = vpack.c.bf16 %v2742, %v2741
      %v2806 = vpack.c.bf16 %v1026, %v1024
      %v2807 = vpack.c.bf16 %v2744, %v2743
      %v2808 = vpack.c.bf16 %v1030, %v1028
      %v2809 = vpack.c.bf16 %v2746, %v2745
      %v2810 = vpack.c.bf16 %v1035, %v1033
      %v2811 = vpack.c.bf16 %v2748, %v2747
      %v2812 = vpack.c.bf16 %v1039, %v1037
      %v2813 = vpack.c.bf16 %v2750, %v2749
      %v2814 = vpack.c.bf16 %v1634, %v1632
      %v2815 = vpack.c.bf16 %v2752, %v2751
      %v2816 = vpack.c.bf16 %v1638, %v1636
      %v2817 = vpack.c.bf16 %v2754, %v2753
      %v2818 = vpack.c.bf16 %v2233, %v2231
      %v2819 = vpack.c.bf16 %v2756, %v2755
      %v2820 = vpack.c.bf16 %v2237, %v2235
      %v2821 = vld [vmem:[%s1] sm:$0xf]
      %v2822 = vld [vmem:[%s1 + $0x4] sm:$0xf]
      %v2823 = vld [vmem:[%s1 + $0x8] sm:$0xf]
      %v2824 = vld [vmem:[%s1 + $0xc] sm:$0xf]
      %v2825 = vld [vmem:[%s1 + $0x10] sm:$0xf]
      %v2826 = vld [vmem:[%s1 + $0x14] sm:$0xf]
      %v2827 = vld [vmem:[%s1 + $0x18] sm:$0xf]
      %v2828 = vld [vmem:[%s1 + $0x1c] sm:$0xf]
      %v2829 = vld [vmem:[%s1 + $0x20] sm:$0xf]
      %v2830 = vld [vmem:[%s1 + $0x24] sm:$0xf]
      %v2831 = vld [vmem:[%s1 + $0x28] sm:$0xf]
      %v2832 = vld [vmem:[%s1 + $0x2c] sm:$0xf]
      %v2833 = vld [vmem:[%s1 + $0x30] sm:$0xf]
      %v2834 = vld [vmem:[%s1 + $0x34] sm:$0xf]
      %v2835 = vld [vmem:[%s1 + $0x38] sm:$0xf]
      %v2836 = vld [vmem:[%s1 + $0x3c] sm:$0xf]
      %v2837 = vld [vmem:[%s1 + $0x40] sm:$0xf]
      %v2838 = vld [vmem:[%s1 + $0x44] sm:$0xf]
      %v2839 = vld [vmem:[%s2] sm:$0x1]
      %v2841 = vlaneseq
      %v2842 = vshrl.u32 %v2841, 7
      %v2843 = vsub.s32 0, %v2842
      %v2844 = vrot.slane %v2839, %v2843
      %v2864 = vunpack.c.l.b16 %v2821
      %v2865 = vunpack.c.l.b16 %v2822
      %v2866 = vunpack.c.l.b16 %v2823
      %v2867 = vunpack.c.l.b16 %v2824
      %v2868 = vunpack.c.l.b16 %v2825
      %v2869 = vunpack.c.l.b16 %v2826
      %v2870 = vunpack.c.l.b16 %v2827
      %v2871 = vunpack.c.l.b16 %v2828
      %v2872 = vunpack.c.l.b16 %v2829
      %v2873 = vunpack.c.l.b16 %v2830
      %v2874 = vunpack.c.l.b16 %v2831
      %v2875 = vunpack.c.l.b16 %v2832
      %v2876 = vunpack.c.l.b16 %v2833
      %v2877 = vunpack.c.l.b16 %v2834
      %v2878 = vunpack.c.l.b16 %v2835
      %v2879 = vunpack.c.l.b16 %v2836
      %v2880 = vunpack.c.l.b16 %v2837
      %v2881 = vunpack.c.l.b16 %v2838
      %v2882 = vpack.c.b16 %v2865, %v2864
      %v2883 = vpack.c.b16 %v2867, %v2866
      %v2884 = vpack.c.b16 %v2869, %v2868
      %v2885 = vpack.c.b16 %v2871, %v2870
      %v2886 = vpack.c.b16 %v2873, %v2872
      %v2887 = vpack.c.b16 %v2875, %v2874
      %v2888 = vpack.c.b16 %v2877, %v2876
      %v2889 = vpack.c.b16 %v2879, %v2878
      %v2890 = vpack.c.b16 %v2881, %v2880
      %v2901 = vsel %vm2302, %v2758, 0
      %v2904 = vsel %vm2302, %v2760, 0
      %v2907 = vsel %vm2302, %v2762, 0
      %v2910 = vsel %vm2302, %v2764, 0
      %v2913 = vsel %vm2302, %v2766, 0
      %v2916 = vsel %vm2302, %v2768, 0
      %v2919 = vsel %vm2302, %v2770, 0
      %v2922 = vsel %vm2302, %v2772, 0
      %v2925 = vsel %vm2302, %v2774, 0
      %v2928 = vsel %vm2302, %v2776, 0
      %v2931 = vsel %vm2302, %v2778, 0
      %v2934 = vsel %vm2302, %v2780, 0
      %v2937 = vsel %vm2302, %v2782, 0
      %v2940 = vsel %vm2302, %v2784, 0
      %v2943 = vsel %vm2302, %v2786, 0
      %v2946 = vsel %vm2302, %v2788, 0
      %v2949 = vsel %vm2302, %v2790, 0
      %v2952 = vsel %vm2302, %v2792, 0
      %v2955 = vsel %vm2302, %v2794, 0
      %v2958 = vsel %vm2302, %v2796, 0
      %v2961 = vsel %vm2302, %v2798, 0
      %v2964 = vsel %vm2302, %v2800, 0
      %v2967 = vsel %vm2302, %v2802, 0
      %v2970 = vsel %vm2302, %v2804, 0
      %v2973 = vsel %vm2302, %v2806, 0
      %v2976 = vsel %vm2302, %v2808, 0
      %v2979 = vsel %vm2302, %v2810, 0
      %v2982 = vsel %vm2302, %v2812, 0
      %v2985 = vsel %vm2302, %v2814, 0
      %v2988 = vsel %vm2302, %v2816, 0
      %v2991 = vsel %vm2302, %v2818, 0
      %v2994 = vsel %vm2302, %v2820, 0
      %2996 = vmatprep.subr.bf16.mxu0 0
      %2997 = vmatpush1.bf16.msra.mxu0 %v2882
      %2998 = vmatprep.subr.bf16.mxu0 0
      %2999 = vmatpush1.bf16.msra.mxu0 %v2883
      %3000 = vmatprep.subr.bf16.mxu0 0
      %3001 = vmatpush1.bf16.msra.mxu0 %v2884
      %3002 = vmatprep.subr.bf16.mxu0 0
      %3003 = vmatpush1.bf16.msra.mxu0 %v2885
      %3004 = vmatprep.subr.bf16.mxu0 0
      %3005 = vmatpush1.bf16.msra.mxu0 %v2886
      %3006 = vmatprep.subr.bf16.mxu0 0
      %3007 = vmatpush1.bf16.msra.mxu0 %v2887
      %3008 = vmatprep.subr.bf16.mxu0 0
      %3009 = vmatpush1.bf16.msra.mxu0 %v2888
      %3010 = vmatprep.subr.bf16.mxu0 0
      %3011 = vmatpush1.bf16.msra.mxu0 %v2889
      %3012 = vmatprep.subr.bf16.mxu0 0
      %3013 = vmatpush1.bf16.msra.mxu0 %v2890
      %3014 = vmatprep.subr.bf16.mxu0 0
      %3015 = vmatpush1.bf16.msra.mxu0 0
      %3016 = vmatprep.subr.bf16.mxu0 0
      %3017 = vmatpush1.bf16.msra.mxu0 0
      %3018 = vmatprep.subr.bf16.mxu0 0
      %3019 = vmatpush1.bf16.msra.mxu0 0
      %3020 = vmatprep.subr.bf16.mxu0 0
      %3021 = vmatpush1.bf16.msra.mxu0 0
      %3022 = vmatprep.subr.bf16.mxu0 0
      %3023 = vmatpush1.bf16.msra.mxu0 0
      %3024 = vmatprep.subr.bf16.mxu0 0
      %3025 = vmatpush1.bf16.msra.mxu0 0
      %3026 = vmatprep.subr.bf16.mxu0 0
      %3027 = vmatpush1.bf16.msra.mxu0 0
      %3028 = vmatprep.mubr.bf16.mxu0 %v2901
      %3029 = vmatmul.mubr.bf16.gmra.mrb[0].mxu0 %v2757
      %v3030 = vpop.f32.mrb[0].mxu0
      %v3031 = vadd.f32 %v2844, %v3030
      %v3032 = vpop.f32.mrb[0].mxu0
      %v3033 = vpop.f32.mrb[0].mxu0
      %v3034 = vadd.f32 %v2844, %v3033
      %v3035 = vpop.f32.mrb[0].mxu0
      %3036 = vmatprep.mubr.bf16.mxu0 %v2904
      %3037 = vmatmul.mubr.bf16.gmra.mrb[0].mxu0 %v2759
      %v3038 = vpop.f32.mrb[0].mxu0
      %v3039 = vadd.f32 %v2844, %v3038
      %v3040 = vpop.f32.mrb[0].mxu0
      %v3041 = vpop.f32.mrb[0].mxu0
      %v3042 = vadd.f32 %v2844, %v3041
      %v3043 = vpop.f32.mrb[0].mxu0
      %3044 = vmatprep.mubr.bf16.mxu0 %v2907
      %3045 = vmatmul.mubr.bf16.gmra.mrb[0].mxu0 %v2761
      %v3046 = vpop.f32.mrb[0].mxu0
      %v3047 = vadd.f32 %v2844, %v3046
      %v3048 = vpop.f32.mrb[0].mxu0
      %v3049 = vpop.f32.mrb[0].mxu0
      %v3050 = vadd.f32 %v2844, %v3049
      %v3051 = vpop.f32.mrb[0].mxu0
      %3052 = vmatprep.mubr.bf16.mxu0 %v2910
      %3053 = vmatmul.mubr.bf16.gmra.mrb[0].mxu0 %v2763
      %v3054 = vpop.f32.mrb[0].mxu0
      %v3055 = vadd.f32 %v2844, %v3054
      %v3056 = vpop.f32.mrb[0].mxu0
      %v3057 = vpop.f32.mrb[0].mxu0
      %v3058 = vadd.f32 %v2844, %v3057
      %v3059 = vpop.f32.mrb[0].mxu0
      %3060 = vmatprep.mubr.bf16.mxu0 %v2913
      %3061 = vmatmul.mubr.bf16.gmra.mrb[0].mxu0 %v2765
      %v3062 = vpop.f32.mrb[0].mxu0
      %v3063 = vadd.f32 %v2844, %v3062
      %v3064 = vpop.f32.mrb[0].mxu0
      %v3065 = vpop.f32.mrb[0].mxu0
      %v3066 = vadd.f32 %v2844, %v3065
      %v3067 = vpop.f32.mrb[0].mxu0
      %3068 = vmatprep.mubr.bf16.mxu0 %v2916
      %3069 = vmatmul.mubr.bf16.gmra.mrb[0].mxu0 %v2767
      %v3070 = vpop.f32.mrb[0].mxu0
      %v3071 = vadd.f32 %v2844, %v3070
      %v3072 = vpop.f32.mrb[0].mxu0
      %v3073 = vpop.f32.mrb[0].mxu0
      %v3074 = vadd.f32 %v2844, %v3073
      %v3075 = vpop.f32.mrb[0].mxu0
      %3076 = vmatprep.mubr.bf16.mxu0 %v2919
      %3077 = vmatmul.mubr.bf16.gmra.mrb[0].mxu0 %v2769
      %v3078 = vpop.f32.mrb[0].mxu0
      %v3079 = vadd.f32 %v2844, %v3078
      %v3080 = vpop.f32.mrb[0].mxu0
      %v3081 = vpop.f32.mrb[0].mxu0
      %v3082 = vadd.f32 %v2844, %v3081
      %v3083 = vpop.f32.mrb[0].mxu0
      %3084 = vmatprep.mubr.bf16.mxu0 %v2922
      %3085 = vmatmul.mubr.bf16.gmra.mrb[0].mxu0 %v2771
      %v3086 = vpop.f32.mrb[0].mxu0
      %v3087 = vadd.f32 %v2844, %v3086
      %v3088 = vpop.f32.mrb[0].mxu0
      %v3089 = vpop.f32.mrb[0].mxu0
      %v3090 = vadd.f32 %v2844, %v3089
      %v3091 = vpop.f32.mrb[0].mxu0
      %3092 = vmatprep.mubr.bf16.mxu0 %v2925
      %3093 = vmatmul.mubr.bf16.gmra.mrb[0].mxu0 %v2773
      %v3094 = vpop.f32.mrb[0].mxu0
      %v3095 = vadd.f32 %v2844, %v3094
      %v3096 = vpop.f32.mrb[0].mxu0
      %v3097 = vpop.f32.mrb[0].mxu0
      %v3098 = vadd.f32 %v2844, %v3097
      %v3099 = vpop.f32.mrb[0].mxu0
      %3100 = vmatprep.mubr.bf16.mxu0 %v2928
      %3101 = vmatmul.mubr.bf16.gmra.mrb[0].mxu0 %v2775
      %v3102 = vpop.f32.mrb[0].mxu0
      %v3103 = vadd.f32 %v2844, %v3102
      %v3104 = vpop.f32.mrb[0].mxu0
      %v3105 = vpop.f32.mrb[0].mxu0
      %v3106 = vadd.f32 %v2844, %v3105
      %v3107 = vpop.f32.mrb[0].mxu0
      %3108 = vmatprep.mubr.bf16.mxu0 %v2931
      %3109 = vmatmul.mubr.bf16.gmra.mrb[0].mxu0 %v2777
      %v3110 = vpop.f32.mrb[0].mxu0
      %v3111 = vadd.f32 %v2844, %v3110
      %v3112 = vpop.f32.mrb[0].mxu0
      %v3113 = vpop.f32.mrb[0].mxu0
      %v3114 = vadd.f32 %v2844, %v3113
      %v3115 = vpop.f32.mrb[0].mxu0
      %3116 = vmatprep.mubr.bf16.mxu0 %v2934
      %3117 = vmatmul.mubr.bf16.gmra.mrb[0].mxu0 %v2779
      %v3118 = vpop.f32.mrb[0].mxu0
      %v3119 = vadd.f32 %v2844, %v3118
      %v3120 = vpop.f32.mrb[0].mxu0
      %v3121 = vpop.f32.mrb[0].mxu0
      %v3122 = vadd.f32 %v2844, %v3121
      %v3123 = vpop.f32.mrb[0].mxu0
      %3124 = vmatprep.mubr.bf16.mxu0 %v2937
      %3125 = vmatmul.mubr.bf16.gmra.mrb[0].mxu0 %v2781
      %v3126 = vpop.f32.mrb[0].mxu0
      %v3127 = vadd.f32 %v2844, %v3126
      %v3128 = vpop.f32.mrb[0].mxu0
      %v3129 = vpop.f32.mrb[0].mxu0
      %v3130 = vadd.f32 %v2844, %v3129
      %v3131 = vpop.f32.mrb[0].mxu0
      %3132 = vmatprep.mubr.bf16.mxu0 %v2940
      %3133 = vmatmul.mubr.bf16.gmra.mrb[0].mxu0 %v2783
      %v3134 = vpop.f32.mrb[0].mxu0
      %v3135 = vadd.f32 %v2844, %v3134
      %v3136 = vpop.f32.mrb[0].mxu0
      %v3137 = vpop.f32.mrb[0].mxu0
      %v3138 = vadd.f32 %v2844, %v3137
      %v3139 = vpop.f32.mrb[0].mxu0
      %3140 = vmatprep.mubr.bf16.mxu0 %v2943
      %3141 = vmatmul.mubr.bf16.gmra.mrb[0].mxu0 %v2785
      %v3142 = vpop.f32.mrb[0].mxu0
      %v3143 = vadd.f32 %v2844, %v3142
      %v3144 = vpop.f32.mrb[0].mxu0
      %v3145 = vpop.f32.mrb[0].mxu0
      %v3146 = vadd.f32 %v2844, %v3145
      %v3147 = vpop.f32.mrb[0].mxu0
      %3148 = vmatprep.mubr.bf16.mxu0 %v2946
      %3149 = vmatmul.mubr.bf16.gmra.mrb[0].mxu0 %v2787
      %v3150 = vpop.f32.mrb[0].mxu0
      %v3151 = vadd.f32 %v2844, %v3150
      %v3152 = vpop.f32.mrb[0].mxu0
      %v3153 = vpop.f32.mrb[0].mxu0
      %v3154 = vadd.f32 %v2844, %v3153
      %v3155 = vpop.f32.mrb[0].mxu0
      %3156 = vmatprep.mubr.bf16.mxu0 %v2949
      %3157 = vmatmul.mubr.bf16.gmra.mrb[0].mxu0 %v2789
      %v3158 = vpop.f32.mrb[0].mxu0
      %v3159 = vadd.f32 %v2844, %v3158
      %v3160 = vpop.f32.mrb[0].mxu0
      %v3161 = vpop.f32.mrb[0].mxu0
      %v3162 = vadd.f32 %v2844, %v3161
      %v3163 = vpop.f32.mrb[0].mxu0
      %3164 = vmatprep.mubr.bf16.mxu0 %v2952
      %3165 = vmatmul.mubr.bf16.gmra.mrb[0].mxu0 %v2791
      %v3166 = vpop.f32.mrb[0].mxu0
      %v3167 = vadd.f32 %v2844, %v3166
      %v3168 = vpop.f32.mrb[0].mxu0
      %v3169 = vpop.f32.mrb[0].mxu0
      %v3170 = vadd.f32 %v2844, %v3169
      %v3171 = vpop.f32.mrb[0].mxu0
      %3172 = vmatprep.mubr.bf16.mxu0 %v2955
      %3173 = vmatmul.mubr.bf16.gmra.mrb[0].mxu0 %v2793
      %v3174 = vpop.f32.mrb[0].mxu0
      %v3175 = vadd.f32 %v2844, %v3174
      %v3176 = vpop.f32.mrb[0].mxu0
      %v3177 = vpop.f32.mrb[0].mxu0
      %v3178 = vadd.f32 %v2844, %v3177
      %v3179 = vpop.f32.mrb[0].mxu0
      %3180 = vmatprep.mubr.bf16.mxu0 %v2958
      %3181 = vmatmul.mubr.bf16.gmra.mrb[0].mxu0 %v2795
      %v3182 = vpop.f32.mrb[0].mxu0
      %v3183 = vadd.f32 %v2844, %v3182
      %v3184 = vpop.f32.mrb[0].mxu0
      %v3185 = vpop.f32.mrb[0].mxu0
      %v3186 = vadd.f32 %v2844, %v3185
      %v3187 = vpop.f32.mrb[0].mxu0
      %3188 = vmatprep.mubr.bf16.mxu0 %v2961
      %3189 = vmatmul.mubr.bf16.gmra.mrb[0].mxu0 %v2797
      %v3190 = vpop.f32.mrb[0].mxu0
      %v3191 = vadd.f32 %v2844, %v3190
      %v3192 = vpop.f32.mrb[0].mxu0
      %v3193 = vpop.f32.mrb[0].mxu0
      %v3194 = vadd.f32 %v2844, %v3193
      %v3195 = vpop.f32.mrb[0].mxu0
      %3196 = vmatprep.mubr.bf16.mxu0 %v2964
      %3197 = vmatmul.mubr.bf16.gmra.mrb[0].mxu0 %v2799
      %v3198 = vpop.f32.mrb[0].mxu0
      %v3199 = vadd.f32 %v2844, %v3198
      %v3200 = vpop.f32.mrb[0].mxu0
      %v3201 = vpop.f32.mrb[0].mxu0
      %v3202 = vadd.f32 %v2844, %v3201
      %v3203 = vpop.f32.mrb[0].mxu0
      %3204 = vmatprep.mubr.bf16.mxu0 %v2967
      %3205 = vmatmul.mubr.bf16.gmra.mrb[0].mxu0 %v2801
      %v3206 = vpop.f32.mrb[0].mxu0
      %v3207 = vadd.f32 %v2844, %v3206
      %v3208 = vpop.f32.mrb[0].mxu0
      %v3209 = vpop.f32.mrb[0].mxu0
      %v3210 = vadd.f32 %v2844, %v3209
      %v3211 = vpop.f32.mrb[0].mxu0
      %3212 = vmatprep.mubr.bf16.mxu0 %v2970
      %3213 = vmatmul.mubr.bf16.gmra.mrb[0].mxu0 %v2803
      %v3214 = vpop.f32.mrb[0].mxu0
      %v3215 = vadd.f32 %v2844, %v3214
      %v3216 = vpop.f32.mrb[0].mxu0
      %v3217 = vpop.f32.mrb[0].mxu0
      %v3218 = vadd.f32 %v2844, %v3217
      %v3219 = vpop.f32.mrb[0].mxu0
      %3220 = vmatprep.mubr.bf16.mxu0 %v2973
      %3221 = vmatmul.mubr.bf16.gmra.mrb[0].mxu0 %v2805
      %v3222 = vpop.f32.mrb[0].mxu0
      %v3223 = vadd.f32 %v2844, %v3222
      %v3224 = vpop.f32.mrb[0].mxu0
      %v3225 = vpop.f32.mrb[0].mxu0
      %v3226 = vadd.f32 %v2844, %v3225
      %v3227 = vpop.f32.mrb[0].mxu0
      %3228 = vmatprep.mubr.bf16.mxu0 %v2976
      %3229 = vmatmul.mubr.bf16.gmra.mrb[0].mxu0 %v2807
      %v3230 = vpop.f32.mrb[0].mxu0
      %v3231 = vadd.f32 %v2844, %v3230
      %v3232 = vpop.f32.mrb[0].mxu0
      %v3233 = vpop.f32.mrb[0].mxu0
      %v3234 = vadd.f32 %v2844, %v3233
      %v3235 = vpop.f32.mrb[0].mxu0
      %3236 = vmatprep.mubr.bf16.mxu0 %v2979
      %3237 = vmatmul.mubr.bf16.gmra.mrb[0].mxu0 %v2809
      %v3238 = vpop.f32.mrb[0].mxu0
      %v3239 = vadd.f32 %v2844, %v3238
      %v3240 = vpop.f32.mrb[0].mxu0
      %v3241 = vpop.f32.mrb[0].mxu0
      %v3242 = vadd.f32 %v2844, %v3241
      %v3243 = vpop.f32.mrb[0].mxu0
      %3244 = vmatprep.mubr.bf16.mxu0 %v2982
      %3245 = vmatmul.mubr.bf16.gmra.mrb[0].mxu0 %v2811
      %v3246 = vpop.f32.mrb[0].mxu0
      %v3247 = vadd.f32 %v2844, %v3246
      %v3248 = vpop.f32.mrb[0].mxu0
      %v3249 = vpop.f32.mrb[0].mxu0
      %v3250 = vadd.f32 %v2844, %v3249
      %v3251 = vpop.f32.mrb[0].mxu0
      %3252 = vmatprep.mubr.bf16.mxu0 %v2985
      %3253 = vmatmul.mubr.bf16.gmra.mrb[0].mxu0 %v2813
      %v3254 = vpop.f32.mrb[0].mxu0
      %v3255 = vadd.f32 %v2844, %v3254
      %v3256 = vpop.f32.mrb[0].mxu0
      %v3257 = vpop.f32.mrb[0].mxu0
      %v3258 = vadd.f32 %v2844, %v3257
      %v3259 = vpop.f32.mrb[0].mxu0
      %3260 = vmatprep.mubr.bf16.mxu0 %v2988
      %3261 = vmatmul.mubr.bf16.gmra.mrb[0].mxu0 %v2815
      %v3262 = vpop.f32.mrb[0].mxu0
      %v3263 = vadd.f32 %v2844, %v3262
      %v3264 = vpop.f32.mrb[0].mxu0
      %v3265 = vpop.f32.mrb[0].mxu0
      %v3266 = vadd.f32 %v2844, %v3265
      %v3267 = vpop.f32.mrb[0].mxu0
      %3268 = vmatprep.mubr.bf16.mxu0 %v2991
      %3269 = vmatmul.mubr.bf16.gmra.mrb[0].mxu0 %v2817
      %v3270 = vpop.f32.mrb[0].mxu0
      %v3271 = vadd.f32 %v2844, %v3270
      %v3272 = vpop.f32.mrb[0].mxu0
      %v3273 = vpop.f32.mrb[0].mxu0
      %v3274 = vadd.f32 %v2844, %v3273
      %v3275 = vpop.f32.mrb[0].mxu0
      %3276 = vmatprep.mubr.bf16.mxu0 %v2994
      %3277 = vmatmul.mubr.bf16.gmra.mrb[0].mxu0 %v2819
      %v3278 = vpop.f32.mrb[0].mxu0
      %v3279 = vadd.f32 %v2844, %v3278
      %v3280 = vpop.f32.mrb[0].mxu0
      %v3281 = vpop.f32.mrb[0].mxu0
      %v3282 = vadd.f32 %v2844, %v3281
      %v3283 = vpop.f32.mrb[0].mxu0
      %3284 = vdwg.mxu0
      %vm3285 = vcmask 97280
      %3286 = vst.msk [vmem:[%s204] sm:$0xff] %vm3285, %v3031
      %3287 = vst.msk [vmem:[%s204 + $0x8] sm:$0xff] %vm3285, %v3034
      %3288 = vst.msk [vmem:[%s204 + $0x10] sm:$0xff] %vm3285, %v3039
      %3289 = vst.msk [vmem:[%s204 + $0x18] sm:$0xff] %vm3285, %v3042
      %3290 = vst.msk [vmem:[%s204 + $0x20] sm:$0xff] %vm3285, %v3047
      %3291 = vst.msk [vmem:[%s204 + $0x28] sm:$0xff] %vm3285, %v3050
      %3292 = vst.msk [vmem:[%s204 + $0x30] sm:$0xff] %vm3285, %v3055
      %3293 = vst.msk [vmem:[%s204 + $0x38] sm:$0xff] %vm3285, %v3058
      %3294 = vst.msk [vmem:[%s204 + $0x40] sm:$0xff] %vm3285, %v3063
      %3295 = vst.msk [vmem:[%s204 + $0x48] sm:$0xff] %vm3285, %v3066
      %3296 = vst.msk [vmem:[%s204 + $0x50] sm:$0xff] %vm3285, %v3071
      %3297 = vst.msk [vmem:[%s204 + $0x58] sm:$0xff] %vm3285, %v3074
      %3298 = vst.msk [vmem:[%s204 + $0x60] sm:$0xff] %vm3285, %v3079
      %3299 = vst.msk [vmem:[%s204 + $0x68] sm:$0xff] %vm3285, %v3082
      %3300 = vst.msk [vmem:[%s204 + $0x70] sm:$0xff] %vm3285, %v3087
      %3301 = vst.msk [vmem:[%s204 + $0x78] sm:$0xff] %vm3285, %v3090
      %3302 = vst.msk [vmem:[%s204 + $0x80] sm:$0xff] %vm3285, %v3095
      %3303 = vst.msk [vmem:[%s204 + $0x88] sm:$0xff] %vm3285, %v3098
      %3304 = vst.msk [vmem:[%s204 + $0x90] sm:$0xff] %vm3285, %v3103
      %3305 = vst.msk [vmem:[%s204 + $0x98] sm:$0xff] %vm3285, %v3106
      %3306 = vst.msk [vmem:[%s204 + $0xa0] sm:$0xff] %vm3285, %v3111
      %3307 = vst.msk [vmem:[%s204 + $0xa8] sm:$0xff] %vm3285, %v3114
      %3308 = vst.msk [vmem:[%s204 + $0xb0] sm:$0xff] %vm3285, %v3119
      %3309 = vst.msk [vmem:[%s204 + $0xb8] sm:$0xff] %vm3285, %v3122
      %3310 = vst.msk [vmem:[%s204 + $0xc0] sm:$0xff] %vm3285, %v3127
      %3311 = vst.msk [vmem:[%s204 + $0xc8] sm:$0xff] %vm3285, %v3130
      %3312 = vst.msk [vmem:[%s204 + $0xd0] sm:$0xff] %vm3285, %v3135
      %3313 = vst.msk [vmem:[%s204 + $0xd8] sm:$0xff] %vm3285, %v3138
      %3314 = vst.msk [vmem:[%s204 + $0xe0] sm:$0xff] %vm3285, %v3143
      %3315 = vst.msk [vmem:[%s204 + $0xe8] sm:$0xff] %vm3285, %v3146
      %3316 = vst.msk [vmem:[%s204 + $0xf0] sm:$0xff] %vm3285, %v3151
      %3317 = vst.msk [vmem:[%s204 + $0xf8] sm:$0xff] %vm3285, %v3154
      %3318 = vst.msk [vmem:[%s204 + $0x100] sm:$0xff] %vm3285, %v3159
      %3319 = vst.msk [vmem:[%s204 + $0x108] sm:$0xff] %vm3285, %v3162
      %3320 = vst.msk [vmem:[%s204 + $0x110] sm:$0xff] %vm3285, %v3167
      %3321 = vst.msk [vmem:[%s204 + $0x118] sm:$0xff] %vm3285, %v3170
      %3322 = vst.msk [vmem:[%s204 + $0x120] sm:$0xff] %vm3285, %v3175
      %3323 = vst.msk [vmem:[%s204 + $0x128] sm:$0xff] %vm3285, %v3178
      %3324 = vst.msk [vmem:[%s204 + $0x130] sm:$0xff] %vm3285, %v3183
      %3325 = vst.msk [vmem:[%s204 + $0x138] sm:$0xff] %vm3285, %v3186
      %3326 = vst.msk [vmem:[%s204 + $0x140] sm:$0xff] %vm3285, %v3191
      %3327 = vst.msk [vmem:[%s204 + $0x148] sm:$0xff] %vm3285, %v3194
      %3328 = vst.msk [vmem:[%s204 + $0x150] sm:$0xff] %vm3285, %v3199
      %3329 = vst.msk [vmem:[%s204 + $0x158] sm:$0xff] %vm3285, %v3202
      %3330 = vst.msk [vmem:[%s204 + $0x160] sm:$0xff] %vm3285, %v3207
      %3331 = vst.msk [vmem:[%s204 + $0x168] sm:$0xff] %vm3285, %v3210
      %3332 = vst.msk [vmem:[%s204 + $0x170] sm:$0xff] %vm3285, %v3215
      %3333 = vst.msk [vmem:[%s204 + $0x178] sm:$0xff] %vm3285, %v3218
      %3334 = vst.msk [vmem:[%s204 + $0x180] sm:$0xff] %vm3285, %v3223
      %3335 = vst.msk [vmem:[%s204 + $0x188] sm:$0xff] %vm3285, %v3226
      %3336 = vst.msk [vmem:[%s204 + $0x190] sm:$0xff] %vm3285, %v3231
      %3337 = vst.msk [vmem:[%s204 + $0x198] sm:$0xff] %vm3285, %v3234
      %3338 = vst.msk [vmem:[%s204 + $0x1a0] sm:$0xff] %vm3285, %v3239
      %3339 = vst.msk [vmem:[%s204 + $0x1a8] sm:$0xff] %vm3285, %v3242
      %3340 = vst.msk [vmem:[%s204 + $0x1b0] sm:$0xff] %vm3285, %v3247
      %3341 = vst.msk [vmem:[%s204 + $0x1b8] sm:$0xff] %vm3285, %v3250
      %3342 = vst.msk [vmem:[%s204 + $0x1c0] sm:$0xff] %vm3285, %v3255
      %3343 = vst.msk [vmem:[%s204 + $0x1c8] sm:$0xff] %vm3285, %v3258
      %3344 = vst.msk [vmem:[%s204 + $0x1d0] sm:$0xff] %vm3285, %v3263
      %3345 = vst.msk [vmem:[%s204 + $0x1d8] sm:$0xff] %vm3285, %v3266
      %3346 = vst.msk [vmem:[%s204 + $0x1e0] sm:$0xff] %vm3285, %v3271
      %3347 = vst.msk [vmem:[%s204 + $0x1e8] sm:$0xff] %vm3285, %v3274
      %3348 = vst.msk [vmem:[%s204 + $0x1f0] sm:$0xff] %vm3285, %v3279
      %3349 = vst.msk [vmem:[%s204 + $0x1f8] sm:$0xff] %vm3285, %v3282
      %s3350 = smul.u32 %s18, 2
      %s3351 = sadd.s32 %s3350, %s19
      %p3352 = scmp.lt.s32.totalorder %s3351, 3
      %s3353 = scalar_select %p3352, %s3351, 3
      %s3354 = smul.addr %s3353, 64
      %s3355 = smul.addr %s3354, 8
      %s3356 = scalar_lea.vmem %s3, %s3355
      // Predicated region
      $region33: #{_lambda_.9} parent=31 // pred_check
        %p3357 = pneg %p120
      $region34: #{_lambda_.9} parent=31 // pred_check_branch
        %3359 = sbr.rel (%p3357) target = $region36
      $region35: #{_lambda_.9} parent=31 // pred_region
        %s3360 = smul.u32 %s18, 2
        %s3361 = sadd.s32 %s3360, %s19
      $region36: #{_lambda_.9} parent=31 // pred_fallthru
        _
    $region32: #{_lambda_.9} parent=5 // pred_fallthru
      _
    %p3362 = scmp.le.s32.totalorder 2, %s9
    // Predicated region
    $region37: #{_lambda_.9} parent=5 // pred_check
      %p3363 = pneg %p3362
    $region38: #{_lambda_.9} parent=5 // pred_check_branch
      %3365 = sbr.rel (%p3363) target = $region40
    $region39: #{_lambda_.9} parent=5 // pred_region
      %s3366 = ssub.s32 %s9, 2
      // Predicated region
      $region41: #{_lambda_.9} parent=39 // pred_check
        %p3367 = pneg %p126
      $region42: #{_lambda_.9} parent=39 // pred_check_branch
        %3369 = sbr.rel (%p3367) target = $region44
      $region43: #{_lambda_.9} parent=39 // pred_region
        %s3370 = smul.u32 %s20, 2
        %s3371 = sadd.s32 %s3370, %s21
        %p3372 = scmp.lt.s32.totalorder %s3371, 3
        %s3373 = scalar_select %p3372, %s3371, 3
        %s3374 = smul.addr %s3373, 64
        %s3375 = smul.addr %s3374, 8
        %s3376 = scalar_lea.vmem %s3, %s3375
      $region44: #{_lambda_.9} parent=39 // pred_fallthru
        _
    $region40: #{_lambda_.9} parent=5 // pred_fallthru
      _
  $region6: #{_lambda_.9} parent=0 // loop_footer
    %s13 = sadd.s32 1, %s9
  $region7: #{_lambda_.9} parent=0 // loop_footer_branch
    %8 = sbr.rel target = $region3
  $region8: #{_lambda_.9} parent=0 // loop_exit
    _

</llo_original>
